<compile_context>
chip_gen: v7x
topology: tpu7x:2x2x1
jax: 0.10.0
libtpu: 0.0.40
codegen_flags: <defaults>
</compile_context>

<pallas_src>
import functools
import numpy as np

import jax
import jax.numpy as jnp
from jax.experimental import pallas as pl
from jax.experimental.pallas import tpu as pltpu


BN_EPS = 1e-3
STEM_OUT = 32                       # round_filters(32) with width_coefficient=None
VMEM_LIMIT = 64 * 1024 * 1024       # explicit budget (fits v7x's 64 MiB per TC)

# Small blocks_args (constructor argument of EfficientNetEncoder), b0-style first stages.
BLOCKS_ARGS = [
    dict(kernel_size=3, num_repeat=1, input_filters=32, output_filters=16,
         expand_ratio=1, id_skip=True, stride=1, se_ratio=0.25),
    dict(kernel_size=3, num_repeat=2, input_filters=16, output_filters=24,
         expand_ratio=6, id_skip=True, stride=2, se_ratio=0.25),
]


# --------------------------------------------------------------------------- #
# Small helpers
# --------------------------------------------------------------------------- #

def _round_up(x, m):
    return (x + m - 1) // m * m


def _same_pad(h, w, k, s):
    """TF-style 'SAME' padding as used by get_same_padding_conv2d."""
    oh = -(-h // s)
    ow = -(-w // s)
    ph = max((oh - 1) * s + k - h, 0)
    pw = max((ow - 1) * s + k - w, 0)
    return (ph // 2, ph - ph // 2), (pw // 2, pw - pw // 2), oh, ow


def _full_spec(shape):
    shape = tuple(int(s) for s in shape)
    return pl.BlockSpec(shape, lambda i, nd=len(shape): (0,) * nd)


def _pick_tm(hw):
    """Spatial (H*W) tile for the pointwise matmuls: big tiles, always mult. of 8."""
    if hw <= 1024:
        tm = _round_up(hw, 8)
        return tm, tm
    return 512, _round_up(hw, 512)


# --------------------------------------------------------------------------- #
# Pallas kernels
# --------------------------------------------------------------------------- #

def _make_pw_kernel(act_swish, has_gate, has_res):
    """1x1 conv as bf16 MXU matmul with fused BN scale/bias, optional SE gate on the
    input, optional swish, optional residual add."""
    def kernel(*refs):
        idx = 0
        x_ref = refs[idx]; idx += 1
        g_ref = None
        if has_gate:
            g_ref = refs[idx]; idx += 1
        w_ref = refs[idx]; idx += 1
        s_ref = refs[idx]; idx += 1
        b_ref = refs[idx]; idx += 1
        r_ref = None
        if has_res:
            r_ref = refs[idx]; idx += 1
        o_ref = refs[idx]

        x = x_ref[0]                                   # (tm, cin) f32
        if has_gate:
            x = x * g_ref[0]                           # (1, cin) SE gate, fused
        y = jnp.dot(x.astype(jnp.bfloat16), w_ref[...],
                    preferred_element_type=jnp.float32)
        y = y * s_ref[...] + b_ref[...]                # folded BN (f32 epilogue)
        if act_swish:
            y = y * jax.nn.sigmoid(y)
        if has_res:
            y = y + r_ref[0]
        o_ref[0] = y.astype(o_ref.dtype)
    return kernel


def _dw_kernel(ph_ref, w_ref, b_ref, o_ref, pool_ref, *, K, S, HO, WO):
    """Depthwise KxK conv over a polyphase-split SAME-padded block.

    ph_ref:   (1, S*S, hs, ws, C)  phases (for S=1 a single phase = padded input)
    w_ref:    (K*K, 1, C)          taps with BN scale pre-folded
    b_ref:    (1, C)               BN bias
    o_ref:    (1, HO, WO, C)       post-BN, post-swish activation
    pool_ref: (1, 1, C)            global average pool of the output (SE squeeze)
    """
    c = o_ref.shape[-1]
    acc = jnp.zeros((HO, WO, c), jnp.float32)
    for ky in range(K):
        for kx in range(K):
            p = (ky % S) * S + (kx % S)
            oy, ox = ky // S, kx // S
            tap = ph_ref[0, p, oy:oy + HO, ox:ox + WO, :]      # unit-stride slice
            acc = acc + tap * w_ref[ky * K + kx]               # (1, C) broadcast
    y = acc + b_ref[...]
    y = y * jax.nn.sigmoid(y)                                  # swish
    o_ref[0] = y.astype(o_ref.dtype)
    pool_ref[...] = jnp.mean(y, axis=(0, 1), keepdims=True)    # (1, 1, C)


def _se_gate_kernel(p_ref, w1_ref, b1_ref, w2_ref, b2_ref, g_ref):
    """SE gate: pooled -> 1x1 reduce -> swish -> 1x1 expand -> sigmoid.  Tiny."""
    p = p_ref[...]                                             # (N, C)
    s = jnp.dot(p, w1_ref[...], preferred_element_type=jnp.float32) + b1_ref[...]
    s = s * jax.nn.sigmoid(s)
    s = jnp.dot(s, w2_ref[...], preferred_element_type=jnp.float32) + b2_ref[...]
    g_ref[...] = jax.nn.sigmoid(s)


# --------------------------------------------------------------------------- #
# Layer wrappers (pallas_call invocations)
# --------------------------------------------------------------------------- #

def pointwise_conv_bn(x, w_bf16, scale, bias, *, act_swish=False, gate=None,
                      residual=None):
    """1x1 conv (+ folded BN, optional SE gate, swish, residual) over NHWC input."""
    n, h, wdim, cin = x.shape
    cout = w_bf16.shape[1]
    hw = h * wdim
    tm, hwp = _pick_tm(hw)
    assert hwp % tm == 0

    xf = x.reshape(n, hw, cin)
    if hwp != hw:
        xf = jnp.pad(xf, ((0, 0), (0, hwp - hw), (0, 0)))

    args = [xf]
    in_specs = [pl.BlockSpec((1, tm, cin), lambda b, i: (b, i, 0))]
    if gate is not None:                                       # (n, 1, cin)
        args.append(gate)
        in_specs.append(pl.BlockSpec((1, 1, cin), lambda b, i: (b, 0, 0)))
    args += [w_bf16, scale.reshape(1, cout), bias.reshape(1, cout)]
    in_specs += [pl.BlockSpec((cin, cout), lambda b, i: (0, 0)),
                 pl.BlockSpec((1, cout), lambda b, i: (0, 0)),
                 pl.BlockSpec((1, cout), lambda b, i: (0, 0))]
    if residual is not None:
        rf = residual.reshape(n, hw, cout)
        if hwp != hw:
            rf = jnp.pad(rf, ((0, 0), (0, hwp - hw), (0, 0)))
        args.append(rf)
        in_specs.append(pl.BlockSpec((1, tm, cout), lambda b, i: (b, i, 0)))

    kern = _make_pw_kernel(act_swish, gate is not None, residual is not None)
    out = pl.pallas_call(
        kern,
        out_shape=jax.ShapeDtypeStruct((n, hwp, cout), jnp.float32),
        grid=(n, hwp // tm),
        in_specs=in_specs,
        out_specs=pl.BlockSpec((1, tm, cout), lambda b, i: (b, i, 0)),
        compiler_params=pltpu.CompilerParams(
            dimension_semantics=("parallel", "parallel"),
            vmem_limit_bytes=VMEM_LIMIT),
    )(*args)
    return out[:, :hw, :].reshape(n, h, wdim, cout)


def depthwise_conv_bn_swish(x, w_scaled, bias, k, stride):
    """Depthwise KxK SAME conv + folded BN + swish; also returns global avg-pool."""
    n, h, wdim, c = x.shape
    (pt, pb), (plft, prgt), ho, wo = _same_pad(h, wdim, k, stride)
    xp = jnp.pad(x, ((0, 0), (pt, pb), (plft, prgt), (0, 0)))
    s = stride
    hs = -(-xp.shape[1] // s)
    ws = -(-xp.shape[2] // s)
    hp2, wp2 = hs * s, ws * s
    if hp2 != xp.shape[1] or wp2 != xp.shape[2]:
        xp = jnp.pad(xp, ((0, 0), (0, hp2 - xp.shape[1]), (0, wp2 - xp.shape[2]), (0, 0)))
    if s == 1:
        phases = xp[:, None]                                   # (n, 1, hs, ws, c)
    else:
        # polyphase split (space-to-depth by parity): phases[:, py*s+px] = xp[:, py::s, px::s]
        phases = xp.reshape(n, hs, s, ws, s, c).transpose(0, 2, 4, 1, 3, 5)
        phases = phases.reshape(n, s * s, hs, ws, c)

    kern = functools.partial(_dw_kernel, K=k, S=s, HO=ho, WO=wo)
    out, pooled = pl.pallas_call(
        kern,
        out_shape=(jax.ShapeDtypeStruct((n, ho, wo, c), jnp.float32),
                   jax.ShapeDtypeStruct((n, 1, c), jnp.float32)),
        grid=(n,),
        in_specs=[pl.BlockSpec((1, s * s, hs, ws, c), lambda b: (b, 0, 0, 0, 0)),
                  pl.BlockSpec((k * k, 1, c), lambda b: (0, 0, 0)),
                  pl.BlockSpec((1, c), lambda b: (0, 0))],
        out_specs=(pl.BlockSpec((1, ho, wo, c), lambda b: (b, 0, 0, 0)),
                   pl.BlockSpec((1, 1, c), lambda b: (b, 0, 0))),
        compiler_params=pltpu.CompilerParams(
            dimension_semantics=("parallel",),
            vmem_limit_bytes=VMEM_LIMIT),
    )(phases, w_scaled, bias.reshape(1, c))
    return out, pooled


def se_gate(pooled, w1, b1, w2, b2):
    """Compute the (N, 1, C) SE gate from the (N, 1, C) pooled activation."""
    n, _, c = pooled.shape
    cse = w1.shape[1]
    pad = (-cse) % 8                       # zero-pad squeeze dim (math-neutral)
    if pad:
        w1 = jnp.pad(w1, ((0, 0), (0, pad)))
        b1 = jnp.pad(b1, ((0, 0), (0, pad)))
        w2 = jnp.pad(w2, ((0, pad), (0, 0)))
    p2 = pooled.reshape(n, c)
    gate = pl.pallas_call(
        _se_gate_kernel,
        out_shape=jax.ShapeDtypeStruct((n, c), jnp.float32),
        grid=(1,),
        in_specs=[_full_spec(p2.shape), _full_spec(w1.shape), _full_spec(b1.shape),
                  _full_spec(w2.shape), _full_spec(b2.shape)],
        out_specs=_full_spec((n, c)),
        compiler_params=pltpu.CompilerParams(
            dimension_semantics=("arbitrary",),
            vmem_limit_bytes=VMEM_LIMIT),
    )(p2, w1, b1, w2, b2)
    return gate.reshape(n, 1, c)


def stem_conv_bn_swish(x, w_bf16, scale, bias, k, stride):
    """Stem 3x3/s2 SAME conv as a single im2col matmul (reuses the pointwise kernel)."""
    n, h, wdim, cin = x.shape
    (pt, pb), (plft, prgt), ho, wo = _same_pad(h, wdim, k, stride)
    xp = jnp.pad(x, ((0, 0), (pt, pb), (plft, prgt), (0, 0)))
    taps = []
    for dy in range(k):
        for dx in range(k):
            taps.append(xp[:, dy:dy + (ho - 1) * stride + 1:stride,
                           dx:dx + (wo - 1) * stride + 1:stride, :])
    im2col = jnp.concatenate(taps, axis=-1)            # (N, Ho, Wo, k*k*cin)
    kk_cin = k * k * cin
    pad = (-kk_cin) % 8
    if pad:
        im2col = jnp.pad(im2col, ((0, 0), (0, 0), (0, 0), (0, pad)))
    return pointwise_conv_bn(im2col, w_bf16, scale, bias, act_swish=True)


# --------------------------------------------------------------------------- #
# Model construction (deterministic synthetic parameters)
# --------------------------------------------------------------------------- #

def _expand_block_cfgs(blocks_args):
    cfgs = []
    for ba in blocks_args:
        ba = dict(ba)
        cfgs.append(dict(ba))
        if ba['num_repeat'] > 1:
            ba['input_filters'] = ba['output_filters']
            ba['stride'] = 1
        for _ in range(ba['num_repeat'] - 1):
            cfgs.append(dict(ba))
    return cfgs


def init_params(key):
    keys = iter(jax.random.split(key, 256))

    def nrm(shape, std):
        return jax.random.normal(next(keys), shape, jnp.float32) * std

    def bn(c):
        gamma = 1.0 + 0.1 * nrm((c,), 1.0)
        beta = 0.1 * nrm((c,), 1.0)
        # eval-mode BN with fresh running stats: mean=0, var=1 -> fold into scale/bias
        scale = gamma / jnp.sqrt(1.0 + BN_EPS)
        bias = beta
        return scale, bias

    params = {}
    kk_cin = 9 * 3
    stem_w = nrm((kk_cin, STEM_OUT), 1.0 / np.sqrt(kk_cin))
    stem_w = jnp.pad(stem_w, ((0, (-kk_cin) % 8), (0, 0)))
    params['stem_w'] = stem_w.astype(jnp.bfloat16)
    params['stem_scale'], params['stem_bias'] = bn(STEM_OUT)

    cfgs = _expand_block_cfgs(BLOCKS_ARGS)
    blocks = []
    for cfg in cfgs:
        inp, outf = cfg['input_filters'], cfg['output_filters']
        k, er = cfg['kernel_size'], cfg['expand_ratio']
        oup = inp * er
        p = {}
        if er != 1:
            p['expand_w'] = nrm((inp, oup), 1.0 / np.sqrt(inp)).astype(jnp.bfloat16)
            p['expand_scale'], p['expand_bias'] = bn(oup)
        dw_scale, dw_bias = bn(oup)
        dw_w = nrm((k * k, 1, oup), 1.0 / np.sqrt(k * k))
        p['dw_w_scaled'] = dw_w * dw_scale.reshape(1, 1, oup)   # fold BN scale into taps
        p['dw_bias'] = dw_bias
        cse = max(1, int(inp * cfg['se_ratio']))
        p['se_w1'] = nrm((oup, cse), 1.0 / np.sqrt(oup))
        p['se_b1'] = 0.01 * nrm((1, cse), 1.0)
        p['se_w2'] = nrm((cse, oup), 1.0 / np.sqrt(cse))
        p['se_b2'] = 0.01 * nrm((1, oup), 1.0)
        p['proj_w'] = nrm((oup, outf), 1.0 / np.sqrt(oup)).astype(jnp.bfloat16)
        p['proj_scale'], p['proj_bias'] = bn(outf)
        blocks.append(p)
    params['blocks'] = blocks
    return params, cfgs


def efficientnet_encoder_forward(x_nchw, params, cfgs):
    # layout: NCHW (PyTorch) -> NHWC for all Pallas kernels -> back to NCHW.
    x = jnp.transpose(x_nchw, (0, 2, 3, 1)).astype(jnp.float32)

    # stem: 3x3 stride-2 SAME conv -> BN -> swish (single im2col matmul)
    x = stem_conv_bn_swish(x, params['stem_w'], params['stem_scale'],
                           params['stem_bias'], 3, 2)

    # MBConv blocks
    for cfg, p in zip(cfgs, params['blocks']):
        inputs = x
        if cfg['expand_ratio'] != 1:
            x = pointwise_conv_bn(x, p['expand_w'], p['expand_scale'],
                                  p['expand_bias'], act_swish=True)
        x, pooled = depthwise_conv_bn_swish(x, p['dw_w_scaled'], p['dw_bias'],
                                            cfg['kernel_size'], cfg['stride'])
        gate = se_gate(pooled, p['se_w1'], p['se_b1'], p['se_w2'], p['se_b2'])
        skip = (cfg['id_skip'] and cfg['stride'] == 1
                and cfg['input_filters'] == cfg['output_filters'])
        # SE gate + projection conv + BN + (drop_connect==identity) residual, all fused
        x = pointwise_conv_bn(x, p['proj_w'], p['proj_scale'], p['proj_bias'],
                              act_swish=False, gate=gate,
                              residual=inputs if skip else None)

    # ver=1 forward == extract_features, which returns x right after the block loop
    # (conv_head / avg_pool / fc / encode_convs / map2styles are never executed).
    return jnp.transpose(x, (0, 3, 1, 2))


# --------------------------------------------------------------------------- #
# Main
# --------------------------------------------------------------------------- #

if __name__ == "__main__":
    root = jax.random.PRNGKey(0)
    k_in, k_par = jax.random.split(root)

    params, cfgs = init_params(k_par)
    x = jax.random.normal(k_in, (2, 3, 16, 16), jnp.float32)   # NCHW like PyTorch

    fwd = jax.jit(lambda inp: efficientnet_encoder_forward(inp, params, cfgs))
    out = fwd(x)
    out = jax.block_until_ready(out)

    # stem /2 -> 8x8 (32ch); block1 s1 -> 8x8 (16ch); block2 s2 -> 4x4 (24ch); repeat -> 4x4 (24ch)
    assert out.shape == (2, 24, 4, 4), out.shape
    assert bool(jnp.all(jnp.isfinite(out)))
    print("KERNEL_OK")
</pallas_src>

<mosaic_0001>
module attributes {stable_mosaic.version = 11 : i64} {
  func.func @kernel(%arg0: i32, %arg1: i32, %arg2: memref<1x64x32xf32, #tpu.memory_space<vmem>>, %arg3: memref<32x32xbf16, #tpu.memory_space<vmem>>, %arg4: memref<1x32xf32, #tpu.memory_space<vmem>>, %arg5: memref<1x32xf32, #tpu.memory_space<vmem>>, %arg6: memref<1x64x32xf32, #tpu.memory_space<vmem>>) attributes {dimension_semantics = [#tpu.dimension_semantics<parallel>, #tpu.dimension_semantics<parallel>], iteration_bounds = array<i64: 2, 1>, scalar_prefetch = 0 : i64, scratch_operands = 0 : i64, tpu.core_type = #tpu.core_type<tc>, window_params = [{transform_indices = @transform_0, window_bounds = array<i64: 1, 64, 32>}, {pipeline_mode = #tpu.pipeline_mode<synchronous>, transform_indices = @transform_1, window_bounds = array<i64: 32, 32>}, {pipeline_mode = #tpu.pipeline_mode<synchronous>, transform_indices = @transform_2, window_bounds = array<i64: 1, 32>}, {pipeline_mode = #tpu.pipeline_mode<synchronous>, transform_indices = @transform_3, window_bounds = array<i64: 1, 32>}, {transform_indices = @transform_4, window_bounds = array<i64: 1, 64, 32>}]} {
    %c0 = arith.constant 0 : index
    %c0_0 = arith.constant 0 : index
    %c0_1 = arith.constant 0 : index
    %0 = vector.load %arg2[%c0, %c0_0, %c0_1] : memref<1x64x32xf32, #tpu.memory_space<vmem>>, vector<1x64x32xf32>
    %1 = vector.shape_cast %0 : vector<1x64x32xf32> to vector<64x32xf32>
    %2 = arith.truncf %1 : vector<64x32xf32> to vector<64x32xbf16>
    %c0_2 = arith.constant 0 : index
    %c0_3 = arith.constant 0 : index
    %3 = vector.load %arg3[%c0_2, %c0_3] : memref<32x32xbf16, #tpu.memory_space<vmem>>, vector<32x32xbf16>
    %cst = arith.constant dense<0.000000e+00> : vector<64x32xf32>
    %4 = tpu.matmul %2, %3, %cst {dimension_numbers = #tpu.dot_dimension_numbers<[1], [0], [0], [1], [0, 0, 1, 1], [], []>} : vector<64x32xbf16>, vector<32x32xbf16>, vector<64x32xf32> -> vector<64x32xf32>
    %c0_4 = arith.constant 0 : index
    %c0_5 = arith.constant 0 : index
    %5 = vector.load %arg4[%c0_4, %c0_5] : memref<1x32xf32, #tpu.memory_space<vmem>>, vector<1x32xf32>
    %6 = vector.broadcast %5 : vector<1x32xf32> to vector<64x32xf32>
    %7 = arith.mulf %4, %6 : vector<64x32xf32>
    %c0_6 = arith.constant 0 : index
    %c0_7 = arith.constant 0 : index
    %8 = vector.load %arg5[%c0_6, %c0_7] : memref<1x32xf32, #tpu.memory_space<vmem>>, vector<1x32xf32>
    %9 = vector.broadcast %8 : vector<1x32xf32> to vector<64x32xf32>
    %10 = arith.addf %7, %9 : vector<64x32xf32>
    %11 = arith.negf %10 : vector<64x32xf32>
    %12 = math.exp %11 : vector<64x32xf32>
    %cst_8 = arith.constant 1.000000e+00 : f32
    %13 = vector.broadcast %cst_8 : f32 to vector<64x32xf32>
    %14 = arith.addf %13, %12 : vector<64x32xf32>
    %15 = arith.divf %13, %14 : vector<64x32xf32>
    %16 = arith.mulf %10, %15 : vector<64x32xf32>
    %c0_9 = arith.constant 0 : index
    %c0_10 = arith.constant 0 : index
    %c0_11 = arith.constant 0 : index
    %17 = vector.load %arg6[%c0_9, %c0_10, %c0_11] : memref<1x64x32xf32, #tpu.memory_space<vmem>>, vector<1x64x32xf32>
    %18 = vector.shape_cast %17 : vector<1x64x32xf32> to vector<64x32xf32>
    %19 = vector.shape_cast %16 : vector<64x32xf32> to vector<1x64x32xf32>
    tpu.vector_store %arg6[%c0_9, %c0_10, %c0_11], %19 {strides = array<i32>} : memref<1x64x32xf32, #tpu.memory_space<vmem>>, vector<1x64x32xf32>,
    return
  }
  func.func @transform_0(%arg0: i32, %arg1: i32) -> (i32, i32, i32) {
    %c0_i32 = arith.constant 0 : i32
    %c0_i32_0 = arith.constant 0 : i32
    return %arg0, %arg1, %c0_i32 : i32, i32, i32
  }
  func.func @transform_1(%arg0: i32, %arg1: i32) -> (i32, i32) {
    %c0_i32 = arith.constant 0 : i32
    %c0_i32_0 = arith.constant 0 : i32
    %c0_i32_1 = arith.constant 0 : i32
    return %c0_i32, %c0_i32_0 : i32, i32
  }
  func.func @transform_2(%arg0: i32, %arg1: i32) -> (i32, i32) {
    %c0_i32 = arith.constant 0 : i32
    %c0_i32_0 = arith.constant 0 : i32
    %c0_i32_1 = arith.constant 0 : i32
    return %c0_i32, %c0_i32_0 : i32, i32
  }
  func.func @transform_3(%arg0: i32, %arg1: i32) -> (i32, i32) {
    %c0_i32 = arith.constant 0 : i32
    %c0_i32_0 = arith.constant 0 : i32
    %c0_i32_1 = arith.constant 0 : i32
    return %c0_i32, %c0_i32_0 : i32, i32
  }
  func.func @transform_4(%arg0: i32, %arg1: i32) -> (i32, i32, i32) {
    %c0_i32 = arith.constant 0 : i32
    %c0_i32_0 = arith.constant 0 : i32
    return %arg0, %arg1, %c0_i32 : i32, i32, i32
  }
}

module attributes {stable_mosaic.version = 11 : i64} {
  func.func @_dw_kernel(%arg0: i32, %arg1: memref<1x1x10x10x32xf32, #tpu.memory_space<vmem>>, %arg2: memref<9x1x32xf32, #tpu.memory_space<vmem>>, %arg3: memref<1x32xf32, #tpu.memory_space<vmem>>, %arg4: memref<1x8x8x32xf32, #tpu.memory_space<vmem>>, %arg5: memref<1x1x32xf32, #tpu.memory_space<vmem>>) attributes {dimension_semantics = [#tpu.dimension_semantics<parallel>], iteration_bounds = array<i64: 2>, scalar_prefetch = 0 : i64, scratch_operands = 0 : i64, tpu.core_type = #tpu.core_type<tc>, window_params = [{transform_indices = @transform_0, window_bounds = array<i64: 1, 1, 10, 10, 32>}, {pipeline_mode = #tpu.pipeline_mode<synchronous>, transform_indices = @transform_1, window_bounds = array<i64: 9, 1, 32>}, {pipeline_mode = #tpu.pipeline_mode<synchronous>, transform_indices = @transform_2, window_bounds = array<i64: 1, 32>}, {transform_indices = @transform_3, window_bounds = array<i64: 1, 8, 8, 32>}, {transform_indices = @transform_4, window_bounds = array<i64: 1, 1, 32>}]} {
    %cst = arith.constant 0.000000e+00 : f32
    %0 = vector.broadcast %cst : f32 to vector<8x8x32xf32>
    %c0 = arith.constant 0 : index
    %c0_0 = arith.constant 0 : index
    %c0_1 = arith.constant 0 : index
    %c0_2 = arith.constant 0 : index
    %c0_3 = arith.constant 0 : index
    %1 = vector.load %arg1[%c0, %c0_0, %c0_1, %c0_2, %c0_3] : memref<1x1x10x10x32xf32, #tpu.memory_space<vmem>>, vector<1x1x8x8x32xf32>
    %2 = vector.shape_cast %1 : vector<1x1x8x8x32xf32> to vector<8x8x32xf32>
    %c0_4 = arith.constant 0 : index
    %c0_5 = arith.constant 0 : index
    %c0_6 = arith.constant 0 : index
    %3 = vector.load %arg2[%c0_4, %c0_5, %c0_6] : memref<9x1x32xf32, #tpu.memory_space<vmem>>, vector<1x1x32xf32>
    %4 = vector.shape_cast %3 : vector<1x1x32xf32> to vector<1x32xf32>
    %5 = vector.shape_cast %4 : vector<1x32xf32> to vector<1x1x32xf32>
    %6 = vector.broadcast %5 : vector<1x1x32xf32> to vector<8x8x32xf32>
    %7 = arith.mulf %2, %6 : vector<8x8x32xf32>
    %8 = arith.addf %0, %7 : vector<8x8x32xf32>
    %c0_7 = arith.constant 0 : index
    %c0_8 = arith.constant 0 : index
    %c0_9 = arith.constant 0 : index
    %c1 = arith.constant 1 : index
    %c0_10 = arith.constant 0 : index
    %9 = vector.load %arg1[%c0_7, %c0_8, %c0_9, %c1, %c0_10] : memref<1x1x10x10x32xf32, #tpu.memory_space<vmem>>, vector<1x1x8x8x32xf32>
    %10 = vector.shape_cast %9 : vector<1x1x8x8x32xf32> to vector<8x8x32xf32>
    %c1_11 = arith.constant 1 : index
    %c0_12 = arith.constant 0 : index
    %c0_13 = arith.constant 0 : index
    %11 = vector.load %arg2[%c1_11, %c0_12, %c0_13] : memref<9x1x32xf32, #tpu.memory_space<vmem>>, vector<1x1x32xf32>
    %12 = vector.shape_cast %11 : vector<1x1x32xf32> to vector<1x32xf32>
    %13 = vector.shape_cast %12 : vector<1x32xf32> to vector<1x1x32xf32>
    %14 = vector.broadcast %13 : vector<1x1x32xf32> to vector<8x8x32xf32>
    %15 = arith.mulf %10, %14 : vector<8x8x32xf32>
    %16 = arith.addf %8, %15 : vector<8x8x32xf32>
    %c0_14 = arith.constant 0 : index
    %c0_15 = arith.constant 0 : index
    %c0_16 = arith.constant 0 : index
    %c2 = arith.constant 2 : index
    %c0_17 = arith.constant 0 : index
    %17 = vector.load %arg1[%c0_14, %c0_15, %c0_16, %c2, %c0_17] : memref<1x1x10x10x32xf32, #tpu.memory_space<vmem>>, vector<1x1x8x8x32xf32>
    %18 = vector.shape_cast %17 : vector<1x1x8x8x32xf32> to vector<8x8x32xf32>
    %c2_18 = arith.constant 2 : index
    %c0_19 = arith.constant 0 : index
    %c0_20 = arith.constant 0 : index
    %19 = vector.load %arg2[%c2_18, %c0_19, %c0_20] : memref<9x1x32xf32, #tpu.memory_space<vmem>>, vector<1x1x32xf32>
    %20 = vector.shape_cast %19 : vector<1x1x32xf32> to vector<1x32xf32>
    %21 = vector.shape_cast %20 : vector<1x32xf32> to vector<1x1x32xf32>
    %22 = vector.broadcast %21 : vector<1x1x32xf32> to vector<8x8x32xf32>
    %23 = arith.mulf %18, %22 : vector<8x8x32xf32>
    %24 = arith.addf %16, %23 : vector<8x8x32xf32>
    %c0_21 = arith.constant 0 : index
    %c0_22 = arith.constant 0 : index
    %c1_23 = arith.constant 1 : index
    %c0_24 = arith.constant 0 : index
    %c0_25 = arith.constant 0 : index
    %25 = vector.load %arg1[%c0_21, %c0_22, %c1_23, %c0_24, %c0_25] : memref<1x1x10x10x32xf32, #tpu.memory_space<vmem>>, vector<1x1x8x8x32xf32>
    %26 = vector.shape_cast %25 : vector<1x1x8x8x32xf32> to vector<8x8x32xf32>
    %c3 = arith.constant 3 : index
    %c0_26 = arith.constant 0 : index
    %c0_27 = arith.constant 0 : index
    %27 = vector.load %arg2[%c3, %c0_26, %c0_27] : memref<9x1x32xf32, #tpu.memory_space<vmem>>, vector<1x1x32xf32>
    %28 = vector.shape_cast %27 : vector<1x1x32xf32> to vector<1x32xf32>
    %29 = vector.shape_cast %28 : vector<1x32xf32> to vector<1x1x32xf32>
    %30 = vector.broadcast %29 : vector<1x1x32xf32> to vector<8x8x32xf32>
    %31 = arith.mulf %26, %30 : vector<8x8x32xf32>
    %32 = arith.addf %24, %31 : vector<8x8x32xf32>
    %c0_28 = arith.constant 0 : index
    %c0_29 = arith.constant 0 : index
    %c1_30 = arith.constant 1 : index
    %c1_31 = arith.constant 1 : index
    %c0_32 = arith.constant 0 : index
    %33 = vector.load %arg1[%c0_28, %c0_29, %c1_30, %c1_31, %c0_32] : memref<1x1x10x10x32xf32, #tpu.memory_space<vmem>>, vector<1x1x8x8x32xf32>
    %34 = vector.shape_cast %33 : vector<1x1x8x8x32xf32> to vector<8x8x32xf32>
    %c4 = arith.constant 4 : index
    %c0_33 = arith.constant 0 : index
    %c0_34 = arith.constant 0 : index
    %35 = vector.load %arg2[%c4, %c0_33, %c0_34] : memref<9x1x32xf32, #tpu.memory_space<vmem>>, vector<1x1x32xf32>
    %36 = vector.shape_cast %35 : vector<1x1x32xf32> to vector<1x32xf32>
    %37 = vector.shape_cast %36 : vector<1x32xf32> to vector<1x1x32xf32>
    %38 = vector.broadcast %37 : vector<1x1x32xf32> to vector<8x8x32xf32>
    %39 = arith.mulf %34, %38 : vector<8x8x32xf32>
    %40 = arith.addf %32, %39 : vector<8x8x32xf32>
    %c0_35 = arith.constant 0 : index
    %c0_36 = arith.constant 0 : index
    %c1_37 = arith.constant 1 : index
    %c2_38 = arith.constant 2 : index
    %c0_39 = arith.constant 0 : index
    %41 = vector.load %arg1[%c0_35, %c0_36, %c1_37, %c2_38, %c0_39] : memref<1x1x10x10x32xf32, #tpu.memory_space<vmem>>, vector<1x1x8x8x32xf32>
    %42 = vector.shape_cast %41 : vector<1x1x8x8x32xf32> to vector<8x8x32xf32>
    %c5 = arith.constant 5 : index
    %c0_40 = arith.constant 0 : index
    %c0_41 = arith.constant 0 : index
    %43 = vector.load %arg2[%c5, %c0_40, %c0_41] : memref<9x1x32xf32, #tpu.memory_space<vmem>>, vector<1x1x32xf32>
    %44 = vector.shape_cast %43 : vector<1x1x32xf32> to vector<1x32xf32>
    %45 = vector.shape_cast %44 : vector<1x32xf32> to vector<1x1x32xf32>
    %46 = vector.broadcast %45 : vector<1x1x32xf32> to vector<8x8x32xf32>
    %47 = arith.mulf %42, %46 : vector<8x8x32xf32>
    %48 = arith.addf %40, %47 : vector<8x8x32xf32>
    %c0_42 = arith.constant 0 : index
    %c0_43 = arith.constant 0 : index
    %c2_44 = arith.constant 2 : index
    %c0_45 = arith.constant 0 : index
    %c0_46 = arith.constant 0 : index
    %49 = vector.load %arg1[%c0_42, %c0_43, %c2_44, %c0_45, %c0_46] : memref<1x1x10x10x32xf32, #tpu.memory_space<vmem>>, vector<1x1x8x8x32xf32>
    %50 = vector.shape_cast %49 : vector<1x1x8x8x32xf32> to vector<8x8x32xf32>
    %c6 = arith.constant 6 : index
    %c0_47 = arith.constant 0 : index
    %c0_48 = arith.constant 0 : index
    %51 = vector.load %arg2[%c6, %c0_47, %c0_48] : memref<9x1x32xf32, #tpu.memory_space<vmem>>, vector<1x1x32xf32>
    %52 = vector.shape_cast %51 : vector<1x1x32xf32> to vector<1x32xf32>
    %53 = vector.shape_cast %52 : vector<1x32xf32> to vector<1x1x32xf32>
    %54 = vector.broadcast %53 : vector<1x1x32xf32> to vector<8x8x32xf32>
    %55 = arith.mulf %50, %54 : vector<8x8x32xf32>
    %56 = arith.addf %48, %55 : vector<8x8x32xf32>
    %c0_49 = arith.constant 0 : index
    %c0_50 = arith.constant 0 : index
    %c2_51 = arith.constant 2 : index
    %c1_52 = arith.constant 1 : index
    %c0_53 = arith.constant 0 : index
    %57 = vector.load %arg1[%c0_49, %c0_50, %c2_51, %c1_52, %c0_53] : memref<1x1x10x10x32xf32, #tpu.memory_space<vmem>>, vector<1x1x8x8x32xf32>
    %58 = vector.shape_cast %57 : vector<1x1x8x8x32xf32> to vector<8x8x32xf32>
    %c7 = arith.constant 7 : index
    %c0_54 = arith.constant 0 : index
    %c0_55 = arith.constant 0 : index
    %59 = vector.load %arg2[%c7, %c0_54, %c0_55] : memref<9x1x32xf32, #tpu.memory_space<vmem>>, vector<1x1x32xf32>
    %60 = vector.shape_cast %59 : vector<1x1x32xf32> to vector<1x32xf32>
    %61 = vector.shape_cast %60 : vector<1x32xf32> to vector<1x1x32xf32>
    %62 = vector.broadcast %61 : vector<1x1x32xf32> to vector<8x8x32xf32>
    %63 = arith.mulf %58, %62 : vector<8x8x32xf32>
    %64 = arith.addf %56, %63 : vector<8x8x32xf32>
    %c0_56 = arith.constant 0 : index
    %c0_57 = arith.constant 0 : index
    %c2_58 = arith.constant 2 : index
    %c2_59 = arith.constant 2 : index
    %c0_60 = arith.constant 0 : index
    %65 = vector.load %arg1[%c0_56, %c0_57, %c2_58, %c2_59, %c0_60] : memref<1x1x10x10x32xf32, #tpu.memory_space<vmem>>, vector<1x1x8x8x32xf32>
    %66 = vector.shape_cast %65 : vector<1x1x8x8x32xf32> to vector<8x8x32xf32>
    %c8 = arith.constant 8 : index
    %c0_61 = arith.constant 0 : index
    %c0_62 = arith.constant 0 : index
    %67 = vector.load %arg2[%c8, %c0_61, %c0_62] : memref<9x1x32xf32, #tpu.memory_space<vmem>>, vector<1x1x32xf32>
    %68 = vector.shape_cast %67 : vector<1x1x32xf32> to vector<1x32xf32>
    %69 = vector.shape_cast %68 : vector<1x32xf32> to vector<1x1x32xf32>
    %70 = vector.broadcast %69 : vector<1x1x32xf32> to vector<8x8x32xf32>
    %71 = arith.mulf %66, %70 : vector<8x8x32xf32>
    %72 = arith.addf %64, %71 : vector<8x8x32xf32>
    %c0_63 = arith.constant 0 : index
    %c0_64 = arith.constant 0 : index
    %73 = vector.load %arg3[%c0_63, %c0_64] : memref<1x32xf32, #tpu.memory_space<vmem>>, vector<1x32xf32>
    %74 = vector.shape_cast %73 : vector<1x32xf32> to vector<1x1x32xf32>
    %75 = vector.broadcast %74 : vector<1x1x32xf32> to vector<8x8x32xf32>
    %76 = arith.addf %72, %75 : vector<8x8x32xf32>
    %77 = arith.negf %76 : vector<8x8x32xf32>
    %78 = math.exp %77 : vector<8x8x32xf32>
    %cst_65 = arith.constant 1.000000e+00 : f32
    %79 = vector.broadcast %cst_65 : f32 to vector<8x8x32xf32>
    %80 = arith.addf %79, %78 : vector<8x8x32xf32>
    %81 = arith.divf %79, %80 : vector<8x8x32xf32>
    %82 = arith.mulf %76, %81 : vector<8x8x32xf32>
    %c0_66 = arith.constant 0 : index
    %c0_67 = arith.constant 0 : index
    %c0_68 = arith.constant 0 : index
    %c0_69 = arith.constant 0 : index
    %83 = vector.load %arg4[%c0_66, %c0_67, %c0_68, %c0_69] : memref<1x8x8x32xf32, #tpu.memory_space<vmem>>, vector<1x8x8x32xf32>
    %84 = vector.shape_cast %83 : vector<1x8x8x32xf32> to vector<8x8x32xf32>
    %85 = vector.shape_cast %82 : vector<8x8x32xf32> to vector<1x8x8x32xf32>
    tpu.vector_store %arg4[%c0_66, %c0_67, %c0_68, %c0_69], %85 {strides = array<i32>} : memref<1x8x8x32xf32, #tpu.memory_space<vmem>>, vector<1x8x8x32xf32>,
    %cst_70 = arith.constant dense<0.000000e+00> : vector<32xf32>
    %86 = vector.multi_reduction <add>, %82, %cst_70 [0, 1] : vector<8x8x32xf32> to vector<32xf32>
    %87 = vector.shape_cast %86 : vector<32xf32> to vector<1x1x32xf32>
    %cst_71 = arith.constant 6.400000e+01 : f32
    %88 = vector.broadcast %cst_71 : f32 to vector<1x1x32xf32>
    %89 = arith.divf %87, %88 : vector<1x1x32xf32>
    %c0_72 = arith.constant 0 : index
    %c0_73 = arith.constant 0 : index
    %c0_74 = arith.constant 0 : index
    %90 = vector.load %arg5[%c0_72, %c0_73, %c0_74] : memref<1x1x32xf32, #tpu.memory_space<vmem>>, vector<1x1x32xf32>
    tpu.vector_store %arg5[%c0_72, %c0_73, %c0_74], %89 {strides = array<i32>} : memref<1x1x32xf32, #tpu.memory_space<vmem>>, vector<1x1x32xf32>,
    return
  }
  func.func @transform_0(%arg0: i32) -> (i32, i32, i32, i32, i32) {
    %c0_i32 = arith.constant 0 : i32
    %c0_i32_0 = arith.constant 0 : i32
    %c0_i32_1 = arith.constant 0 : i32
    %c0_i32_2 = arith.constant 0 : i32
    %c0_i32_3 = arith.constant 0 : i32
    return %arg0, %c0_i32, %c0_i32_0, %c0_i32_1, %c0_i32_2 : i32, i32, i32, i32, i32
  }
  func.func @transform_1(%arg0: i32) -> (i32, i32, i32) {
    %c0_i32 = arith.constant 0 : i32
    %c0_i32_0 = arith.constant 0 : i32
    %c0_i32_1 = arith.constant 0 : i32
    %c0_i32_2 = arith.constant 0 : i32
    return %c0_i32, %c0_i32_0, %c0_i32_1 : i32, i32, i32
  }
  func.func @transform_2(%arg0: i32) -> (i32, i32) {
    %c0_i32 = arith.constant 0 : i32
    %c0_i32_0 = arith.constant 0 : i32
    %c0_i32_1 = arith.constant 0 : i32
    return %c0_i32, %c0_i32_0 : i32, i32
  }
  func.func @transform_3(%arg0: i32) -> (i32, i32, i32, i32) {
    %c0_i32 = arith.constant 0 : i32
    %c0_i32_0 = arith.constant 0 : i32
    %c0_i32_1 = arith.constant 0 : i32
    %c0_i32_2 = arith.constant 0 : i32
    return %arg0, %c0_i32, %c0_i32_0, %c0_i32_1 : i32, i32, i32, i32
  }
  func.func @transform_4(%arg0: i32) -> (i32, i32, i32) {
    %c0_i32 = arith.constant 0 : i32
    %c0_i32_0 = arith.constant 0 : i32
    %c0_i32_1 = arith.constant 0 : i32
    return %arg0, %c0_i32, %c0_i32_0 : i32, i32, i32
  }
}

module attributes {stable_mosaic.version = 11 : i64} {
  func.func @_se_gate_kernel(%arg0: i32, %arg1: memref<2x32xf32, #tpu.memory_space<vmem>>, %arg2: memref<32x8xf32, #tpu.memory_space<vmem>>, %arg3: memref<1x8xf32, #tpu.memory_space<vmem>>, %arg4: memref<8x32xf32, #tpu.memory_space<vmem>>, %arg5: memref<1x32xf32, #tpu.memory_space<vmem>>, %arg6: memref<2x32xf32, #tpu.memory_space<vmem>>) attributes {dimension_semantics = [#tpu.dimension_semantics<arbitrary>], iteration_bounds = array<i64: 1>, scalar_prefetch = 0 : i64, scratch_operands = 0 : i64, tpu.core_type = #tpu.core_type<tc>, window_params = [{pipeline_mode = #tpu.pipeline_mode<synchronous>, transform_indices = @transform_0, window_bounds = array<i64: 2, 32>}, {pipeline_mode = #tpu.pipeline_mode<synchronous>, transform_indices = @transform_1, window_bounds = array<i64: 32, 8>}, {pipeline_mode = #tpu.pipeline_mode<synchronous>, transform_indices = @transform_2, window_bounds = array<i64: 1, 8>}, {pipeline_mode = #tpu.pipeline_mode<synchronous>, transform_indices = @transform_3, window_bounds = array<i64: 8, 32>}, {pipeline_mode = #tpu.pipeline_mode<synchronous>, transform_indices = @transform_4, window_bounds = array<i64: 1, 32>}, {pipeline_mode = #tpu.pipeline_mode<synchronous>, transform_indices = @transform_5, window_bounds = array<i64: 2, 32>}]} {
    %c0 = arith.constant 0 : index
    %c0_0 = arith.constant 0 : index
    %0 = vector.load %arg1[%c0, %c0_0] : memref<2x32xf32, #tpu.memory_space<vmem>>, vector<2x32xf32>
    %c0_1 = arith.constant 0 : index
    %c0_2 = arith.constant 0 : index
    %1 = vector.load %arg2[%c0_1, %c0_2] : memref<32x8xf32, #tpu.memory_space<vmem>>, vector<32x8xf32>
    %cst = arith.constant dense<0.000000e+00> : vector<2x8xf32>
    %2 = tpu.matmul %0, %1, %cst {dimension_numbers = #tpu.dot_dimension_numbers<[1], [0], [0], [1], [0, 0, 1, 1], [], []>} : vector<2x32xf32>, vector<32x8xf32>, vector<2x8xf32> -> vector<2x8xf32>
    %c0_3 = arith.constant 0 : index
    %c0_4 = arith.constant 0 : index
    %3 = vector.load %arg3[%c0_3, %c0_4] : memref<1x8xf32, #tpu.memory_space<vmem>>, vector<1x8xf32>
    %4 = vector.broadcast %3 : vector<1x8xf32> to vector<2x8xf32>
    %5 = arith.addf %2, %4 : vector<2x8xf32>
    %6 = arith.negf %5 : vector<2x8xf32>
    %7 = math.exp %6 : vector<2x8xf32>
    %cst_5 = arith.constant 1.000000e+00 : f32
    %8 = vector.broadcast %cst_5 : f32 to vector<2x8xf32>
    %9 = arith.addf %8, %7 : vector<2x8xf32>
    %10 = arith.divf %8, %9 : vector<2x8xf32>
    %11 = arith.mulf %5, %10 : vector<2x8xf32>
    %c0_6 = arith.constant 0 : index
    %c0_7 = arith.constant 0 : index
    %12 = vector.load %arg4[%c0_6, %c0_7] : memref<8x32xf32, #tpu.memory_space<vmem>>, vector<8x32xf32>
    %cst_8 = arith.constant dense<0.000000e+00> : vector<2x32xf32>
    %13 = tpu.matmul %11, %12, %cst_8 {dimension_numbers = #tpu.dot_dimension_numbers<[1], [0], [0], [1], [0, 0, 1, 1], [], []>} : vector<2x8xf32>, vector<8x32xf32>, vector<2x32xf32> -> vector<2x32xf32>
    %c0_9 = arith.constant 0 : index
    %c0_10 = arith.constant 0 : index
    %14 = vector.load %arg5[%c0_9, %c0_10] : memref<1x32xf32, #tpu.memory_space<vmem>>, vector<1x32xf32>
    %15 = vector.broadcast %14 : vector<1x32xf32> to vector<2x32xf32>
    %16 = arith.addf %13, %15 : vector<2x32xf32>
    %17 = arith.negf %16 : vector<2x32xf32>
    %18 = math.exp %17 : vector<2x32xf32>
    %cst_11 = arith.constant 1.000000e+00 : f32
    %19 = vector.broadcast %cst_11 : f32 to vector<2x32xf32>
    %20 = arith.addf %19, %18 : vector<2x32xf32>
    %21 = arith.divf %19, %20 : vector<2x32xf32>
    %c0_12 = arith.constant 0 : index
    %c0_13 = arith.constant 0 : index
    %22 = vector.load %arg6[%c0_12, %c0_13] : memref<2x32xf32, #tpu.memory_space<vmem>>, vector<2x32xf32>
    tpu.vector_store %arg6[%c0_12, %c0_13], %21 {strides = array<i32>} : memref<2x32xf32, #tpu.memory_space<vmem>>, vector<2x32xf32>,
    return
  }
  func.func @transform_0(%arg0: i32) -> (i32, i32) {
    %c0_i32 = arith.constant 0 : i32
    %c0_i32_0 = arith.constant 0 : i32
    %c0_i32_1 = arith.constant 0 : i32
    return %c0_i32, %c0_i32_0 : i32, i32
  }
  func.func @transform_1(%arg0: i32) -> (i32, i32) {
    %c0_i32 = arith.constant 0 : i32
    %c0_i32_0 = arith.constant 0 : i32
    %c0_i32_1 = arith.constant 0 : i32
    return %c0_i32, %c0_i32_0 : i32, i32
  }
  func.func @transform_2(%arg0: i32) -> (i32, i32) {
    %c0_i32 = arith.constant 0 : i32
    %c0_i32_0 = arith.constant 0 : i32
    %c0_i32_1 = arith.constant 0 : i32
    return %c0_i32, %c0_i32_0 : i32, i32
  }
  func.func @transform_3(%arg0: i32) -> (i32, i32) {
    %c0_i32 = arith.constant 0 : i32
    %c0_i32_0 = arith.constant 0 : i32
    %c0_i32_1 = arith.constant 0 : i32
    return %c0_i32, %c0_i32_0 : i32, i32
  }
  func.func @transform_4(%arg0: i32) -> (i32, i32) {
    %c0_i32 = arith.constant 0 : i32
    %c0_i32_0 = arith.constant 0 : i32
    %c0_i32_1 = arith.constant 0 : i32
    return %c0_i32, %c0_i32_0 : i32, i32
  }
  func.func @transform_5(%arg0: i32) -> (i32, i32) {
    %c0_i32 = arith.constant 0 : i32
    %c0_i32_0 = arith.constant 0 : i32
    %c0_i32_1 = arith.constant 0 : i32
    return %c0_i32, %c0_i32_0 : i32, i32
  }
}

module attributes {stable_mosaic.version = 11 : i64} {
  func.func @kernel(%arg0: i32, %arg1: i32, %arg2: memref<1x64x32xf32, #tpu.memory_space<vmem>>, %arg3: memref<1x1x32xf32, #tpu.memory_space<vmem>>, %arg4: memref<32x16xbf16, #tpu.memory_space<vmem>>, %arg5: memref<1x16xf32, #tpu.memory_space<vmem>>, %arg6: memref<1x16xf32, #tpu.memory_space<vmem>>, %arg7: memref<1x64x16xf32, #tpu.memory_space<vmem>>) attributes {dimension_semantics = [#tpu.dimension_semantics<parallel>, #tpu.dimension_semantics<parallel>], iteration_bounds = array<i64: 2, 1>, scalar_prefetch = 0 : i64, scratch_operands = 0 : i64, tpu.core_type = #tpu.core_type<tc>, window_params = [{transform_indices = @transform_0, window_bounds = array<i64: 1, 64, 32>}, {transform_indices = @transform_1, window_bounds = array<i64: 1, 1, 32>}, {pipeline_mode = #tpu.pipeline_mode<synchronous>, transform_indices = @transform_2, window_bounds = array<i64: 32, 16>}, {pipeline_mode = #tpu.pipeline_mode<synchronous>, transform_indices = @transform_3, window_bounds = array<i64: 1, 16>}, {pipeline_mode = #tpu.pipeline_mode<synchronous>, transform_indices = @transform_4, window_bounds = array<i64: 1, 16>}, {transform_indices = @transform_5, window_bounds = array<i64: 1, 64, 16>}]} {
    %c0 = arith.constant 0 : index
    %c0_0 = arith.constant 0 : index
    %c0_1 = arith.constant 0 : index
    %0 = vector.load %arg2[%c0, %c0_0, %c0_1] : memref<1x64x32xf32, #tpu.memory_space<vmem>>, vector<1x64x32xf32>
    %1 = vector.shape_cast %0 : vector<1x64x32xf32> to vector<64x32xf32>
    %c0_2 = arith.constant 0 : index
    %c0_3 = arith.constant 0 : index
    %c0_4 = arith.constant 0 : index
    %2 = vector.load %arg3[%c0_2, %c0_3, %c0_4] : memref<1x1x32xf32, #tpu.memory_space<vmem>>, vector<1x1x32xf32>
    %3 = vector.shape_cast %2 : vector<1x1x32xf32> to vector<1x32xf32>
    %4 = vector.broadcast %3 : vector<1x32xf32> to vector<64x32xf32>
    %5 = arith.mulf %1, %4 : vector<64x32xf32>
    %6 = arith.truncf %5 : vector<64x32xf32> to vector<64x32xbf16>
    %c0_5 = arith.constant 0 : index
    %c0_6 = arith.constant 0 : index
    %7 = vector.load %arg4[%c0_5, %c0_6] : memref<32x16xbf16, #tpu.memory_space<vmem>>, vector<32x16xbf16>
    %cst = arith.constant dense<0.000000e+00> : vector<64x16xf32>
    %8 = tpu.matmul %6, %7, %cst {dimension_numbers = #tpu.dot_dimension_numbers<[1], [0], [0], [1], [0, 0, 1, 1], [], []>} : vector<64x32xbf16>, vector<32x16xbf16>, vector<64x16xf32> -> vector<64x16xf32>
    %c0_7 = arith.constant 0 : index
    %c0_8 = arith.constant 0 : index
    %9 = vector.load %arg5[%c0_7, %c0_8] : memref<1x16xf32, #tpu.memory_space<vmem>>, vector<1x16xf32>
    %10 = vector.broadcast %9 : vector<1x16xf32> to vector<64x16xf32>
    %11 = arith.mulf %8, %10 : vector<64x16xf32>
    %c0_9 = arith.constant 0 : index
    %c0_10 = arith.constant 0 : index
    %12 = vector.load %arg6[%c0_9, %c0_10] : memref<1x16xf32, #tpu.memory_space<vmem>>, vector<1x16xf32>
    %13 = vector.broadcast %12 : vector<1x16xf32> to vector<64x16xf32>
    %14 = arith.addf %11, %13 : vector<64x16xf32>
    %c0_11 = arith.constant 0 : index
    %c0_12 = arith.constant 0 : index
    %c0_13 = arith.constant 0 : index
    %15 = vector.load %arg7[%c0_11, %c0_12, %c0_13] : memref<1x64x16xf32, #tpu.memory_space<vmem>>, vector<1x64x16xf32>
    %16 = vector.shape_cast %15 : vector<1x64x16xf32> to vector<64x16xf32>
    %17 = vector.shape_cast %14 : vector<64x16xf32> to vector<1x64x16xf32>
    tpu.vector_store %arg7[%c0_11, %c0_12, %c0_13], %17 {strides = array<i32>} : memref<1x64x16xf32, #tpu.memory_space<vmem>>, vector<1x64x16xf32>,
    return
  }
  func.func @transform_0(%arg0: i32, %arg1: i32) -> (i32, i32, i32) {
    %c0_i32 = arith.constant 0 : i32
    %c0_i32_0 = arith.constant 0 : i32
    return %arg0, %arg1, %c0_i32 : i32, i32, i32
  }
  func.func @transform_1(%arg0: i32, %arg1: i32) -> (i32, i32, i32) {
    %c0_i32 = arith.constant 0 : i32
    %c0_i32_0 = arith.constant 0 : i32
    %c0_i32_1 = arith.constant 0 : i32
    return %arg0, %c0_i32, %c0_i32_0 : i32, i32, i32
  }
  func.func @transform_2(%arg0: i32, %arg1: i32) -> (i32, i32) {
    %c0_i32 = arith.constant 0 : i32
    %c0_i32_0 = arith.constant 0 : i32
    %c0_i32_1 = arith.constant 0 : i32
    return %c0_i32, %c0_i32_0 : i32, i32
  }
  func.func @transform_3(%arg0: i32, %arg1: i32) -> (i32, i32) {
    %c0_i32 = arith.constant 0 : i32
    %c0_i32_0 = arith.constant 0 : i32
    %c0_i32_1 = arith.constant 0 : i32
    return %c0_i32, %c0_i32_0 : i32, i32
  }
  func.func @transform_4(%arg0: i32, %arg1: i32) -> (i32, i32) {
    %c0_i32 = arith.constant 0 : i32
    %c0_i32_0 = arith.constant 0 : i32
    %c0_i32_1 = arith.constant 0 : i32
    return %c0_i32, %c0_i32_0 : i32, i32
  }
  func.func @transform_5(%arg0: i32, %arg1: i32) -> (i32, i32, i32) {
    %c0_i32 = arith.constant 0 : i32
    %c0_i32_0 = arith.constant 0 : i32
    return %arg0, %arg1, %c0_i32 : i32, i32, i32
  }
}

module attributes {stable_mosaic.version = 11 : i64} {
  func.func @kernel(%arg0: i32, %arg1: i32, %arg2: memref<1x64x16xf32, #tpu.memory_space<vmem>>, %arg3: memref<16x96xbf16, #tpu.memory_space<vmem>>, %arg4: memref<1x96xf32, #tpu.memory_space<vmem>>, %arg5: memref<1x96xf32, #tpu.memory_space<vmem>>, %arg6: memref<1x64x96xf32, #tpu.memory_space<vmem>>) attributes {dimension_semantics = [#tpu.dimension_semantics<parallel>, #tpu.dimension_semantics<parallel>], iteration_bounds = array<i64: 2, 1>, scalar_prefetch = 0 : i64, scratch_operands = 0 : i64, tpu.core_type = #tpu.core_type<tc>, window_params = [{transform_indices = @transform_0, window_bounds = array<i64: 1, 64, 16>}, {pipeline_mode = #tpu.pipeline_mode<synchronous>, transform_indices = @transform_1, window_bounds = array<i64: 16, 96>}, {pipeline_mode = #tpu.pipeline_mode<synchronous>, transform_indices = @transform_2, window_bounds = array<i64: 1, 96>}, {pipeline_mode = #tpu.pipeline_mode<synchronous>, transform_indices = @transform_3, window_bounds = array<i64: 1, 96>}, {transform_indices = @transform_4, window_bounds = array<i64: 1, 64, 96>}]} {
    %c0 = arith.constant 0 : index
    %c0_0 = arith.constant 0 : index
    %c0_1 = arith.constant 0 : index
    %0 = vector.load %arg2[%c0, %c0_0, %c0_1] : memref<1x64x16xf32, #tpu.memory_space<vmem>>, vector<1x64x16xf32>
    %1 = vector.shape_cast %0 : vector<1x64x16xf32> to vector<64x16xf32>
    %2 = arith.truncf %1 : vector<64x16xf32> to vector<64x16xbf16>
    %c0_2 = arith.constant 0 : index
    %c0_3 = arith.constant 0 : index
    %3 = vector.load %arg3[%c0_2, %c0_3] : memref<16x96xbf16, #tpu.memory_space<vmem>>, vector<16x96xbf16>
    %cst = arith.constant dense<0.000000e+00> : vector<64x96xf32>
    %4 = tpu.matmul %2, %3, %cst {dimension_numbers = #tpu.dot_dimension_numbers<[1], [0], [0], [1], [0, 0, 1, 1], [], []>} : vector<64x16xbf16>, vector<16x96xbf16>, vector<64x96xf32> -> vector<64x96xf32>
    %c0_4 = arith.constant 0 : index
    %c0_5 = arith.constant 0 : index
    %5 = vector.load %arg4[%c0_4, %c0_5] : memref<1x96xf32, #tpu.memory_space<vmem>>, vector<1x96xf32>
    %6 = vector.broadcast %5 : vector<1x96xf32> to vector<64x96xf32>
    %7 = arith.mulf %4, %6 : vector<64x96xf32>
    %c0_6 = arith.constant 0 : index
    %c0_7 = arith.constant 0 : index
    %8 = vector.load %arg5[%c0_6, %c0_7] : memref<1x96xf32, #tpu.memory_space<vmem>>, vector<1x96xf32>
    %9 = vector.broadcast %8 : vector<1x96xf32> to vector<64x96xf32>
    %10 = arith.addf %7, %9 : vector<64x96xf32>
    %11 = arith.negf %10 : vector<64x96xf32>
    %12 = math.exp %11 : vector<64x96xf32>
    %cst_8 = arith.constant 1.000000e+00 : f32
    %13 = vector.broadcast %cst_8 : f32 to vector<64x96xf32>
    %14 = arith.addf %13, %12 : vector<64x96xf32>
    %15 = arith.divf %13, %14 : vector<64x96xf32>
    %16 = arith.mulf %10, %15 : vector<64x96xf32>
    %c0_9 = arith.constant 0 : index
    %c0_10 = arith.constant 0 : index
    %c0_11 = arith.constant 0 : index
    %17 = vector.load %arg6[%c0_9, %c0_10, %c0_11] : memref<1x64x96xf32, #tpu.memory_space<vmem>>, vector<1x64x96xf32>
    %18 = vector.shape_cast %17 : vector<1x64x96xf32> to vector<64x96xf32>
    %19 = vector.shape_cast %16 : vector<64x96xf32> to vector<1x64x96xf32>
    tpu.vector_store %arg6[%c0_9, %c0_10, %c0_11], %19 {strides = array<i32>} : memref<1x64x96xf32, #tpu.memory_space<vmem>>, vector<1x64x96xf32>,
    return
  }
  func.func @transform_0(%arg0: i32, %arg1: i32) -> (i32, i32, i32) {
    %c0_i32 = arith.constant 0 : i32
    %c0_i32_0 = arith.constant 0 : i32
    return %arg0, %arg1, %c0_i32 : i32, i32, i32
  }
  func.func @transform_1(%arg0: i32, %arg1: i32) -> (i32, i32) {
    %c0_i32 = arith.constant 0 : i32
    %c0_i32_0 = arith.constant 0 : i32
    %c0_i32_1 = arith.constant 0 : i32
    return %c0_i32, %c0_i32_0 : i32, i32
  }
  func.func @transform_2(%arg0: i32, %arg1: i32) -> (i32, i32) {
    %c0_i32 = arith.constant 0 : i32
    %c0_i32_0 = arith.constant 0 : i32
    %c0_i32_1 = arith.constant 0 : i32
    return %c0_i32, %c0_i32_0 : i32, i32
  }
  func.func @transform_3(%arg0: i32, %arg1: i32) -> (i32, i32) {
    %c0_i32 = arith.constant 0 : i32
    %c0_i32_0 = arith.constant 0 : i32
    %c0_i32_1 = arith.constant 0 : i32
    return %c0_i32, %c0_i32_0 : i32, i32
  }
  func.func @transform_4(%arg0: i32, %arg1: i32) -> (i32, i32, i32) {
    %c0_i32 = arith.constant 0 : i32
    %c0_i32_0 = arith.constant 0 : i32
    return %arg0, %arg1, %c0_i32 : i32, i32, i32
  }
}

module attributes {stable_mosaic.version = 11 : i64} {
  func.func @_se_gate_kernel(%arg0: i32, %arg1: memref<2x96xf32, #tpu.memory_space<vmem>>, %arg2: memref<96x8xf32, #tpu.memory_space<vmem>>, %arg3: memref<1x8xf32, #tpu.memory_space<vmem>>, %arg4: memref<8x96xf32, #tpu.memory_space<vmem>>, %arg5: memref<1x96xf32, #tpu.memory_space<vmem>>, %arg6: memref<2x96xf32, #tpu.memory_space<vmem>>) attributes {dimension_semantics = [#tpu.dimension_semantics<arbitrary>], iteration_bounds = array<i64: 1>, scalar_prefetch = 0 : i64, scratch_operands = 0 : i64, tpu.core_type = #tpu.core_type<tc>, window_params = [{pipeline_mode = #tpu.pipeline_mode<synchronous>, transform_indices = @transform_0, window_bounds = array<i64: 2, 96>}, {pipeline_mode = #tpu.pipeline_mode<synchronous>, transform_indices = @transform_1, window_bounds = array<i64: 96, 8>}, {pipeline_mode = #tpu.pipeline_mode<synchronous>, transform_indices = @transform_2, window_bounds = array<i64: 1, 8>}, {pipeline_mode = #tpu.pipeline_mode<synchronous>, transform_indices = @transform_3, window_bounds = array<i64: 8, 96>}, {pipeline_mode = #tpu.pipeline_mode<synchronous>, transform_indices = @transform_4, window_bounds = array<i64: 1, 96>}, {pipeline_mode = #tpu.pipeline_mode<synchronous>, transform_indices = @transform_5, window_bounds = array<i64: 2, 96>}]} {
    %c0 = arith.constant 0 : index
    %c0_0 = arith.constant 0 : index
    %0 = vector.load %arg1[%c0, %c0_0] : memref<2x96xf32, #tpu.memory_space<vmem>>, vector<2x96xf32>
    %c0_1 = arith.constant 0 : index
    %c0_2 = arith.constant 0 : index
    %1 = vector.load %arg2[%c0_1, %c0_2] : memref<96x8xf32, #tpu.memory_space<vmem>>, vector<96x8xf32>
    %cst = arith.constant dense<0.000000e+00> : vector<2x8xf32>
    %2 = tpu.matmul %0, %1, %cst {dimension_numbers = #tpu.dot_dimension_numbers<[1], [0], [0], [1], [0, 0, 1, 1], [], []>} : vector<2x96xf32>, vector<96x8xf32>, vector<2x8xf32> -> vector<2x8xf32>
    %c0_3 = arith.constant 0 : index
    %c0_4 = arith.constant 0 : index
    %3 = vector.load %arg3[%c0_3, %c0_4] : memref<1x8xf32, #tpu.memory_space<vmem>>, vector<1x8xf32>
    %4 = vector.broadcast %3 : vector<1x8xf32> to vector<2x8xf32>
    %5 = arith.addf %2, %4 : vector<2x8xf32>
    %6 = arith.negf %5 : vector<2x8xf32>
    %7 = math.exp %6 : vector<2x8xf32>
    %cst_5 = arith.constant 1.000000e+00 : f32
    %8 = vector.broadcast %cst_5 : f32 to vector<2x8xf32>
    %9 = arith.addf %8, %7 : vector<2x8xf32>
    %10 = arith.divf %8, %9 : vector<2x8xf32>
    %11 = arith.mulf %5, %10 : vector<2x8xf32>
    %c0_6 = arith.constant 0 : index
    %c0_7 = arith.constant 0 : index
    %12 = vector.load %arg4[%c0_6, %c0_7] : memref<8x96xf32, #tpu.memory_space<vmem>>, vector<8x96xf32>
    %cst_8 = arith.constant dense<0.000000e+00> : vector<2x96xf32>
    %13 = tpu.matmul %11, %12, %cst_8 {dimension_numbers = #tpu.dot_dimension_numbers<[1], [0], [0], [1], [0, 0, 1, 1], [], []>} : vector<2x8xf32>, vector<8x96xf32>, vector<2x96xf32> -> vector<2x96xf32>
    %c0_9 = arith.constant 0 : index
    %c0_10 = arith.constant 0 : index
    %14 = vector.load %arg5[%c0_9, %c0_10] : memref<1x96xf32, #tpu.memory_space<vmem>>, vector<1x96xf32>
    %15 = vector.broadcast %14 : vector<1x96xf32> to vector<2x96xf32>
    %16 = arith.addf %13, %15 : vector<2x96xf32>
    %17 = arith.negf %16 : vector<2x96xf32>
    %18 = math.exp %17 : vector<2x96xf32>
    %cst_11 = arith.constant 1.000000e+00 : f32
    %19 = vector.broadcast %cst_11 : f32 to vector<2x96xf32>
    %20 = arith.addf %19, %18 : vector<2x96xf32>
    %21 = arith.divf %19, %20 : vector<2x96xf32>
    %c0_12 = arith.constant 0 : index
    %c0_13 = arith.constant 0 : index
    %22 = vector.load %arg6[%c0_12, %c0_13] : memref<2x96xf32, #tpu.memory_space<vmem>>, vector<2x96xf32>
    tpu.vector_store %arg6[%c0_12, %c0_13], %21 {strides = array<i32>} : memref<2x96xf32, #tpu.memory_space<vmem>>, vector<2x96xf32>,
    return
  }
  func.func @transform_0(%arg0: i32) -> (i32, i32) {
    %c0_i32 = arith.constant 0 : i32
    %c0_i32_0 = arith.constant 0 : i32
    %c0_i32_1 = arith.constant 0 : i32
    return %c0_i32, %c0_i32_0 : i32, i32
  }
  func.func @transform_1(%arg0: i32) -> (i32, i32) {
    %c0_i32 = arith.constant 0 : i32
    %c0_i32_0 = arith.constant 0 : i32
    %c0_i32_1 = arith.constant 0 : i32
    return %c0_i32, %c0_i32_0 : i32, i32
  }
  func.func @transform_2(%arg0: i32) -> (i32, i32) {
    %c0_i32 = arith.constant 0 : i32
    %c0_i32_0 = arith.constant 0 : i32
    %c0_i32_1 = arith.constant 0 : i32
    return %c0_i32, %c0_i32_0 : i32, i32
  }
  func.func @transform_3(%arg0: i32) -> (i32, i32) {
    %c0_i32 = arith.constant 0 : i32
    %c0_i32_0 = arith.constant 0 : i32
    %c0_i32_1 = arith.constant 0 : i32
    return %c0_i32, %c0_i32_0 : i32, i32
  }
  func.func @transform_4(%arg0: i32) -> (i32, i32) {
    %c0_i32 = arith.constant 0 : i32
    %c0_i32_0 = arith.constant 0 : i32
    %c0_i32_1 = arith.constant 0 : i32
    return %c0_i32, %c0_i32_0 : i32, i32
  }
  func.func @transform_5(%arg0: i32) -> (i32, i32) {
    %c0_i32 = arith.constant 0 : i32
    %c0_i32_0 = arith.constant 0 : i32
    %c0_i32_1 = arith.constant 0 : i32
    return %c0_i32, %c0_i32_0 : i32, i32
  }
}

module attributes {stable_mosaic.version = 11 : i64} {
  func.func @_dw_kernel(%arg0: i32, %arg1: memref<1x4x5x5x96xf32, #tpu.memory_space<vmem>>, %arg2: memref<9x1x96xf32, #tpu.memory_space<vmem>>, %arg3: memref<1x96xf32, #tpu.memory_space<vmem>>, %arg4: memref<1x4x4x96xf32, #tpu.memory_space<vmem>>, %arg5: memref<1x1x96xf32, #tpu.memory_space<vmem>>) attributes {dimension_semantics = [#tpu.dimension_semantics<parallel>], iteration_bounds = array<i64: 2>, scalar_prefetch = 0 : i64, scratch_operands = 0 : i64, tpu.core_type = #tpu.core_type<tc>, window_params = [{transform_indices = @transform_0, window_bounds = array<i64: 1, 4, 5, 5, 96>}, {pipeline_mode = #tpu.pipeline_mode<synchronous>, transform_indices = @transform_1, window_bounds = array<i64: 9, 1, 96>}, {pipeline_mode = #tpu.pipeline_mode<synchronous>, transform_indices = @transform_2, window_bounds = array<i64: 1, 96>}, {transform_indices = @transform_3, window_bounds = array<i64: 1, 4, 4, 96>}, {transform_indices = @transform_4, window_bounds = array<i64: 1, 1, 96>}]} {
    %cst = arith.constant 0.000000e+00 : f32
    %0 = vector.broadcast %cst : f32 to vector<4x4x96xf32>
    %c0 = arith.constant 0 : index
    %c0_0 = arith.constant 0 : index
    %c0_1 = arith.constant 0 : index
    %c0_2 = arith.constant 0 : index
    %c0_3 = arith.constant 0 : index
    %1 = vector.load %arg1[%c0, %c0_0, %c0_1, %c0_2, %c0_3] : memref<1x4x5x5x96xf32, #tpu.memory_space<vmem>>, vector<1x1x4x4x96xf32>
    %2 = vector.shape_cast %1 : vector<1x1x4x4x96xf32> to vector<4x4x96xf32>
    %c0_4 = arith.constant 0 : index
    %c0_5 = arith.constant 0 : index
    %c0_6 = arith.constant 0 : index
    %3 = vector.load %arg2[%c0_4, %c0_5, %c0_6] : memref<9x1x96xf32, #tpu.memory_space<vmem>>, vector<1x1x96xf32>
    %4 = vector.shape_cast %3 : vector<1x1x96xf32> to vector<1x96xf32>
    %5 = vector.shape_cast %4 : vector<1x96xf32> to vector<1x1x96xf32>
    %6 = vector.broadcast %5 : vector<1x1x96xf32> to vector<4x4x96xf32>
    %7 = arith.mulf %2, %6 : vector<4x4x96xf32>
    %8 = arith.addf %0, %7 : vector<4x4x96xf32>
    %c0_7 = arith.constant 0 : index
    %c1 = arith.constant 1 : index
    %c0_8 = arith.constant 0 : index
    %c0_9 = arith.constant 0 : index
    %c0_10 = arith.constant 0 : index
    %9 = vector.load %arg1[%c0_7, %c1, %c0_8, %c0_9, %c0_10] : memref<1x4x5x5x96xf32, #tpu.memory_space<vmem>>, vector<1x1x4x4x96xf32>
    %10 = vector.shape_cast %9 : vector<1x1x4x4x96xf32> to vector<4x4x96xf32>
    %c1_11 = arith.constant 1 : index
    %c0_12 = arith.constant 0 : index
    %c0_13 = arith.constant 0 : index
    %11 = vector.load %arg2[%c1_11, %c0_12, %c0_13] : memref<9x1x96xf32, #tpu.memory_space<vmem>>, vector<1x1x96xf32>
    %12 = vector.shape_cast %11 : vector<1x1x96xf32> to vector<1x96xf32>
    %13 = vector.shape_cast %12 : vector<1x96xf32> to vector<1x1x96xf32>
    %14 = vector.broadcast %13 : vector<1x1x96xf32> to vector<4x4x96xf32>
    %15 = arith.mulf %10, %14 : vector<4x4x96xf32>
    %16 = arith.addf %8, %15 : vector<4x4x96xf32>
    %c0_14 = arith.constant 0 : index
    %c0_15 = arith.constant 0 : index
    %c0_16 = arith.constant 0 : index
    %c1_17 = arith.constant 1 : index
    %c0_18 = arith.constant 0 : index
    %17 = vector.load %arg1[%c0_14, %c0_15, %c0_16, %c1_17, %c0_18] : memref<1x4x5x5x96xf32, #tpu.memory_space<vmem>>, vector<1x1x4x4x96xf32>
    %18 = vector.shape_cast %17 : vector<1x1x4x4x96xf32> to vector<4x4x96xf32>
    %c2 = arith.constant 2 : index
    %c0_19 = arith.constant 0 : index
    %c0_20 = arith.constant 0 : index
    %19 = vector.load %arg2[%c2, %c0_19, %c0_20] : memref<9x1x96xf32, #tpu.memory_space<vmem>>, vector<1x1x96xf32>
    %20 = vector.shape_cast %19 : vector<1x1x96xf32> to vector<1x96xf32>
    %21 = vector.shape_cast %20 : vector<1x96xf32> to vector<1x1x96xf32>
    %22 = vector.broadcast %21 : vector<1x1x96xf32> to vector<4x4x96xf32>
    %23 = arith.mulf %18, %22 : vector<4x4x96xf32>
    %24 = arith.addf %16, %23 : vector<4x4x96xf32>
    %c0_21 = arith.constant 0 : index
    %c2_22 = arith.constant 2 : index
    %c0_23 = arith.constant 0 : index
    %c0_24 = arith.constant 0 : index
    %c0_25 = arith.constant 0 : index
    %25 = vector.load %arg1[%c0_21, %c2_22, %c0_23, %c0_24, %c0_25] : memref<1x4x5x5x96xf32, #tpu.memory_space<vmem>>, vector<1x1x4x4x96xf32>
    %26 = vector.shape_cast %25 : vector<1x1x4x4x96xf32> to vector<4x4x96xf32>
    %c3 = arith.constant 3 : index
    %c0_26 = arith.constant 0 : index
    %c0_27 = arith.constant 0 : index
    %27 = vector.load %arg2[%c3, %c0_26, %c0_27] : memref<9x1x96xf32, #tpu.memory_space<vmem>>, vector<1x1x96xf32>
    %28 = vector.shape_cast %27 : vector<1x1x96xf32> to vector<1x96xf32>
    %29 = vector.shape_cast %28 : vector<1x96xf32> to vector<1x1x96xf32>
    %30 = vector.broadcast %29 : vector<1x1x96xf32> to vector<4x4x96xf32>
    %31 = arith.mulf %26, %30 : vector<4x4x96xf32>
    %32 = arith.addf %24, %31 : vector<4x4x96xf32>
    %c0_28 = arith.constant 0 : index
    %c3_29 = arith.constant 3 : index
    %c0_30 = arith.constant 0 : index
    %c0_31 = arith.constant 0 : index
    %c0_32 = arith.constant 0 : index
    %33 = vector.load %arg1[%c0_28, %c3_29, %c0_30, %c0_31, %c0_32] : memref<1x4x5x5x96xf32, #tpu.memory_space<vmem>>, vector<1x1x4x4x96xf32>
    %34 = vector.shape_cast %33 : vector<1x1x4x4x96xf32> to vector<4x4x96xf32>
    %c4 = arith.constant 4 : index
    %c0_33 = arith.constant 0 : index
    %c0_34 = arith.constant 0 : index
    %35 = vector.load %arg2[%c4, %c0_33, %c0_34] : memref<9x1x96xf32, #tpu.memory_space<vmem>>, vector<1x1x96xf32>
    %36 = vector.shape_cast %35 : vector<1x1x96xf32> to vector<1x96xf32>
    %37 = vector.shape_cast %36 : vector<1x96xf32> to vector<1x1x96xf32>
    %38 = vector.broadcast %37 : vector<1x1x96xf32> to vector<4x4x96xf32>
    %39 = arith.mulf %34, %38 : vector<4x4x96xf32>
    %40 = arith.addf %32, %39 : vector<4x4x96xf32>
    %c0_35 = arith.constant 0 : index
    %c2_36 = arith.constant 2 : index
    %c0_37 = arith.constant 0 : index
    %c1_38 = arith.constant 1 : index
    %c0_39 = arith.constant 0 : index
    %41 = vector.load %arg1[%c0_35, %c2_36, %c0_37, %c1_38, %c0_39] : memref<1x4x5x5x96xf32, #tpu.memory_space<vmem>>, vector<1x1x4x4x96xf32>
    %42 = vector.shape_cast %41 : vector<1x1x4x4x96xf32> to vector<4x4x96xf32>
    %c5 = arith.constant 5 : index
    %c0_40 = arith.constant 0 : index
    %c0_41 = arith.constant 0 : index
    %43 = vector.load %arg2[%c5, %c0_40, %c0_41] : memref<9x1x96xf32, #tpu.memory_space<vmem>>, vector<1x1x96xf32>
    %44 = vector.shape_cast %43 : vector<1x1x96xf32> to vector<1x96xf32>
    %45 = vector.shape_cast %44 : vector<1x96xf32> to vector<1x1x96xf32>
    %46 = vector.broadcast %45 : vector<1x1x96xf32> to vector<4x4x96xf32>
    %47 = arith.mulf %42, %46 : vector<4x4x96xf32>
    %48 = arith.addf %40, %47 : vector<4x4x96xf32>
    %c0_42 = arith.constant 0 : index
    %c0_43 = arith.constant 0 : index
    %c1_44 = arith.constant 1 : index
    %c0_45 = arith.constant 0 : index
    %c0_46 = arith.constant 0 : index
    %49 = vector.load %arg1[%c0_42, %c0_43, %c1_44, %c0_45, %c0_46] : memref<1x4x5x5x96xf32, #tpu.memory_space<vmem>>, vector<1x1x4x4x96xf32>
    %50 = vector.shape_cast %49 : vector<1x1x4x4x96xf32> to vector<4x4x96xf32>
    %c6 = arith.constant 6 : index
    %c0_47 = arith.constant 0 : index
    %c0_48 = arith.constant 0 : index
    %51 = vector.load %arg2[%c6, %c0_47, %c0_48] : memref<9x1x96xf32, #tpu.memory_space<vmem>>, vector<1x1x96xf32>
    %52 = vector.shape_cast %51 : vector<1x1x96xf32> to vector<1x96xf32>
    %53 = vector.shape_cast %52 : vector<1x96xf32> to vector<1x1x96xf32>
    %54 = vector.broadcast %53 : vector<1x1x96xf32> to vector<4x4x96xf32>
    %55 = arith.mulf %50, %54 : vector<4x4x96xf32>
    %56 = arith.addf %48, %55 : vector<4x4x96xf32>
    %c0_49 = arith.constant 0 : index
    %c1_50 = arith.constant 1 : index
    %c1_51 = arith.constant 1 : index
    %c0_52 = arith.constant 0 : index
    %c0_53 = arith.constant 0 : index
    %57 = vector.load %arg1[%c0_49, %c1_50, %c1_51, %c0_52, %c0_53] : memref<1x4x5x5x96xf32, #tpu.memory_space<vmem>>, vector<1x1x4x4x96xf32>
    %58 = vector.shape_cast %57 : vector<1x1x4x4x96xf32> to vector<4x4x96xf32>
    %c7 = arith.constant 7 : index
    %c0_54 = arith.constant 0 : index
    %c0_55 = arith.constant 0 : index
    %59 = vector.load %arg2[%c7, %c0_54, %c0_55] : memref<9x1x96xf32, #tpu.memory_space<vmem>>, vector<1x1x96xf32>
    %60 = vector.shape_cast %59 : vector<1x1x96xf32> to vector<1x96xf32>
    %61 = vector.shape_cast %60 : vector<1x96xf32> to vector<1x1x96xf32>
    %62 = vector.broadcast %61 : vector<1x1x96xf32> to vector<4x4x96xf32>
    %63 = arith.mulf %58, %62 : vector<4x4x96xf32>
    %64 = arith.addf %56, %63 : vector<4x4x96xf32>
    %c0_56 = arith.constant 0 : index
    %c0_57 = arith.constant 0 : index
    %c1_58 = arith.constant 1 : index
    %c1_59 = arith.constant 1 : index
    %c0_60 = arith.constant 0 : index
    %65 = vector.load %arg1[%c0_56, %c0_57, %c1_58, %c1_59, %c0_60] : memref<1x4x5x5x96xf32, #tpu.memory_space<vmem>>, vector<1x1x4x4x96xf32>
    %66 = vector.shape_cast %65 : vector<1x1x4x4x96xf32> to vector<4x4x96xf32>
    %c8 = arith.constant 8 : index
    %c0_61 = arith.constant 0 : index
    %c0_62 = arith.constant 0 : index
    %67 = vector.load %arg2[%c8, %c0_61, %c0_62] : memref<9x1x96xf32, #tpu.memory_space<vmem>>, vector<1x1x96xf32>
    %68 = vector.shape_cast %67 : vector<1x1x96xf32> to vector<1x96xf32>
    %69 = vector.shape_cast %68 : vector<1x96xf32> to vector<1x1x96xf32>
    %70 = vector.broadcast %69 : vector<1x1x96xf32> to vector<4x4x96xf32>
    %71 = arith.mulf %66, %70 : vector<4x4x96xf32>
    %72 = arith.addf %64, %71 : vector<4x4x96xf32>
    %c0_63 = arith.constant 0 : index
    %c0_64 = arith.constant 0 : index
    %73 = vector.load %arg3[%c0_63, %c0_64] : memref<1x96xf32, #tpu.memory_space<vmem>>, vector<1x96xf32>
    %74 = vector.shape_cast %73 : vector<1x96xf32> to vector<1x1x96xf32>
    %75 = vector.broadcast %74 : vector<1x1x96xf32> to vector<4x4x96xf32>
    %76 = arith.addf %72, %75 : vector<4x4x96xf32>
    %77 = arith.negf %76 : vector<4x4x96xf32>
    %78 = math.exp %77 : vector<4x4x96xf32>
    %cst_65 = arith.constant 1.000000e+00 : f32
    %79 = vector.broadcast %cst_65 : f32 to vector<4x4x96xf32>
    %80 = arith.addf %79, %78 : vector<4x4x96xf32>
    %81 = arith.divf %79, %80 : vector<4x4x96xf32>
    %82 = arith.mulf %76, %81 : vector<4x4x96xf32>
    %c0_66 = arith.constant 0 : index
    %c0_67 = arith.constant 0 : index
    %c0_68 = arith.constant 0 : index
    %c0_69 = arith.constant 0 : index
    %83 = vector.load %arg4[%c0_66, %c0_67, %c0_68, %c0_69] : memref<1x4x4x96xf32, #tpu.memory_space<vmem>>, vector<1x4x4x96xf32>
    %84 = vector.shape_cast %83 : vector<1x4x4x96xf32> to vector<4x4x96xf32>
    %85 = vector.shape_cast %82 : vector<4x4x96xf32> to vector<1x4x4x96xf32>
    tpu.vector_store %arg4[%c0_66, %c0_67, %c0_68, %c0_69], %85 {strides = array<i32>} : memref<1x4x4x96xf32, #tpu.memory_space<vmem>>, vector<1x4x4x96xf32>,
    %cst_70 = arith.constant dense<0.000000e+00> : vector<96xf32>
    %86 = vector.multi_reduction <add>, %82, %cst_70 [0, 1] : vector<4x4x96xf32> to vector<96xf32>
    %87 = vector.shape_cast %86 : vector<96xf32> to vector<1x1x96xf32>
    %cst_71 = arith.constant 1.600000e+01 : f32
    %88 = vector.broadcast %cst_71 : f32 to vector<1x1x96xf32>
    %89 = arith.divf %87, %88 : vector<1x1x96xf32>
    %c0_72 = arith.constant 0 : index
    %c0_73 = arith.constant 0 : index
    %c0_74 = arith.constant 0 : index
    %90 = vector.load %arg5[%c0_72, %c0_73, %c0_74] : memref<1x1x96xf32, #tpu.memory_space<vmem>>, vector<1x1x96xf32>
    tpu.vector_store %arg5[%c0_72, %c0_73, %c0_74], %89 {strides = array<i32>} : memref<1x1x96xf32, #tpu.memory_space<vmem>>, vector<1x1x96xf32>,
    return
  }
  func.func @transform_0(%arg0: i32) -> (i32, i32, i32, i32, i32) {
    %c0_i32 = arith.constant 0 : i32
    %c0_i32_0 = arith.constant 0 : i32
    %c0_i32_1 = arith.constant 0 : i32
    %c0_i32_2 = arith.constant 0 : i32
    %c0_i32_3 = arith.constant 0 : i32
    return %arg0, %c0_i32, %c0_i32_0, %c0_i32_1, %c0_i32_2 : i32, i32, i32, i32, i32
  }
  func.func @transform_1(%arg0: i32) -> (i32, i32, i32) {
    %c0_i32 = arith.constant 0 : i32
    %c0_i32_0 = arith.constant 0 : i32
    %c0_i32_1 = arith.constant 0 : i32
    %c0_i32_2 = arith.constant 0 : i32
    return %c0_i32, %c0_i32_0, %c0_i32_1 : i32, i32, i32
  }
  func.func @transform_2(%arg0: i32) -> (i32, i32) {
    %c0_i32 = arith.constant 0 : i32
    %c0_i32_0 = arith.constant 0 : i32
    %c0_i32_1 = arith.constant 0 : i32
    return %c0_i32, %c0_i32_0 : i32, i32
  }
  func.func @transform_3(%arg0: i32) -> (i32, i32, i32, i32) {
    %c0_i32 = arith.constant 0 : i32
    %c0_i32_0 = arith.constant 0 : i32
    %c0_i32_1 = arith.constant 0 : i32
    %c0_i32_2 = arith.constant 0 : i32
    return %arg0, %c0_i32, %c0_i32_0, %c0_i32_1 : i32, i32, i32, i32
  }
  func.func @transform_4(%arg0: i32) -> (i32, i32, i32) {
    %c0_i32 = arith.constant 0 : i32
    %c0_i32_0 = arith.constant 0 : i32
    %c0_i32_1 = arith.constant 0 : i32
    return %arg0, %c0_i32, %c0_i32_0 : i32, i32, i32
  }
}

module attributes {stable_mosaic.version = 11 : i64} {
  func.func @kernel(%arg0: i32, %arg1: i32, %arg2: memref<1x16x96xf32, #tpu.memory_space<vmem>>, %arg3: memref<1x1x96xf32, #tpu.memory_space<vmem>>, %arg4: memref<96x24xbf16, #tpu.memory_space<vmem>>, %arg5: memref<1x24xf32, #tpu.memory_space<vmem>>, %arg6: memref<1x24xf32, #tpu.memory_space<vmem>>, %arg7: memref<1x16x24xf32, #tpu.memory_space<vmem>>) attributes {dimension_semantics = [#tpu.dimension_semantics<parallel>, #tpu.dimension_semantics<parallel>], iteration_bounds = array<i64: 2, 1>, scalar_prefetch = 0 : i64, scratch_operands = 0 : i64, tpu.core_type = #tpu.core_type<tc>, window_params = [{transform_indices = @transform_0, window_bounds = array<i64: 1, 16, 96>}, {transform_indices = @transform_1, window_bounds = array<i64: 1, 1, 96>}, {pipeline_mode = #tpu.pipeline_mode<synchronous>, transform_indices = @transform_2, window_bounds = array<i64: 96, 24>}, {pipeline_mode = #tpu.pipeline_mode<synchronous>, transform_indices = @transform_3, window_bounds = array<i64: 1, 24>}, {pipeline_mode = #tpu.pipeline_mode<synchronous>, transform_indices = @transform_4, window_bounds = array<i64: 1, 24>}, {transform_indices = @transform_5, window_bounds = array<i64: 1, 16, 24>}]} {
    %c0 = arith.constant 0 : index
    %c0_0 = arith.constant 0 : index
    %c0_1 = arith.constant 0 : index
    %0 = vector.load %arg2[%c0, %c0_0, %c0_1] : memref<1x16x96xf32, #tpu.memory_space<vmem>>, vector<1x16x96xf32>
    %1 = vector.shape_cast %0 : vector<1x16x96xf32> to vector<16x96xf32>
    %c0_2 = arith.constant 0 : index
    %c0_3 = arith.constant 0 : index
    %c0_4 = arith.constant 0 : index
    %2 = vector.load %arg3[%c0_2, %c0_3, %c0_4] : memref<1x1x96xf32, #tpu.memory_space<vmem>>, vector<1x1x96xf32>
    %3 = vector.shape_cast %2 : vector<1x1x96xf32> to vector<1x96xf32>
    %4 = vector.broadcast %3 : vector<1x96xf32> to vector<16x96xf32>
    %5 = arith.mulf %1, %4 : vector<16x96xf32>
    %6 = arith.truncf %5 : vector<16x96xf32> to vector<16x96xbf16>
    %c0_5 = arith.constant 0 : index
    %c0_6 = arith.constant 0 : index
    %7 = vector.load %arg4[%c0_5, %c0_6] : memref<96x24xbf16, #tpu.memory_space<vmem>>, vector<96x24xbf16>
    %cst = arith.constant dense<0.000000e+00> : vector<16x24xf32>
    %8 = tpu.matmul %6, %7, %cst {dimension_numbers = #tpu.dot_dimension_numbers<[1], [0], [0], [1], [0, 0, 1, 1], [], []>} : vector<16x96xbf16>, vector<96x24xbf16>, vector<16x24xf32> -> vector<16x24xf32>
    %c0_7 = arith.constant 0 : index
    %c0_8 = arith.constant 0 : index
    %9 = vector.load %arg5[%c0_7, %c0_8] : memref<1x24xf32, #tpu.memory_space<vmem>>, vector<1x24xf32>
    %10 = vector.broadcast %9 : vector<1x24xf32> to vector<16x24xf32>
    %11 = arith.mulf %8, %10 : vector<16x24xf32>
    %c0_9 = arith.constant 0 : index
    %c0_10 = arith.constant 0 : index
    %12 = vector.load %arg6[%c0_9, %c0_10] : memref<1x24xf32, #tpu.memory_space<vmem>>, vector<1x24xf32>
    %13 = vector.broadcast %12 : vector<1x24xf32> to vector<16x24xf32>
    %14 = arith.addf %11, %13 : vector<16x24xf32>
    %c0_11 = arith.constant 0 : index
    %c0_12 = arith.constant 0 : index
    %c0_13 = arith.constant 0 : index
    %15 = vector.load %arg7[%c0_11, %c0_12, %c0_13] : memref<1x16x24xf32, #tpu.memory_space<vmem>>, vector<1x16x24xf32>
    %16 = vector.shape_cast %15 : vector<1x16x24xf32> to vector<16x24xf32>
    %17 = vector.shape_cast %14 : vector<16x24xf32> to vector<1x16x24xf32>
    tpu.vector_store %arg7[%c0_11, %c0_12, %c0_13], %17 {strides = array<i32>} : memref<1x16x24xf32, #tpu.memory_space<vmem>>, vector<1x16x24xf32>,
    return
  }
  func.func @transform_0(%arg0: i32, %arg1: i32) -> (i32, i32, i32) {
    %c0_i32 = arith.constant 0 : i32
    %c0_i32_0 = arith.constant 0 : i32
    return %arg0, %arg1, %c0_i32 : i32, i32, i32
  }
  func.func @transform_1(%arg0: i32, %arg1: i32) -> (i32, i32, i32) {
    %c0_i32 = arith.constant 0 : i32
    %c0_i32_0 = arith.constant 0 : i32
    %c0_i32_1 = arith.constant 0 : i32
    return %arg0, %c0_i32, %c0_i32_0 : i32, i32, i32
  }
  func.func @transform_2(%arg0: i32, %arg1: i32) -> (i32, i32) {
    %c0_i32 = arith.constant 0 : i32
    %c0_i32_0 = arith.constant 0 : i32
    %c0_i32_1 = arith.constant 0 : i32
    return %c0_i32, %c0_i32_0 : i32, i32
  }
  func.func @transform_3(%arg0: i32, %arg1: i32) -> (i32, i32) {
    %c0_i32 = arith.constant 0 : i32
    %c0_i32_0 = arith.constant 0 : i32
    %c0_i32_1 = arith.constant 0 : i32
    return %c0_i32, %c0_i32_0 : i32, i32
  }
  func.func @transform_4(%arg0: i32, %arg1: i32) -> (i32, i32) {
    %c0_i32 = arith.constant 0 : i32
    %c0_i32_0 = arith.constant 0 : i32
    %c0_i32_1 = arith.constant 0 : i32
    return %c0_i32, %c0_i32_0 : i32, i32
  }
  func.func @transform_5(%arg0: i32, %arg1: i32) -> (i32, i32, i32) {
    %c0_i32 = arith.constant 0 : i32
    %c0_i32_0 = arith.constant 0 : i32
    return %arg0, %arg1, %c0_i32 : i32, i32, i32
  }
}

module attributes {stable_mosaic.version = 11 : i64} {
  func.func @kernel(%arg0: i32, %arg1: i32, %arg2: memref<1x16x24xf32, #tpu.memory_space<vmem>>, %arg3: memref<24x144xbf16, #tpu.memory_space<vmem>>, %arg4: memref<1x144xf32, #tpu.memory_space<vmem>>, %arg5: memref<1x144xf32, #tpu.memory_space<vmem>>, %arg6: memref<1x16x144xf32, #tpu.memory_space<vmem>>) attributes {dimension_semantics = [#tpu.dimension_semantics<parallel>, #tpu.dimension_semantics<parallel>], iteration_bounds = array<i64: 2, 1>, scalar_prefetch = 0 : i64, scratch_operands = 0 : i64, tpu.core_type = #tpu.core_type<tc>, window_params = [{transform_indices = @transform_0, window_bounds = array<i64: 1, 16, 24>}, {pipeline_mode = #tpu.pipeline_mode<synchronous>, transform_indices = @transform_1, window_bounds = array<i64: 24, 144>}, {pipeline_mode = #tpu.pipeline_mode<synchronous>, transform_indices = @transform_2, window_bounds = array<i64: 1, 144>}, {pipeline_mode = #tpu.pipeline_mode<synchronous>, transform_indices = @transform_3, window_bounds = array<i64: 1, 144>}, {transform_indices = @transform_4, window_bounds = array<i64: 1, 16, 144>}]} {
    %c0 = arith.constant 0 : index
    %c0_0 = arith.constant 0 : index
    %c0_1 = arith.constant 0 : index
    %0 = vector.load %arg2[%c0, %c0_0, %c0_1] : memref<1x16x24xf32, #tpu.memory_space<vmem>>, vector<1x16x24xf32>
    %1 = vector.shape_cast %0 : vector<1x16x24xf32> to vector<16x24xf32>
    %2 = arith.truncf %1 : vector<16x24xf32> to vector<16x24xbf16>
    %c0_2 = arith.constant 0 : index
    %c0_3 = arith.constant 0 : index
    %3 = vector.load %arg3[%c0_2, %c0_3] : memref<24x144xbf16, #tpu.memory_space<vmem>>, vector<24x144xbf16>
    %cst = arith.constant dense<0.000000e+00> : vector<16x144xf32>
    %4 = tpu.matmul %2, %3, %cst {dimension_numbers = #tpu.dot_dimension_numbers<[1], [0], [0], [1], [0, 0, 1, 1], [], []>} : vector<16x24xbf16>, vector<24x144xbf16>, vector<16x144xf32> -> vector<16x144xf32>
    %c0_4 = arith.constant 0 : index
    %c0_5 = arith.constant 0 : index
    %5 = vector.load %arg4[%c0_4, %c0_5] : memref<1x144xf32, #tpu.memory_space<vmem>>, vector<1x144xf32>
    %6 = vector.broadcast %5 : vector<1x144xf32> to vector<16x144xf32>
    %7 = arith.mulf %4, %6 : vector<16x144xf32>
    %c0_6 = arith.constant 0 : index
    %c0_7 = arith.constant 0 : index
    %8 = vector.load %arg5[%c0_6, %c0_7] : memref<1x144xf32, #tpu.memory_space<vmem>>, vector<1x144xf32>
    %9 = vector.broadcast %8 : vector<1x144xf32> to vector<16x144xf32>
    %10 = arith.addf %7, %9 : vector<16x144xf32>
    %11 = arith.negf %10 : vector<16x144xf32>
    %12 = math.exp %11 : vector<16x144xf32>
    %cst_8 = arith.constant 1.000000e+00 : f32
    %13 = vector.broadcast %cst_8 : f32 to vector<16x144xf32>
    %14 = arith.addf %13, %12 : vector<16x144xf32>
    %15 = arith.divf %13, %14 : vector<16x144xf32>
    %16 = arith.mulf %10, %15 : vector<16x144xf32>
    %c0_9 = arith.constant 0 : index
    %c0_10 = arith.constant 0 : index
    %c0_11 = arith.constant 0 : index
    %17 = vector.load %arg6[%c0_9, %c0_10, %c0_11] : memref<1x16x144xf32, #tpu.memory_space<vmem>>, vector<1x16x144xf32>
    %18 = vector.shape_cast %17 : vector<1x16x144xf32> to vector<16x144xf32>
    %19 = vector.shape_cast %16 : vector<16x144xf32> to vector<1x16x144xf32>
    tpu.vector_store %arg6[%c0_9, %c0_10, %c0_11], %19 {strides = array<i32>} : memref<1x16x144xf32, #tpu.memory_space<vmem>>, vector<1x16x144xf32>,
    return
  }
  func.func @transform_0(%arg0: i32, %arg1: i32) -> (i32, i32, i32) {
    %c0_i32 = arith.constant 0 : i32
    %c0_i32_0 = arith.constant 0 : i32
    return %arg0, %arg1, %c0_i32 : i32, i32, i32
  }
  func.func @transform_1(%arg0: i32, %arg1: i32) -> (i32, i32) {
    %c0_i32 = arith.constant 0 : i32
    %c0_i32_0 = arith.constant 0 : i32
    %c0_i32_1 = arith.constant 0 : i32
    return %c0_i32, %c0_i32_0 : i32, i32
  }
  func.func @transform_2(%arg0: i32, %arg1: i32) -> (i32, i32) {
    %c0_i32 = arith.constant 0 : i32
    %c0_i32_0 = arith.constant 0 : i32
    %c0_i32_1 = arith.constant 0 : i32
    return %c0_i32, %c0_i32_0 : i32, i32
  }
  func.func @transform_3(%arg0: i32, %arg1: i32) -> (i32, i32) {
    %c0_i32 = arith.constant 0 : i32
    %c0_i32_0 = arith.constant 0 : i32
    %c0_i32_1 = arith.constant 0 : i32
    return %c0_i32, %c0_i32_0 : i32, i32
  }
  func.func @transform_4(%arg0: i32, %arg1: i32) -> (i32, i32, i32) {
    %c0_i32 = arith.constant 0 : i32
    %c0_i32_0 = arith.constant 0 : i32
    return %arg0, %arg1, %c0_i32 : i32, i32, i32
  }
}

module attributes {stable_mosaic.version = 11 : i64} {
  func.func @_se_gate_kernel(%arg0: i32, %arg1: memref<2x144xf32, #tpu.memory_space<vmem>>, %arg2: memref<144x8xf32, #tpu.memory_space<vmem>>, %arg3: memref<1x8xf32, #tpu.memory_space<vmem>>, %arg4: memref<8x144xf32, #tpu.memory_space<vmem>>, %arg5: memref<1x144xf32, #tpu.memory_space<vmem>>, %arg6: memref<2x144xf32, #tpu.memory_space<vmem>>) attributes {dimension_semantics = [#tpu.dimension_semantics<arbitrary>], iteration_bounds = array<i64: 1>, scalar_prefetch = 0 : i64, scratch_operands = 0 : i64, tpu.core_type = #tpu.core_type<tc>, window_params = [{pipeline_mode = #tpu.pipeline_mode<synchronous>, transform_indices = @transform_0, window_bounds = array<i64: 2, 144>}, {pipeline_mode = #tpu.pipeline_mode<synchronous>, transform_indices = @transform_1, window_bounds = array<i64: 144, 8>}, {pipeline_mode = #tpu.pipeline_mode<synchronous>, transform_indices = @transform_2, window_bounds = array<i64: 1, 8>}, {pipeline_mode = #tpu.pipeline_mode<synchronous>, transform_indices = @transform_3, window_bounds = array<i64: 8, 144>}, {pipeline_mode = #tpu.pipeline_mode<synchronous>, transform_indices = @transform_4, window_bounds = array<i64: 1, 144>}, {pipeline_mode = #tpu.pipeline_mode<synchronous>, transform_indices = @transform_5, window_bounds = array<i64: 2, 144>}]} {
    %c0 = arith.constant 0 : index
    %c0_0 = arith.constant 0 : index
    %0 = vector.load %arg1[%c0, %c0_0] : memref<2x144xf32, #tpu.memory_space<vmem>>, vector<2x144xf32>
    %c0_1 = arith.constant 0 : index
    %c0_2 = arith.constant 0 : index
    %1 = vector.load %arg2[%c0_1, %c0_2] : memref<144x8xf32, #tpu.memory_space<vmem>>, vector<144x8xf32>
    %cst = arith.constant dense<0.000000e+00> : vector<2x8xf32>
    %2 = tpu.matmul %0, %1, %cst {dimension_numbers = #tpu.dot_dimension_numbers<[1], [0], [0], [1], [0, 0, 1, 1], [], []>} : vector<2x144xf32>, vector<144x8xf32>, vector<2x8xf32> -> vector<2x8xf32>
    %c0_3 = arith.constant 0 : index
    %c0_4 = arith.constant 0 : index
    %3 = vector.load %arg3[%c0_3, %c0_4] : memref<1x8xf32, #tpu.memory_space<vmem>>, vector<1x8xf32>
    %4 = vector.broadcast %3 : vector<1x8xf32> to vector<2x8xf32>
    %5 = arith.addf %2, %4 : vector<2x8xf32>
    %6 = arith.negf %5 : vector<2x8xf32>
    %7 = math.exp %6 : vector<2x8xf32>
    %cst_5 = arith.constant 1.000000e+00 : f32
    %8 = vector.broadcast %cst_5 : f32 to vector<2x8xf32>
    %9 = arith.addf %8, %7 : vector<2x8xf32>
    %10 = arith.divf %8, %9 : vector<2x8xf32>
    %11 = arith.mulf %5, %10 : vector<2x8xf32>
    %c0_6 = arith.constant 0 : index
    %c0_7 = arith.constant 0 : index
    %12 = vector.load %arg4[%c0_6, %c0_7] : memref<8x144xf32, #tpu.memory_space<vmem>>, vector<8x144xf32>
    %cst_8 = arith.constant dense<0.000000e+00> : vector<2x144xf32>
    %13 = tpu.matmul %11, %12, %cst_8 {dimension_numbers = #tpu.dot_dimension_numbers<[1], [0], [0], [1], [0, 0, 1, 1], [], []>} : vector<2x8xf32>, vector<8x144xf32>, vector<2x144xf32> -> vector<2x144xf32>
    %c0_9 = arith.constant 0 : index
    %c0_10 = arith.constant 0 : index
    %14 = vector.load %arg5[%c0_9, %c0_10] : memref<1x144xf32, #tpu.memory_space<vmem>>, vector<1x144xf32>
    %15 = vector.broadcast %14 : vector<1x144xf32> to vector<2x144xf32>
    %16 = arith.addf %13, %15 : vector<2x144xf32>
    %17 = arith.negf %16 : vector<2x144xf32>
    %18 = math.exp %17 : vector<2x144xf32>
    %cst_11 = arith.constant 1.000000e+00 : f32
    %19 = vector.broadcast %cst_11 : f32 to vector<2x144xf32>
    %20 = arith.addf %19, %18 : vector<2x144xf32>
    %21 = arith.divf %19, %20 : vector<2x144xf32>
    %c0_12 = arith.constant 0 : index
    %c0_13 = arith.constant 0 : index
    %22 = vector.load %arg6[%c0_12, %c0_13] : memref<2x144xf32, #tpu.memory_space<vmem>>, vector<2x144xf32>
    tpu.vector_store %arg6[%c0_12, %c0_13], %21 {strides = array<i32>} : memref<2x144xf32, #tpu.memory_space<vmem>>, vector<2x144xf32>,
    return
  }
  func.func @transform_0(%arg0: i32) -> (i32, i32) {
    %c0_i32 = arith.constant 0 : i32
    %c0_i32_0 = arith.constant 0 : i32
    %c0_i32_1 = arith.constant 0 : i32
    return %c0_i32, %c0_i32_0 : i32, i32
  }
  func.func @transform_1(%arg0: i32) -> (i32, i32) {
    %c0_i32 = arith.constant 0 : i32
    %c0_i32_0 = arith.constant 0 : i32
    %c0_i32_1 = arith.constant 0 : i32
    return %c0_i32, %c0_i32_0 : i32, i32
  }
  func.func @transform_2(%arg0: i32) -> (i32, i32) {
    %c0_i32 = arith.constant 0 : i32
    %c0_i32_0 = arith.constant 0 : i32
    %c0_i32_1 = arith.constant 0 : i32
    return %c0_i32, %c0_i32_0 : i32, i32
  }
  func.func @transform_3(%arg0: i32) -> (i32, i32) {
    %c0_i32 = arith.constant 0 : i32
    %c0_i32_0 = arith.constant 0 : i32
    %c0_i32_1 = arith.constant 0 : i32
    return %c0_i32, %c0_i32_0 : i32, i32
  }
  func.func @transform_4(%arg0: i32) -> (i32, i32) {
    %c0_i32 = arith.constant 0 : i32
    %c0_i32_0 = arith.constant 0 : i32
    %c0_i32_1 = arith.constant 0 : i32
    return %c0_i32, %c0_i32_0 : i32, i32
  }
  func.func @transform_5(%arg0: i32) -> (i32, i32) {
    %c0_i32 = arith.constant 0 : i32
    %c0_i32_0 = arith.constant 0 : i32
    %c0_i32_1 = arith.constant 0 : i32
    return %c0_i32, %c0_i32_0 : i32, i32
  }
}

module attributes {stable_mosaic.version = 11 : i64} {
  func.func @_dw_kernel(%arg0: i32, %arg1: memref<1x1x6x6x144xf32, #tpu.memory_space<vmem>>, %arg2: memref<9x1x144xf32, #tpu.memory_space<vmem>>, %arg3: memref<1x144xf32, #tpu.memory_space<vmem>>, %arg4: memref<1x4x4x144xf32, #tpu.memory_space<vmem>>, %arg5: memref<1x1x144xf32, #tpu.memory_space<vmem>>) attributes {dimension_semantics = [#tpu.dimension_semantics<parallel>], iteration_bounds = array<i64: 2>, scalar_prefetch = 0 : i64, scratch_operands = 0 : i64, tpu.core_type = #tpu.core_type<tc>, window_params = [{transform_indices = @transform_0, window_bounds = array<i64: 1, 1, 6, 6, 144>}, {pipeline_mode = #tpu.pipeline_mode<synchronous>, transform_indices = @transform_1, window_bounds = array<i64: 9, 1, 144>}, {pipeline_mode = #tpu.pipeline_mode<synchronous>, transform_indices = @transform_2, window_bounds = array<i64: 1, 144>}, {transform_indices = @transform_3, window_bounds = array<i64: 1, 4, 4, 144>}, {transform_indices = @transform_4, window_bounds = array<i64: 1, 1, 144>}]} {
    %cst = arith.constant 0.000000e+00 : f32
    %0 = vector.broadcast %cst : f32 to vector<4x4x144xf32>
    %c0 = arith.constant 0 : index
    %c0_0 = arith.constant 0 : index
    %c0_1 = arith.constant 0 : index
    %c0_2 = arith.constant 0 : index
    %c0_3 = arith.constant 0 : index
    %1 = vector.load %arg1[%c0, %c0_0, %c0_1, %c0_2, %c0_3] : memref<1x1x6x6x144xf32, #tpu.memory_space<vmem>>, vector<1x1x4x4x144xf32>
    %2 = vector.shape_cast %1 : vector<1x1x4x4x144xf32> to vector<4x4x144xf32>
    %c0_4 = arith.constant 0 : index
    %c0_5 = arith.constant 0 : index
    %c0_6 = arith.constant 0 : index
    %3 = vector.load %arg2[%c0_4, %c0_5, %c0_6] : memref<9x1x144xf32, #tpu.memory_space<vmem>>, vector<1x1x144xf32>
    %4 = vector.shape_cast %3 : vector<1x1x144xf32> to vector<1x144xf32>
    %5 = vector.shape_cast %4 : vector<1x144xf32> to vector<1x1x144xf32>
    %6 = vector.broadcast %5 : vector<1x1x144xf32> to vector<4x4x144xf32>
    %7 = arith.mulf %2, %6 : vector<4x4x144xf32>
    %8 = arith.addf %0, %7 : vector<4x4x144xf32>
    %c0_7 = arith.constant 0 : index
    %c0_8 = arith.constant 0 : index
    %c0_9 = arith.constant 0 : index
    %c1 = arith.constant 1 : index
    %c0_10 = arith.constant 0 : index
    %9 = vector.load %arg1[%c0_7, %c0_8, %c0_9, %c1, %c0_10] : memref<1x1x6x6x144xf32, #tpu.memory_space<vmem>>, vector<1x1x4x4x144xf32>
    %10 = vector.shape_cast %9 : vector<1x1x4x4x144xf32> to vector<4x4x144xf32>
    %c1_11 = arith.constant 1 : index
    %c0_12 = arith.constant 0 : index
    %c0_13 = arith.constant 0 : index
    %11 = vector.load %arg2[%c1_11, %c0_12, %c0_13] : memref<9x1x144xf32, #tpu.memory_space<vmem>>, vector<1x1x144xf32>
    %12 = vector.shape_cast %11 : vector<1x1x144xf32> to vector<1x144xf32>
    %13 = vector.shape_cast %12 : vector<1x144xf32> to vector<1x1x144xf32>
    %14 = vector.broadcast %13 : vector<1x1x144xf32> to vector<4x4x144xf32>
    %15 = arith.mulf %10, %14 : vector<4x4x144xf32>
    %16 = arith.addf %8, %15 : vector<4x4x144xf32>
    %c0_14 = arith.constant 0 : index
    %c0_15 = arith.constant 0 : index
    %c0_16 = arith.constant 0 : index
    %c2 = arith.constant 2 : index
    %c0_17 = arith.constant 0 : index
    %17 = vector.load %arg1[%c0_14, %c0_15, %c0_16, %c2, %c0_17] : memref<1x1x6x6x144xf32, #tpu.memory_space<vmem>>, vector<1x1x4x4x144xf32>
    %18 = vector.shape_cast %17 : vector<1x1x4x4x144xf32> to vector<4x4x144xf32>
    %c2_18 = arith.constant 2 : index
    %c0_19 = arith.constant 0 : index
    %c0_20 = arith.constant 0 : index
    %19 = vector.load %arg2[%c2_18, %c0_19, %c0_20] : memref<9x1x144xf32, #tpu.memory_space<vmem>>, vector<1x1x144xf32>
    %20 = vector.shape_cast %19 : vector<1x1x144xf32> to vector<1x144xf32>
    %21 = vector.shape_cast %20 : vector<1x144xf32> to vector<1x1x144xf32>
    %22 = vector.broadcast %21 : vector<1x1x144xf32> to vector<4x4x144xf32>
    %23 = arith.mulf %18, %22 : vector<4x4x144xf32>
    %24 = arith.addf %16, %23 : vector<4x4x144xf32>
    %c0_21 = arith.constant 0 : index
    %c0_22 = arith.constant 0 : index
    %c1_23 = arith.constant 1 : index
    %c0_24 = arith.constant 0 : index
    %c0_25 = arith.constant 0 : index
    %25 = vector.load %arg1[%c0_21, %c0_22, %c1_23, %c0_24, %c0_25] : memref<1x1x6x6x144xf32, #tpu.memory_space<vmem>>, vector<1x1x4x4x144xf32>
    %26 = vector.shape_cast %25 : vector<1x1x4x4x144xf32> to vector<4x4x144xf32>
    %c3 = arith.constant 3 : index
    %c0_26 = arith.constant 0 : index
    %c0_27 = arith.constant 0 : index
    %27 = vector.load %arg2[%c3, %c0_26, %c0_27] : memref<9x1x144xf32, #tpu.memory_space<vmem>>, vector<1x1x144xf32>
    %28 = vector.shape_cast %27 : vector<1x1x144xf32> to vector<1x144xf32>
    %29 = vector.shape_cast %28 : vector<1x144xf32> to vector<1x1x144xf32>
    %30 = vector.broadcast %29 : vector<1x1x144xf32> to vector<4x4x144xf32>
    %31 = arith.mulf %26, %30 : vector<4x4x144xf32>
    %32 = arith.addf %24, %31 : vector<4x4x144xf32>
    %c0_28 = arith.constant 0 : index
    %c0_29 = arith.constant 0 : index
    %c1_30 = arith.constant 1 : index
    %c1_31 = arith.constant 1 : index
    %c0_32 = arith.constant 0 : index
    %33 = vector.load %arg1[%c0_28, %c0_29, %c1_30, %c1_31, %c0_32] : memref<1x1x6x6x144xf32, #tpu.memory_space<vmem>>, vector<1x1x4x4x144xf32>
    %34 = vector.shape_cast %33 : vector<1x1x4x4x144xf32> to vector<4x4x144xf32>
    %c4 = arith.constant 4 : index
    %c0_33 = arith.constant 0 : index
    %c0_34 = arith.constant 0 : index
    %35 = vector.load %arg2[%c4, %c0_33, %c0_34] : memref<9x1x144xf32, #tpu.memory_space<vmem>>, vector<1x1x144xf32>
    %36 = vector.shape_cast %35 : vector<1x1x144xf32> to vector<1x144xf32>
    %37 = vector.shape_cast %36 : vector<1x144xf32> to vector<1x1x144xf32>
    %38 = vector.broadcast %37 : vector<1x1x144xf32> to vector<4x4x144xf32>
    %39 = arith.mulf %34, %38 : vector<4x4x144xf32>
    %40 = arith.addf %32, %39 : vector<4x4x144xf32>
    %c0_35 = arith.constant 0 : index
    %c0_36 = arith.constant 0 : index
    %c1_37 = arith.constant 1 : index
    %c2_38 = arith.constant 2 : index
    %c0_39 = arith.constant 0 : index
    %41 = vector.load %arg1[%c0_35, %c0_36, %c1_37, %c2_38, %c0_39] : memref<1x1x6x6x144xf32, #tpu.memory_space<vmem>>, vector<1x1x4x4x144xf32>
    %42 = vector.shape_cast %41 : vector<1x1x4x4x144xf32> to vector<4x4x144xf32>
    %c5 = arith.constant 5 : index
    %c0_40 = arith.constant 0 : index
    %c0_41 = arith.constant 0 : index
    %43 = vector.load %arg2[%c5, %c0_40, %c0_41] : memref<9x1x144xf32, #tpu.memory_space<vmem>>, vector<1x1x144xf32>
    %44 = vector.shape_cast %43 : vector<1x1x144xf32> to vector<1x144xf32>
    %45 = vector.shape_cast %44 : vector<1x144xf32> to vector<1x1x144xf32>
    %46 = vector.broadcast %45 : vector<1x1x144xf32> to vector<4x4x144xf32>
    %47 = arith.mulf %42, %46 : vector<4x4x144xf32>
    %48 = arith.addf %40, %47 : vector<4x4x144xf32>
    %c0_42 = arith.constant 0 : index
    %c0_43 = arith.constant 0 : index
    %c2_44 = arith.constant 2 : index
    %c0_45 = arith.constant 0 : index
    %c0_46 = arith.constant 0 : index
    %49 = vector.load %arg1[%c0_42, %c0_43, %c2_44, %c0_45, %c0_46] : memref<1x1x6x6x144xf32, #tpu.memory_space<vmem>>, vector<1x1x4x4x144xf32>
    %50 = vector.shape_cast %49 : vector<1x1x4x4x144xf32> to vector<4x4x144xf32>
    %c6 = arith.constant 6 : index
    %c0_47 = arith.constant 0 : index
    %c0_48 = arith.constant 0 : index
    %51 = vector.load %arg2[%c6, %c0_47, %c0_48] : memref<9x1x144xf32, #tpu.memory_space<vmem>>, vector<1x1x144xf32>
    %52 = vector.shape_cast %51 : vector<1x1x144xf32> to vector<1x144xf32>
    %53 = vector.shape_cast %52 : vector<1x144xf32> to vector<1x1x144xf32>
    %54 = vector.broadcast %53 : vector<1x1x144xf32> to vector<4x4x144xf32>
    %55 = arith.mulf %50, %54 : vector<4x4x144xf32>
    %56 = arith.addf %48, %55 : vector<4x4x144xf32>
    %c0_49 = arith.constant 0 : index
    %c0_50 = arith.constant 0 : index
    %c2_51 = arith.constant 2 : index
    %c1_52 = arith.constant 1 : index
    %c0_53 = arith.constant 0 : index
    %57 = vector.load %arg1[%c0_49, %c0_50, %c2_51, %c1_52, %c0_53] : memref<1x1x6x6x144xf32, #tpu.memory_space<vmem>>, vector<1x1x4x4x144xf32>
    %58 = vector.shape_cast %57 : vector<1x1x4x4x144xf32> to vector<4x4x144xf32>
    %c7 = arith.constant 7 : index
    %c0_54 = arith.constant 0 : index
    %c0_55 = arith.constant 0 : index
    %59 = vector.load %arg2[%c7, %c0_54, %c0_55] : memref<9x1x144xf32, #tpu.memory_space<vmem>>, vector<1x1x144xf32>
    %60 = vector.shape_cast %59 : vector<1x1x144xf32> to vector<1x144xf32>
    %61 = vector.shape_cast %60 : vector<1x144xf32> to vector<1x1x144xf32>
    %62 = vector.broadcast %61 : vector<1x1x144xf32> to vector<4x4x144xf32>
    %63 = arith.mulf %58, %62 : vector<4x4x144xf32>
    %64 = arith.addf %56, %63 : vector<4x4x144xf32>
    %c0_56 = arith.constant 0 : index
    %c0_57 = arith.constant 0 : index
    %c2_58 = arith.constant 2 : index
    %c2_59 = arith.constant 2 : index
    %c0_60 = arith.constant 0 : index
    %65 = vector.load %arg1[%c0_56, %c0_57, %c2_58, %c2_59, %c0_60] : memref<1x1x6x6x144xf32, #tpu.memory_space<vmem>>, vector<1x1x4x4x144xf32>
    %66 = vector.shape_cast %65 : vector<1x1x4x4x144xf32> to vector<4x4x144xf32>
    %c8 = arith.constant 8 : index
    %c0_61 = arith.constant 0 : index
    %c0_62 = arith.constant 0 : index
    %67 = vector.load %arg2[%c8, %c0_61, %c0_62] : memref<9x1x144xf32, #tpu.memory_space<vmem>>, vector<1x1x144xf32>
    %68 = vector.shape_cast %67 : vector<1x1x144xf32> to vector<1x144xf32>
    %69 = vector.shape_cast %68 : vector<1x144xf32> to vector<1x1x144xf32>
    %70 = vector.broadcast %69 : vector<1x1x144xf32> to vector<4x4x144xf32>
    %71 = arith.mulf %66, %70 : vector<4x4x144xf32>
    %72 = arith.addf %64, %71 : vector<4x4x144xf32>
    %c0_63 = arith.constant 0 : index
    %c0_64 = arith.constant 0 : index
    %73 = vector.load %arg3[%c0_63, %c0_64] : memref<1x144xf32, #tpu.memory_space<vmem>>, vector<1x144xf32>
    %74 = vector.shape_cast %73 : vector<1x144xf32> to vector<1x1x144xf32>
    %75 = vector.broadcast %74 : vector<1x1x144xf32> to vector<4x4x144xf32>
    %76 = arith.addf %72, %75 : vector<4x4x144xf32>
    %77 = arith.negf %76 : vector<4x4x144xf32>
    %78 = math.exp %77 : vector<4x4x144xf32>
    %cst_65 = arith.constant 1.000000e+00 : f32
    %79 = vector.broadcast %cst_65 : f32 to vector<4x4x144xf32>
    %80 = arith.addf %79, %78 : vector<4x4x144xf32>
    %81 = arith.divf %79, %80 : vector<4x4x144xf32>
    %82 = arith.mulf %76, %81 : vector<4x4x144xf32>
    %c0_66 = arith.constant 0 : index
    %c0_67 = arith.constant 0 : index
    %c0_68 = arith.constant 0 : index
    %c0_69 = arith.constant 0 : index
    %83 = vector.load %arg4[%c0_66, %c0_67, %c0_68, %c0_69] : memref<1x4x4x144xf32, #tpu.memory_space<vmem>>, vector<1x4x4x144xf32>
    %84 = vector.shape_cast %83 : vector<1x4x4x144xf32> to vector<4x4x144xf32>
    %85 = vector.shape_cast %82 : vector<4x4x144xf32> to vector<1x4x4x144xf32>
    tpu.vector_store %arg4[%c0_66, %c0_67, %c0_68, %c0_69], %85 {strides = array<i32>} : memref<1x4x4x144xf32, #tpu.memory_space<vmem>>, vector<1x4x4x144xf32>,
    %cst_70 = arith.constant dense<0.000000e+00> : vector<144xf32>
    %86 = vector.multi_reduction <add>, %82, %cst_70 [0, 1] : vector<4x4x144xf32> to vector<144xf32>
    %87 = vector.shape_cast %86 : vector<144xf32> to vector<1x1x144xf32>
    %cst_71 = arith.constant 1.600000e+01 : f32
    %88 = vector.broadcast %cst_71 : f32 to vector<1x1x144xf32>
    %89 = arith.divf %87, %88 : vector<1x1x144xf32>
    %c0_72 = arith.constant 0 : index
    %c0_73 = arith.constant 0 : index
    %c0_74 = arith.constant 0 : index
    %90 = vector.load %arg5[%c0_72, %c0_73, %c0_74] : memref<1x1x144xf32, #tpu.memory_space<vmem>>, vector<1x1x144xf32>
    tpu.vector_store %arg5[%c0_72, %c0_73, %c0_74], %89 {strides = array<i32>} : memref<1x1x144xf32, #tpu.memory_space<vmem>>, vector<1x1x144xf32>,
    return
  }
  func.func @transform_0(%arg0: i32) -> (i32, i32, i32, i32, i32) {
    %c0_i32 = arith.constant 0 : i32
    %c0_i32_0 = arith.constant 0 : i32
    %c0_i32_1 = arith.constant 0 : i32
    %c0_i32_2 = arith.constant 0 : i32
    %c0_i32_3 = arith.constant 0 : i32
    return %arg0, %c0_i32, %c0_i32_0, %c0_i32_1, %c0_i32_2 : i32, i32, i32, i32, i32
  }
  func.func @transform_1(%arg0: i32) -> (i32, i32, i32) {
    %c0_i32 = arith.constant 0 : i32
    %c0_i32_0 = arith.constant 0 : i32
    %c0_i32_1 = arith.constant 0 : i32
    %c0_i32_2 = arith.constant 0 : i32
    return %c0_i32, %c0_i32_0, %c0_i32_1 : i32, i32, i32
  }
  func.func @transform_2(%arg0: i32) -> (i32, i32) {
    %c0_i32 = arith.constant 0 : i32
    %c0_i32_0 = arith.constant 0 : i32
    %c0_i32_1 = arith.constant 0 : i32
    return %c0_i32, %c0_i32_0 : i32, i32
  }
  func.func @transform_3(%arg0: i32) -> (i32, i32, i32, i32) {
    %c0_i32 = arith.constant 0 : i32
    %c0_i32_0 = arith.constant 0 : i32
    %c0_i32_1 = arith.constant 0 : i32
    %c0_i32_2 = arith.constant 0 : i32
    return %arg0, %c0_i32, %c0_i32_0, %c0_i32_1 : i32, i32, i32, i32
  }
  func.func @transform_4(%arg0: i32) -> (i32, i32, i32) {
    %c0_i32 = arith.constant 0 : i32
    %c0_i32_0 = arith.constant 0 : i32
    %c0_i32_1 = arith.constant 0 : i32
    return %arg0, %c0_i32, %c0_i32_0 : i32, i32, i32
  }
}

module attributes {stable_mosaic.version = 11 : i64} {
  func.func @kernel(%arg0: i32, %arg1: i32, %arg2: memref<1x16x144xf32, #tpu.memory_space<vmem>>, %arg3: memref<1x1x144xf32, #tpu.memory_space<vmem>>, %arg4: memref<144x24xbf16, #tpu.memory_space<vmem>>, %arg5: memref<1x24xf32, #tpu.memory_space<vmem>>, %arg6: memref<1x24xf32, #tpu.memory_space<vmem>>, %arg7: memref<1x16x24xf32, #tpu.memory_space<vmem>>, %arg8: memref<1x16x24xf32, #tpu.memory_space<vmem>>) attributes {dimension_semantics = [#tpu.dimension_semantics<parallel>, #tpu.dimension_semantics<parallel>], iteration_bounds = array<i64: 2, 1>, scalar_prefetch = 0 : i64, scratch_operands = 0 : i64, tpu.core_type = #tpu.core_type<tc>, window_params = [{transform_indices = @transform_0, window_bounds = array<i64: 1, 16, 144>}, {transform_indices = @transform_1, window_bounds = array<i64: 1, 1, 144>}, {pipeline_mode = #tpu.pipeline_mode<synchronous>, transform_indices = @transform_2, window_bounds = array<i64: 144, 24>}, {pipeline_mode = #tpu.pipeline_mode<synchronous>, transform_indices = @transform_3, window_bounds = array<i64: 1, 24>}, {pipeline_mode = #tpu.pipeline_mode<synchronous>, transform_indices = @transform_4, window_bounds = array<i64: 1, 24>}, {transform_indices = @transform_5, window_bounds = array<i64: 1, 16, 24>}, {transform_indices = @transform_6, window_bounds = array<i64: 1, 16, 24>}]} {
    %c0 = arith.constant 0 : index
    %c0_0 = arith.constant 0 : index
    %c0_1 = arith.constant 0 : index
    %0 = vector.load %arg2[%c0, %c0_0, %c0_1] : memref<1x16x144xf32, #tpu.memory_space<vmem>>, vector<1x16x144xf32>
    %1 = vector.shape_cast %0 : vector<1x16x144xf32> to vector<16x144xf32>
    %c0_2 = arith.constant 0 : index
    %c0_3 = arith.constant 0 : index
    %c0_4 = arith.constant 0 : index
    %2 = vector.load %arg3[%c0_2, %c0_3, %c0_4] : memref<1x1x144xf32, #tpu.memory_space<vmem>>, vector<1x1x144xf32>
    %3 = vector.shape_cast %2 : vector<1x1x144xf32> to vector<1x144xf32>
    %4 = vector.broadcast %3 : vector<1x144xf32> to vector<16x144xf32>
    %5 = arith.mulf %1, %4 : vector<16x144xf32>
    %6 = arith.truncf %5 : vector<16x144xf32> to vector<16x144xbf16>
    %c0_5 = arith.constant 0 : index
    %c0_6 = arith.constant 0 : index
    %7 = vector.load %arg4[%c0_5, %c0_6] : memref<144x24xbf16, #tpu.memory_space<vmem>>, vector<144x24xbf16>
    %cst = arith.constant dense<0.000000e+00> : vector<16x24xf32>
    %8 = tpu.matmul %6, %7, %cst {dimension_numbers = #tpu.dot_dimension_numbers<[1], [0], [0], [1], [0, 0, 1, 1], [], []>} : vector<16x144xbf16>, vector<144x24xbf16>, vector<16x24xf32> -> vector<16x24xf32>
    %c0_7 = arith.constant 0 : index
    %c0_8 = arith.constant 0 : index
    %9 = vector.load %arg5[%c0_7, %c0_8] : memref<1x24xf32, #tpu.memory_space<vmem>>, vector<1x24xf32>
    %10 = vector.broadcast %9 : vector<1x24xf32> to vector<16x24xf32>
    %11 = arith.mulf %8, %10 : vector<16x24xf32>
    %c0_9 = arith.constant 0 : index
    %c0_10 = arith.constant 0 : index
    %12 = vector.load %arg6[%c0_9, %c0_10] : memref<1x24xf32, #tpu.memory_space<vmem>>, vector<1x24xf32>
    %13 = vector.broadcast %12 : vector<1x24xf32> to vector<16x24xf32>
    %14 = arith.addf %11, %13 : vector<16x24xf32>
    %c0_11 = arith.constant 0 : index
    %c0_12 = arith.constant 0 : index
    %c0_13 = arith.constant 0 : index
    %15 = vector.load %arg7[%c0_11, %c0_12, %c0_13] : memref<1x16x24xf32, #tpu.memory_space<vmem>>, vector<1x16x24xf32>
    %16 = vector.shape_cast %15 : vector<1x16x24xf32> to vector<16x24xf32>
    %17 = arith.addf %14, %16 : vector<16x24xf32>
    %c0_14 = arith.constant 0 : index
    %c0_15 = arith.constant 0 : index
    %c0_16 = arith.constant 0 : index
    %18 = vector.load %arg8[%c0_14, %c0_15, %c0_16] : memref<1x16x24xf32, #tpu.memory_space<vmem>>, vector<1x16x24xf32>
    %19 = vector.shape_cast %18 : vector<1x16x24xf32> to vector<16x24xf32>
    %20 = vector.shape_cast %17 : vector<16x24xf32> to vector<1x16x24xf32>
    tpu.vector_store %arg8[%c0_14, %c0_15, %c0_16], %20 {strides = array<i32>} : memref<1x16x24xf32, #tpu.memory_space<vmem>>, vector<1x16x24xf32>,
    return
  }
  func.func @transform_0(%arg0: i32, %arg1: i32) -> (i32, i32, i32) {
    %c0_i32 = arith.constant 0 : i32
    %c0_i32_0 = arith.constant 0 : i32
    return %arg0, %arg1, %c0_i32 : i32, i32, i32
  }
  func.func @transform_1(%arg0: i32, %arg1: i32) -> (i32, i32, i32) {
    %c0_i32 = arith.constant 0 : i32
    %c0_i32_0 = arith.constant 0 : i32
    %c0_i32_1 = arith.constant 0 : i32
    return %arg0, %c0_i32, %c0_i32_0 : i32, i32, i32
  }
  func.func @transform_2(%arg0: i32, %arg1: i32) -> (i32, i32) {
    %c0_i32 = arith.constant 0 : i32
    %c0_i32_0 = arith.constant 0 : i32
    %c0_i32_1 = arith.constant 0 : i32
    return %c0_i32, %c0_i32_0 : i32, i32
  }
  func.func @transform_3(%arg0: i32, %arg1: i32) -> (i32, i32) {
    %c0_i32 = arith.constant 0 : i32
    %c0_i32_0 = arith.constant 0 : i32
    %c0_i32_1 = arith.constant 0 : i32
    return %c0_i32, %c0_i32_0 : i32, i32
  }
  func.func @transform_4(%arg0: i32, %arg1: i32) -> (i32, i32) {
    %c0_i32 = arith.constant 0 : i32
    %c0_i32_0 = arith.constant 0 : i32
    %c0_i32_1 = arith.constant 0 : i32
    return %c0_i32, %c0_i32_0 : i32, i32
  }
  func.func @transform_5(%arg0: i32, %arg1: i32) -> (i32, i32, i32) {
    %c0_i32 = arith.constant 0 : i32
    %c0_i32_0 = arith.constant 0 : i32
    return %arg0, %arg1, %c0_i32 : i32, i32, i32
  }
  func.func @transform_6(%arg0: i32, %arg1: i32) -> (i32, i32, i32) {
    %c0_i32 = arith.constant 0 : i32
    %c0_i32_0 = arith.constant 0 : i32
    return %arg0, %arg1, %c0_i32 : i32, i32, i32
  }
}

</mosaic_0001>

<llo_original>
// kernel: _lambda_.12
$region0: #{_lambda_.12}
  #allocation0 [shape = 'u32[]', space=smem, size = 0x4, offset = 0x4, fixed_abs, tag = 'smem constant byte address 0x4 - core index']
  #allocation1 [shape = 'u32[144,128]{1,0:T(1,128)}', space=vmem, size = 0x12000, scoped, tag = 'internal scratch']
  %s0 = inlined_call_operand.hbm [shape: f32[2,64,32], index: 0, kind: input, shape index: {}]
  %s1 = inlined_call_operand.hbm [shape: bf16[32,32], index: 1, kind: input, shape index: {}]
  %s2 = inlined_call_operand.hbm [shape: f32[1,32], index: 2, kind: input, shape index: {}]
  %s3 = inlined_call_operand.hbm [shape: f32[1,32], index: 3, kind: input, shape index: {}]
  %s4 = inlined_call_operand.hbm [shape: f32[2,64,32], index: 4, kind: output, shape index: {}]
  %s5 = sld [smem:[#allocation0]]
  $region65: #{_lambda_.12} parent=0
    _
  %s7 = ssub.s32 1, %s5
  %s8 = scalar_select 0, %s7, %s5
  $region1: #{_lambda_.12} parent=0
    #allocation2 [shape = 'u8[65536]{0}', space=vmem, size = 0x10000, scoped, tag = 'input window, operand 0']
    #allocation3 [shape = 's32[2]{0}', space=sflag, size = 0x8, scoped, tag = 'scoped memory for _lambda_.12']
    #allocation4 [shape = 's32[2]{0}', space=sflag, size = 0x8, scoped, tag = 'scoped memory for _lambda_.12']
    #allocation5 [shape = 'u8[8192]{0}', space=vmem, size = 0x2000, scoped, tag = 'input window, operand 1, single buffered']
    #allocation6 [shape = 's32[1]{0}', space=sflag, size = 0x4, scoped, tag = 'scoped memory for _lambda_.12']
    #allocation7 [shape = 'u8[512]{0}', space=vmem, size = 0x400, scoped, tag = 'input window, operand 2, single buffered']
    #allocation8 [shape = 'u8[512]{0}', space=vmem, size = 0x400, scoped, tag = 'input window, operand 3, single buffered']
    #allocation9 [shape = 's32[1]{0}', space=sflag, size = 0x4, scoped, tag = 'scoped memory for _lambda_.12']
    #allocation10 [shape = 'u8[65536]{0}', space=vmem, size = 0x10000, scoped, tag = 'output window, operand 0']
    %9 = vsyncpa [#allocation3], 0
    %s10 = scalar_lea.sflag [#allocation3], 1
    %11 = vsyncpa %s10, 0
    %12 = vsyncpa [#allocation6], 0
    %13 = vsyncpa [#allocation9], 0
    %14 = vsyncpa [#allocation4], 0
    %s15 = scalar_lea.sflag [#allocation4], 1
    %16 = vsyncpa %s15, 0
    loop: start=0, step=1, limit=4
    $region2: #{_lambda_.12} parent=1 // loop_pre_header
      _
    $region3: #{_lambda_.12} parent=1 // loop_header
      %s18 = sphi 0, %s22
      %p19 = scmp.ge.s32.totalorder %s18, 4
      %s25 = sphi 0, %s37
      %s26 = sphi 0, %s33
      %s27 = sphi 0, %s25
      %s28 = sphi 0, %s26
      %s29 = sphi 0, %s27
      %s30 = sphi 0, %s28
      %s42 = sphi 0, %s44
      %s45 = sphi 0, %s42
      %s46 = sphi 0, %s45
      %s62 = sphi 0, %s46
      %s66 = sphi 0, %s66
      %s68 = sphi 0, %s66
      %s69 = sphi 0, %s68
      %s83 = sphi 0, %s69
      %s87 = sphi 0, %s87
      %s89 = sphi 0, %s87
      %s90 = sphi 0, %s89
      %s104 = sphi 0, %s90
      %s108 = sphi 0, %s108
      %s110 = sphi 0, %s108
      %s111 = sphi 0, %s110
      %s125 = sphi 0, %s111
      %s133 = sphi 0, %s135
      %s136 = sphi 0, %s133
      %s137 = sphi 0, %s136
      %s153 = sphi 0, %s137
    $region4: #{_lambda_.12} parent=1 // loop_header_branch
      %21 = sbr.rel (%p19) target = $region8
    $region5: #{_lambda_.12} parent=1 // loop_body
      %s23 = ssub.s32 %s18, 1
      %s24 = ssub.s32 %s18, 2
      %s31 = sadd.s32 1, %s26
      %p32 = scmp.ge.s32.totalorder %s31, 1
      %s33 = scalar_select %p32, 0, %s31
      %s34 = sadd.s32 1, %s25
      %s35 = scalar_select %p32, %s34, %s25
      %p36 = scmp.ge.s32.totalorder %s35, 2
      %s37 = scalar_select %p36, 0, %s35
      %s38 = ssub.s32 %s25, %s37
      %s39 = ssub.s32 %s26, %s33
      %s40 = sor.u32 %s38, %s39
      %p41 = scmp.eq.s32.totalorder %s40, 0
      %s43 = sadd.s32 %s42, 1
      %s44 = scalar_select %p41, %s42, %s43
      %p47 = pneg %p41
      %p48 = scmp.eq.s32.totalorder %s18, 1
      %p49 = por %p47, %p48
      %p50 = scmp.ne.s32.totalorder %s42, %s45
      %p51 = scmp.eq.s32.totalorder %s18, 0
      %p52 = por %p50, %p51
      %p53 = scmp.ne.s32.totalorder %s42, %s45
      %p54 = scmp.eq.s32.totalorder %s23, 1
      %p55 = por %p53, %p54
      %p56 = scmp.ne.s32.totalorder %s45, %s46
      %p57 = scmp.eq.s32.totalorder %s23, 0
      %p58 = por %p56, %p57
      %p59 = scmp.ne.s32.totalorder %s45, %s46
      %p60 = scmp.eq.s32.totalorder %s24, 1
      %p61 = por %p59, %p60
      %p63 = scmp.ne.s32.totalorder %s46, %s62
      %p64 = scmp.eq.s32.totalorder %s24, 0
      %p65 = por %p63, %p64
      %s67 = sadd.s32 %s66, 1
      %p70 = scmp.eq.s32.totalorder %s18, 1
      %p71 = scmp.ne.s32.totalorder %s66, %s68
      %p72 = scmp.eq.s32.totalorder %s18, 0
      %p73 = por %p71, %p72
      %p74 = scmp.ne.s32.totalorder %s66, %s68
      %p75 = scmp.eq.s32.totalorder %s23, 1
      %p76 = por %p74, %p75
      %p77 = scmp.ne.s32.totalorder %s68, %s69
      %p78 = scmp.eq.s32.totalorder %s23, 0
      %p79 = por %p77, %p78
      %p80 = scmp.ne.s32.totalorder %s68, %s69
      %p81 = scmp.eq.s32.totalorder %s24, 1
      %p82 = por %p80, %p81
      %p84 = scmp.ne.s32.totalorder %s69, %s83
      %p85 = scmp.eq.s32.totalorder %s24, 0
      %p86 = por %p84, %p85
      %s88 = sadd.s32 %s87, 1
      %p91 = scmp.eq.s32.totalorder %s18, 1
      %p92 = scmp.ne.s32.totalorder %s87, %s89
      %p93 = scmp.eq.s32.totalorder %s18, 0
      %p94 = por %p92, %p93
      %p95 = scmp.ne.s32.totalorder %s87, %s89
      %p96 = scmp.eq.s32.totalorder %s23, 1
      %p97 = por %p95, %p96
      %p98 = scmp.ne.s32.totalorder %s89, %s90
      %p99 = scmp.eq.s32.totalorder %s23, 0
      %p100 = por %p98, %p99
      %p101 = scmp.ne.s32.totalorder %s89, %s90
      %p102 = scmp.eq.s32.totalorder %s24, 1
      %p103 = por %p101, %p102
      %p105 = scmp.ne.s32.totalorder %s90, %s104
      %p106 = scmp.eq.s32.totalorder %s24, 0
      %p107 = por %p105, %p106
      %s109 = sadd.s32 %s108, 1
      %p112 = scmp.eq.s32.totalorder %s18, 1
      %p113 = scmp.ne.s32.totalorder %s108, %s110
      %p114 = scmp.eq.s32.totalorder %s18, 0
      %p115 = por %p113, %p114
      %p116 = scmp.ne.s32.totalorder %s108, %s110
      %p117 = scmp.eq.s32.totalorder %s23, 1
      %p118 = por %p116, %p117
      %p119 = scmp.ne.s32.totalorder %s110, %s111
      %p120 = scmp.eq.s32.totalorder %s23, 0
      %p121 = por %p119, %p120
      %p122 = scmp.ne.s32.totalorder %s110, %s111
      %p123 = scmp.eq.s32.totalorder %s24, 1
      %p124 = por %p122, %p123
      %p126 = scmp.ne.s32.totalorder %s111, %s125
      %p127 = scmp.eq.s32.totalorder %s24, 0
      %p128 = por %p126, %p127
      %s129 = ssub.s32 %s25, %s37
      %s130 = ssub.s32 %s26, %s33
      %s131 = sor.u32 %s129, %s130
      %p132 = scmp.eq.s32.totalorder %s131, 0
      %s134 = sadd.s32 %s133, 1
      %s135 = scalar_select %p132, %s133, %s134
      %p138 = pneg %p132
      %p139 = scmp.eq.s32.totalorder %s18, 1
      %p140 = por %p138, %p139
      %p141 = scmp.ne.s32.totalorder %s133, %s136
      %p142 = scmp.eq.s32.totalorder %s18, 0
      %p143 = por %p141, %p142
      %p144 = scmp.ne.s32.totalorder %s133, %s136
      %p145 = scmp.eq.s32.totalorder %s23, 1
      %p146 = por %p144, %p145
      %p147 = scmp.ne.s32.totalorder %s136, %s137
      %p148 = scmp.eq.s32.totalorder %s23, 0
      %p149 = por %p147, %p148
      %p150 = scmp.ne.s32.totalorder %s136, %s137
      %p151 = scmp.eq.s32.totalorder %s24, 1
      %p152 = por %p150, %p151
      %p154 = scmp.ne.s32.totalorder %s137, %s153
      %p155 = scmp.eq.s32.totalorder %s24, 0
      %p156 = por %p154, %p155
      %p157 = scmp.le.s32.totalorder 1, %s18
      %p158 = scmp.lt.s32.totalorder %s18, 3
      %p159 = pnand %p157, %p158
      %p160 = pneg %p159
      // Predicated region
      $region9: #{_lambda_.12} parent=5 // pred_check
        _
      $region10: #{_lambda_.12} parent=5 // pred_check_branch
        %162 = sbr.rel (%p159) target = $region12
      $region11: #{_lambda_.12} parent=5 // pred_region
        %s163 = ssub.s32 %s18, 1
        // Predicated region
        $region13: #{_lambda_.12} parent=11 // pred_check
          %p164 = pneg %p79
        $region14: #{_lambda_.12} parent=11 // pred_check_branch
          %166 = sbr.rel (%p164) target = $region16
        $region15: #{_lambda_.12} parent=11 // pred_region
          %s168 = ssub.s32 256, 256
          %169 = vsyncadd [#allocation6], %s168
          %s170 = sshll.u32 [#allocation5], 4
          %s171 = int_to_ptr.vmem [resolvable:$true] %s170
          %176 = dma.hbm_to_vmem [thread:$0]  %s1, 256, %s171, [#allocation6], 64, 64, 4
        $region16: #{_lambda_.12} parent=11 // pred_fallthru
          _
        // Predicated region
        $region17: #{_lambda_.12} parent=11 // pred_check
          %p177 = pneg %p100
        $region18: #{_lambda_.12} parent=11 // pred_check_branch
          %179 = sbr.rel (%p177) target = $region20
        $region19: #{_lambda_.12} parent=11 // pred_region
          %s181 = ssub.s32 16, 16
          %182 = vsyncadd [#allocation6], %s181
          %s184 = sshll.u32 [#allocation7], 4
          %s185 = int_to_ptr.vmem [resolvable:$true] %s184
          %187 = dma.hbm_to_vmem [thread:$0]  %s2, 16, %s185, [#allocation6]
        $region20: #{_lambda_.12} parent=11 // pred_fallthru
          _
        // Predicated region
        $region21: #{_lambda_.12} parent=11 // pred_check
          %p188 = pneg %p121
        $region22: #{_lambda_.12} parent=11 // pred_check_branch
          %190 = sbr.rel (%p188) target = $region24
        $region23: #{_lambda_.12} parent=11 // pred_region
          %s192 = ssub.s32 16, 16
          %193 = vsyncadd [#allocation9], %s192
          %s195 = sshll.u32 [#allocation8], 4
          %s196 = int_to_ptr.vmem [resolvable:$true] %s195
          %198 = dma.hbm_to_vmem [thread:$0]  %s3, 16, %s196, [#allocation9]
        $region24: #{_lambda_.12} parent=11 // pred_fallthru
          _
      $region12: #{_lambda_.12} parent=5 // pred_fallthru
        _
      %p199 = scmp.lt.s32.totalorder %s18, 2
      // Predicated region
      $region25: #{_lambda_.12} parent=5 // pred_check
        %p200 = pneg %p199
      $region26: #{_lambda_.12} parent=5 // pred_check_branch
        %202 = sbr.rel (%p200) target = $region28
      $region27: #{_lambda_.12} parent=5 // pred_region
        // Predicated region
        $region29: #{_lambda_.12} parent=27 // pred_check
          %p203 = pneg %p52
        $region30: #{_lambda_.12} parent=27 // pred_check_branch
          %205 = sbr.rel (%p203) target = $region32
        $region31: #{_lambda_.12} parent=27 // pred_region
          %s206 = sand.u32 %s42, 1
          %s207 = scalar_lea.sflag [#allocation3], %s206
          %s208 = sand.u32 %s42, 1
          %s209 = smul.addr %s208, 64
          %s210 = scalar_lea.vmem [#allocation2], %s209
          %s211 = smul.u32 8, %s26
          %s213 = ssub.s32 1024, 1024
          %214 = vsyncadd %s207, %s213
          %s215 = smul.addr %s25, 8
          %s216 = sadd.s32 %s211, %s215
          %s217 = smul.addr %s216, 128
          %s218 = scalar_lea.hbm %s0, %s217
          %s219 = sshll.u32 %s210, 4
          %s220 = int_to_ptr.vmem [resolvable:$true] %s219
          %225 = dma.hbm_to_vmem [thread:$0]  %s218, 1024, %s220, %s207, 128, 128, 8
        $region32: #{_lambda_.12} parent=27 // pred_fallthru
          _
      $region28: #{_lambda_.12} parent=5 // pred_fallthru
        _
      %p226 = scmp.le.s32.totalorder 1, %s18
      %p227 = scmp.lt.s32.totalorder %s18, 3
      %p228 = pnand %p226, %p227
      %p229 = pneg %p228
      // Predicated region
      $region33: #{_lambda_.12} parent=5 // pred_check
        _
      $region34: #{_lambda_.12} parent=5 // pred_check_branch
        %231 = sbr.rel (%p228) target = $region36
      $region35: #{_lambda_.12} parent=5 // pred_region
        %s232 = ssub.s32 %s18, 1
        %s233 = sand.u32 %s45, 1
        %s234 = scalar_lea.sflag [#allocation3], %s233
        %s235 = sand.u32 %s45, 1
        %s236 = smul.addr %s235, 64
        %s237 = scalar_lea.vmem [#allocation2], %s236
        // Predicated region
        $region37: #{_lambda_.12} parent=35 // pred_check
          %p238 = pneg %p58
        $region38: #{_lambda_.12} parent=35 // pred_check_branch
          %240 = sbr.rel (%p238) target = $region40
        $region39: #{_lambda_.12} parent=35 // pred_region
          %241 = dma.done %s234, 1024
        $region40: #{_lambda_.12} parent=35 // pred_fallthru
          _
        // Predicated region
        $region41: #{_lambda_.12} parent=35 // pred_check
          %p242 = pneg %p79
        $region42: #{_lambda_.12} parent=35 // pred_check_branch
          %244 = sbr.rel (%p242) target = $region44
        $region43: #{_lambda_.12} parent=35 // pred_region
          %245 = dma.done [#allocation6], 256
        $region44: #{_lambda_.12} parent=35 // pred_fallthru
          _
        // Predicated region
        $region45: #{_lambda_.12} parent=35 // pred_check
          %p246 = pneg %p100
        $region46: #{_lambda_.12} parent=35 // pred_check_branch
          %248 = sbr.rel (%p246) target = $region48
        $region47: #{_lambda_.12} parent=35 // pred_region
          %249 = dma.done [#allocation6], 16
        $region48: #{_lambda_.12} parent=35 // pred_fallthru
          _
        // Predicated region
        $region49: #{_lambda_.12} parent=35 // pred_check
          %p250 = pneg %p121
        $region50: #{_lambda_.12} parent=35 // pred_check_branch
          %252 = sbr.rel (%p250) target = $region52
        $region51: #{_lambda_.12} parent=35 // pred_region
          %253 = dma.done [#allocation9], 16
        $region52: #{_lambda_.12} parent=35 // pred_fallthru
          _
        %s254 = sand.u32 %s45, 1
        %s255 = scalar_lea.sflag [#allocation3], %s254
        %s256 = sand.u32 %s45, 1
        %s257 = smul.addr %s256, 64
        %s258 = scalar_lea.vmem [#allocation2], %s257
        %p259 = pneg %p58
        %p260 = pneg %p55
        %p261 = pneg %p79
        %p262 = pneg %p76
        %p263 = pneg %p100
        %p264 = pneg %p97
        %p265 = pneg %p121
        %p266 = pneg %p118
        %p267 = pneg %p149
        %p268 = pneg %p146
        %s269 = sand.u32 %s136, 1
        %s270 = scalar_lea.sflag [#allocation4], %s269
        %s271 = sand.u32 %s136, 1
        %s272 = smul.addr %s271, 64
        %s273 = scalar_lea.vmem [#allocation10], %s272
        %s274 = smul.u32 8, %s28
        %s275 = smul.u32 8, %s28
        %v277 = vld [vmem:[%s237] sm:$0xff]
        %v278 = vld [vmem:[%s237 + $0x8] sm:$0xff]
        %v279 = vld [vmem:[%s237 + $0x10] sm:$0xff]
        %v280 = vld [vmem:[%s237 + $0x18] sm:$0xff]
        %v281 = vld [vmem:[%s237 + $0x20] sm:$0xff]
        %v282 = vld [vmem:[%s237 + $0x28] sm:$0xff]
        %v283 = vld [vmem:[%s237 + $0x30] sm:$0xff]
        %v284 = vld [vmem:[%s237 + $0x38] sm:$0xff]
        %v285 = vpack.c.bf16 %v278, %v277
        %v286 = vpack.c.bf16 %v280, %v279
        %v287 = vpack.c.bf16 %v282, %v281
        %v288 = vpack.c.bf16 %v284, %v283
        %v289 = vld [vmem:[#allocation5] sm:$0xf]
        %v290 = vld [vmem:[#allocation5 + $0x4] sm:$0xf]
        %v291 = vld [vmem:[#allocation5 + $0x8] sm:$0xf]
        %v292 = vld [vmem:[#allocation5 + $0xc] sm:$0xf]
        %v297 = vunpack.c.l.b16 %v289
        %v298 = vunpack.c.l.b16 %v290
        %v299 = vunpack.c.l.b16 %v291
        %v300 = vunpack.c.l.b16 %v292
        %v301 = vpack.c.b16 %v298, %v297
        %v302 = vpack.c.b16 %v300, %v299
        %vm305 = vcmask 261120
        %v307 = vsel %vm305, %v285, 0
        %v310 = vsel %vm305, %v286, 0
        %v313 = vsel %vm305, %v287, 0
        %v316 = vsel %vm305, %v288, 0
        %318 = vmatprep.subr.bf16.mxu0 0
        %319 = vmatpush1.bf16.msra.mxu0 %v301
        %320 = vmatprep.subr.bf16.mxu0 0
        %321 = vmatpush1.bf16.msra.mxu0 %v302
        %322 = vmatprep.subr.bf16.mxu0 0
        %323 = vmatpush1.bf16.msra.mxu0 0
        %324 = vmatprep.subr.bf16.mxu0 0
        %325 = vmatpush1.bf16.msra.mxu0 0
        %326 = vmatprep.subr.bf16.mxu0 0
        %327 = vmatpush1.bf16.msra.mxu0 0
        %328 = vmatprep.subr.bf16.mxu0 0
        %329 = vmatpush1.bf16.msra.mxu0 0
        %330 = vmatprep.subr.bf16.mxu0 0
        %331 = vmatpush1.bf16.msra.mxu0 0
        %332 = vmatprep.subr.bf16.mxu0 0
        %333 = vmatpush1.bf16.msra.mxu0 0
        %334 = vmatprep.subr.bf16.mxu0 0
        %335 = vmatpush1.bf16.msra.mxu0 0
        %336 = vmatprep.subr.bf16.mxu0 0
        %337 = vmatpush1.bf16.msra.mxu0 0
        %338 = vmatprep.subr.bf16.mxu0 0
        %339 = vmatpush1.bf16.msra.mxu0 0
        %340 = vmatprep.subr.bf16.mxu0 0
        %341 = vmatpush1.bf16.msra.mxu0 0
        %342 = vmatprep.subr.bf16.mxu0 0
        %343 = vmatpush1.bf16.msra.mxu0 0
        %344 = vmatprep.subr.bf16.mxu0 0
        %345 = vmatpush1.bf16.msra.mxu0 0
        %346 = vmatprep.subr.bf16.mxu0 0
        %347 = vmatpush1.bf16.msra.mxu0 0
        %348 = vmatprep.subr.bf16.mxu0 0
        %349 = vmatpush1.bf16.msra.mxu0 0
        %350 = vmatprep.mubr.bf16.mxu0 0
        %351 = vmatmul.mubr.bf16.gmra.mrb[0].mxu0 %v307
        %v352 = vpop.f32.mrb[0].mxu0
        %v353 = vadd.f32 0.0, %v352
        %v354 = vpop.f32.mrb[0].mxu0
        %v355 = vpop.f32.mrb[0].mxu0
        %v356 = vadd.f32 0.0, %v355
        %v357 = vpop.f32.mrb[0].mxu0
        %358 = vmatprep.mubr.bf16.mxu0 0
        %359 = vmatmul.mubr.bf16.gmra.mrb[0].mxu0 %v310
        %v360 = vpop.f32.mrb[0].mxu0
        %v361 = vadd.f32 0.0, %v360
        %v362 = vpop.f32.mrb[0].mxu0
        %v363 = vpop.f32.mrb[0].mxu0
        %v364 = vadd.f32 0.0, %v363
        %v365 = vpop.f32.mrb[0].mxu0
        %366 = vmatprep.mubr.bf16.mxu0 0
        %367 = vmatmul.mubr.bf16.gmra.mrb[0].mxu0 %v313
        %v368 = vpop.f32.mrb[0].mxu0
        %v369 = vadd.f32 0.0, %v368
        %v370 = vpop.f32.mrb[0].mxu0
        %v371 = vpop.f32.mrb[0].mxu0
        %v372 = vadd.f32 0.0, %v371
        %v373 = vpop.f32.mrb[0].mxu0
        %374 = vmatprep.mubr.bf16.mxu0 0
        %375 = vmatmul.mubr.bf16.gmra.mrb[0].mxu0 %v316
        %v376 = vpop.f32.mrb[0].mxu0
        %v377 = vadd.f32 0.0, %v376
        %v378 = vpop.f32.mrb[0].mxu0
        %v379 = vpop.f32.mrb[0].mxu0
        %v380 = vadd.f32 0.0, %v379
        %v381 = vpop.f32.mrb[0].mxu0
        %382 = vdwg.mxu0
        %v383 = vld [vmem:[#allocation7] sm:$0x1]
        %v385 = vlaneseq
        %v386 = vshrl.u32 %v385, 7
        %v387 = vsub.s32 0, %v386
        %v388 = vrot.slane %v383, %v387
        %v390 = vmul.f32 %v353, %v388
        %v391 = vmul.f32 %v356, %v388
        %v392 = vmul.f32 %v361, %v388
        %v393 = vmul.f32 %v364, %v388
        %v394 = vmul.f32 %v369, %v388
        %v395 = vmul.f32 %v372, %v388
        %v396 = vmul.f32 %v377, %v388
        %v397 = vmul.f32 %v380, %v388
        %v398 = vld [vmem:[#allocation8] sm:$0x1]
        %v400 = vlaneseq
        %v401 = vshrl.u32 %v400, 7
        %v402 = vsub.s32 0, %v401
        %v403 = vrot.slane %v398, %v402
        %v405 = vadd.f32 %v390, %v403
        %v406 = vadd.f32 %v391, %v403
        %v407 = vadd.f32 %v392, %v403
        %v408 = vadd.f32 %v393, %v403
        %v409 = vadd.f32 %v394, %v403
        %v410 = vadd.f32 %v395, %v403
        %v411 = vadd.f32 %v396, %v403
        %v412 = vadd.f32 %v397, %v403
        %v413 = vxor.u32 %v405, 2147483648
        %v414 = vxor.u32 %v406, 2147483648
        %v415 = vxor.u32 %v407, 2147483648
        %v416 = vxor.u32 %v408, 2147483648
        %v417 = vxor.u32 %v409, 2147483648
        %v418 = vxor.u32 %v410, 2147483648
        %v419 = vxor.u32 %v411, 2147483648
        %v420 = vxor.u32 %v412, 2147483648
        %v421 = vmul.f32 %v413, 1.442695
        %v422 = vpow.pop %v421
        %v423 = vmul.f32 %v414, 1.442695
        %v424 = vpow.pop %v423
        %v425 = vmul.f32 %v415, 1.442695
        %v426 = vpow.pop %v425
        %v427 = vmul.f32 %v416, 1.442695
        %v428 = vpow.pop %v427
        %v429 = vmul.f32 %v417, 1.442695
        %v430 = vpow.pop %v429
        %v431 = vmul.f32 %v418, 1.442695
        %v432 = vpow.pop %v431
        %v433 = vmul.f32 %v419, 1.442695
        %v434 = vpow.pop %v433
        %v435 = vmul.f32 %v420, 1.442695
        %v436 = vpow.pop %v435
        %v437 = vadd.f32 %v422, 1.0
        %v438 = vadd.f32 %v424, 1.0
        %v439 = vadd.f32 %v426, 1.0
        %v440 = vadd.f32 %v428, 1.0
        %v441 = vadd.f32 %v430, 1.0
        %v442 = vadd.f32 %v432, 1.0
        %v443 = vadd.f32 %v434, 1.0
        %v444 = vadd.f32 %v436, 1.0
        %v445 = vrcp.pop %v437
        %v446 = vmul.f32 1.0, %v445
        %v447 = vrcp.pop %v438
        %v448 = vmul.f32 1.0, %v447
        %v449 = vrcp.pop %v439
        %v450 = vmul.f32 1.0, %v449
        %v451 = vrcp.pop %v440
        %v452 = vmul.f32 1.0, %v451
        %v453 = vrcp.pop %v441
        %v454 = vmul.f32 1.0, %v453
        %v455 = vrcp.pop %v442
        %v456 = vmul.f32 1.0, %v455
        %v457 = vrcp.pop %v443
        %v458 = vmul.f32 1.0, %v457
        %v459 = vrcp.pop %v444
        %v460 = vmul.f32 1.0, %v459
        %v461 = vmul.f32 %v405, %v446
        %v462 = vmul.f32 %v406, %v448
        %v463 = vmul.f32 %v407, %v450
        %v464 = vmul.f32 %v408, %v452
        %v465 = vmul.f32 %v409, %v454
        %v466 = vmul.f32 %v410, %v456
        %v467 = vmul.f32 %v411, %v458
        %v468 = vmul.f32 %v412, %v460
        %469 = vst.msk [vmem:[%s273] sm:$0xff] %vm305, %v461
        %470 = vst.msk [vmem:[%s273 + $0x8] sm:$0xff] %vm305, %v462
        %471 = vst.msk [vmem:[%s273 + $0x10] sm:$0xff] %vm305, %v463
        %472 = vst.msk [vmem:[%s273 + $0x18] sm:$0xff] %vm305, %v464
        %473 = vst.msk [vmem:[%s273 + $0x20] sm:$0xff] %vm305, %v465
        %474 = vst.msk [vmem:[%s273 + $0x28] sm:$0xff] %vm305, %v466
        %475 = vst.msk [vmem:[%s273 + $0x30] sm:$0xff] %vm305, %v467
        %476 = vst.msk [vmem:[%s273 + $0x38] sm:$0xff] %vm305, %v468
        %s477 = sand.u32 %s136, 1
        %s478 = scalar_lea.sflag [#allocation4], %s477
        %s479 = sand.u32 %s136, 1
        %s480 = smul.addr %s479, 64
        %s481 = scalar_lea.vmem [#allocation10], %s480
        // Predicated region
        $region53: #{_lambda_.12} parent=35 // pred_check
          %p482 = pneg %p146
        $region54: #{_lambda_.12} parent=35 // pred_check_branch
          %484 = sbr.rel (%p482) target = $region56
        $region55: #{_lambda_.12} parent=35 // pred_region
          %s485 = smul.u32 8, %s28
          %s487 = ssub.s32 1024, 1024
          %488 = vsyncadd %s478, %s487
          %s489 = smul.addr %s27, 8
          %s490 = sadd.s32 %s485, %s489
          %s491 = smul.addr %s490, 128
          %s492 = scalar_lea.hbm %s4, %s491
          %s493 = sshll.u32 %s481, 4
          %s494 = int_to_ptr.vmem [resolvable:$true] %s493
          %499 = dma.vmem_to_hbm [thread:$0]  %s494, 1024, %s492, %s478, 128, 128, 8
        $region56: #{_lambda_.12} parent=35 // pred_fallthru
          _
      $region36: #{_lambda_.12} parent=5 // pred_fallthru
        _
      %p500 = scmp.le.s32.totalorder 2, %s18
      // Predicated region
      $region57: #{_lambda_.12} parent=5 // pred_check
        %p501 = pneg %p500
      $region58: #{_lambda_.12} parent=5 // pred_check_branch
        %503 = sbr.rel (%p501) target = $region60
      $region59: #{_lambda_.12} parent=5 // pred_region
        %s504 = ssub.s32 %s18, 2
        // Predicated region
        $region61: #{_lambda_.12} parent=59 // pred_check
          %p505 = pneg %p152
        $region62: #{_lambda_.12} parent=59 // pred_check_branch
          %507 = sbr.rel (%p505) target = $region64
        $region63: #{_lambda_.12} parent=59 // pred_region
          %s508 = sand.u32 %s137, 1
          %s509 = scalar_lea.sflag [#allocation4], %s508
          %s510 = sand.u32 %s137, 1
          %s511 = smul.addr %s510, 64
          %s512 = scalar_lea.vmem [#allocation10], %s511
          %513 = dma.done %s509, 1024
        $region64: #{_lambda_.12} parent=59 // pred_fallthru
          _
      $region60: #{_lambda_.12} parent=5 // pred_fallthru
        _
    $region6: #{_lambda_.12} parent=1 // loop_footer
      %s22 = sadd.s32 1, %s18
    $region7: #{_lambda_.12} parent=1 // loop_footer_branch
      %17 = sbr.rel target = $region3
    $region8: #{_lambda_.12} parent=1 // loop_exit
      _
    %514 = vsyncpa [#allocation3], 1
    %s515 = scalar_lea.sflag [#allocation3], 1
    %516 = vsyncpa %s515, 1
    %517 = vsyncpa [#allocation6], 1
    %518 = vsyncpa [#allocation9], 1
    %519 = vsyncpa [#allocation4], 1
    %s520 = scalar_lea.sflag [#allocation4], 1
    %521 = vsyncpa %s520, 1

// kernel: _lambda_.14
$region0: #{_lambda_.14}
  #allocation0 [shape = 'u32[]', space=smem, size = 0x4, offset = 0x4, fixed_abs, tag = 'smem constant byte address 0x4 - core index']
  #allocation1 [shape = 'u32[144,128]{1,0:T(1,128)}', space=vmem, size = 0x12000, scoped, tag = 'internal scratch']
  %s0 = inlined_call_operand.hbm [shape: f32[2,32], index: 0, kind: input, shape index: {}]
  %s1 = inlined_call_operand.hbm [shape: f32[32,8], index: 1, kind: input, shape index: {}]
  %s2 = inlined_call_operand.hbm [shape: f32[1,8], index: 2, kind: input, shape index: {}]
  %s3 = inlined_call_operand.hbm [shape: f32[8,32], index: 3, kind: input, shape index: {}]
  %s4 = inlined_call_operand.hbm [shape: f32[1,32], index: 4, kind: input, shape index: {}]
  %s5 = inlined_call_operand.hbm [shape: f32[2,32], index: 5, kind: output, shape index: {}]
  %s6 = sld [smem:[#allocation0]]
  $region50: #{_lambda_.14} parent=0
    _
  %s8 = ssub.s32 1, %s6
  %s9 = scalar_select 0, %s8, %s6
  $region1: #{_lambda_.14} parent=0
    #allocation2 [shape = 'u8[1024]{0}', space=vmem, size = 0x400, scoped, tag = 'input window, operand 0, single buffered']
    #allocation3 [shape = 's32[1]{0}', space=sflag, size = 0x4, scoped, tag = 'scoped memory for _lambda_.14']
    #allocation4 [shape = 's32[1]{0}', space=sflag, size = 0x4, scoped, tag = 'scoped memory for _lambda_.14']
    #allocation5 [shape = 'u8[16384]{0}', space=vmem, size = 0x4000, scoped, tag = 'input window, operand 1, single buffered']
    #allocation6 [shape = 's32[1]{0}', space=sflag, size = 0x4, scoped, tag = 'scoped memory for _lambda_.14']
    #allocation7 [shape = 'u8[512]{0}', space=vmem, size = 0x400, scoped, tag = 'input window, operand 2, single buffered']
    #allocation8 [shape = 'u8[4096]{0}', space=vmem, size = 0x1000, scoped, tag = 'input window, operand 3, single buffered']
    #allocation9 [shape = 's32[1]{0}', space=sflag, size = 0x4, scoped, tag = 'scoped memory for _lambda_.14']
    #allocation10 [shape = 'u8[512]{0}', space=vmem, size = 0x400, scoped, tag = 'input window, operand 4, single buffered']
    #allocation11 [shape = 'u8[1024]{0}', space=vmem, size = 0x400, scoped, tag = 'output window, operand 0, single buffered']
    %10 = vsyncpa [#allocation3], 0
    %11 = vsyncpa [#allocation6], 0
    %12 = vsyncpa [#allocation9], 0
    %13 = vsyncpa [#allocation4], 0
    // Predicated region
    $region2: #{_lambda_.14} parent=1 // pred_check
      _
    $region3: #{_lambda_.14} parent=1 // pred_check_branch
      %15 = sbr.rel (0) target = $region5
    $region4: #{_lambda_.14} parent=1 // pred_region
      %s17 = ssub.s32 32, 32
      %18 = vsyncadd [#allocation3], %s17
      %s20 = sshll.u32 [#allocation2], 4
      %s21 = int_to_ptr.vmem [resolvable:$true] %s20
      %23 = dma.hbm_to_vmem [thread:$0]  %s0, 32, %s21, [#allocation3]
    $region5: #{_lambda_.14} parent=1 // pred_fallthru
      _
    // Predicated region
    $region6: #{_lambda_.14} parent=1 // pred_check
      _
    $region7: #{_lambda_.14} parent=1 // pred_check_branch
      %25 = sbr.rel (0) target = $region9
    $region8: #{_lambda_.14} parent=1 // pred_region
      %s27 = ssub.s32 512, 512
      %28 = vsyncadd [#allocation6], %s27
      %s29 = sshll.u32 [#allocation5], 4
      %s30 = int_to_ptr.vmem [resolvable:$true] %s29
      %35 = dma.hbm_to_vmem [thread:$0]  %s1, 512, %s30, [#allocation6], 128, 128, 8
    $region9: #{_lambda_.14} parent=1 // pred_fallthru
      _
    // Predicated region
    $region10: #{_lambda_.14} parent=1 // pred_check
      _
    $region11: #{_lambda_.14} parent=1 // pred_check_branch
      %37 = sbr.rel (0) target = $region13
    $region12: #{_lambda_.14} parent=1 // pred_region
      %s39 = ssub.s32 16, 16
      %40 = vsyncadd [#allocation6], %s39
      %s42 = sshll.u32 [#allocation7], 4
      %s43 = int_to_ptr.vmem [resolvable:$true] %s42
      %45 = dma.hbm_to_vmem [thread:$0]  %s2, 16, %s43, [#allocation6]
    $region13: #{_lambda_.14} parent=1 // pred_fallthru
      _
    // Predicated region
    $region14: #{_lambda_.14} parent=1 // pred_check
      _
    $region15: #{_lambda_.14} parent=1 // pred_check_branch
      %47 = sbr.rel (0) target = $region17
    $region16: #{_lambda_.14} parent=1 // pred_region
      %s49 = ssub.s32 128, 128
      %50 = vsyncadd [#allocation9], %s49
      %s52 = sshll.u32 [#allocation8], 4
      %s53 = int_to_ptr.vmem [resolvable:$true] %s52
      %55 = dma.hbm_to_vmem [thread:$0]  %s3, 128, %s53, [#allocation9]
    $region17: #{_lambda_.14} parent=1 // pred_fallthru
      _
    // Predicated region
    $region18: #{_lambda_.14} parent=1 // pred_check
      _
    $region19: #{_lambda_.14} parent=1 // pred_check_branch
      %57 = sbr.rel (0) target = $region21
    $region20: #{_lambda_.14} parent=1 // pred_region
      %s59 = ssub.s32 16, 16
      %60 = vsyncadd [#allocation9], %s59
      %s62 = sshll.u32 [#allocation10], 4
      %s63 = int_to_ptr.vmem [resolvable:$true] %s62
      %65 = dma.hbm_to_vmem [thread:$0]  %s4, 16, %s63, [#allocation9]
    $region21: #{_lambda_.14} parent=1 // pred_fallthru
      _
    // Predicated region
    $region22: #{_lambda_.14} parent=1 // pred_check
      _
    $region23: #{_lambda_.14} parent=1 // pred_check_branch
      %67 = sbr.rel (0) target = $region25
    $region24: #{_lambda_.14} parent=1 // pred_region
      %68 = dma.done [#allocation3], 32
    $region25: #{_lambda_.14} parent=1 // pred_fallthru
      _
    // Predicated region
    $region26: #{_lambda_.14} parent=1 // pred_check
      _
    $region27: #{_lambda_.14} parent=1 // pred_check_branch
      %70 = sbr.rel (0) target = $region29
    $region28: #{_lambda_.14} parent=1 // pred_region
      %71 = dma.done [#allocation6], 512
    $region29: #{_lambda_.14} parent=1 // pred_fallthru
      _
    // Predicated region
    $region30: #{_lambda_.14} parent=1 // pred_check
      _
    $region31: #{_lambda_.14} parent=1 // pred_check_branch
      %73 = sbr.rel (0) target = $region33
    $region32: #{_lambda_.14} parent=1 // pred_region
      %74 = dma.done [#allocation6], 16
    $region33: #{_lambda_.14} parent=1 // pred_fallthru
      _
    // Predicated region
    $region34: #{_lambda_.14} parent=1 // pred_check
      _
    $region35: #{_lambda_.14} parent=1 // pred_check_branch
      %76 = sbr.rel (0) target = $region37
    $region36: #{_lambda_.14} parent=1 // pred_region
      %77 = dma.done [#allocation9], 128
    $region37: #{_lambda_.14} parent=1 // pred_fallthru
      _
    // Predicated region
    $region38: #{_lambda_.14} parent=1 // pred_check
      _
    $region39: #{_lambda_.14} parent=1 // pred_check_branch
      %79 = sbr.rel (0) target = $region41
    $region40: #{_lambda_.14} parent=1 // pred_region
      %80 = dma.done [#allocation9], 16
    $region41: #{_lambda_.14} parent=1 // pred_fallthru
      _
    %v81 = vld [vmem:[#allocation2] sm:$0x3]
    %v82 = vld [vmem:[#allocation5] sm:$0xff]
    %v83 = vld [vmem:[#allocation5 + $0x8] sm:$0xff]
    %v84 = vld [vmem:[#allocation5 + $0x10] sm:$0xff]
    %v85 = vld [vmem:[#allocation5 + $0x18] sm:$0xff]
    %v86 = vld [vmem:[#allocation7] sm:$0x1]
    %v88 = vlaneseq
    %v89 = vshrl.u32 %v88, 7
    %v90 = vsub.s32 0, %v89
    %v91 = vrot.slane %v86, %v90
    %vm93 = vcmask 261120
    %v95 = vsel %vm93, %v81, 0
    %97 = vmatprep.subr.mxu0 0.0
    %98 = vmatpush1.msra.mxu0 %v82
    %99 = vmatprep.subr.mxu0 0.0
    %100 = vmatpush1.msra.mxu0 %v83
    %101 = vmatprep.subr.mxu0 0.0
    %102 = vmatpush1.msra.mxu0 %v84
    %103 = vmatprep.subr.mxu0 0.0
    %104 = vmatpush1.msra.mxu0 %v85
    %105 = vmatprep.subr.mxu0 0.0
    %106 = vmatpush1.msra.mxu0 0.0
    %107 = vmatprep.subr.mxu0 0.0
    %108 = vmatpush1.msra.mxu0 0.0
    %109 = vmatprep.subr.mxu0 0.0
    %110 = vmatpush1.msra.mxu0 0.0
    %111 = vmatprep.subr.mxu0 0.0
    %112 = vmatpush1.msra.mxu0 0.0
    %113 = vmatprep.subr.mxu0 0.0
    %114 = vmatpush1.msra.mxu0 0.0
    %115 = vmatprep.subr.mxu0 0.0
    %116 = vmatpush1.msra.mxu0 0.0
    %117 = vmatprep.subr.mxu0 0.0
    %118 = vmatpush1.msra.mxu0 0.0
    %119 = vmatprep.subr.mxu0 0.0
    %120 = vmatpush1.msra.mxu0 0.0
    %121 = vmatprep.subr.mxu0 0.0
    %122 = vmatpush1.msra.mxu0 0.0
    %123 = vmatprep.subr.mxu0 0.0
    %124 = vmatpush1.msra.mxu0 0.0
    %125 = vmatprep.subr.mxu0 0.0
    %126 = vmatpush1.msra.mxu0 0.0
    %127 = vmatprep.subr.mxu0 0.0
    %128 = vmatpush1.msra.mxu0 0.0
    %129 = vmatprep.subr.mxu0 0.0
    %130 = vmatpush1.msra.mxu0 0.0
    %131 = vmatprep.subr.mxu0 0.0
    %132 = vmatpush1.msra.mxu0 0.0
    %133 = vmatprep.subr.mxu0 0.0
    %134 = vmatpush1.msra.mxu0 0.0
    %135 = vmatprep.subr.mxu0 0.0
    %136 = vmatpush1.msra.mxu0 0.0
    %137 = vmatprep.subr.mxu0 0.0
    %138 = vmatpush1.msra.mxu0 0.0
    %139 = vmatprep.subr.mxu0 0.0
    %140 = vmatpush1.msra.mxu0 0.0
    %141 = vmatprep.subr.mxu0 0.0
    %142 = vmatpush1.msra.mxu0 0.0
    %143 = vmatprep.subr.mxu0 0.0
    %144 = vmatpush1.msra.mxu0 0.0
    %145 = vmatprep.subr.mxu0 0.0
    %146 = vmatpush1.msra.mxu0 0.0
    %147 = vmatprep.subr.mxu0 0.0
    %148 = vmatpush1.msra.mxu0 0.0
    %149 = vmatprep.subr.mxu0 0.0
    %150 = vmatpush1.msra.mxu0 0.0
    %151 = vmatprep.subr.mxu0 0.0
    %152 = vmatpush1.msra.mxu0 0.0
    %153 = vmatprep.subr.mxu0 0.0
    %154 = vmatpush1.msra.mxu0 0.0
    %155 = vmatprep.subr.mxu0 0.0
    %156 = vmatpush1.msra.mxu0 0.0
    %157 = vmatprep.subr.mxu0 0.0
    %158 = vmatpush1.msra.mxu0 0.0
    %159 = vmatprep.subr.mxu0 0.0
    %160 = vmatpush1.msra.mxu0 0.0
    %161 = vmatprep.mubr.f32.mxu0 0.0
    %162 = vmatmul.mubr.f32.gmra.mrb[0].mxu0 %v95
    %v163 = vpop.f32.mrb[0].mxu0
    %v164 = vadd.f32 %v91, %v163
    %v165 = vpop.f32.mrb[0].mxu0
    %166 = vdwg.mxu0
    %v167 = vxor.u32 %v164, 2147483648
    %v168 = vmul.f32 %v167, 1.442695
    %v169 = vpow.pop %v168
    %v170 = vadd.f32 %v169, 1.0
    %v171 = vrcp.pop %v170
    %v172 = vmul.f32 1.0, %v171
    %v173 = vmul.f32 %v164, %v172
    %v174 = vld [vmem:[#allocation8] sm:$0xff]
    %v175 = vld [vmem:[#allocation10] sm:$0x1]
    %v177 = vlaneseq
    %v178 = vshrl.u32 %v177, 7
    %v179 = vsub.s32 0, %v178
    %v180 = vrot.slane %v175, %v179
    %vm182 = vcmask 64512
    %v184 = vsel %vm182, %v173, 0
    %186 = vmatprep.subr.mxu0 0.0
    %187 = vmatpush1.msra.mxu0 %v174
    %188 = vmatprep.subr.mxu0 0.0
    %189 = vmatpush1.msra.mxu0 0.0
    %190 = vmatprep.subr.mxu0 0.0
    %191 = vmatpush1.msra.mxu0 0.0
    %192 = vmatprep.subr.mxu0 0.0
    %193 = vmatpush1.msra.mxu0 0.0
    %194 = vmatprep.subr.mxu0 0.0
    %195 = vmatpush1.msra.mxu0 0.0
    %196 = vmatprep.subr.mxu0 0.0
    %197 = vmatpush1.msra.mxu0 0.0
    %198 = vmatprep.subr.mxu0 0.0
    %199 = vmatpush1.msra.mxu0 0.0
    %200 = vmatprep.subr.mxu0 0.0
    %201 = vmatpush1.msra.mxu0 0.0
    %202 = vmatprep.subr.mxu0 0.0
    %203 = vmatpush1.msra.mxu0 0.0
    %204 = vmatprep.subr.mxu0 0.0
    %205 = vmatpush1.msra.mxu0 0.0
    %206 = vmatprep.subr.mxu0 0.0
    %207 = vmatpush1.msra.mxu0 0.0
    %208 = vmatprep.subr.mxu0 0.0
    %209 = vmatpush1.msra.mxu0 0.0
    %210 = vmatprep.subr.mxu0 0.0
    %211 = vmatpush1.msra.mxu0 0.0
    %212 = vmatprep.subr.mxu0 0.0
    %213 = vmatpush1.msra.mxu0 0.0
    %214 = vmatprep.subr.mxu0 0.0
    %215 = vmatpush1.msra.mxu0 0.0
    %216 = vmatprep.subr.mxu0 0.0
    %217 = vmatpush1.msra.mxu0 0.0
    %218 = vmatprep.subr.mxu0 0.0
    %219 = vmatpush1.msra.mxu0 0.0
    %220 = vmatprep.subr.mxu0 0.0
    %221 = vmatpush1.msra.mxu0 0.0
    %222 = vmatprep.subr.mxu0 0.0
    %223 = vmatpush1.msra.mxu0 0.0
    %224 = vmatprep.subr.mxu0 0.0
    %225 = vmatpush1.msra.mxu0 0.0
    %226 = vmatprep.subr.mxu0 0.0
    %227 = vmatpush1.msra.mxu0 0.0
    %228 = vmatprep.subr.mxu0 0.0
    %229 = vmatpush1.msra.mxu0 0.0
    %230 = vmatprep.subr.mxu0 0.0
    %231 = vmatpush1.msra.mxu0 0.0
    %232 = vmatprep.subr.mxu0 0.0
    %233 = vmatpush1.msra.mxu0 0.0
    %234 = vmatprep.subr.mxu0 0.0
    %235 = vmatpush1.msra.mxu0 0.0
    %236 = vmatprep.subr.mxu0 0.0
    %237 = vmatpush1.msra.mxu0 0.0
    %238 = vmatprep.subr.mxu0 0.0
    %239 = vmatpush1.msra.mxu0 0.0
    %240 = vmatprep.subr.mxu0 0.0
    %241 = vmatpush1.msra.mxu0 0.0
    %242 = vmatprep.subr.mxu0 0.0
    %243 = vmatpush1.msra.mxu0 0.0
    %244 = vmatprep.subr.mxu0 0.0
    %245 = vmatpush1.msra.mxu0 0.0
    %246 = vmatprep.subr.mxu0 0.0
    %247 = vmatpush1.msra.mxu0 0.0
    %248 = vmatprep.subr.mxu0 0.0
    %249 = vmatpush1.msra.mxu0 0.0
    %250 = vmatprep.mubr.f32.mxu0 0.0
    %251 = vmatmul.mubr.f32.gmra.mrb[0].mxu0 %v184
    %v252 = vpop.f32.mrb[0].mxu0
    %v253 = vadd.f32 %v180, %v252
    %v254 = vpop.f32.mrb[0].mxu0
    %255 = vdwg.mxu0
    %v256 = vxor.u32 %v253, 2147483648
    %v257 = vmul.f32 %v256, 1.442695
    %v258 = vpow.pop %v257
    %v259 = vadd.f32 %v258, 1.0
    %v260 = vrcp.pop %v259
    %v261 = vmul.f32 1.0, %v260
    %vm262 = vcmask 254976
    %263 = vst.msk [vmem:[#allocation11] sm:$0x3] %vm262, %v261
    // Predicated region
    $region42: #{_lambda_.14} parent=1 // pred_check
      _
    $region43: #{_lambda_.14} parent=1 // pred_check_branch
      %265 = sbr.rel (0) target = $region45
    $region44: #{_lambda_.14} parent=1 // pred_region
      %s267 = ssub.s32 32, 32
      %268 = vsyncadd [#allocation4], %s267
      %s270 = sshll.u32 [#allocation11], 4
      %s271 = int_to_ptr.vmem [resolvable:$true] %s270
      %273 = dma.vmem_to_hbm [thread:$0]  %s271, 32, %s5, [#allocation4]
    $region45: #{_lambda_.14} parent=1 // pred_fallthru
      _
    // Predicated region
    $region46: #{_lambda_.14} parent=1 // pred_check
      _
    $region47: #{_lambda_.14} parent=1 // pred_check_branch
      %275 = sbr.rel (0) target = $region49
    $region48: #{_lambda_.14} parent=1 // pred_region
      %276 = dma.done [#allocation4], 32
    $region49: #{_lambda_.14} parent=1 // pred_fallthru
      _
    %277 = vsyncpa [#allocation3], 1
    %278 = vsyncpa [#allocation6], 1
    %279 = vsyncpa [#allocation9], 1
    %280 = vsyncpa [#allocation4], 1

// kernel: _lambda_.13
$region0: #{_lambda_.13}
  #allocation0 [shape = 'u32[]', space=smem, size = 0x4, offset = 0x4, fixed_abs, tag = 'smem constant byte address 0x4 - core index']
  #allocation1 [shape = 'u32[144,128]{1,0:T(1,128)}', space=vmem, size = 0x12000, scoped, tag = 'internal scratch']
  %s0 = inlined_call_operand.hbm [shape: f32[2,1,10,10,32], index: 0, kind: input, shape index: {}]
  %s1 = inlined_call_operand.hbm [shape: f32[9,1,32], index: 1, kind: input, shape index: {}]
  %s2 = inlined_call_operand.hbm [shape: f32[1,32], index: 2, kind: input, shape index: {}]
  %s3 = inlined_call_operand.hbm [shape: f32[2,8,8,32], index: 3, kind: output, shape index: {0}]
  %s4 = inlined_call_operand.hbm [shape: f32[2,1,32], index: 4, kind: output, shape index: {1}]
  %5 = xla_tuple %s3, %s4
  %s6 = sld [smem:[#allocation0]]
  $region65: #{_lambda_.13} parent=0
    _
  %s8 = ssub.s32 1, %s6
  %s9 = scalar_select 0, %s8, %s6
  $region1: #{_lambda_.13} parent=0
    #allocation2 [shape = 'u8[163840]{0}', space=vmem, size = 0x28000, scoped, tag = 'input window, operand 0']
    #allocation3 [shape = 's32[2]{0}', space=sflag, size = 0x8, scoped, tag = 'scoped memory for _lambda_.13']
    #allocation4 [shape = 's32[2]{0}', space=sflag, size = 0x8, scoped, tag = 'scoped memory for _lambda_.13']
    #allocation5 [shape = 'u8[4608]{0}', space=vmem, size = 0x1400, scoped, tag = 'input window, operand 1, single buffered']
    #allocation6 [shape = 's32[1]{0}', space=sflag, size = 0x4, scoped, tag = 'scoped memory for _lambda_.13']
    #allocation7 [shape = 'u8[512]{0}', space=vmem, size = 0x400, scoped, tag = 'input window, operand 2, single buffered']
    #allocation8 [shape = 'u8[65536]{0}', space=vmem, size = 0x10000, scoped, tag = 'output window, operand 0']
    #allocation9 [shape = 'u8[1024]{0}', space=vmem, size = 0x400, scoped, tag = 'output window, operand 1']
    #allocation10 [shape = 's32[2]{0}', space=sflag, size = 0x8, scoped, tag = 'scoped memory for _lambda_.13']
    %10 = vsyncpa [#allocation3], 0
    %s11 = scalar_lea.sflag [#allocation3], 1
    %12 = vsyncpa %s11, 0
    %13 = vsyncpa [#allocation6], 0
    %14 = vsyncpa [#allocation4], 0
    %s15 = scalar_lea.sflag [#allocation4], 1
    %16 = vsyncpa %s15, 0
    %17 = vsyncpa [#allocation10], 0
    %s18 = scalar_lea.sflag [#allocation10], 1
    %19 = vsyncpa %s18, 0
    loop: start=0, step=1, limit=4
    $region2: #{_lambda_.13} parent=1 // loop_pre_header
      _
    $region3: #{_lambda_.13} parent=1 // loop_header
      %s21 = sphi 0, %s25
      %p22 = scmp.ge.s32.totalorder %s21, 4
      %s31 = sphi 0, %s33
      %s34 = sphi 0, %s31
      %s35 = sphi 0, %s34
      %s51 = sphi 0, %s35
      %s55 = sphi 0, %s55
      %s57 = sphi 0, %s55
      %s58 = sphi 0, %s57
      %s72 = sphi 0, %s58
      %s76 = sphi 0, %s76
      %s78 = sphi 0, %s76
      %s79 = sphi 0, %s78
      %s93 = sphi 0, %s79
      %s99 = sphi 0, %s101
      %s102 = sphi 0, %s99
      %s103 = sphi 0, %s102
      %s119 = sphi 0, %s103
      %s125 = sphi 0, %s127
      %s128 = sphi 0, %s125
      %s129 = sphi 0, %s128
      %s145 = sphi 0, %s129
    $region4: #{_lambda_.13} parent=1 // loop_header_branch
      %24 = sbr.rel (%p22) target = $region8
    $region5: #{_lambda_.13} parent=1 // loop_body
      %s26 = ssub.s32 %s21, 1
      %s27 = ssub.s32 %s21, 2
      %s28 = sadd.s32 %s21, 1
      %s29 = ssub.s32 %s21, %s28
      %p30 = scmp.eq.s32.totalorder %s29, 0
      %s32 = sadd.s32 %s31, 1
      %s33 = scalar_select %p30, %s31, %s32
      %p36 = pneg %p30
      %p37 = scmp.eq.s32.totalorder %s21, 1
      %p38 = por %p36, %p37
      %p39 = scmp.ne.s32.totalorder %s31, %s34
      %p40 = scmp.eq.s32.totalorder %s21, 0
      %p41 = por %p39, %p40
      %p42 = scmp.ne.s32.totalorder %s31, %s34
      %p43 = scmp.eq.s32.totalorder %s26, 1
      %p44 = por %p42, %p43
      %p45 = scmp.ne.s32.totalorder %s34, %s35
      %p46 = scmp.eq.s32.totalorder %s26, 0
      %p47 = por %p45, %p46
      %p48 = scmp.ne.s32.totalorder %s34, %s35
      %p49 = scmp.eq.s32.totalorder %s27, 1
      %p50 = por %p48, %p49
      %p52 = scmp.ne.s32.totalorder %s35, %s51
      %p53 = scmp.eq.s32.totalorder %s27, 0
      %p54 = por %p52, %p53
      %s56 = sadd.s32 %s55, 1
      %p59 = scmp.eq.s32.totalorder %s21, 1
      %p60 = scmp.ne.s32.totalorder %s55, %s57
      %p61 = scmp.eq.s32.totalorder %s21, 0
      %p62 = por %p60, %p61
      %p63 = scmp.ne.s32.totalorder %s55, %s57
      %p64 = scmp.eq.s32.totalorder %s26, 1
      %p65 = por %p63, %p64
      %p66 = scmp.ne.s32.totalorder %s57, %s58
      %p67 = scmp.eq.s32.totalorder %s26, 0
      %p68 = por %p66, %p67
      %p69 = scmp.ne.s32.totalorder %s57, %s58
      %p70 = scmp.eq.s32.totalorder %s27, 1
      %p71 = por %p69, %p70
      %p73 = scmp.ne.s32.totalorder %s58, %s72
      %p74 = scmp.eq.s32.totalorder %s27, 0
      %p75 = por %p73, %p74
      %s77 = sadd.s32 %s76, 1
      %p80 = scmp.eq.s32.totalorder %s21, 1
      %p81 = scmp.ne.s32.totalorder %s76, %s78
      %p82 = scmp.eq.s32.totalorder %s21, 0
      %p83 = por %p81, %p82
      %p84 = scmp.ne.s32.totalorder %s76, %s78
      %p85 = scmp.eq.s32.totalorder %s26, 1
      %p86 = por %p84, %p85
      %p87 = scmp.ne.s32.totalorder %s78, %s79
      %p88 = scmp.eq.s32.totalorder %s26, 0
      %p89 = por %p87, %p88
      %p90 = scmp.ne.s32.totalorder %s78, %s79
      %p91 = scmp.eq.s32.totalorder %s27, 1
      %p92 = por %p90, %p91
      %p94 = scmp.ne.s32.totalorder %s79, %s93
      %p95 = scmp.eq.s32.totalorder %s27, 0
      %p96 = por %p94, %p95
      %s97 = ssub.s32 %s21, %s28
      %p98 = scmp.eq.s32.totalorder %s97, 0
      %s100 = sadd.s32 %s99, 1
      %s101 = scalar_select %p98, %s99, %s100
      %p104 = pneg %p98
      %p105 = scmp.eq.s32.totalorder %s21, 1
      %p106 = por %p104, %p105
      %p107 = scmp.ne.s32.totalorder %s99, %s102
      %p108 = scmp.eq.s32.totalorder %s21, 0
      %p109 = por %p107, %p108
      %p110 = scmp.ne.s32.totalorder %s99, %s102
      %p111 = scmp.eq.s32.totalorder %s26, 1
      %p112 = por %p110, %p111
      %p113 = scmp.ne.s32.totalorder %s102, %s103
      %p114 = scmp.eq.s32.totalorder %s26, 0
      %p115 = por %p113, %p114
      %p116 = scmp.ne.s32.totalorder %s102, %s103
      %p117 = scmp.eq.s32.totalorder %s27, 1
      %p118 = por %p116, %p117
      %p120 = scmp.ne.s32.totalorder %s103, %s119
      %p121 = scmp.eq.s32.totalorder %s27, 0
      %p122 = por %p120, %p121
      %s123 = ssub.s32 %s21, %s28
      %p124 = scmp.eq.s32.totalorder %s123, 0
      %s126 = sadd.s32 %s125, 1
      %s127 = scalar_select %p124, %s125, %s126
      %p130 = pneg %p124
      %p131 = scmp.eq.s32.totalorder %s21, 1
      %p132 = por %p130, %p131
      %p133 = scmp.ne.s32.totalorder %s125, %s128
      %p134 = scmp.eq.s32.totalorder %s21, 0
      %p135 = por %p133, %p134
      %p136 = scmp.ne.s32.totalorder %s125, %s128
      %p137 = scmp.eq.s32.totalorder %s26, 1
      %p138 = por %p136, %p137
      %p139 = scmp.ne.s32.totalorder %s128, %s129
      %p140 = scmp.eq.s32.totalorder %s26, 0
      %p141 = por %p139, %p140
      %p142 = scmp.ne.s32.totalorder %s128, %s129
      %p143 = scmp.eq.s32.totalorder %s27, 1
      %p144 = por %p142, %p143
      %p146 = scmp.ne.s32.totalorder %s129, %s145
      %p147 = scmp.eq.s32.totalorder %s27, 0
      %p148 = por %p146, %p147
      %p149 = scmp.le.s32.totalorder 1, %s21
      %p150 = scmp.lt.s32.totalorder %s21, 3
      %p151 = pnand %p149, %p150
      %p152 = pneg %p151
      // Predicated region
      $region9: #{_lambda_.13} parent=5 // pred_check
        _
      $region10: #{_lambda_.13} parent=5 // pred_check_branch
        %154 = sbr.rel (%p151) target = $region12
      $region11: #{_lambda_.13} parent=5 // pred_region
        %s155 = ssub.s32 %s21, 1
        // Predicated region
        $region13: #{_lambda_.13} parent=11 // pred_check
          %p156 = pneg %p68
        $region14: #{_lambda_.13} parent=11 // pred_check_branch
          %158 = sbr.rel (%p156) target = $region16
        $region15: #{_lambda_.13} parent=11 // pred_region
          %s160 = ssub.s32 144, 144
          %161 = vsyncadd [#allocation6], %s160
          %s162 = sshll.u32 [#allocation5], 4
          %s163 = int_to_ptr.vmem [resolvable:$true] %s162
          %168 = dma.hbm_to_vmem [thread:$0]  %s1, 144, %s163, [#allocation6], 16, 16, 1
        $region16: #{_lambda_.13} parent=11 // pred_fallthru
          _
        // Predicated region
        $region17: #{_lambda_.13} parent=11 // pred_check
          %p169 = pneg %p89
        $region18: #{_lambda_.13} parent=11 // pred_check_branch
          %171 = sbr.rel (%p169) target = $region20
        $region19: #{_lambda_.13} parent=11 // pred_region
          %s173 = ssub.s32 16, 16
          %174 = vsyncadd [#allocation6], %s173
          %s176 = sshll.u32 [#allocation7], 4
          %s177 = int_to_ptr.vmem [resolvable:$true] %s176
          %179 = dma.hbm_to_vmem [thread:$0]  %s2, 16, %s177, [#allocation6]
        $region20: #{_lambda_.13} parent=11 // pred_fallthru
          _
      $region12: #{_lambda_.13} parent=5 // pred_fallthru
        _
      %p180 = scmp.lt.s32.totalorder %s21, 2
      // Predicated region
      $region21: #{_lambda_.13} parent=5 // pred_check
        %p181 = pneg %p180
      $region22: #{_lambda_.13} parent=5 // pred_check_branch
        %183 = sbr.rel (%p181) target = $region24
      $region23: #{_lambda_.13} parent=5 // pred_region
        // Predicated region
        $region25: #{_lambda_.13} parent=23 // pred_check
          %p184 = pneg %p41
        $region26: #{_lambda_.13} parent=23 // pred_check_branch
          %186 = sbr.rel (%p184) target = $region28
        $region27: #{_lambda_.13} parent=23 // pred_region
          %s187 = sand.u32 %s31, 1
          %s188 = scalar_lea.sflag [#allocation3], %s187
          %s189 = sand.u32 %s31, 1
          %s190 = smul.addr %s189, 160
          %s191 = scalar_lea.vmem [#allocation2], %s190
          %s193 = ssub.s32 2560, 2560
          %194 = vsyncadd %s188, %s193
          %s195 = smul.addr %s21, 20
          %s196 = smul.addr %s195, 128
          %s197 = scalar_lea.hbm %s0, %s196
          %s198 = sshll.u32 %s191, 4
          %s199 = int_to_ptr.vmem [resolvable:$true] %s198
          %204 = dma.hbm_to_vmem [thread:$0]  %s197, 2560, %s199, %s188, 128, 128, 8
        $region28: #{_lambda_.13} parent=23 // pred_fallthru
          _
      $region24: #{_lambda_.13} parent=5 // pred_fallthru
        _
      %p205 = scmp.le.s32.totalorder 1, %s21
      %p206 = scmp.lt.s32.totalorder %s21, 3
      %p207 = pnand %p205, %p206
      %p208 = pneg %p207
      // Predicated region
      $region29: #{_lambda_.13} parent=5 // pred_check
        _
      $region30: #{_lambda_.13} parent=5 // pred_check_branch
        %210 = sbr.rel (%p207) target = $region32
      $region31: #{_lambda_.13} parent=5 // pred_region
        %s211 = ssub.s32 %s21, 1
        %s212 = sand.u32 %s34, 1
        %s213 = scalar_lea.sflag [#allocation3], %s212
        %s214 = sand.u32 %s34, 1
        %s215 = smul.addr %s214, 160
        %s216 = scalar_lea.vmem [#allocation2], %s215
        // Predicated region
        $region33: #{_lambda_.13} parent=31 // pred_check
          %p217 = pneg %p47
        $region34: #{_lambda_.13} parent=31 // pred_check_branch
          %219 = sbr.rel (%p217) target = $region36
        $region35: #{_lambda_.13} parent=31 // pred_region
          %220 = dma.done %s213, 2560
        $region36: #{_lambda_.13} parent=31 // pred_fallthru
          _
        // Predicated region
        $region37: #{_lambda_.13} parent=31 // pred_check
          %p221 = pneg %p68
        $region38: #{_lambda_.13} parent=31 // pred_check_branch
          %223 = sbr.rel (%p221) target = $region40
        $region39: #{_lambda_.13} parent=31 // pred_region
          %224 = dma.done [#allocation6], 144
        $region40: #{_lambda_.13} parent=31 // pred_fallthru
          _
        // Predicated region
        $region41: #{_lambda_.13} parent=31 // pred_check
          %p225 = pneg %p89
        $region42: #{_lambda_.13} parent=31 // pred_check_branch
          %227 = sbr.rel (%p225) target = $region44
        $region43: #{_lambda_.13} parent=31 // pred_region
          %228 = dma.done [#allocation6], 16
        $region44: #{_lambda_.13} parent=31 // pred_fallthru
          _
        %s229 = sand.u32 %s34, 1
        %s230 = scalar_lea.sflag [#allocation3], %s229
        %s231 = sand.u32 %s34, 1
        %s232 = smul.addr %s231, 160
        %s233 = scalar_lea.vmem [#allocation2], %s232
        %p234 = pneg %p47
        %p235 = pneg %p44
        %p236 = pneg %p68
        %p237 = pneg %p65
        %p238 = pneg %p89
        %p239 = pneg %p86
        %p240 = pneg %p115
        %p241 = pneg %p112
        %s242 = sand.u32 %s102, 1
        %s243 = scalar_lea.sflag [#allocation4], %s242
        %s244 = sand.u32 %s102, 1
        %s245 = smul.addr %s244, 64
        %s246 = scalar_lea.vmem [#allocation8], %s245
        %p247 = pneg %p141
        %p248 = pneg %p138
        %s249 = sand.u32 %s128, 1
        %s250 = scalar_lea.sflag [#allocation10], %s249
        %s251 = sand.u32 %s128, 1
        %s252 = scalar_lea.vmem [#allocation9], %s251
        %v253 = vld [vmem:[%s216] sm:$0xff]
        %v254 = vld [vmem:[%s216 + $0x10] sm:$0xff]
        %v255 = vld [vmem:[%s216 + $0x20] sm:$0xff]
        %v256 = vld [vmem:[%s216 + $0x30] sm:$0xff]
        %v257 = vld [vmem:[%s216 + $0x40] sm:$0xff]
        %v258 = vld [vmem:[%s216 + $0x50] sm:$0xff]
        %v259 = vld [vmem:[%s216 + $0x60] sm:$0xff]
        %v260 = vld [vmem:[%s216 + $0x70] sm:$0xff]
        %v261 = vld [vmem:[#allocation5] sm:$0x1]
        %v263 = vlaneseq
        %v264 = vshrl.u32 %v263, 7
        %v265 = vsub.s32 0, %v264
        %v266 = vrot.slane %v261, %v265
        %v268 = vmul.f32 %v253, %v266
        %v269 = vmul.f32 %v254, %v266
        %v270 = vmul.f32 %v255, %v266
        %v271 = vmul.f32 %v256, %v266
        %v272 = vmul.f32 %v257, %v266
        %v273 = vmul.f32 %v258, %v266
        %v274 = vmul.f32 %v259, %v266
        %v275 = vmul.f32 %v260, %v266
        %v276 = vadd.f32 %v268, 0.0
        %v277 = vadd.f32 %v269, 0.0
        %v278 = vadd.f32 %v270, 0.0
        %v279 = vadd.f32 %v271, 0.0
        %v280 = vadd.f32 %v272, 0.0
        %v281 = vadd.f32 %v273, 0.0
        %v282 = vadd.f32 %v274, 0.0
        %v283 = vadd.f32 %v275, 0.0
        %v284 = vld [vmem:[%s216 + $0x1] sm:$0xff]
        %v285 = vld [vmem:[%s216 + $0x11] sm:$0xff]
        %v286 = vld [vmem:[%s216 + $0x21] sm:$0xff]
        %v287 = vld [vmem:[%s216 + $0x31] sm:$0xff]
        %v288 = vld [vmem:[%s216 + $0x41] sm:$0xff]
        %v289 = vld [vmem:[%s216 + $0x51] sm:$0xff]
        %v290 = vld [vmem:[%s216 + $0x61] sm:$0xff]
        %v291 = vld [vmem:[%s216 + $0x71] sm:$0xff]
        %s292 = scalar_lea.vmem [#allocation5], 1
        %v293 = vld [vmem:[%s292] sm:$0x1]
        %v295 = vlaneseq
        %v296 = vshrl.u32 %v295, 7
        %v297 = vsub.s32 0, %v296
        %v298 = vrot.slane %v293, %v297
        %v300 = vmul.f32 %v284, %v298
        %v301 = vmul.f32 %v285, %v298
        %v302 = vmul.f32 %v286, %v298
        %v303 = vmul.f32 %v287, %v298
        %v304 = vmul.f32 %v288, %v298
        %v305 = vmul.f32 %v289, %v298
        %v306 = vmul.f32 %v290, %v298
        %v307 = vmul.f32 %v291, %v298
        %v308 = vadd.f32 %v276, %v300
        %v309 = vadd.f32 %v277, %v301
        %v310 = vadd.f32 %v278, %v302
        %v311 = vadd.f32 %v279, %v303
        %v312 = vadd.f32 %v280, %v304
        %v313 = vadd.f32 %v281, %v305
        %v314 = vadd.f32 %v282, %v306
        %v315 = vadd.f32 %v283, %v307
        %v316 = vld [vmem:[%s216 + $0x2] sm:$0xff]
        %v317 = vld [vmem:[%s216 + $0x12] sm:$0xff]
        %v318 = vld [vmem:[%s216 + $0x22] sm:$0xff]
        %v319 = vld [vmem:[%s216 + $0x32] sm:$0xff]
        %v320 = vld [vmem:[%s216 + $0x42] sm:$0xff]
        %v321 = vld [vmem:[%s216 + $0x52] sm:$0xff]
        %v322 = vld [vmem:[%s216 + $0x62] sm:$0xff]
        %v323 = vld [vmem:[%s216 + $0x72] sm:$0xff]
        %s324 = scalar_lea.vmem [#allocation5], 2
        %v325 = vld [vmem:[%s324] sm:$0x1]
        %v327 = vlaneseq
        %v328 = vshrl.u32 %v327, 7
        %v329 = vsub.s32 0, %v328
        %v330 = vrot.slane %v325, %v329
        %v332 = vmul.f32 %v316, %v330
        %v333 = vmul.f32 %v317, %v330
        %v334 = vmul.f32 %v318, %v330
        %v335 = vmul.f32 %v319, %v330
        %v336 = vmul.f32 %v320, %v330
        %v337 = vmul.f32 %v321, %v330
        %v338 = vmul.f32 %v322, %v330
        %v339 = vmul.f32 %v323, %v330
        %v340 = vadd.f32 %v308, %v332
        %v341 = vadd.f32 %v309, %v333
        %v342 = vadd.f32 %v310, %v334
        %v343 = vadd.f32 %v311, %v335
        %v344 = vadd.f32 %v312, %v336
        %v345 = vadd.f32 %v313, %v337
        %v346 = vadd.f32 %v314, %v338
        %v347 = vadd.f32 %v315, %v339
        %s348 = scalar_lea.vmem %s216, 16 [#allocation2]
        %v349 = vld [vmem:[%s348] sm:$0xff]
        %v350 = vld [vmem:[%s348 + $0x10] sm:$0xff]
        %v351 = vld [vmem:[%s348 + $0x20] sm:$0xff]
        %v352 = vld [vmem:[%s348 + $0x30] sm:$0xff]
        %v353 = vld [vmem:[%s348 + $0x40] sm:$0xff]
        %v354 = vld [vmem:[%s348 + $0x50] sm:$0xff]
        %v355 = vld [vmem:[%s348 + $0x60] sm:$0xff]
        %v356 = vld [vmem:[%s348 + $0x70] sm:$0xff]
        %s357 = scalar_lea.vmem [#allocation5], 3
        %v358 = vld [vmem:[%s357] sm:$0x1]
        %v360 = vlaneseq
        %v361 = vshrl.u32 %v360, 7
        %v362 = vsub.s32 0, %v361
        %v363 = vrot.slane %v358, %v362
        %v365 = vmul.f32 %v349, %v363
        %v366 = vmul.f32 %v350, %v363
        %v367 = vmul.f32 %v351, %v363
        %v368 = vmul.f32 %v352, %v363
        %v369 = vmul.f32 %v353, %v363
        %v370 = vmul.f32 %v354, %v363
        %v371 = vmul.f32 %v355, %v363
        %v372 = vmul.f32 %v356, %v363
        %v373 = vadd.f32 %v340, %v365
        %v374 = vadd.f32 %v341, %v366
        %v375 = vadd.f32 %v342, %v367
        %v376 = vadd.f32 %v343, %v368
        %v377 = vadd.f32 %v344, %v369
        %v378 = vadd.f32 %v345, %v370
        %v379 = vadd.f32 %v346, %v371
        %v380 = vadd.f32 %v347, %v372
        %v381 = vld [vmem:[%s348 + $0x1] sm:$0xff]
        %v382 = vld [vmem:[%s348 + $0x11] sm:$0xff]
        %v383 = vld [vmem:[%s348 + $0x21] sm:$0xff]
        %v384 = vld [vmem:[%s348 + $0x31] sm:$0xff]
        %v385 = vld [vmem:[%s348 + $0x41] sm:$0xff]
        %v386 = vld [vmem:[%s348 + $0x51] sm:$0xff]
        %v387 = vld [vmem:[%s348 + $0x61] sm:$0xff]
        %v388 = vld [vmem:[%s348 + $0x71] sm:$0xff]
        %s389 = scalar_lea.vmem [#allocation5], 4
        %v390 = vld [vmem:[%s389] sm:$0x1]
        %v392 = vlaneseq
        %v393 = vshrl.u32 %v392, 7
        %v394 = vsub.s32 0, %v393
        %v395 = vrot.slane %v390, %v394
        %v397 = vmul.f32 %v381, %v395
        %v398 = vmul.f32 %v382, %v395
        %v399 = vmul.f32 %v383, %v395
        %v400 = vmul.f32 %v384, %v395
        %v401 = vmul.f32 %v385, %v395
        %v402 = vmul.f32 %v386, %v395
        %v403 = vmul.f32 %v387, %v395
        %v404 = vmul.f32 %v388, %v395
        %v405 = vadd.f32 %v373, %v397
        %v406 = vadd.f32 %v374, %v398
        %v407 = vadd.f32 %v375, %v399
        %v408 = vadd.f32 %v376, %v400
        %v409 = vadd.f32 %v377, %v401
        %v410 = vadd.f32 %v378, %v402
        %v411 = vadd.f32 %v379, %v403
        %v412 = vadd.f32 %v380, %v404
        %v413 = vld [vmem:[%s348 + $0x2] sm:$0xff]
        %v414 = vld [vmem:[%s348 + $0x12] sm:$0xff]
        %v415 = vld [vmem:[%s348 + $0x22] sm:$0xff]
        %v416 = vld [vmem:[%s348 + $0x32] sm:$0xff]
        %v417 = vld [vmem:[%s348 + $0x42] sm:$0xff]
        %v418 = vld [vmem:[%s348 + $0x52] sm:$0xff]
        %v419 = vld [vmem:[%s348 + $0x62] sm:$0xff]
        %v420 = vld [vmem:[%s348 + $0x72] sm:$0xff]
        %s421 = scalar_lea.vmem [#allocation5], 5
        %v422 = vld [vmem:[%s421] sm:$0x1]
        %v424 = vlaneseq
        %v425 = vshrl.u32 %v424, 7
        %v426 = vsub.s32 0, %v425
        %v427 = vrot.slane %v422, %v426
        %v429 = vmul.f32 %v413, %v427
        %v430 = vmul.f32 %v414, %v427
        %v431 = vmul.f32 %v415, %v427
        %v432 = vmul.f32 %v416, %v427
        %v433 = vmul.f32 %v417, %v427
        %v434 = vmul.f32 %v418, %v427
        %v435 = vmul.f32 %v419, %v427
        %v436 = vmul.f32 %v420, %v427
        %v437 = vadd.f32 %v405, %v429
        %v438 = vadd.f32 %v406, %v430
        %v439 = vadd.f32 %v407, %v431
        %v440 = vadd.f32 %v408, %v432
        %v441 = vadd.f32 %v409, %v433
        %v442 = vadd.f32 %v410, %v434
        %v443 = vadd.f32 %v411, %v435
        %v444 = vadd.f32 %v412, %v436
        %s445 = scalar_lea.vmem %s216, 32 [#allocation2]
        %v446 = vld [vmem:[%s445] sm:$0xff]
        %v447 = vld [vmem:[%s445 + $0x10] sm:$0xff]
        %v448 = vld [vmem:[%s445 + $0x20] sm:$0xff]
        %v449 = vld [vmem:[%s445 + $0x30] sm:$0xff]
        %v450 = vld [vmem:[%s445 + $0x40] sm:$0xff]
        %v451 = vld [vmem:[%s445 + $0x50] sm:$0xff]
        %v452 = vld [vmem:[%s445 + $0x60] sm:$0xff]
        %v453 = vld [vmem:[%s445 + $0x70] sm:$0xff]
        %s454 = scalar_lea.vmem [#allocation5], 6
        %v455 = vld [vmem:[%s454] sm:$0x1]
        %v457 = vlaneseq
        %v458 = vshrl.u32 %v457, 7
        %v459 = vsub.s32 0, %v458
        %v460 = vrot.slane %v455, %v459
        %v462 = vmul.f32 %v446, %v460
        %v463 = vmul.f32 %v447, %v460
        %v464 = vmul.f32 %v448, %v460
        %v465 = vmul.f32 %v449, %v460
        %v466 = vmul.f32 %v450, %v460
        %v467 = vmul.f32 %v451, %v460
        %v468 = vmul.f32 %v452, %v460
        %v469 = vmul.f32 %v453, %v460
        %v470 = vadd.f32 %v437, %v462
        %v471 = vadd.f32 %v438, %v463
        %v472 = vadd.f32 %v439, %v464
        %v473 = vadd.f32 %v440, %v465
        %v474 = vadd.f32 %v441, %v466
        %v475 = vadd.f32 %v442, %v467
        %v476 = vadd.f32 %v443, %v468
        %v477 = vadd.f32 %v444, %v469
        %v478 = vld [vmem:[%s445 + $0x1] sm:$0xff]
        %v479 = vld [vmem:[%s445 + $0x11] sm:$0xff]
        %v480 = vld [vmem:[%s445 + $0x21] sm:$0xff]
        %v481 = vld [vmem:[%s445 + $0x31] sm:$0xff]
        %v482 = vld [vmem:[%s445 + $0x41] sm:$0xff]
        %v483 = vld [vmem:[%s445 + $0x51] sm:$0xff]
        %v484 = vld [vmem:[%s445 + $0x61] sm:$0xff]
        %v485 = vld [vmem:[%s445 + $0x71] sm:$0xff]
        %s486 = scalar_lea.vmem [#allocation5], 7
        %v487 = vld [vmem:[%s486] sm:$0x1]
        %v489 = vlaneseq
        %v490 = vshrl.u32 %v489, 7
        %v491 = vsub.s32 0, %v490
        %v492 = vrot.slane %v487, %v491
        %v494 = vmul.f32 %v478, %v492
        %v495 = vmul.f32 %v479, %v492
        %v496 = vmul.f32 %v480, %v492
        %v497 = vmul.f32 %v481, %v492
        %v498 = vmul.f32 %v482, %v492
        %v499 = vmul.f32 %v483, %v492
        %v500 = vmul.f32 %v484, %v492
        %v501 = vmul.f32 %v485, %v492
        %v502 = vadd.f32 %v470, %v494
        %v503 = vadd.f32 %v471, %v495
        %v504 = vadd.f32 %v472, %v496
        %v505 = vadd.f32 %v473, %v497
        %v506 = vadd.f32 %v474, %v498
        %v507 = vadd.f32 %v475, %v499
        %v508 = vadd.f32 %v476, %v500
        %v509 = vadd.f32 %v477, %v501
        %v510 = vld [vmem:[%s445 + $0x2] sm:$0xff]
        %v511 = vld [vmem:[%s445 + $0x12] sm:$0xff]
        %v512 = vld [vmem:[%s445 + $0x22] sm:$0xff]
        %v513 = vld [vmem:[%s445 + $0x32] sm:$0xff]
        %v514 = vld [vmem:[%s445 + $0x42] sm:$0xff]
        %v515 = vld [vmem:[%s445 + $0x52] sm:$0xff]
        %v516 = vld [vmem:[%s445 + $0x62] sm:$0xff]
        %v517 = vld [vmem:[%s445 + $0x72] sm:$0xff]
        %s518 = scalar_lea.vmem [#allocation5], 8
        %v519 = vld [vmem:[%s518] sm:$0x1]
        %v521 = vlaneseq
        %v522 = vshrl.u32 %v521, 7
        %v523 = vsub.s32 0, %v522
        %v524 = vrot.slane %v519, %v523
        %v526 = vmul.f32 %v510, %v524
        %v527 = vmul.f32 %v511, %v524
        %v528 = vmul.f32 %v512, %v524
        %v529 = vmul.f32 %v513, %v524
        %v530 = vmul.f32 %v514, %v524
        %v531 = vmul.f32 %v515, %v524
        %v532 = vmul.f32 %v516, %v524
        %v533 = vmul.f32 %v517, %v524
        %v534 = vadd.f32 %v502, %v526
        %v535 = vadd.f32 %v503, %v527
        %v536 = vadd.f32 %v504, %v528
        %v537 = vadd.f32 %v505, %v529
        %v538 = vadd.f32 %v506, %v530
        %v539 = vadd.f32 %v507, %v531
        %v540 = vadd.f32 %v508, %v532
        %v541 = vadd.f32 %v509, %v533
        %v542 = vld [vmem:[#allocation7] sm:$0x1]
        %v544 = vlaneseq
        %v545 = vshrl.u32 %v544, 7
        %v546 = vsub.s32 0, %v545
        %v547 = vrot.slane %v542, %v546
        %v549 = vadd.f32 %v534, %v547
        %v550 = vadd.f32 %v535, %v547
        %v551 = vadd.f32 %v536, %v547
        %v552 = vadd.f32 %v537, %v547
        %v553 = vadd.f32 %v538, %v547
        %v554 = vadd.f32 %v539, %v547
        %v555 = vadd.f32 %v540, %v547
        %v556 = vadd.f32 %v541, %v547
        %v557 = vxor.u32 %v549, 2147483648
        %v558 = vxor.u32 %v550, 2147483648
        %v559 = vxor.u32 %v551, 2147483648
        %v560 = vxor.u32 %v552, 2147483648
        %v561 = vxor.u32 %v553, 2147483648
        %v562 = vxor.u32 %v554, 2147483648
        %v563 = vxor.u32 %v555, 2147483648
        %v564 = vxor.u32 %v556, 2147483648
        %v565 = vmul.f32 %v557, 1.442695
        %v566 = vpow.pop %v565
        %v567 = vmul.f32 %v558, 1.442695
        %v568 = vpow.pop %v567
        %v569 = vmul.f32 %v559, 1.442695
        %v570 = vpow.pop %v569
        %v571 = vmul.f32 %v560, 1.442695
        %v572 = vpow.pop %v571
        %v573 = vmul.f32 %v561, 1.442695
        %v574 = vpow.pop %v573
        %v575 = vmul.f32 %v562, 1.442695
        %v576 = vpow.pop %v575
        %v577 = vmul.f32 %v563, 1.442695
        %v578 = vpow.pop %v577
        %v579 = vmul.f32 %v564, 1.442695
        %v580 = vpow.pop %v579
        %v581 = vadd.f32 %v566, 1.0
        %v582 = vadd.f32 %v568, 1.0
        %v583 = vadd.f32 %v570, 1.0
        %v584 = vadd.f32 %v572, 1.0
        %v585 = vadd.f32 %v574, 1.0
        %v586 = vadd.f32 %v576, 1.0
        %v587 = vadd.f32 %v578, 1.0
        %v588 = vadd.f32 %v580, 1.0
        %v589 = vrcp.pop %v581
        %v590 = vmul.f32 1.0, %v589
        %v591 = vrcp.pop %v582
        %v592 = vmul.f32 1.0, %v591
        %v593 = vrcp.pop %v583
        %v594 = vmul.f32 1.0, %v593
        %v595 = vrcp.pop %v584
        %v596 = vmul.f32 1.0, %v595
        %v597 = vrcp.pop %v585
        %v598 = vmul.f32 1.0, %v597
        %v599 = vrcp.pop %v586
        %v600 = vmul.f32 1.0, %v599
        %v601 = vrcp.pop %v587
        %v602 = vmul.f32 1.0, %v601
        %v603 = vrcp.pop %v588
        %v604 = vmul.f32 1.0, %v603
        %v605 = vmul.f32 %v549, %v590
        %v606 = vmul.f32 %v550, %v592
        %v607 = vmul.f32 %v551, %v594
        %v608 = vmul.f32 %v552, %v596
        %v609 = vmul.f32 %v553, %v598
        %v610 = vmul.f32 %v554, %v600
        %v611 = vmul.f32 %v555, %v602
        %v612 = vmul.f32 %v556, %v604
        %vm613 = vcmask 261120
        %614 = vst.msk [vmem:[%s246] sm:$0xff] %vm613, %v605
        %615 = vst.msk [vmem:[%s246 + $0x8] sm:$0xff] %vm613, %v606
        %616 = vst.msk [vmem:[%s246 + $0x10] sm:$0xff] %vm613, %v607
        %617 = vst.msk [vmem:[%s246 + $0x18] sm:$0xff] %vm613, %v608
        %618 = vst.msk [vmem:[%s246 + $0x20] sm:$0xff] %vm613, %v609
        %619 = vst.msk [vmem:[%s246 + $0x28] sm:$0xff] %vm613, %v610
        %620 = vst.msk [vmem:[%s246 + $0x30] sm:$0xff] %vm613, %v611
        %621 = vst.msk [vmem:[%s246 + $0x38] sm:$0xff] %vm613, %v612
        %v622 = vsel %vm613, %v605, 0.0
        %v623 = vsel %vm613, %v606, 0.0
        %v624 = vadd.f32 %v622, %v623
        %v625 = vsel %vm613, %v607, 0.0
        %v626 = vadd.f32 %v624, %v625
        %v627 = vsel %vm613, %v608, 0.0
        %v628 = vadd.f32 %v626, %v627
        %v629 = vsel %vm613, %v609, 0.0
        %v630 = vadd.f32 %v628, %v629
        %v631 = vsel %vm613, %v610, 0.0
        %v632 = vadd.f32 %v630, %v631
        %v633 = vsel %vm613, %v611, 0.0
        %v634 = vadd.f32 %v632, %v633
        %v635 = vsel %vm613, %v612, 0.0
        %v636 = vadd.f32 %v634, %v635
        %v637 = vrot.slane %v636, 4
        %v638 = vadd.f32 %v636, %v637
        %v639 = vrot.slane %v638, 2
        %v640 = vadd.f32 %v638, %v639
        %v641 = vrot.slane %v640, 1
        %v642 = vadd.f32 %v640, %v641
        %v643 = vrcp.pop 64.0
        %v644 = vmul.f32 %v642, %v643
        %vm645 = vcmask 253952
        %646 = vst.msk [vmem:[%s252] sm:$0x1] %vm645, %v644
        %s647 = sand.u32 %s102, 1
        %s648 = scalar_lea.sflag [#allocation4], %s647
        %s649 = sand.u32 %s102, 1
        %s650 = smul.addr %s649, 64
        %s651 = scalar_lea.vmem [#allocation8], %s650
        %s652 = sand.u32 %s128, 1
        %s653 = scalar_lea.sflag [#allocation10], %s652
        %s654 = sand.u32 %s128, 1
        %s655 = scalar_lea.vmem [#allocation9], %s654
        // Predicated region
        $region45: #{_lambda_.13} parent=31 // pred_check
          %p656 = pneg %p112
        $region46: #{_lambda_.13} parent=31 // pred_check_branch
          %658 = sbr.rel (%p656) target = $region48
        $region47: #{_lambda_.13} parent=31 // pred_region
          %s660 = ssub.s32 1024, 1024
          %661 = vsyncadd %s648, %s660
          %s662 = smul.addr %s26, 8
          %s663 = smul.addr %s662, 128
          %s664 = scalar_lea.hbm %s3, %s663
          %s665 = sshll.u32 %s651, 4
          %s666 = int_to_ptr.vmem [resolvable:$true] %s665
          %671 = dma.vmem_to_hbm [thread:$0]  %s666, 1024, %s664, %s648, 128, 128, 8
        $region48: #{_lambda_.13} parent=31 // pred_fallthru
          _
        // Predicated region
        $region49: #{_lambda_.13} parent=31 // pred_check
          %p672 = pneg %p138
        $region50: #{_lambda_.13} parent=31 // pred_check_branch
          %674 = sbr.rel (%p672) target = $region52
        $region51: #{_lambda_.13} parent=31 // pred_region
          %s676 = ssub.s32 16, 16
          %677 = vsyncadd %s653, %s676
          %s678 = smul.addr %s26, 16
          %s679 = scalar_lea.hbm %s4, %s678
          %s681 = sshll.u32 %s655, 4
          %s682 = int_to_ptr.vmem [resolvable:$true] %s681
          %684 = dma.vmem_to_hbm [thread:$0]  %s682, 16, %s679, %s653
        $region52: #{_lambda_.13} parent=31 // pred_fallthru
          _
      $region32: #{_lambda_.13} parent=5 // pred_fallthru
        _
      %p685 = scmp.le.s32.totalorder 2, %s21
      // Predicated region
      $region53: #{_lambda_.13} parent=5 // pred_check
        %p686 = pneg %p685
      $region54: #{_lambda_.13} parent=5 // pred_check_branch
        %688 = sbr.rel (%p686) target = $region56
      $region55: #{_lambda_.13} parent=5 // pred_region
        %s689 = ssub.s32 %s21, 2
        // Predicated region
        $region57: #{_lambda_.13} parent=55 // pred_check
          %p690 = pneg %p118
        $region58: #{_lambda_.13} parent=55 // pred_check_branch
          %692 = sbr.rel (%p690) target = $region60
        $region59: #{_lambda_.13} parent=55 // pred_region
          %s693 = sand.u32 %s103, 1
          %s694 = scalar_lea.sflag [#allocation4], %s693
          %s695 = sand.u32 %s103, 1
          %s696 = smul.addr %s695, 64
          %s697 = scalar_lea.vmem [#allocation8], %s696
          %698 = dma.done %s694, 1024
        $region60: #{_lambda_.13} parent=55 // pred_fallthru
          _
        // Predicated region
        $region61: #{_lambda_.13} parent=55 // pred_check
          %p699 = pneg %p144
        $region62: #{_lambda_.13} parent=55 // pred_check_branch
          %701 = sbr.rel (%p699) target = $region64
        $region63: #{_lambda_.13} parent=55 // pred_region
          %s702 = sand.u32 %s129, 1
          %s703 = scalar_lea.sflag [#allocation10], %s702
          %s704 = sand.u32 %s129, 1
          %s705 = scalar_lea.vmem [#allocation9], %s704
          %706 = dma.done %s703, 16
        $region64: #{_lambda_.13} parent=55 // pred_fallthru
          _
      $region56: #{_lambda_.13} parent=5 // pred_fallthru
        _
    $region6: #{_lambda_.13} parent=1 // loop_footer
      %s25 = sadd.s32 1, %s21
    $region7: #{_lambda_.13} parent=1 // loop_footer_branch
      %20 = sbr.rel target = $region3
    $region8: #{_lambda_.13} parent=1 // loop_exit
      _
    %707 = vsyncpa [#allocation3], 1
    %s708 = scalar_lea.sflag [#allocation3], 1
    %709 = vsyncpa %s708, 1
    %710 = vsyncpa [#allocation6], 1
    %711 = vsyncpa [#allocation4], 1
    %s712 = scalar_lea.sflag [#allocation4], 1
    %713 = vsyncpa %s712, 1
    %714 = vsyncpa [#allocation10], 1
    %s715 = scalar_lea.sflag [#allocation10], 1
    %716 = vsyncpa %s715, 1

// kernel: _lambda_.15
$region0: #{_lambda_.15}
  #allocation0 [shape = 'u32[]', space=smem, size = 0x4, offset = 0x4, fixed_abs, tag = 'smem constant byte address 0x4 - core index']
  #allocation1 [shape = 'u32[144,128]{1,0:T(1,128)}', space=vmem, size = 0x12000, scoped, tag = 'internal scratch']
  %s0 = inlined_call_operand.hbm [shape: f32[2,64,32], index: 0, kind: input, shape index: {}]
  %s1 = inlined_call_operand.hbm [shape: f32[2,1,32], index: 1, kind: input, shape index: {}]
  %s2 = inlined_call_operand.hbm [shape: bf16[32,16], index: 2, kind: input, shape index: {}]
  %s3 = inlined_call_operand.hbm [shape: f32[1,16], index: 3, kind: input, shape index: {}]
  %s4 = inlined_call_operand.hbm [shape: f32[1,16], index: 4, kind: input, shape index: {}]
  %s5 = inlined_call_operand.hbm [shape: f32[2,64,16], index: 5, kind: output, shape index: {}]
  %s6 = sld [smem:[#allocation0]]
  $region73: #{_lambda_.15} parent=0
    _
  %s8 = ssub.s32 1, %s6
  %s9 = scalar_select 0, %s8, %s6
  $region1: #{_lambda_.15} parent=0
    #allocation2 [shape = 'u8[65536]{0}', space=vmem, size = 0x10000, scoped, tag = 'input window, operand 0']
    #allocation3 [shape = 's32[2]{0}', space=sflag, size = 0x8, scoped, tag = 'scoped memory for _lambda_.15']
    #allocation4 [shape = 's32[2]{0}', space=sflag, size = 0x8, scoped, tag = 'scoped memory for _lambda_.15']
    #allocation5 [shape = 'u8[1024]{0}', space=vmem, size = 0x400, scoped, tag = 'input window, operand 1']
    #allocation6 [shape = 's32[2]{0}', space=sflag, size = 0x8, scoped, tag = 'scoped memory for _lambda_.15']
    #allocation7 [shape = 'u8[8192]{0}', space=vmem, size = 0x2000, scoped, tag = 'input window, operand 2, single buffered']
    #allocation8 [shape = 'u8[512]{0}', space=vmem, size = 0x400, scoped, tag = 'input window, operand 3, single buffered']
    #allocation9 [shape = 's32[1]{0}', space=sflag, size = 0x4, scoped, tag = 'scoped memory for _lambda_.15']
    #allocation10 [shape = 'u8[512]{0}', space=vmem, size = 0x400, scoped, tag = 'input window, operand 4, single buffered']
    #allocation11 [shape = 'u8[65536]{0}', space=vmem, size = 0x10000, scoped, tag = 'output window, operand 0']
    %10 = vsyncpa [#allocation3], 0
    %s11 = scalar_lea.sflag [#allocation3], 1
    %12 = vsyncpa %s11, 0
    %13 = vsyncpa [#allocation6], 0
    %s14 = scalar_lea.sflag [#allocation6], 1
    %15 = vsyncpa %s14, 0
    %16 = vsyncpa [#allocation9], 0
    %17 = vsyncpa [#allocation4], 0
    %s18 = scalar_lea.sflag [#allocation4], 1
    %19 = vsyncpa %s18, 0
    loop: start=0, step=1, limit=4
    $region2: #{_lambda_.15} parent=1 // loop_pre_header
      _
    $region3: #{_lambda_.15} parent=1 // loop_header
      %s21 = sphi 0, %s25
      %p22 = scmp.ge.s32.totalorder %s21, 4
      %s28 = sphi 0, %s40
      %s29 = sphi 0, %s36
      %s30 = sphi 0, %s28
      %s31 = sphi 0, %s29
      %s32 = sphi 0, %s30
      %s33 = sphi 0, %s31
      %s45 = sphi 0, %s47
      %s48 = sphi 0, %s45
      %s49 = sphi 0, %s48
      %s65 = sphi 0, %s49
      %s71 = sphi 0, %s73
      %s74 = sphi 0, %s71
      %s75 = sphi 0, %s74
      %s91 = sphi 0, %s75
      %s95 = sphi 0, %s95
      %s97 = sphi 0, %s95
      %s98 = sphi 0, %s97
      %s112 = sphi 0, %s98
      %s116 = sphi 0, %s116
      %s118 = sphi 0, %s116
      %s119 = sphi 0, %s118
      %s133 = sphi 0, %s119
      %s137 = sphi 0, %s137
      %s139 = sphi 0, %s137
      %s140 = sphi 0, %s139
      %s154 = sphi 0, %s140
      %s162 = sphi 0, %s164
      %s165 = sphi 0, %s162
      %s166 = sphi 0, %s165
      %s182 = sphi 0, %s166
    $region4: #{_lambda_.15} parent=1 // loop_header_branch
      %24 = sbr.rel (%p22) target = $region8
    $region5: #{_lambda_.15} parent=1 // loop_body
      %s26 = ssub.s32 %s21, 1
      %s27 = ssub.s32 %s21, 2
      %s34 = sadd.s32 1, %s29
      %p35 = scmp.ge.s32.totalorder %s34, 1
      %s36 = scalar_select %p35, 0, %s34
      %s37 = sadd.s32 1, %s28
      %s38 = scalar_select %p35, %s37, %s28
      %p39 = scmp.ge.s32.totalorder %s38, 2
      %s40 = scalar_select %p39, 0, %s38
      %s41 = ssub.s32 %s28, %s40
      %s42 = ssub.s32 %s29, %s36
      %s43 = sor.u32 %s41, %s42
      %p44 = scmp.eq.s32.totalorder %s43, 0
      %s46 = sadd.s32 %s45, 1
      %s47 = scalar_select %p44, %s45, %s46
      %p50 = pneg %p44
      %p51 = scmp.eq.s32.totalorder %s21, 1
      %p52 = por %p50, %p51
      %p53 = scmp.ne.s32.totalorder %s45, %s48
      %p54 = scmp.eq.s32.totalorder %s21, 0
      %p55 = por %p53, %p54
      %p56 = scmp.ne.s32.totalorder %s45, %s48
      %p57 = scmp.eq.s32.totalorder %s26, 1
      %p58 = por %p56, %p57
      %p59 = scmp.ne.s32.totalorder %s48, %s49
      %p60 = scmp.eq.s32.totalorder %s26, 0
      %p61 = por %p59, %p60
      %p62 = scmp.ne.s32.totalorder %s48, %s49
      %p63 = scmp.eq.s32.totalorder %s27, 1
      %p64 = por %p62, %p63
      %p66 = scmp.ne.s32.totalorder %s49, %s65
      %p67 = scmp.eq.s32.totalorder %s27, 0
      %p68 = por %p66, %p67
      %s69 = ssub.s32 %s28, %s40
      %p70 = scmp.eq.s32.totalorder %s69, 0
      %s72 = sadd.s32 %s71, 1
      %s73 = scalar_select %p70, %s71, %s72
      %p76 = pneg %p70
      %p77 = scmp.eq.s32.totalorder %s21, 1
      %p78 = por %p76, %p77
      %p79 = scmp.ne.s32.totalorder %s71, %s74
      %p80 = scmp.eq.s32.totalorder %s21, 0
      %p81 = por %p79, %p80
      %p82 = scmp.ne.s32.totalorder %s71, %s74
      %p83 = scmp.eq.s32.totalorder %s26, 1
      %p84 = por %p82, %p83
      %p85 = scmp.ne.s32.totalorder %s74, %s75
      %p86 = scmp.eq.s32.totalorder %s26, 0
      %p87 = por %p85, %p86
      %p88 = scmp.ne.s32.totalorder %s74, %s75
      %p89 = scmp.eq.s32.totalorder %s27, 1
      %p90 = por %p88, %p89
      %p92 = scmp.ne.s32.totalorder %s75, %s91
      %p93 = scmp.eq.s32.totalorder %s27, 0
      %p94 = por %p92, %p93
      %s96 = sadd.s32 %s95, 1
      %p99 = scmp.eq.s32.totalorder %s21, 1
      %p100 = scmp.ne.s32.totalorder %s95, %s97
      %p101 = scmp.eq.s32.totalorder %s21, 0
      %p102 = por %p100, %p101
      %p103 = scmp.ne.s32.totalorder %s95, %s97
      %p104 = scmp.eq.s32.totalorder %s26, 1
      %p105 = por %p103, %p104
      %p106 = scmp.ne.s32.totalorder %s97, %s98
      %p107 = scmp.eq.s32.totalorder %s26, 0
      %p108 = por %p106, %p107
      %p109 = scmp.ne.s32.totalorder %s97, %s98
      %p110 = scmp.eq.s32.totalorder %s27, 1
      %p111 = por %p109, %p110
      %p113 = scmp.ne.s32.totalorder %s98, %s112
      %p114 = scmp.eq.s32.totalorder %s27, 0
      %p115 = por %p113, %p114
      %s117 = sadd.s32 %s116, 1
      %p120 = scmp.eq.s32.totalorder %s21, 1
      %p121 = scmp.ne.s32.totalorder %s116, %s118
      %p122 = scmp.eq.s32.totalorder %s21, 0
      %p123 = por %p121, %p122
      %p124 = scmp.ne.s32.totalorder %s116, %s118
      %p125 = scmp.eq.s32.totalorder %s26, 1
      %p126 = por %p124, %p125
      %p127 = scmp.ne.s32.totalorder %s118, %s119
      %p128 = scmp.eq.s32.totalorder %s26, 0
      %p129 = por %p127, %p128
      %p130 = scmp.ne.s32.totalorder %s118, %s119
      %p131 = scmp.eq.s32.totalorder %s27, 1
      %p132 = por %p130, %p131
      %p134 = scmp.ne.s32.totalorder %s119, %s133
      %p135 = scmp.eq.s32.totalorder %s27, 0
      %p136 = por %p134, %p135
      %s138 = sadd.s32 %s137, 1
      %p141 = scmp.eq.s32.totalorder %s21, 1
      %p142 = scmp.ne.s32.totalorder %s137, %s139
      %p143 = scmp.eq.s32.totalorder %s21, 0
      %p144 = por %p142, %p143
      %p145 = scmp.ne.s32.totalorder %s137, %s139
      %p146 = scmp.eq.s32.totalorder %s26, 1
      %p147 = por %p145, %p146
      %p148 = scmp.ne.s32.totalorder %s139, %s140
      %p149 = scmp.eq.s32.totalorder %s26, 0
      %p150 = por %p148, %p149
      %p151 = scmp.ne.s32.totalorder %s139, %s140
      %p152 = scmp.eq.s32.totalorder %s27, 1
      %p153 = por %p151, %p152
      %p155 = scmp.ne.s32.totalorder %s140, %s154
      %p156 = scmp.eq.s32.totalorder %s27, 0
      %p157 = por %p155, %p156
      %s158 = ssub.s32 %s28, %s40
      %s159 = ssub.s32 %s29, %s36
      %s160 = sor.u32 %s158, %s159
      %p161 = scmp.eq.s32.totalorder %s160, 0
      %s163 = sadd.s32 %s162, 1
      %s164 = scalar_select %p161, %s162, %s163
      %p167 = pneg %p161
      %p168 = scmp.eq.s32.totalorder %s21, 1
      %p169 = por %p167, %p168
      %p170 = scmp.ne.s32.totalorder %s162, %s165
      %p171 = scmp.eq.s32.totalorder %s21, 0
      %p172 = por %p170, %p171
      %p173 = scmp.ne.s32.totalorder %s162, %s165
      %p174 = scmp.eq.s32.totalorder %s26, 1
      %p175 = por %p173, %p174
      %p176 = scmp.ne.s32.totalorder %s165, %s166
      %p177 = scmp.eq.s32.totalorder %s26, 0
      %p178 = por %p176, %p177
      %p179 = scmp.ne.s32.totalorder %s165, %s166
      %p180 = scmp.eq.s32.totalorder %s27, 1
      %p181 = por %p179, %p180
      %p183 = scmp.ne.s32.totalorder %s166, %s182
      %p184 = scmp.eq.s32.totalorder %s27, 0
      %p185 = por %p183, %p184
      %p186 = scmp.le.s32.totalorder 1, %s21
      %p187 = scmp.lt.s32.totalorder %s21, 3
      %p188 = pnand %p186, %p187
      %p189 = pneg %p188
      // Predicated region
      $region9: #{_lambda_.15} parent=5 // pred_check
        _
      $region10: #{_lambda_.15} parent=5 // pred_check_branch
        %191 = sbr.rel (%p188) target = $region12
      $region11: #{_lambda_.15} parent=5 // pred_region
        %s192 = ssub.s32 %s21, 1
        // Predicated region
        $region13: #{_lambda_.15} parent=11 // pred_check
          %p193 = pneg %p108
        $region14: #{_lambda_.15} parent=11 // pred_check_branch
          %195 = sbr.rel (%p193) target = $region16
        $region15: #{_lambda_.15} parent=11 // pred_region
          %s197 = ssub.s32 256, 256
          %198 = vsyncadd [#allocation6], %s197
          %s199 = sshll.u32 [#allocation7], 4
          %s200 = int_to_ptr.vmem [resolvable:$true] %s199
          %205 = dma.hbm_to_vmem [thread:$0]  %s2, 256, %s200, [#allocation6], 64, 64, 4
        $region16: #{_lambda_.15} parent=11 // pred_fallthru
          _
        // Predicated region
        $region17: #{_lambda_.15} parent=11 // pred_check
          %p206 = pneg %p129
        $region18: #{_lambda_.15} parent=11 // pred_check_branch
          %208 = sbr.rel (%p206) target = $region20
        $region19: #{_lambda_.15} parent=11 // pred_region
          %s210 = ssub.s32 16, 16
          %211 = vsyncadd [#allocation9], %s210
          %s213 = sshll.u32 [#allocation8], 4
          %s214 = int_to_ptr.vmem [resolvable:$true] %s213
          %216 = dma.hbm_to_vmem [thread:$0]  %s3, 16, %s214, [#allocation9]
        $region20: #{_lambda_.15} parent=11 // pred_fallthru
          _
        // Predicated region
        $region21: #{_lambda_.15} parent=11 // pred_check
          %p217 = pneg %p150
        $region22: #{_lambda_.15} parent=11 // pred_check_branch
          %219 = sbr.rel (%p217) target = $region24
        $region23: #{_lambda_.15} parent=11 // pred_region
          %s221 = ssub.s32 16, 16
          %222 = vsyncadd [#allocation9], %s221
          %s224 = sshll.u32 [#allocation10], 4
          %s225 = int_to_ptr.vmem [resolvable:$true] %s224
          %227 = dma.hbm_to_vmem [thread:$0]  %s4, 16, %s225, [#allocation9]
        $region24: #{_lambda_.15} parent=11 // pred_fallthru
          _
      $region12: #{_lambda_.15} parent=5 // pred_fallthru
        _
      %p228 = scmp.lt.s32.totalorder %s21, 2
      // Predicated region
      $region25: #{_lambda_.15} parent=5 // pred_check
        %p229 = pneg %p228
      $region26: #{_lambda_.15} parent=5 // pred_check_branch
        %231 = sbr.rel (%p229) target = $region28
      $region27: #{_lambda_.15} parent=5 // pred_region
        // Predicated region
        $region29: #{_lambda_.15} parent=27 // pred_check
          %p232 = pneg %p55
        $region30: #{_lambda_.15} parent=27 // pred_check_branch
          %234 = sbr.rel (%p232) target = $region32
        $region31: #{_lambda_.15} parent=27 // pred_region
          %s235 = sand.u32 %s45, 1
          %s236 = scalar_lea.sflag [#allocation3], %s235
          %s237 = sand.u32 %s45, 1
          %s238 = smul.addr %s237, 64
          %s239 = scalar_lea.vmem [#allocation2], %s238
          %s240 = smul.u32 8, %s29
          %s242 = ssub.s32 1024, 1024
          %243 = vsyncadd %s236, %s242
          %s244 = smul.addr %s28, 8
          %s245 = sadd.s32 %s240, %s244
          %s246 = smul.addr %s245, 128
          %s247 = scalar_lea.hbm %s0, %s246
          %s248 = sshll.u32 %s239, 4
          %s249 = int_to_ptr.vmem [resolvable:$true] %s248
          %254 = dma.hbm_to_vmem [thread:$0]  %s247, 1024, %s249, %s236, 128, 128, 8
        $region32: #{_lambda_.15} parent=27 // pred_fallthru
          _
        // Predicated region
        $region33: #{_lambda_.15} parent=27 // pred_check
          %p255 = pneg %p81
        $region34: #{_lambda_.15} parent=27 // pred_check_branch
          %257 = sbr.rel (%p255) target = $region36
        $region35: #{_lambda_.15} parent=27 // pred_region
          %s258 = sand.u32 %s21, 1
          %s259 = scalar_lea.sflag [#allocation6], %s258
          %s260 = sand.u32 %s71, 1
          %s261 = scalar_lea.vmem [#allocation5], %s260
          %s263 = ssub.s32 16, 16
          %264 = vsyncadd %s259, %s263
          %s265 = smul.addr %s28, 16
          %s266 = scalar_lea.hbm %s1, %s265
          %s268 = sshll.u32 %s261, 4
          %s269 = int_to_ptr.vmem [resolvable:$true] %s268
          %271 = dma.hbm_to_vmem [thread:$0]  %s266, 16, %s269, %s259
        $region36: #{_lambda_.15} parent=27 // pred_fallthru
          _
      $region28: #{_lambda_.15} parent=5 // pred_fallthru
        _
      %p272 = scmp.le.s32.totalorder 1, %s21
      %p273 = scmp.lt.s32.totalorder %s21, 3
      %p274 = pnand %p272, %p273
      %p275 = pneg %p274
      // Predicated region
      $region37: #{_lambda_.15} parent=5 // pred_check
        _
      $region38: #{_lambda_.15} parent=5 // pred_check_branch
        %277 = sbr.rel (%p274) target = $region40
      $region39: #{_lambda_.15} parent=5 // pred_region
        %s278 = ssub.s32 %s21, 1
        %s279 = sand.u32 %s48, 1
        %s280 = scalar_lea.sflag [#allocation3], %s279
        %s281 = sand.u32 %s48, 1
        %s282 = smul.addr %s281, 64
        %s283 = scalar_lea.vmem [#allocation2], %s282
        // Predicated region
        $region41: #{_lambda_.15} parent=39 // pred_check
          %p284 = pneg %p61
        $region42: #{_lambda_.15} parent=39 // pred_check_branch
          %286 = sbr.rel (%p284) target = $region44
        $region43: #{_lambda_.15} parent=39 // pred_region
          %287 = dma.done %s280, 1024
        $region44: #{_lambda_.15} parent=39 // pred_fallthru
          _
        %s288 = sand.u32 %s26, 1
        %s289 = scalar_lea.sflag [#allocation6], %s288
        %s290 = sand.u32 %s74, 1
        %s291 = scalar_lea.vmem [#allocation5], %s290
        // Predicated region
        $region45: #{_lambda_.15} parent=39 // pred_check
          %p292 = pneg %p87
        $region46: #{_lambda_.15} parent=39 // pred_check_branch
          %294 = sbr.rel (%p292) target = $region48
        $region47: #{_lambda_.15} parent=39 // pred_region
          %295 = dma.done %s289, 16
        $region48: #{_lambda_.15} parent=39 // pred_fallthru
          _
        // Predicated region
        $region49: #{_lambda_.15} parent=39 // pred_check
          %p296 = pneg %p108
        $region50: #{_lambda_.15} parent=39 // pred_check_branch
          %298 = sbr.rel (%p296) target = $region52
        $region51: #{_lambda_.15} parent=39 // pred_region
          %299 = dma.done [#allocation6], 256
        $region52: #{_lambda_.15} parent=39 // pred_fallthru
          _
        // Predicated region
        $region53: #{_lambda_.15} parent=39 // pred_check
          %p300 = pneg %p129
        $region54: #{_lambda_.15} parent=39 // pred_check_branch
          %302 = sbr.rel (%p300) target = $region56
        $region55: #{_lambda_.15} parent=39 // pred_region
          %303 = dma.done [#allocation9], 16
        $region56: #{_lambda_.15} parent=39 // pred_fallthru
          _
        // Predicated region
        $region57: #{_lambda_.15} parent=39 // pred_check
          %p304 = pneg %p150
        $region58: #{_lambda_.15} parent=39 // pred_check_branch
          %306 = sbr.rel (%p304) target = $region60
        $region59: #{_lambda_.15} parent=39 // pred_region
          %307 = dma.done [#allocation9], 16
        $region60: #{_lambda_.15} parent=39 // pred_fallthru
          _
        %s308 = sand.u32 %s48, 1
        %s309 = scalar_lea.sflag [#allocation3], %s308
        %s310 = sand.u32 %s48, 1
        %s311 = smul.addr %s310, 64
        %s312 = scalar_lea.vmem [#allocation2], %s311
        %p313 = pneg %p61
        %p314 = pneg %p58
        %s315 = sand.u32 %s26, 1
        %s316 = scalar_lea.sflag [#allocation6], %s315
        %s317 = sand.u32 %s74, 1
        %s318 = scalar_lea.vmem [#allocation5], %s317
        %p319 = pneg %p87
        %p320 = pneg %p84
        %p321 = pneg %p108
        %p322 = pneg %p105
        %p323 = pneg %p129
        %p324 = pneg %p126
        %p325 = pneg %p150
        %p326 = pneg %p147
        %p327 = pneg %p178
        %p328 = pneg %p175
        %s329 = sand.u32 %s165, 1
        %s330 = scalar_lea.sflag [#allocation4], %s329
        %s331 = sand.u32 %s165, 1
        %s332 = smul.addr %s331, 64
        %s333 = scalar_lea.vmem [#allocation11], %s332
        %s334 = smul.u32 8, %s31
        %s335 = smul.u32 8, %s31
        %v337 = vld [vmem:[%s283] sm:$0xff]
        %v338 = vld [vmem:[%s283 + $0x8] sm:$0xff]
        %v339 = vld [vmem:[%s283 + $0x10] sm:$0xff]
        %v340 = vld [vmem:[%s283 + $0x18] sm:$0xff]
        %v341 = vld [vmem:[%s283 + $0x20] sm:$0xff]
        %v342 = vld [vmem:[%s283 + $0x28] sm:$0xff]
        %v343 = vld [vmem:[%s283 + $0x30] sm:$0xff]
        %v344 = vld [vmem:[%s283 + $0x38] sm:$0xff]
        %v345 = vld [vmem:[%s291] sm:$0x1]
        %v347 = vlaneseq
        %v348 = vshrl.u32 %v347, 7
        %v349 = vsub.s32 0, %v348
        %v350 = vrot.slane %v345, %v349
        %v352 = vmul.f32 %v337, %v350
        %v353 = vmul.f32 %v338, %v350
        %v354 = vmul.f32 %v339, %v350
        %v355 = vmul.f32 %v340, %v350
        %v356 = vmul.f32 %v341, %v350
        %v357 = vmul.f32 %v342, %v350
        %v358 = vmul.f32 %v343, %v350
        %v359 = vmul.f32 %v344, %v350
        %v360 = vpack.c.bf16 %v353, %v352
        %v361 = vpack.c.bf16 %v355, %v354
        %v362 = vpack.c.bf16 %v357, %v356
        %v363 = vpack.c.bf16 %v359, %v358
        %v364 = vld [vmem:[#allocation7] sm:$0xf]
        %v365 = vld [vmem:[#allocation7 + $0x4] sm:$0xf]
        %v366 = vld [vmem:[#allocation7 + $0x8] sm:$0xf]
        %v367 = vld [vmem:[#allocation7 + $0xc] sm:$0xf]
        %v372 = vunpack.c.l.b16 %v364
        %v373 = vunpack.c.l.b16 %v365
        %v374 = vunpack.c.l.b16 %v366
        %v375 = vunpack.c.l.b16 %v367
        %v376 = vpack.c.b16 %v373, %v372
        %v377 = vpack.c.b16 %v375, %v374
        %vm380 = vcmask 261120
        %v382 = vsel %vm380, %v360, 0
        %v385 = vsel %vm380, %v361, 0
        %v388 = vsel %vm380, %v362, 0
        %v391 = vsel %vm380, %v363, 0
        %393 = vmatprep.subr.bf16.mxu0 0
        %394 = vmatpush1.bf16.msra.mxu0 %v376
        %395 = vmatprep.subr.bf16.mxu0 0
        %396 = vmatpush1.bf16.msra.mxu0 %v377
        %397 = vmatprep.subr.bf16.mxu0 0
        %398 = vmatpush1.bf16.msra.mxu0 0
        %399 = vmatprep.subr.bf16.mxu0 0
        %400 = vmatpush1.bf16.msra.mxu0 0
        %401 = vmatprep.subr.bf16.mxu0 0
        %402 = vmatpush1.bf16.msra.mxu0 0
        %403 = vmatprep.subr.bf16.mxu0 0
        %404 = vmatpush1.bf16.msra.mxu0 0
        %405 = vmatprep.subr.bf16.mxu0 0
        %406 = vmatpush1.bf16.msra.mxu0 0
        %407 = vmatprep.subr.bf16.mxu0 0
        %408 = vmatpush1.bf16.msra.mxu0 0
        %409 = vmatprep.subr.bf16.mxu0 0
        %410 = vmatpush1.bf16.msra.mxu0 0
        %411 = vmatprep.subr.bf16.mxu0 0
        %412 = vmatpush1.bf16.msra.mxu0 0
        %413 = vmatprep.subr.bf16.mxu0 0
        %414 = vmatpush1.bf16.msra.mxu0 0
        %415 = vmatprep.subr.bf16.mxu0 0
        %416 = vmatpush1.bf16.msra.mxu0 0
        %417 = vmatprep.subr.bf16.mxu0 0
        %418 = vmatpush1.bf16.msra.mxu0 0
        %419 = vmatprep.subr.bf16.mxu0 0
        %420 = vmatpush1.bf16.msra.mxu0 0
        %421 = vmatprep.subr.bf16.mxu0 0
        %422 = vmatpush1.bf16.msra.mxu0 0
        %423 = vmatprep.subr.bf16.mxu0 0
        %424 = vmatpush1.bf16.msra.mxu0 0
        %425 = vmatprep.mubr.bf16.mxu0 0
        %426 = vmatmul.mubr.bf16.gmra.mrb[0].mxu0 %v382
        %v427 = vpop.f32.mrb[0].mxu0
        %v428 = vadd.f32 0.0, %v427
        %v429 = vpop.f32.mrb[0].mxu0
        %v430 = vpop.f32.mrb[0].mxu0
        %v431 = vadd.f32 0.0, %v430
        %v432 = vpop.f32.mrb[0].mxu0
        %433 = vmatprep.mubr.bf16.mxu0 0
        %434 = vmatmul.mubr.bf16.gmra.mrb[0].mxu0 %v385
        %v435 = vpop.f32.mrb[0].mxu0
        %v436 = vadd.f32 0.0, %v435
        %v437 = vpop.f32.mrb[0].mxu0
        %v438 = vpop.f32.mrb[0].mxu0
        %v439 = vadd.f32 0.0, %v438
        %v440 = vpop.f32.mrb[0].mxu0
        %441 = vmatprep.mubr.bf16.mxu0 0
        %442 = vmatmul.mubr.bf16.gmra.mrb[0].mxu0 %v388
        %v443 = vpop.f32.mrb[0].mxu0
        %v444 = vadd.f32 0.0, %v443
        %v445 = vpop.f32.mrb[0].mxu0
        %v446 = vpop.f32.mrb[0].mxu0
        %v447 = vadd.f32 0.0, %v446
        %v448 = vpop.f32.mrb[0].mxu0
        %449 = vmatprep.mubr.bf16.mxu0 0
        %450 = vmatmul.mubr.bf16.gmra.mrb[0].mxu0 %v391
        %v451 = vpop.f32.mrb[0].mxu0
        %v452 = vadd.f32 0.0, %v451
        %v453 = vpop.f32.mrb[0].mxu0
        %v454 = vpop.f32.mrb[0].mxu0
        %v455 = vadd.f32 0.0, %v454
        %v456 = vpop.f32.mrb[0].mxu0
        %457 = vdwg.mxu0
        %v458 = vld [vmem:[#allocation8] sm:$0x1]
        %v460 = vlaneseq
        %v461 = vshrl.u32 %v460, 7
        %v462 = vsub.s32 0, %v461
        %v463 = vrot.slane %v458, %v462
        %v465 = vmul.f32 %v428, %v463
        %v466 = vmul.f32 %v431, %v463
        %v467 = vmul.f32 %v436, %v463
        %v468 = vmul.f32 %v439, %v463
        %v469 = vmul.f32 %v444, %v463
        %v470 = vmul.f32 %v447, %v463
        %v471 = vmul.f32 %v452, %v463
        %v472 = vmul.f32 %v455, %v463
        %v473 = vld [vmem:[#allocation10] sm:$0x1]
        %v475 = vlaneseq
        %v476 = vshrl.u32 %v475, 7
        %v477 = vsub.s32 0, %v476
        %v478 = vrot.slane %v473, %v477
        %v480 = vadd.f32 %v465, %v478
        %v481 = vadd.f32 %v466, %v478
        %v482 = vadd.f32 %v467, %v478
        %v483 = vadd.f32 %v468, %v478
        %v484 = vadd.f32 %v469, %v478
        %v485 = vadd.f32 %v470, %v478
        %v486 = vadd.f32 %v471, %v478
        %v487 = vadd.f32 %v472, %v478
        %vm488 = vcmask 130048
        %489 = vst.msk [vmem:[%s333] sm:$0xff] %vm488, %v480
        %490 = vst.msk [vmem:[%s333 + $0x8] sm:$0xff] %vm488, %v481
        %491 = vst.msk [vmem:[%s333 + $0x10] sm:$0xff] %vm488, %v482
        %492 = vst.msk [vmem:[%s333 + $0x18] sm:$0xff] %vm488, %v483
        %493 = vst.msk [vmem:[%s333 + $0x20] sm:$0xff] %vm488, %v484
        %494 = vst.msk [vmem:[%s333 + $0x28] sm:$0xff] %vm488, %v485
        %495 = vst.msk [vmem:[%s333 + $0x30] sm:$0xff] %vm488, %v486
        %496 = vst.msk [vmem:[%s333 + $0x38] sm:$0xff] %vm488, %v487
        %s497 = sand.u32 %s165, 1
        %s498 = scalar_lea.sflag [#allocation4], %s497
        %s499 = sand.u32 %s165, 1
        %s500 = smul.addr %s499, 64
        %s501 = scalar_lea.vmem [#allocation11], %s500
        // Predicated region
        $region61: #{_lambda_.15} parent=39 // pred_check
          %p502 = pneg %p175
        $region62: #{_lambda_.15} parent=39 // pred_check_branch
          %504 = sbr.rel (%p502) target = $region64
        $region63: #{_lambda_.15} parent=39 // pred_region
          %s505 = smul.u32 8, %s31
          %s507 = ssub.s32 1024, 1024
          %508 = vsyncadd %s498, %s507
          %s509 = smul.addr %s30, 8
          %s510 = sadd.s32 %s505, %s509
          %s511 = smul.addr %s510, 128
          %s512 = scalar_lea.hbm %s5, %s511
          %s513 = sshll.u32 %s501, 4
          %s514 = int_to_ptr.vmem [resolvable:$true] %s513
          %519 = dma.vmem_to_hbm [thread:$0]  %s514, 1024, %s512, %s498, 128, 128, 8
        $region64: #{_lambda_.15} parent=39 // pred_fallthru
          _
      $region40: #{_lambda_.15} parent=5 // pred_fallthru
        _
      %p520 = scmp.le.s32.totalorder 2, %s21
      // Predicated region
      $region65: #{_lambda_.15} parent=5 // pred_check
        %p521 = pneg %p520
      $region66: #{_lambda_.15} parent=5 // pred_check_branch
        %523 = sbr.rel (%p521) target = $region68
      $region67: #{_lambda_.15} parent=5 // pred_region
        %s524 = ssub.s32 %s21, 2
        // Predicated region
        $region69: #{_lambda_.15} parent=67 // pred_check
          %p525 = pneg %p181
        $region70: #{_lambda_.15} parent=67 // pred_check_branch
          %527 = sbr.rel (%p525) target = $region72
        $region71: #{_lambda_.15} parent=67 // pred_region
          %s528 = sand.u32 %s166, 1
          %s529 = scalar_lea.sflag [#allocation4], %s528
          %s530 = sand.u32 %s166, 1
          %s531 = smul.addr %s530, 64
          %s532 = scalar_lea.vmem [#allocation11], %s531
          %533 = dma.done %s529, 1024
        $region72: #{_lambda_.15} parent=67 // pred_fallthru
          _
      $region68: #{_lambda_.15} parent=5 // pred_fallthru
        _
    $region6: #{_lambda_.15} parent=1 // loop_footer
      %s25 = sadd.s32 1, %s21
    $region7: #{_lambda_.15} parent=1 // loop_footer_branch
      %20 = sbr.rel target = $region3
    $region8: #{_lambda_.15} parent=1 // loop_exit
      _
    %534 = vsyncpa [#allocation3], 1
    %s535 = scalar_lea.sflag [#allocation3], 1
    %536 = vsyncpa %s535, 1
    %537 = vsyncpa [#allocation6], 1
    %s538 = scalar_lea.sflag [#allocation6], 1
    %539 = vsyncpa %s538, 1
    %540 = vsyncpa [#allocation9], 1
    %541 = vsyncpa [#allocation4], 1
    %s542 = scalar_lea.sflag [#allocation4], 1
    %543 = vsyncpa %s542, 1

// kernel: _lambda_.16
$region0: #{_lambda_.16}
  #allocation0 [shape = 'u32[]', space=smem, size = 0x4, offset = 0x4, fixed_abs, tag = 'smem constant byte address 0x4 - core index']
  #allocation1 [shape = 'u32[144,128]{1,0:T(1,128)}', space=vmem, size = 0x12000, scoped, tag = 'internal scratch']
  %s0 = inlined_call_operand.hbm [shape: f32[2,64,16], index: 0, kind: input, shape index: {}]
  %s1 = inlined_call_operand.hbm [shape: bf16[16,96], index: 1, kind: input, shape index: {}]
  %s2 = inlined_call_operand.hbm [shape: f32[1,96], index: 2, kind: input, shape index: {}]
  %s3 = inlined_call_operand.hbm [shape: f32[1,96], index: 3, kind: input, shape index: {}]
  %s4 = inlined_call_operand.hbm [shape: f32[2,64,96], index: 4, kind: output, shape index: {}]
  %s5 = sld [smem:[#allocation0]]
  $region65: #{_lambda_.16} parent=0
    _
  %s7 = ssub.s32 1, %s5
  %s8 = scalar_select 0, %s7, %s5
  $region1: #{_lambda_.16} parent=0
    #allocation2 [shape = 'u8[65536]{0}', space=vmem, size = 0x10000, scoped, tag = 'input window, operand 0']
    #allocation3 [shape = 's32[2]{0}', space=sflag, size = 0x8, scoped, tag = 'scoped memory for _lambda_.16']
    #allocation4 [shape = 's32[2]{0}', space=sflag, size = 0x8, scoped, tag = 'scoped memory for _lambda_.16']
    #allocation5 [shape = 'u8[4096]{0}', space=vmem, size = 0x1000, scoped, tag = 'input window, operand 1, single buffered']
    #allocation6 [shape = 's32[1]{0}', space=sflag, size = 0x4, scoped, tag = 'scoped memory for _lambda_.16']
    #allocation7 [shape = 'u8[512]{0}', space=vmem, size = 0x400, scoped, tag = 'input window, operand 2, single buffered']
    #allocation8 [shape = 'u8[512]{0}', space=vmem, size = 0x400, scoped, tag = 'input window, operand 3, single buffered']
    #allocation9 [shape = 's32[1]{0}', space=sflag, size = 0x4, scoped, tag = 'scoped memory for _lambda_.16']
    #allocation10 [shape = 'u8[65536]{0}', space=vmem, size = 0x10000, scoped, tag = 'output window, operand 0']
    %9 = vsyncpa [#allocation3], 0
    %s10 = scalar_lea.sflag [#allocation3], 1
    %11 = vsyncpa %s10, 0
    %12 = vsyncpa [#allocation6], 0
    %13 = vsyncpa [#allocation9], 0
    %14 = vsyncpa [#allocation4], 0
    %s15 = scalar_lea.sflag [#allocation4], 1
    %16 = vsyncpa %s15, 0
    loop: start=0, step=1, limit=4
    $region2: #{_lambda_.16} parent=1 // loop_pre_header
      _
    $region3: #{_lambda_.16} parent=1 // loop_header
      %s18 = sphi 0, %s22
      %p19 = scmp.ge.s32.totalorder %s18, 4
      %s25 = sphi 0, %s37
      %s26 = sphi 0, %s33
      %s27 = sphi 0, %s25
      %s28 = sphi 0, %s26
      %s29 = sphi 0, %s27
      %s30 = sphi 0, %s28
      %s42 = sphi 0, %s44
      %s45 = sphi 0, %s42
      %s46 = sphi 0, %s45
      %s62 = sphi 0, %s46
      %s66 = sphi 0, %s66
      %s68 = sphi 0, %s66
      %s69 = sphi 0, %s68
      %s83 = sphi 0, %s69
      %s87 = sphi 0, %s87
      %s89 = sphi 0, %s87
      %s90 = sphi 0, %s89
      %s104 = sphi 0, %s90
      %s108 = sphi 0, %s108
      %s110 = sphi 0, %s108
      %s111 = sphi 0, %s110
      %s125 = sphi 0, %s111
      %s133 = sphi 0, %s135
      %s136 = sphi 0, %s133
      %s137 = sphi 0, %s136
      %s153 = sphi 0, %s137
    $region4: #{_lambda_.16} parent=1 // loop_header_branch
      %21 = sbr.rel (%p19) target = $region8
    $region5: #{_lambda_.16} parent=1 // loop_body
      %s23 = ssub.s32 %s18, 1
      %s24 = ssub.s32 %s18, 2
      %s31 = sadd.s32 1, %s26
      %p32 = scmp.ge.s32.totalorder %s31, 1
      %s33 = scalar_select %p32, 0, %s31
      %s34 = sadd.s32 1, %s25
      %s35 = scalar_select %p32, %s34, %s25
      %p36 = scmp.ge.s32.totalorder %s35, 2
      %s37 = scalar_select %p36, 0, %s35
      %s38 = ssub.s32 %s25, %s37
      %s39 = ssub.s32 %s26, %s33
      %s40 = sor.u32 %s38, %s39
      %p41 = scmp.eq.s32.totalorder %s40, 0
      %s43 = sadd.s32 %s42, 1
      %s44 = scalar_select %p41, %s42, %s43
      %p47 = pneg %p41
      %p48 = scmp.eq.s32.totalorder %s18, 1
      %p49 = por %p47, %p48
      %p50 = scmp.ne.s32.totalorder %s42, %s45
      %p51 = scmp.eq.s32.totalorder %s18, 0
      %p52 = por %p50, %p51
      %p53 = scmp.ne.s32.totalorder %s42, %s45
      %p54 = scmp.eq.s32.totalorder %s23, 1
      %p55 = por %p53, %p54
      %p56 = scmp.ne.s32.totalorder %s45, %s46
      %p57 = scmp.eq.s32.totalorder %s23, 0
      %p58 = por %p56, %p57
      %p59 = scmp.ne.s32.totalorder %s45, %s46
      %p60 = scmp.eq.s32.totalorder %s24, 1
      %p61 = por %p59, %p60
      %p63 = scmp.ne.s32.totalorder %s46, %s62
      %p64 = scmp.eq.s32.totalorder %s24, 0
      %p65 = por %p63, %p64
      %s67 = sadd.s32 %s66, 1
      %p70 = scmp.eq.s32.totalorder %s18, 1
      %p71 = scmp.ne.s32.totalorder %s66, %s68
      %p72 = scmp.eq.s32.totalorder %s18, 0
      %p73 = por %p71, %p72
      %p74 = scmp.ne.s32.totalorder %s66, %s68
      %p75 = scmp.eq.s32.totalorder %s23, 1
      %p76 = por %p74, %p75
      %p77 = scmp.ne.s32.totalorder %s68, %s69
      %p78 = scmp.eq.s32.totalorder %s23, 0
      %p79 = por %p77, %p78
      %p80 = scmp.ne.s32.totalorder %s68, %s69
      %p81 = scmp.eq.s32.totalorder %s24, 1
      %p82 = por %p80, %p81
      %p84 = scmp.ne.s32.totalorder %s69, %s83
      %p85 = scmp.eq.s32.totalorder %s24, 0
      %p86 = por %p84, %p85
      %s88 = sadd.s32 %s87, 1
      %p91 = scmp.eq.s32.totalorder %s18, 1
      %p92 = scmp.ne.s32.totalorder %s87, %s89
      %p93 = scmp.eq.s32.totalorder %s18, 0
      %p94 = por %p92, %p93
      %p95 = scmp.ne.s32.totalorder %s87, %s89
      %p96 = scmp.eq.s32.totalorder %s23, 1
      %p97 = por %p95, %p96
      %p98 = scmp.ne.s32.totalorder %s89, %s90
      %p99 = scmp.eq.s32.totalorder %s23, 0
      %p100 = por %p98, %p99
      %p101 = scmp.ne.s32.totalorder %s89, %s90
      %p102 = scmp.eq.s32.totalorder %s24, 1
      %p103 = por %p101, %p102
      %p105 = scmp.ne.s32.totalorder %s90, %s104
      %p106 = scmp.eq.s32.totalorder %s24, 0
      %p107 = por %p105, %p106
      %s109 = sadd.s32 %s108, 1
      %p112 = scmp.eq.s32.totalorder %s18, 1
      %p113 = scmp.ne.s32.totalorder %s108, %s110
      %p114 = scmp.eq.s32.totalorder %s18, 0
      %p115 = por %p113, %p114
      %p116 = scmp.ne.s32.totalorder %s108, %s110
      %p117 = scmp.eq.s32.totalorder %s23, 1
      %p118 = por %p116, %p117
      %p119 = scmp.ne.s32.totalorder %s110, %s111
      %p120 = scmp.eq.s32.totalorder %s23, 0
      %p121 = por %p119, %p120
      %p122 = scmp.ne.s32.totalorder %s110, %s111
      %p123 = scmp.eq.s32.totalorder %s24, 1
      %p124 = por %p122, %p123
      %p126 = scmp.ne.s32.totalorder %s111, %s125
      %p127 = scmp.eq.s32.totalorder %s24, 0
      %p128 = por %p126, %p127
      %s129 = ssub.s32 %s25, %s37
      %s130 = ssub.s32 %s26, %s33
      %s131 = sor.u32 %s129, %s130
      %p132 = scmp.eq.s32.totalorder %s131, 0
      %s134 = sadd.s32 %s133, 1
      %s135 = scalar_select %p132, %s133, %s134
      %p138 = pneg %p132
      %p139 = scmp.eq.s32.totalorder %s18, 1
      %p140 = por %p138, %p139
      %p141 = scmp.ne.s32.totalorder %s133, %s136
      %p142 = scmp.eq.s32.totalorder %s18, 0
      %p143 = por %p141, %p142
      %p144 = scmp.ne.s32.totalorder %s133, %s136
      %p145 = scmp.eq.s32.totalorder %s23, 1
      %p146 = por %p144, %p145
      %p147 = scmp.ne.s32.totalorder %s136, %s137
      %p148 = scmp.eq.s32.totalorder %s23, 0
      %p149 = por %p147, %p148
      %p150 = scmp.ne.s32.totalorder %s136, %s137
      %p151 = scmp.eq.s32.totalorder %s24, 1
      %p152 = por %p150, %p151
      %p154 = scmp.ne.s32.totalorder %s137, %s153
      %p155 = scmp.eq.s32.totalorder %s24, 0
      %p156 = por %p154, %p155
      %p157 = scmp.le.s32.totalorder 1, %s18
      %p158 = scmp.lt.s32.totalorder %s18, 3
      %p159 = pnand %p157, %p158
      %p160 = pneg %p159
      // Predicated region
      $region9: #{_lambda_.16} parent=5 // pred_check
        _
      $region10: #{_lambda_.16} parent=5 // pred_check_branch
        %162 = sbr.rel (%p159) target = $region12
      $region11: #{_lambda_.16} parent=5 // pred_region
        %s163 = ssub.s32 %s18, 1
        // Predicated region
        $region13: #{_lambda_.16} parent=11 // pred_check
          %p164 = pneg %p79
        $region14: #{_lambda_.16} parent=11 // pred_check_branch
          %166 = sbr.rel (%p164) target = $region16
        $region15: #{_lambda_.16} parent=11 // pred_region
          %s168 = ssub.s32 128, 128
          %169 = vsyncadd [#allocation6], %s168
          %s170 = sshll.u32 [#allocation5], 4
          %s171 = int_to_ptr.vmem [resolvable:$true] %s170
          %176 = dma.hbm_to_vmem [thread:$0]  %s1, 128, %s171, [#allocation6], 64, 64, 4
        $region16: #{_lambda_.16} parent=11 // pred_fallthru
          _
        // Predicated region
        $region17: #{_lambda_.16} parent=11 // pred_check
          %p177 = pneg %p100
        $region18: #{_lambda_.16} parent=11 // pred_check_branch
          %179 = sbr.rel (%p177) target = $region20
        $region19: #{_lambda_.16} parent=11 // pred_region
          %s181 = ssub.s32 16, 16
          %182 = vsyncadd [#allocation6], %s181
          %s184 = sshll.u32 [#allocation7], 4
          %s185 = int_to_ptr.vmem [resolvable:$true] %s184
          %187 = dma.hbm_to_vmem [thread:$0]  %s2, 16, %s185, [#allocation6]
        $region20: #{_lambda_.16} parent=11 // pred_fallthru
          _
        // Predicated region
        $region21: #{_lambda_.16} parent=11 // pred_check
          %p188 = pneg %p121
        $region22: #{_lambda_.16} parent=11 // pred_check_branch
          %190 = sbr.rel (%p188) target = $region24
        $region23: #{_lambda_.16} parent=11 // pred_region
          %s192 = ssub.s32 16, 16
          %193 = vsyncadd [#allocation9], %s192
          %s195 = sshll.u32 [#allocation8], 4
          %s196 = int_to_ptr.vmem [resolvable:$true] %s195
          %198 = dma.hbm_to_vmem [thread:$0]  %s3, 16, %s196, [#allocation9]
        $region24: #{_lambda_.16} parent=11 // pred_fallthru
          _
      $region12: #{_lambda_.16} parent=5 // pred_fallthru
        _
      %p199 = scmp.lt.s32.totalorder %s18, 2
      // Predicated region
      $region25: #{_lambda_.16} parent=5 // pred_check
        %p200 = pneg %p199
      $region26: #{_lambda_.16} parent=5 // pred_check_branch
        %202 = sbr.rel (%p200) target = $region28
      $region27: #{_lambda_.16} parent=5 // pred_region
        // Predicated region
        $region29: #{_lambda_.16} parent=27 // pred_check
          %p203 = pneg %p52
        $region30: #{_lambda_.16} parent=27 // pred_check_branch
          %205 = sbr.rel (%p203) target = $region32
        $region31: #{_lambda_.16} parent=27 // pred_region
          %s206 = sand.u32 %s42, 1
          %s207 = scalar_lea.sflag [#allocation3], %s206
          %s208 = sand.u32 %s42, 1
          %s209 = smul.addr %s208, 64
          %s210 = scalar_lea.vmem [#allocation2], %s209
          %s211 = smul.u32 8, %s26
          %s213 = ssub.s32 1024, 1024
          %214 = vsyncadd %s207, %s213
          %s215 = smul.addr %s25, 8
          %s216 = sadd.s32 %s211, %s215
          %s217 = smul.addr %s216, 128
          %s218 = scalar_lea.hbm %s0, %s217
          %s219 = sshll.u32 %s210, 4
          %s220 = int_to_ptr.vmem [resolvable:$true] %s219
          %225 = dma.hbm_to_vmem [thread:$0]  %s218, 1024, %s220, %s207, 128, 128, 8
        $region32: #{_lambda_.16} parent=27 // pred_fallthru
          _
      $region28: #{_lambda_.16} parent=5 // pred_fallthru
        _
      %p226 = scmp.le.s32.totalorder 1, %s18
      %p227 = scmp.lt.s32.totalorder %s18, 3
      %p228 = pnand %p226, %p227
      %p229 = pneg %p228
      // Predicated region
      $region33: #{_lambda_.16} parent=5 // pred_check
        _
      $region34: #{_lambda_.16} parent=5 // pred_check_branch
        %231 = sbr.rel (%p228) target = $region36
      $region35: #{_lambda_.16} parent=5 // pred_region
        %s232 = ssub.s32 %s18, 1
        %s233 = sand.u32 %s45, 1
        %s234 = scalar_lea.sflag [#allocation3], %s233
        %s235 = sand.u32 %s45, 1
        %s236 = smul.addr %s235, 64
        %s237 = scalar_lea.vmem [#allocation2], %s236
        // Predicated region
        $region37: #{_lambda_.16} parent=35 // pred_check
          %p238 = pneg %p58
        $region38: #{_lambda_.16} parent=35 // pred_check_branch
          %240 = sbr.rel (%p238) target = $region40
        $region39: #{_lambda_.16} parent=35 // pred_region
          %241 = dma.done %s234, 1024
        $region40: #{_lambda_.16} parent=35 // pred_fallthru
          _
        // Predicated region
        $region41: #{_lambda_.16} parent=35 // pred_check
          %p242 = pneg %p79
        $region42: #{_lambda_.16} parent=35 // pred_check_branch
          %244 = sbr.rel (%p242) target = $region44
        $region43: #{_lambda_.16} parent=35 // pred_region
          %245 = dma.done [#allocation6], 128
        $region44: #{_lambda_.16} parent=35 // pred_fallthru
          _
        // Predicated region
        $region45: #{_lambda_.16} parent=35 // pred_check
          %p246 = pneg %p100
        $region46: #{_lambda_.16} parent=35 // pred_check_branch
          %248 = sbr.rel (%p246) target = $region48
        $region47: #{_lambda_.16} parent=35 // pred_region
          %249 = dma.done [#allocation6], 16
        $region48: #{_lambda_.16} parent=35 // pred_fallthru
          _
        // Predicated region
        $region49: #{_lambda_.16} parent=35 // pred_check
          %p250 = pneg %p121
        $region50: #{_lambda_.16} parent=35 // pred_check_branch
          %252 = sbr.rel (%p250) target = $region52
        $region51: #{_lambda_.16} parent=35 // pred_region
          %253 = dma.done [#allocation9], 16
        $region52: #{_lambda_.16} parent=35 // pred_fallthru
          _
        %s254 = sand.u32 %s45, 1
        %s255 = scalar_lea.sflag [#allocation3], %s254
        %s256 = sand.u32 %s45, 1
        %s257 = smul.addr %s256, 64
        %s258 = scalar_lea.vmem [#allocation2], %s257
        %p259 = pneg %p58
        %p260 = pneg %p55
        %p261 = pneg %p79
        %p262 = pneg %p76
        %p263 = pneg %p100
        %p264 = pneg %p97
        %p265 = pneg %p121
        %p266 = pneg %p118
        %p267 = pneg %p149
        %p268 = pneg %p146
        %s269 = sand.u32 %s136, 1
        %s270 = scalar_lea.sflag [#allocation4], %s269
        %s271 = sand.u32 %s136, 1
        %s272 = smul.addr %s271, 64
        %s273 = scalar_lea.vmem [#allocation10], %s272
        %s274 = smul.u32 8, %s28
        %s275 = smul.u32 8, %s28
        %v277 = vld [vmem:[%s237] sm:$0xff]
        %v278 = vld [vmem:[%s237 + $0x8] sm:$0xff]
        %v279 = vld [vmem:[%s237 + $0x10] sm:$0xff]
        %v280 = vld [vmem:[%s237 + $0x18] sm:$0xff]
        %v281 = vld [vmem:[%s237 + $0x20] sm:$0xff]
        %v282 = vld [vmem:[%s237 + $0x28] sm:$0xff]
        %v283 = vld [vmem:[%s237 + $0x30] sm:$0xff]
        %v284 = vld [vmem:[%s237 + $0x38] sm:$0xff]
        %v285 = vpack.c.bf16 %v278, %v277
        %v286 = vpack.c.bf16 %v280, %v279
        %v287 = vpack.c.bf16 %v282, %v281
        %v288 = vpack.c.bf16 %v284, %v283
        %v289 = vld [vmem:[#allocation5] sm:$0xf]
        %v290 = vld [vmem:[#allocation5 + $0x4] sm:$0xf]
        %v293 = vunpack.c.l.b16 %v289
        %v294 = vunpack.c.l.b16 %v290
        %v295 = vpack.c.b16 %v294, %v293
        %vm297 = vcmask 130048
        %v299 = vsel %vm297, %v285, 0
        %v302 = vsel %vm297, %v286, 0
        %v305 = vsel %vm297, %v287, 0
        %v308 = vsel %vm297, %v288, 0
        %310 = vmatprep.subr.bf16.mxu0 0
        %311 = vmatpush1.bf16.msra.mxu0 %v295
        %312 = vmatprep.subr.bf16.mxu0 0
        %313 = vmatpush1.bf16.msra.mxu0 0
        %314 = vmatprep.subr.bf16.mxu0 0
        %315 = vmatpush1.bf16.msra.mxu0 0
        %316 = vmatprep.subr.bf16.mxu0 0
        %317 = vmatpush1.bf16.msra.mxu0 0
        %318 = vmatprep.subr.bf16.mxu0 0
        %319 = vmatpush1.bf16.msra.mxu0 0
        %320 = vmatprep.subr.bf16.mxu0 0
        %321 = vmatpush1.bf16.msra.mxu0 0
        %322 = vmatprep.subr.bf16.mxu0 0
        %323 = vmatpush1.bf16.msra.mxu0 0
        %324 = vmatprep.subr.bf16.mxu0 0
        %325 = vmatpush1.bf16.msra.mxu0 0
        %326 = vmatprep.subr.bf16.mxu0 0
        %327 = vmatpush1.bf16.msra.mxu0 0
        %328 = vmatprep.subr.bf16.mxu0 0
        %329 = vmatpush1.bf16.msra.mxu0 0
        %330 = vmatprep.subr.bf16.mxu0 0
        %331 = vmatpush1.bf16.msra.mxu0 0
        %332 = vmatprep.subr.bf16.mxu0 0
        %333 = vmatpush1.bf16.msra.mxu0 0
        %334 = vmatprep.subr.bf16.mxu0 0
        %335 = vmatpush1.bf16.msra.mxu0 0
        %336 = vmatprep.subr.bf16.mxu0 0
        %337 = vmatpush1.bf16.msra.mxu0 0
        %338 = vmatprep.subr.bf16.mxu0 0
        %339 = vmatpush1.bf16.msra.mxu0 0
        %340 = vmatprep.subr.bf16.mxu0 0
        %341 = vmatpush1.bf16.msra.mxu0 0
        %342 = vmatprep.mubr.bf16.mxu0 0
        %343 = vmatmul.mubr.bf16.gmra.mrb[0].mxu0 %v299
        %v344 = vpop.f32.mrb[0].mxu0
        %v345 = vadd.f32 0.0, %v344
        %v346 = vpop.f32.mrb[0].mxu0
        %v347 = vpop.f32.mrb[0].mxu0
        %v348 = vadd.f32 0.0, %v347
        %v349 = vpop.f32.mrb[0].mxu0
        %350 = vmatprep.mubr.bf16.mxu0 0
        %351 = vmatmul.mubr.bf16.gmra.mrb[0].mxu0 %v302
        %v352 = vpop.f32.mrb[0].mxu0
        %v353 = vadd.f32 0.0, %v352
        %v354 = vpop.f32.mrb[0].mxu0
        %v355 = vpop.f32.mrb[0].mxu0
        %v356 = vadd.f32 0.0, %v355
        %v357 = vpop.f32.mrb[0].mxu0
        %358 = vmatprep.mubr.bf16.mxu0 0
        %359 = vmatmul.mubr.bf16.gmra.mrb[0].mxu0 %v305
        %v360 = vpop.f32.mrb[0].mxu0
        %v361 = vadd.f32 0.0, %v360
        %v362 = vpop.f32.mrb[0].mxu0
        %v363 = vpop.f32.mrb[0].mxu0
        %v364 = vadd.f32 0.0, %v363
        %v365 = vpop.f32.mrb[0].mxu0
        %366 = vmatprep.mubr.bf16.mxu0 0
        %367 = vmatmul.mubr.bf16.gmra.mrb[0].mxu0 %v308
        %v368 = vpop.f32.mrb[0].mxu0
        %v369 = vadd.f32 0.0, %v368
        %v370 = vpop.f32.mrb[0].mxu0
        %v371 = vpop.f32.mrb[0].mxu0
        %v372 = vadd.f32 0.0, %v371
        %v373 = vpop.f32.mrb[0].mxu0
        %374 = vdwg.mxu0
        %v375 = vld [vmem:[#allocation7] sm:$0x1]
        %v377 = vlaneseq
        %v378 = vshrl.u32 %v377, 7
        %v379 = vsub.s32 0, %v378
        %v380 = vrot.slane %v375, %v379
        %v382 = vmul.f32 %v345, %v380
        %v383 = vmul.f32 %v348, %v380
        %v384 = vmul.f32 %v353, %v380
        %v385 = vmul.f32 %v356, %v380
        %v386 = vmul.f32 %v361, %v380
        %v387 = vmul.f32 %v364, %v380
        %v388 = vmul.f32 %v369, %v380
        %v389 = vmul.f32 %v372, %v380
        %v390 = vld [vmem:[#allocation8] sm:$0x1]
        %v392 = vlaneseq
        %v393 = vshrl.u32 %v392, 7
        %v394 = vsub.s32 0, %v393
        %v395 = vrot.slane %v390, %v394
        %v397 = vadd.f32 %v382, %v395
        %v398 = vadd.f32 %v383, %v395
        %v399 = vadd.f32 %v384, %v395
        %v400 = vadd.f32 %v385, %v395
        %v401 = vadd.f32 %v386, %v395
        %v402 = vadd.f32 %v387, %v395
        %v403 = vadd.f32 %v388, %v395
        %v404 = vadd.f32 %v389, %v395
        %v405 = vxor.u32 %v397, 2147483648
        %v406 = vxor.u32 %v398, 2147483648
        %v407 = vxor.u32 %v399, 2147483648
        %v408 = vxor.u32 %v400, 2147483648
        %v409 = vxor.u32 %v401, 2147483648
        %v410 = vxor.u32 %v402, 2147483648
        %v411 = vxor.u32 %v403, 2147483648
        %v412 = vxor.u32 %v404, 2147483648
        %v413 = vmul.f32 %v405, 1.442695
        %v414 = vpow.pop %v413
        %v415 = vmul.f32 %v406, 1.442695
        %v416 = vpow.pop %v415
        %v417 = vmul.f32 %v407, 1.442695
        %v418 = vpow.pop %v417
        %v419 = vmul.f32 %v408, 1.442695
        %v420 = vpow.pop %v419
        %v421 = vmul.f32 %v409, 1.442695
        %v422 = vpow.pop %v421
        %v423 = vmul.f32 %v410, 1.442695
        %v424 = vpow.pop %v423
        %v425 = vmul.f32 %v411, 1.442695
        %v426 = vpow.pop %v425
        %v427 = vmul.f32 %v412, 1.442695
        %v428 = vpow.pop %v427
        %v429 = vadd.f32 %v414, 1.0
        %v430 = vadd.f32 %v416, 1.0
        %v431 = vadd.f32 %v418, 1.0
        %v432 = vadd.f32 %v420, 1.0
        %v433 = vadd.f32 %v422, 1.0
        %v434 = vadd.f32 %v424, 1.0
        %v435 = vadd.f32 %v426, 1.0
        %v436 = vadd.f32 %v428, 1.0
        %v437 = vrcp.pop %v429
        %v438 = vmul.f32 1.0, %v437
        %v439 = vrcp.pop %v430
        %v440 = vmul.f32 1.0, %v439
        %v441 = vrcp.pop %v431
        %v442 = vmul.f32 1.0, %v441
        %v443 = vrcp.pop %v432
        %v444 = vmul.f32 1.0, %v443
        %v445 = vrcp.pop %v433
        %v446 = vmul.f32 1.0, %v445
        %v447 = vrcp.pop %v434
        %v448 = vmul.f32 1.0, %v447
        %v449 = vrcp.pop %v435
        %v450 = vmul.f32 1.0, %v449
        %v451 = vrcp.pop %v436
        %v452 = vmul.f32 1.0, %v451
        %v453 = vmul.f32 %v397, %v438
        %v454 = vmul.f32 %v398, %v440
        %v455 = vmul.f32 %v399, %v442
        %v456 = vmul.f32 %v400, %v444
        %v457 = vmul.f32 %v401, %v446
        %v458 = vmul.f32 %v402, %v448
        %v459 = vmul.f32 %v403, %v450
        %v460 = vmul.f32 %v404, %v452
        %vm461 = vcmask 785408
        %462 = vst.msk [vmem:[%s273] sm:$0xff] %vm461, %v453
        %463 = vst.msk [vmem:[%s273 + $0x8] sm:$0xff] %vm461, %v454
        %464 = vst.msk [vmem:[%s273 + $0x10] sm:$0xff] %vm461, %v455
        %465 = vst.msk [vmem:[%s273 + $0x18] sm:$0xff] %vm461, %v456
        %466 = vst.msk [vmem:[%s273 + $0x20] sm:$0xff] %vm461, %v457
        %467 = vst.msk [vmem:[%s273 + $0x28] sm:$0xff] %vm461, %v458
        %468 = vst.msk [vmem:[%s273 + $0x30] sm:$0xff] %vm461, %v459
        %469 = vst.msk [vmem:[%s273 + $0x38] sm:$0xff] %vm461, %v460
        %s470 = sand.u32 %s136, 1
        %s471 = scalar_lea.sflag [#allocation4], %s470
        %s472 = sand.u32 %s136, 1
        %s473 = smul.addr %s472, 64
        %s474 = scalar_lea.vmem [#allocation10], %s473
        // Predicated region
        $region53: #{_lambda_.16} parent=35 // pred_check
          %p475 = pneg %p146
        $region54: #{_lambda_.16} parent=35 // pred_check_branch
          %477 = sbr.rel (%p475) target = $region56
        $region55: #{_lambda_.16} parent=35 // pred_region
          %s478 = smul.u32 8, %s28
          %s480 = ssub.s32 1024, 1024
          %481 = vsyncadd %s471, %s480
          %s482 = smul.addr %s27, 8
          %s483 = sadd.s32 %s478, %s482
          %s484 = smul.addr %s483, 128
          %s485 = scalar_lea.hbm %s4, %s484
          %s486 = sshll.u32 %s474, 4
          %s487 = int_to_ptr.vmem [resolvable:$true] %s486
          %492 = dma.vmem_to_hbm [thread:$0]  %s487, 1024, %s485, %s471, 128, 128, 8
        $region56: #{_lambda_.16} parent=35 // pred_fallthru
          _
      $region36: #{_lambda_.16} parent=5 // pred_fallthru
        _
      %p493 = scmp.le.s32.totalorder 2, %s18
      // Predicated region
      $region57: #{_lambda_.16} parent=5 // pred_check
        %p494 = pneg %p493
      $region58: #{_lambda_.16} parent=5 // pred_check_branch
        %496 = sbr.rel (%p494) target = $region60
      $region59: #{_lambda_.16} parent=5 // pred_region
        %s497 = ssub.s32 %s18, 2
        // Predicated region
        $region61: #{_lambda_.16} parent=59 // pred_check
          %p498 = pneg %p152
        $region62: #{_lambda_.16} parent=59 // pred_check_branch
          %500 = sbr.rel (%p498) target = $region64
        $region63: #{_lambda_.16} parent=59 // pred_region
          %s501 = sand.u32 %s137, 1
          %s502 = scalar_lea.sflag [#allocation4], %s501
          %s503 = sand.u32 %s137, 1
          %s504 = smul.addr %s503, 64
          %s505 = scalar_lea.vmem [#allocation10], %s504
          %506 = dma.done %s502, 1024
        $region64: #{_lambda_.16} parent=59 // pred_fallthru
          _
      $region60: #{_lambda_.16} parent=5 // pred_fallthru
        _
    $region6: #{_lambda_.16} parent=1 // loop_footer
      %s22 = sadd.s32 1, %s18
    $region7: #{_lambda_.16} parent=1 // loop_footer_branch
      %17 = sbr.rel target = $region3
    $region8: #{_lambda_.16} parent=1 // loop_exit
      _
    %507 = vsyncpa [#allocation3], 1
    %s508 = scalar_lea.sflag [#allocation3], 1
    %509 = vsyncpa %s508, 1
    %510 = vsyncpa [#allocation6], 1
    %511 = vsyncpa [#allocation9], 1
    %512 = vsyncpa [#allocation4], 1
    %s513 = scalar_lea.sflag [#allocation4], 1
    %514 = vsyncpa %s513, 1

// kernel: _lambda_.18
$region0: #{_lambda_.18}
  #allocation0 [shape = 'u32[]', space=smem, size = 0x4, offset = 0x4, fixed_abs, tag = 'smem constant byte address 0x4 - core index']
  #allocation1 [shape = 'u32[144,128]{1,0:T(1,128)}', space=vmem, size = 0x12000, scoped, tag = 'internal scratch']
  %s0 = inlined_call_operand.hbm [shape: f32[2,96], index: 0, kind: input, shape index: {}]
  %s1 = inlined_call_operand.hbm [shape: f32[96,8], index: 1, kind: input, shape index: {}]
  %s2 = inlined_call_operand.hbm [shape: f32[1,8], index: 2, kind: input, shape index: {}]
  %s3 = inlined_call_operand.hbm [shape: f32[8,96], index: 3, kind: input, shape index: {}]
  %s4 = inlined_call_operand.hbm [shape: f32[1,96], index: 4, kind: input, shape index: {}]
  %s5 = inlined_call_operand.hbm [shape: f32[2,96], index: 5, kind: output, shape index: {}]
  %s6 = sld [smem:[#allocation0]]
  $region50: #{_lambda_.18} parent=0
    _
  %s8 = ssub.s32 1, %s6
  %s9 = scalar_select 0, %s8, %s6
  $region1: #{_lambda_.18} parent=0
    #allocation2 [shape = 'u8[1024]{0}', space=vmem, size = 0x400, scoped, tag = 'input window, operand 0, single buffered']
    #allocation3 [shape = 's32[1]{0}', space=sflag, size = 0x4, scoped, tag = 'scoped memory for _lambda_.18']
    #allocation4 [shape = 's32[1]{0}', space=sflag, size = 0x4, scoped, tag = 'scoped memory for _lambda_.18']
    #allocation5 [shape = 'u8[49152]{0}', space=vmem, size = 0xc000, scoped, tag = 'input window, operand 1, single buffered']
    #allocation6 [shape = 's32[1]{0}', space=sflag, size = 0x4, scoped, tag = 'scoped memory for _lambda_.18']
    #allocation7 [shape = 'u8[512]{0}', space=vmem, size = 0x400, scoped, tag = 'input window, operand 2, single buffered']
    #allocation8 [shape = 'u8[4096]{0}', space=vmem, size = 0x1000, scoped, tag = 'input window, operand 3, single buffered']
    #allocation9 [shape = 's32[1]{0}', space=sflag, size = 0x4, scoped, tag = 'scoped memory for _lambda_.18']
    #allocation10 [shape = 'u8[512]{0}', space=vmem, size = 0x400, scoped, tag = 'input window, operand 4, single buffered']
    #allocation11 [shape = 'u8[1024]{0}', space=vmem, size = 0x400, scoped, tag = 'output window, operand 0, single buffered']
    %10 = vsyncpa [#allocation3], 0
    %11 = vsyncpa [#allocation6], 0
    %12 = vsyncpa [#allocation9], 0
    %13 = vsyncpa [#allocation4], 0
    // Predicated region
    $region2: #{_lambda_.18} parent=1 // pred_check
      _
    $region3: #{_lambda_.18} parent=1 // pred_check_branch
      %15 = sbr.rel (0) target = $region5
    $region4: #{_lambda_.18} parent=1 // pred_region
      %s17 = ssub.s32 32, 32
      %18 = vsyncadd [#allocation3], %s17
      %s20 = sshll.u32 [#allocation2], 4
      %s21 = int_to_ptr.vmem [resolvable:$true] %s20
      %23 = dma.hbm_to_vmem [thread:$0]  %s0, 32, %s21, [#allocation3]
    $region5: #{_lambda_.18} parent=1 // pred_fallthru
      _
    // Predicated region
    $region6: #{_lambda_.18} parent=1 // pred_check
      _
    $region7: #{_lambda_.18} parent=1 // pred_check_branch
      %25 = sbr.rel (0) target = $region9
    $region8: #{_lambda_.18} parent=1 // pred_region
      %s27 = ssub.s32 1536, 1536
      %28 = vsyncadd [#allocation6], %s27
      %s29 = sshll.u32 [#allocation5], 4
      %s30 = int_to_ptr.vmem [resolvable:$true] %s29
      %35 = dma.hbm_to_vmem [thread:$0]  %s1, 1536, %s30, [#allocation6], 128, 128, 8
    $region9: #{_lambda_.18} parent=1 // pred_fallthru
      _
    // Predicated region
    $region10: #{_lambda_.18} parent=1 // pred_check
      _
    $region11: #{_lambda_.18} parent=1 // pred_check_branch
      %37 = sbr.rel (0) target = $region13
    $region12: #{_lambda_.18} parent=1 // pred_region
      %s39 = ssub.s32 16, 16
      %40 = vsyncadd [#allocation6], %s39
      %s42 = sshll.u32 [#allocation7], 4
      %s43 = int_to_ptr.vmem [resolvable:$true] %s42
      %45 = dma.hbm_to_vmem [thread:$0]  %s2, 16, %s43, [#allocation6]
    $region13: #{_lambda_.18} parent=1 // pred_fallthru
      _
    // Predicated region
    $region14: #{_lambda_.18} parent=1 // pred_check
      _
    $region15: #{_lambda_.18} parent=1 // pred_check_branch
      %47 = sbr.rel (0) target = $region17
    $region16: #{_lambda_.18} parent=1 // pred_region
      %s49 = ssub.s32 128, 128
      %50 = vsyncadd [#allocation9], %s49
      %s52 = sshll.u32 [#allocation8], 4
      %s53 = int_to_ptr.vmem [resolvable:$true] %s52
      %55 = dma.hbm_to_vmem [thread:$0]  %s3, 128, %s53, [#allocation9]
    $region17: #{_lambda_.18} parent=1 // pred_fallthru
      _
    // Predicated region
    $region18: #{_lambda_.18} parent=1 // pred_check
      _
    $region19: #{_lambda_.18} parent=1 // pred_check_branch
      %57 = sbr.rel (0) target = $region21
    $region20: #{_lambda_.18} parent=1 // pred_region
      %s59 = ssub.s32 16, 16
      %60 = vsyncadd [#allocation9], %s59
      %s62 = sshll.u32 [#allocation10], 4
      %s63 = int_to_ptr.vmem [resolvable:$true] %s62
      %65 = dma.hbm_to_vmem [thread:$0]  %s4, 16, %s63, [#allocation9]
    $region21: #{_lambda_.18} parent=1 // pred_fallthru
      _
    // Predicated region
    $region22: #{_lambda_.18} parent=1 // pred_check
      _
    $region23: #{_lambda_.18} parent=1 // pred_check_branch
      %67 = sbr.rel (0) target = $region25
    $region24: #{_lambda_.18} parent=1 // pred_region
      %68 = dma.done [#allocation3], 32
    $region25: #{_lambda_.18} parent=1 // pred_fallthru
      _
    // Predicated region
    $region26: #{_lambda_.18} parent=1 // pred_check
      _
    $region27: #{_lambda_.18} parent=1 // pred_check_branch
      %70 = sbr.rel (0) target = $region29
    $region28: #{_lambda_.18} parent=1 // pred_region
      %71 = dma.done [#allocation6], 1536
    $region29: #{_lambda_.18} parent=1 // pred_fallthru
      _
    // Predicated region
    $region30: #{_lambda_.18} parent=1 // pred_check
      _
    $region31: #{_lambda_.18} parent=1 // pred_check_branch
      %73 = sbr.rel (0) target = $region33
    $region32: #{_lambda_.18} parent=1 // pred_region
      %74 = dma.done [#allocation6], 16
    $region33: #{_lambda_.18} parent=1 // pred_fallthru
      _
    // Predicated region
    $region34: #{_lambda_.18} parent=1 // pred_check
      _
    $region35: #{_lambda_.18} parent=1 // pred_check_branch
      %76 = sbr.rel (0) target = $region37
    $region36: #{_lambda_.18} parent=1 // pred_region
      %77 = dma.done [#allocation9], 128
    $region37: #{_lambda_.18} parent=1 // pred_fallthru
      _
    // Predicated region
    $region38: #{_lambda_.18} parent=1 // pred_check
      _
    $region39: #{_lambda_.18} parent=1 // pred_check_branch
      %79 = sbr.rel (0) target = $region41
    $region40: #{_lambda_.18} parent=1 // pred_region
      %80 = dma.done [#allocation9], 16
    $region41: #{_lambda_.18} parent=1 // pred_fallthru
      _
    %v81 = vld [vmem:[#allocation2] sm:$0x3]
    %v82 = vld [vmem:[#allocation5] sm:$0xff]
    %v83 = vld [vmem:[#allocation5 + $0x8] sm:$0xff]
    %v84 = vld [vmem:[#allocation5 + $0x10] sm:$0xff]
    %v85 = vld [vmem:[#allocation5 + $0x18] sm:$0xff]
    %v86 = vld [vmem:[#allocation5 + $0x20] sm:$0xff]
    %v87 = vld [vmem:[#allocation5 + $0x28] sm:$0xff]
    %v88 = vld [vmem:[#allocation5 + $0x30] sm:$0xff]
    %v89 = vld [vmem:[#allocation5 + $0x38] sm:$0xff]
    %v90 = vld [vmem:[#allocation5 + $0x40] sm:$0xff]
    %v91 = vld [vmem:[#allocation5 + $0x48] sm:$0xff]
    %v92 = vld [vmem:[#allocation5 + $0x50] sm:$0xff]
    %v93 = vld [vmem:[#allocation5 + $0x58] sm:$0xff]
    %v94 = vld [vmem:[#allocation7] sm:$0x1]
    %v96 = vlaneseq
    %v97 = vshrl.u32 %v96, 7
    %v98 = vsub.s32 0, %v97
    %v99 = vrot.slane %v94, %v98
    %vm101 = vcmask 785408
    %v103 = vsel %vm101, %v81, 0
    %105 = vmatprep.subr.mxu0 0.0
    %106 = vmatpush1.msra.mxu0 %v82
    %107 = vmatprep.subr.mxu0 0.0
    %108 = vmatpush1.msra.mxu0 %v83
    %109 = vmatprep.subr.mxu0 0.0
    %110 = vmatpush1.msra.mxu0 %v84
    %111 = vmatprep.subr.mxu0 0.0
    %112 = vmatpush1.msra.mxu0 %v85
    %113 = vmatprep.subr.mxu0 0.0
    %114 = vmatpush1.msra.mxu0 %v86
    %115 = vmatprep.subr.mxu0 0.0
    %116 = vmatpush1.msra.mxu0 %v87
    %117 = vmatprep.subr.mxu0 0.0
    %118 = vmatpush1.msra.mxu0 %v88
    %119 = vmatprep.subr.mxu0 0.0
    %120 = vmatpush1.msra.mxu0 %v89
    %121 = vmatprep.subr.mxu0 0.0
    %122 = vmatpush1.msra.mxu0 %v90
    %123 = vmatprep.subr.mxu0 0.0
    %124 = vmatpush1.msra.mxu0 %v91
    %125 = vmatprep.subr.mxu0 0.0
    %126 = vmatpush1.msra.mxu0 %v92
    %127 = vmatprep.subr.mxu0 0.0
    %128 = vmatpush1.msra.mxu0 %v93
    %129 = vmatprep.subr.mxu0 0.0
    %130 = vmatpush1.msra.mxu0 0.0
    %131 = vmatprep.subr.mxu0 0.0
    %132 = vmatpush1.msra.mxu0 0.0
    %133 = vmatprep.subr.mxu0 0.0
    %134 = vmatpush1.msra.mxu0 0.0
    %135 = vmatprep.subr.mxu0 0.0
    %136 = vmatpush1.msra.mxu0 0.0
    %137 = vmatprep.subr.mxu0 0.0
    %138 = vmatpush1.msra.mxu0 0.0
    %139 = vmatprep.subr.mxu0 0.0
    %140 = vmatpush1.msra.mxu0 0.0
    %141 = vmatprep.subr.mxu0 0.0
    %142 = vmatpush1.msra.mxu0 0.0
    %143 = vmatprep.subr.mxu0 0.0
    %144 = vmatpush1.msra.mxu0 0.0
    %145 = vmatprep.subr.mxu0 0.0
    %146 = vmatpush1.msra.mxu0 0.0
    %147 = vmatprep.subr.mxu0 0.0
    %148 = vmatpush1.msra.mxu0 0.0
    %149 = vmatprep.subr.mxu0 0.0
    %150 = vmatpush1.msra.mxu0 0.0
    %151 = vmatprep.subr.mxu0 0.0
    %152 = vmatpush1.msra.mxu0 0.0
    %153 = vmatprep.subr.mxu0 0.0
    %154 = vmatpush1.msra.mxu0 0.0
    %155 = vmatprep.subr.mxu0 0.0
    %156 = vmatpush1.msra.mxu0 0.0
    %157 = vmatprep.subr.mxu0 0.0
    %158 = vmatpush1.msra.mxu0 0.0
    %159 = vmatprep.subr.mxu0 0.0
    %160 = vmatpush1.msra.mxu0 0.0
    %161 = vmatprep.subr.mxu0 0.0
    %162 = vmatpush1.msra.mxu0 0.0
    %163 = vmatprep.subr.mxu0 0.0
    %164 = vmatpush1.msra.mxu0 0.0
    %165 = vmatprep.subr.mxu0 0.0
    %166 = vmatpush1.msra.mxu0 0.0
    %167 = vmatprep.subr.mxu0 0.0
    %168 = vmatpush1.msra.mxu0 0.0
    %169 = vmatprep.mubr.f32.mxu0 0.0
    %170 = vmatmul.mubr.f32.gmra.mrb[0].mxu0 %v103
    %v171 = vpop.f32.mrb[0].mxu0
    %v172 = vadd.f32 %v99, %v171
    %v173 = vpop.f32.mrb[0].mxu0
    %174 = vdwg.mxu0
    %v175 = vxor.u32 %v172, 2147483648
    %v176 = vmul.f32 %v175, 1.442695
    %v177 = vpow.pop %v176
    %v178 = vadd.f32 %v177, 1.0
    %v179 = vrcp.pop %v178
    %v180 = vmul.f32 1.0, %v179
    %v181 = vmul.f32 %v172, %v180
    %v182 = vld [vmem:[#allocation8] sm:$0xff]
    %v183 = vld [vmem:[#allocation10] sm:$0x1]
    %v185 = vlaneseq
    %v186 = vshrl.u32 %v185, 7
    %v187 = vsub.s32 0, %v186
    %v188 = vrot.slane %v183, %v187
    %vm190 = vcmask 64512
    %v192 = vsel %vm190, %v181, 0
    %194 = vmatprep.subr.mxu0 0.0
    %195 = vmatpush1.msra.mxu0 %v182
    %196 = vmatprep.subr.mxu0 0.0
    %197 = vmatpush1.msra.mxu0 0.0
    %198 = vmatprep.subr.mxu0 0.0
    %199 = vmatpush1.msra.mxu0 0.0
    %200 = vmatprep.subr.mxu0 0.0
    %201 = vmatpush1.msra.mxu0 0.0
    %202 = vmatprep.subr.mxu0 0.0
    %203 = vmatpush1.msra.mxu0 0.0
    %204 = vmatprep.subr.mxu0 0.0
    %205 = vmatpush1.msra.mxu0 0.0
    %206 = vmatprep.subr.mxu0 0.0
    %207 = vmatpush1.msra.mxu0 0.0
    %208 = vmatprep.subr.mxu0 0.0
    %209 = vmatpush1.msra.mxu0 0.0
    %210 = vmatprep.subr.mxu0 0.0
    %211 = vmatpush1.msra.mxu0 0.0
    %212 = vmatprep.subr.mxu0 0.0
    %213 = vmatpush1.msra.mxu0 0.0
    %214 = vmatprep.subr.mxu0 0.0
    %215 = vmatpush1.msra.mxu0 0.0
    %216 = vmatprep.subr.mxu0 0.0
    %217 = vmatpush1.msra.mxu0 0.0
    %218 = vmatprep.subr.mxu0 0.0
    %219 = vmatpush1.msra.mxu0 0.0
    %220 = vmatprep.subr.mxu0 0.0
    %221 = vmatpush1.msra.mxu0 0.0
    %222 = vmatprep.subr.mxu0 0.0
    %223 = vmatpush1.msra.mxu0 0.0
    %224 = vmatprep.subr.mxu0 0.0
    %225 = vmatpush1.msra.mxu0 0.0
    %226 = vmatprep.subr.mxu0 0.0
    %227 = vmatpush1.msra.mxu0 0.0
    %228 = vmatprep.subr.mxu0 0.0
    %229 = vmatpush1.msra.mxu0 0.0
    %230 = vmatprep.subr.mxu0 0.0
    %231 = vmatpush1.msra.mxu0 0.0
    %232 = vmatprep.subr.mxu0 0.0
    %233 = vmatpush1.msra.mxu0 0.0
    %234 = vmatprep.subr.mxu0 0.0
    %235 = vmatpush1.msra.mxu0 0.0
    %236 = vmatprep.subr.mxu0 0.0
    %237 = vmatpush1.msra.mxu0 0.0
    %238 = vmatprep.subr.mxu0 0.0
    %239 = vmatpush1.msra.mxu0 0.0
    %240 = vmatprep.subr.mxu0 0.0
    %241 = vmatpush1.msra.mxu0 0.0
    %242 = vmatprep.subr.mxu0 0.0
    %243 = vmatpush1.msra.mxu0 0.0
    %244 = vmatprep.subr.mxu0 0.0
    %245 = vmatpush1.msra.mxu0 0.0
    %246 = vmatprep.subr.mxu0 0.0
    %247 = vmatpush1.msra.mxu0 0.0
    %248 = vmatprep.subr.mxu0 0.0
    %249 = vmatpush1.msra.mxu0 0.0
    %250 = vmatprep.subr.mxu0 0.0
    %251 = vmatpush1.msra.mxu0 0.0
    %252 = vmatprep.subr.mxu0 0.0
    %253 = vmatpush1.msra.mxu0 0.0
    %254 = vmatprep.subr.mxu0 0.0
    %255 = vmatpush1.msra.mxu0 0.0
    %256 = vmatprep.subr.mxu0 0.0
    %257 = vmatpush1.msra.mxu0 0.0
    %258 = vmatprep.mubr.f32.mxu0 0.0
    %259 = vmatmul.mubr.f32.gmra.mrb[0].mxu0 %v192
    %v260 = vpop.f32.mrb[0].mxu0
    %v261 = vadd.f32 %v188, %v260
    %v262 = vpop.f32.mrb[0].mxu0
    %263 = vdwg.mxu0
    %v264 = vxor.u32 %v261, 2147483648
    %v265 = vmul.f32 %v264, 1.442695
    %v266 = vpow.pop %v265
    %v267 = vadd.f32 %v266, 1.0
    %v268 = vrcp.pop %v267
    %v269 = vmul.f32 1.0, %v268
    %vm270 = vcmask 779264
    %271 = vst.msk [vmem:[#allocation11] sm:$0x3] %vm270, %v269
    // Predicated region
    $region42: #{_lambda_.18} parent=1 // pred_check
      _
    $region43: #{_lambda_.18} parent=1 // pred_check_branch
      %273 = sbr.rel (0) target = $region45
    $region44: #{_lambda_.18} parent=1 // pred_region
      %s275 = ssub.s32 32, 32
      %276 = vsyncadd [#allocation4], %s275
      %s278 = sshll.u32 [#allocation11], 4
      %s279 = int_to_ptr.vmem [resolvable:$true] %s278
      %281 = dma.vmem_to_hbm [thread:$0]  %s279, 32, %s5, [#allocation4]
    $region45: #{_lambda_.18} parent=1 // pred_fallthru
      _
    // Predicated region
    $region46: #{_lambda_.18} parent=1 // pred_check
      _
    $region47: #{_lambda_.18} parent=1 // pred_check_branch
      %283 = sbr.rel (0) target = $region49
    $region48: #{_lambda_.18} parent=1 // pred_region
      %284 = dma.done [#allocation4], 32
    $region49: #{_lambda_.18} parent=1 // pred_fallthru
      _
    %285 = vsyncpa [#allocation3], 1
    %286 = vsyncpa [#allocation6], 1
    %287 = vsyncpa [#allocation9], 1
    %288 = vsyncpa [#allocation4], 1

// kernel: _lambda_.17
$region0: #{_lambda_.17}
  #allocation0 [shape = 'u32[]', space=smem, size = 0x4, offset = 0x4, fixed_abs, tag = 'smem constant byte address 0x4 - core index']
  #allocation1 [shape = 'u32[144,128]{1,0:T(1,128)}', space=vmem, size = 0x12000, scoped, tag = 'internal scratch']
  %s0 = inlined_call_operand.hbm [shape: f32[2,4,5,5,96], index: 0, kind: input, shape index: {}]
  %s1 = inlined_call_operand.hbm [shape: f32[9,1,96], index: 1, kind: input, shape index: {}]
  %s2 = inlined_call_operand.hbm [shape: f32[1,96], index: 2, kind: input, shape index: {}]
  %s3 = inlined_call_operand.hbm [shape: f32[2,4,4,96], index: 3, kind: output, shape index: {0}]
  %s4 = inlined_call_operand.hbm [shape: f32[2,1,96], index: 4, kind: output, shape index: {1}]
  %5 = xla_tuple %s3, %s4
  %s6 = sld [smem:[#allocation0]]
  $region65: #{_lambda_.17} parent=0
    _
  %s8 = ssub.s32 1, %s6
  %s9 = scalar_select 0, %s8, %s6
  $region1: #{_lambda_.17} parent=0
    #allocation2 [shape = 'u8[163840]{0}', space=vmem, size = 0x28000, scoped, tag = 'input window, operand 0']
    #allocation3 [shape = 's32[2]{0}', space=sflag, size = 0x8, scoped, tag = 'scoped memory for _lambda_.17']
    #allocation4 [shape = 's32[2]{0}', space=sflag, size = 0x8, scoped, tag = 'scoped memory for _lambda_.17']
    #allocation5 [shape = 'u8[4608]{0}', space=vmem, size = 0x1400, scoped, tag = 'input window, operand 1, single buffered']
    #allocation6 [shape = 's32[1]{0}', space=sflag, size = 0x4, scoped, tag = 'scoped memory for _lambda_.17']
    #allocation7 [shape = 'u8[512]{0}', space=vmem, size = 0x400, scoped, tag = 'input window, operand 2, single buffered']
    #allocation8 [shape = 'u8[16384]{0}', space=vmem, size = 0x4000, scoped, tag = 'output window, operand 0']
    #allocation9 [shape = 'u8[1024]{0}', space=vmem, size = 0x400, scoped, tag = 'output window, operand 1']
    #allocation10 [shape = 's32[2]{0}', space=sflag, size = 0x8, scoped, tag = 'scoped memory for _lambda_.17']
    %10 = vsyncpa [#allocation3], 0
    %s11 = scalar_lea.sflag [#allocation3], 1
    %12 = vsyncpa %s11, 0
    %13 = vsyncpa [#allocation6], 0
    %14 = vsyncpa [#allocation4], 0
    %s15 = scalar_lea.sflag [#allocation4], 1
    %16 = vsyncpa %s15, 0
    %17 = vsyncpa [#allocation10], 0
    %s18 = scalar_lea.sflag [#allocation10], 1
    %19 = vsyncpa %s18, 0
    loop: start=0, step=1, limit=4
    $region2: #{_lambda_.17} parent=1 // loop_pre_header
      _
    $region3: #{_lambda_.17} parent=1 // loop_header
      %s21 = sphi 0, %s25
      %p22 = scmp.ge.s32.totalorder %s21, 4
      %s31 = sphi 0, %s33
      %s34 = sphi 0, %s31
      %s35 = sphi 0, %s34
      %s51 = sphi 0, %s35
      %s55 = sphi 0, %s55
      %s57 = sphi 0, %s55
      %s58 = sphi 0, %s57
      %s72 = sphi 0, %s58
      %s76 = sphi 0, %s76
      %s78 = sphi 0, %s76
      %s79 = sphi 0, %s78
      %s93 = sphi 0, %s79
      %s99 = sphi 0, %s101
      %s102 = sphi 0, %s99
      %s103 = sphi 0, %s102
      %s119 = sphi 0, %s103
      %s125 = sphi 0, %s127
      %s128 = sphi 0, %s125
      %s129 = sphi 0, %s128
      %s145 = sphi 0, %s129
    $region4: #{_lambda_.17} parent=1 // loop_header_branch
      %24 = sbr.rel (%p22) target = $region8
    $region5: #{_lambda_.17} parent=1 // loop_body
      %s26 = ssub.s32 %s21, 1
      %s27 = ssub.s32 %s21, 2
      %s28 = sadd.s32 %s21, 1
      %s29 = ssub.s32 %s21, %s28
      %p30 = scmp.eq.s32.totalorder %s29, 0
      %s32 = sadd.s32 %s31, 1
      %s33 = scalar_select %p30, %s31, %s32
      %p36 = pneg %p30
      %p37 = scmp.eq.s32.totalorder %s21, 1
      %p38 = por %p36, %p37
      %p39 = scmp.ne.s32.totalorder %s31, %s34
      %p40 = scmp.eq.s32.totalorder %s21, 0
      %p41 = por %p39, %p40
      %p42 = scmp.ne.s32.totalorder %s31, %s34
      %p43 = scmp.eq.s32.totalorder %s26, 1
      %p44 = por %p42, %p43
      %p45 = scmp.ne.s32.totalorder %s34, %s35
      %p46 = scmp.eq.s32.totalorder %s26, 0
      %p47 = por %p45, %p46
      %p48 = scmp.ne.s32.totalorder %s34, %s35
      %p49 = scmp.eq.s32.totalorder %s27, 1
      %p50 = por %p48, %p49
      %p52 = scmp.ne.s32.totalorder %s35, %s51
      %p53 = scmp.eq.s32.totalorder %s27, 0
      %p54 = por %p52, %p53
      %s56 = sadd.s32 %s55, 1
      %p59 = scmp.eq.s32.totalorder %s21, 1
      %p60 = scmp.ne.s32.totalorder %s55, %s57
      %p61 = scmp.eq.s32.totalorder %s21, 0
      %p62 = por %p60, %p61
      %p63 = scmp.ne.s32.totalorder %s55, %s57
      %p64 = scmp.eq.s32.totalorder %s26, 1
      %p65 = por %p63, %p64
      %p66 = scmp.ne.s32.totalorder %s57, %s58
      %p67 = scmp.eq.s32.totalorder %s26, 0
      %p68 = por %p66, %p67
      %p69 = scmp.ne.s32.totalorder %s57, %s58
      %p70 = scmp.eq.s32.totalorder %s27, 1
      %p71 = por %p69, %p70
      %p73 = scmp.ne.s32.totalorder %s58, %s72
      %p74 = scmp.eq.s32.totalorder %s27, 0
      %p75 = por %p73, %p74
      %s77 = sadd.s32 %s76, 1
      %p80 = scmp.eq.s32.totalorder %s21, 1
      %p81 = scmp.ne.s32.totalorder %s76, %s78
      %p82 = scmp.eq.s32.totalorder %s21, 0
      %p83 = por %p81, %p82
      %p84 = scmp.ne.s32.totalorder %s76, %s78
      %p85 = scmp.eq.s32.totalorder %s26, 1
      %p86 = por %p84, %p85
      %p87 = scmp.ne.s32.totalorder %s78, %s79
      %p88 = scmp.eq.s32.totalorder %s26, 0
      %p89 = por %p87, %p88
      %p90 = scmp.ne.s32.totalorder %s78, %s79
      %p91 = scmp.eq.s32.totalorder %s27, 1
      %p92 = por %p90, %p91
      %p94 = scmp.ne.s32.totalorder %s79, %s93
      %p95 = scmp.eq.s32.totalorder %s27, 0
      %p96 = por %p94, %p95
      %s97 = ssub.s32 %s21, %s28
      %p98 = scmp.eq.s32.totalorder %s97, 0
      %s100 = sadd.s32 %s99, 1
      %s101 = scalar_select %p98, %s99, %s100
      %p104 = pneg %p98
      %p105 = scmp.eq.s32.totalorder %s21, 1
      %p106 = por %p104, %p105
      %p107 = scmp.ne.s32.totalorder %s99, %s102
      %p108 = scmp.eq.s32.totalorder %s21, 0
      %p109 = por %p107, %p108
      %p110 = scmp.ne.s32.totalorder %s99, %s102
      %p111 = scmp.eq.s32.totalorder %s26, 1
      %p112 = por %p110, %p111
      %p113 = scmp.ne.s32.totalorder %s102, %s103
      %p114 = scmp.eq.s32.totalorder %s26, 0
      %p115 = por %p113, %p114
      %p116 = scmp.ne.s32.totalorder %s102, %s103
      %p117 = scmp.eq.s32.totalorder %s27, 1
      %p118 = por %p116, %p117
      %p120 = scmp.ne.s32.totalorder %s103, %s119
      %p121 = scmp.eq.s32.totalorder %s27, 0
      %p122 = por %p120, %p121
      %s123 = ssub.s32 %s21, %s28
      %p124 = scmp.eq.s32.totalorder %s123, 0
      %s126 = sadd.s32 %s125, 1
      %s127 = scalar_select %p124, %s125, %s126
      %p130 = pneg %p124
      %p131 = scmp.eq.s32.totalorder %s21, 1
      %p132 = por %p130, %p131
      %p133 = scmp.ne.s32.totalorder %s125, %s128
      %p134 = scmp.eq.s32.totalorder %s21, 0
      %p135 = por %p133, %p134
      %p136 = scmp.ne.s32.totalorder %s125, %s128
      %p137 = scmp.eq.s32.totalorder %s26, 1
      %p138 = por %p136, %p137
      %p139 = scmp.ne.s32.totalorder %s128, %s129
      %p140 = scmp.eq.s32.totalorder %s26, 0
      %p141 = por %p139, %p140
      %p142 = scmp.ne.s32.totalorder %s128, %s129
      %p143 = scmp.eq.s32.totalorder %s27, 1
      %p144 = por %p142, %p143
      %p146 = scmp.ne.s32.totalorder %s129, %s145
      %p147 = scmp.eq.s32.totalorder %s27, 0
      %p148 = por %p146, %p147
      %p149 = scmp.le.s32.totalorder 1, %s21
      %p150 = scmp.lt.s32.totalorder %s21, 3
      %p151 = pnand %p149, %p150
      %p152 = pneg %p151
      // Predicated region
      $region9: #{_lambda_.17} parent=5 // pred_check
        _
      $region10: #{_lambda_.17} parent=5 // pred_check_branch
        %154 = sbr.rel (%p151) target = $region12
      $region11: #{_lambda_.17} parent=5 // pred_region
        %s155 = ssub.s32 %s21, 1
        // Predicated region
        $region13: #{_lambda_.17} parent=11 // pred_check
          %p156 = pneg %p68
        $region14: #{_lambda_.17} parent=11 // pred_check_branch
          %158 = sbr.rel (%p156) target = $region16
        $region15: #{_lambda_.17} parent=11 // pred_region
          %s160 = ssub.s32 144, 144
          %161 = vsyncadd [#allocation6], %s160
          %s162 = sshll.u32 [#allocation5], 4
          %s163 = int_to_ptr.vmem [resolvable:$true] %s162
          %168 = dma.hbm_to_vmem [thread:$0]  %s1, 144, %s163, [#allocation6], 16, 16, 1
        $region16: #{_lambda_.17} parent=11 // pred_fallthru
          _
        // Predicated region
        $region17: #{_lambda_.17} parent=11 // pred_check
          %p169 = pneg %p89
        $region18: #{_lambda_.17} parent=11 // pred_check_branch
          %171 = sbr.rel (%p169) target = $region20
        $region19: #{_lambda_.17} parent=11 // pred_region
          %s173 = ssub.s32 16, 16
          %174 = vsyncadd [#allocation6], %s173
          %s176 = sshll.u32 [#allocation7], 4
          %s177 = int_to_ptr.vmem [resolvable:$true] %s176
          %179 = dma.hbm_to_vmem [thread:$0]  %s2, 16, %s177, [#allocation6]
        $region20: #{_lambda_.17} parent=11 // pred_fallthru
          _
      $region12: #{_lambda_.17} parent=5 // pred_fallthru
        _
      %p180 = scmp.lt.s32.totalorder %s21, 2
      // Predicated region
      $region21: #{_lambda_.17} parent=5 // pred_check
        %p181 = pneg %p180
      $region22: #{_lambda_.17} parent=5 // pred_check_branch
        %183 = sbr.rel (%p181) target = $region24
      $region23: #{_lambda_.17} parent=5 // pred_region
        // Predicated region
        $region25: #{_lambda_.17} parent=23 // pred_check
          %p184 = pneg %p41
        $region26: #{_lambda_.17} parent=23 // pred_check_branch
          %186 = sbr.rel (%p184) target = $region28
        $region27: #{_lambda_.17} parent=23 // pred_region
          %s187 = sand.u32 %s31, 1
          %s188 = scalar_lea.sflag [#allocation3], %s187
          %s189 = sand.u32 %s31, 1
          %s190 = smul.addr %s189, 160
          %s191 = scalar_lea.vmem [#allocation2], %s190
          %s193 = ssub.s32 2560, 2560
          %194 = vsyncadd %s188, %s193
          %s195 = smul.addr %s21, 20
          %s196 = smul.addr %s195, 128
          %s197 = scalar_lea.hbm %s0, %s196
          %s198 = sshll.u32 %s191, 4
          %s199 = int_to_ptr.vmem [resolvable:$true] %s198
          %204 = dma.hbm_to_vmem [thread:$0]  %s197, 2560, %s199, %s188, 128, 128, 8
        $region28: #{_lambda_.17} parent=23 // pred_fallthru
          _
      $region24: #{_lambda_.17} parent=5 // pred_fallthru
        _
      %p205 = scmp.le.s32.totalorder 1, %s21
      %p206 = scmp.lt.s32.totalorder %s21, 3
      %p207 = pnand %p205, %p206
      %p208 = pneg %p207
      // Predicated region
      $region29: #{_lambda_.17} parent=5 // pred_check
        _
      $region30: #{_lambda_.17} parent=5 // pred_check_branch
        %210 = sbr.rel (%p207) target = $region32
      $region31: #{_lambda_.17} parent=5 // pred_region
        %s211 = ssub.s32 %s21, 1
        %s212 = sand.u32 %s34, 1
        %s213 = scalar_lea.sflag [#allocation3], %s212
        %s214 = sand.u32 %s34, 1
        %s215 = smul.addr %s214, 160
        %s216 = scalar_lea.vmem [#allocation2], %s215
        // Predicated region
        $region33: #{_lambda_.17} parent=31 // pred_check
          %p217 = pneg %p47
        $region34: #{_lambda_.17} parent=31 // pred_check_branch
          %219 = sbr.rel (%p217) target = $region36
        $region35: #{_lambda_.17} parent=31 // pred_region
          %220 = dma.done %s213, 2560
        $region36: #{_lambda_.17} parent=31 // pred_fallthru
          _
        // Predicated region
        $region37: #{_lambda_.17} parent=31 // pred_check
          %p221 = pneg %p68
        $region38: #{_lambda_.17} parent=31 // pred_check_branch
          %223 = sbr.rel (%p221) target = $region40
        $region39: #{_lambda_.17} parent=31 // pred_region
          %224 = dma.done [#allocation6], 144
        $region40: #{_lambda_.17} parent=31 // pred_fallthru
          _
        // Predicated region
        $region41: #{_lambda_.17} parent=31 // pred_check
          %p225 = pneg %p89
        $region42: #{_lambda_.17} parent=31 // pred_check_branch
          %227 = sbr.rel (%p225) target = $region44
        $region43: #{_lambda_.17} parent=31 // pred_region
          %228 = dma.done [#allocation6], 16
        $region44: #{_lambda_.17} parent=31 // pred_fallthru
          _
        %s229 = sand.u32 %s34, 1
        %s230 = scalar_lea.sflag [#allocation3], %s229
        %s231 = sand.u32 %s34, 1
        %s232 = smul.addr %s231, 160
        %s233 = scalar_lea.vmem [#allocation2], %s232
        %p234 = pneg %p47
        %p235 = pneg %p44
        %p236 = pneg %p68
        %p237 = pneg %p65
        %p238 = pneg %p89
        %p239 = pneg %p86
        %p240 = pneg %p115
        %p241 = pneg %p112
        %s242 = sand.u32 %s102, 1
        %s243 = scalar_lea.sflag [#allocation4], %s242
        %s244 = sand.u32 %s102, 1
        %s245 = smul.addr %s244, 16
        %s246 = scalar_lea.vmem [#allocation8], %s245
        %p247 = pneg %p141
        %p248 = pneg %p138
        %s249 = sand.u32 %s128, 1
        %s250 = scalar_lea.sflag [#allocation10], %s249
        %s251 = sand.u32 %s128, 1
        %s252 = scalar_lea.vmem [#allocation9], %s251
        %v253 = vld [vmem:[%s216] sm:$0xf]
        %v254 = vld [vmem:[%s216 + $0x8] sm:$0xf]
        %v255 = vld [vmem:[%s216 + $0x10] sm:$0xf]
        %v256 = vld [vmem:[%s216 + $0x18] sm:$0xf]
        %v257 = vld [vmem:[#allocation5] sm:$0x1]
        %v259 = vlaneseq
        %v260 = vshrl.u32 %v259, 7
        %v261 = vsub.s32 0, %v260
        %v262 = vrot.slane %v257, %v261
        %v264 = vmul.f32 %v253, %v262
        %v265 = vmul.f32 %v254, %v262
        %v266 = vmul.f32 %v255, %v262
        %v267 = vmul.f32 %v256, %v262
        %v268 = vadd.f32 %v264, 0.0
        %v269 = vadd.f32 %v265, 0.0
        %v270 = vadd.f32 %v266, 0.0
        %v271 = vadd.f32 %v267, 0.0
        %s272 = scalar_lea.vmem %s216, 40 [#allocation2]
        %v273 = vld [vmem:[%s272] sm:$0xf]
        %v274 = vld [vmem:[%s272 + $0x8] sm:$0xf]
        %v275 = vld [vmem:[%s272 + $0x10] sm:$0xf]
        %v276 = vld [vmem:[%s272 + $0x18] sm:$0xf]
        %s277 = scalar_lea.vmem [#allocation5], 1
        %v278 = vld [vmem:[%s277] sm:$0x1]
        %v280 = vlaneseq
        %v281 = vshrl.u32 %v280, 7
        %v282 = vsub.s32 0, %v281
        %v283 = vrot.slane %v278, %v282
        %v285 = vmul.f32 %v273, %v283
        %v286 = vmul.f32 %v274, %v283
        %v287 = vmul.f32 %v275, %v283
        %v288 = vmul.f32 %v276, %v283
        %v289 = vadd.f32 %v268, %v285
        %v290 = vadd.f32 %v269, %v286
        %v291 = vadd.f32 %v270, %v287
        %v292 = vadd.f32 %v271, %v288
        %v293 = vld [vmem:[%s216 + $0x1] sm:$0xf]
        %v294 = vld [vmem:[%s216 + $0x9] sm:$0xf]
        %v295 = vld [vmem:[%s216 + $0x11] sm:$0xf]
        %v296 = vld [vmem:[%s216 + $0x19] sm:$0xf]
        %s297 = scalar_lea.vmem [#allocation5], 2
        %v298 = vld [vmem:[%s297] sm:$0x1]
        %v300 = vlaneseq
        %v301 = vshrl.u32 %v300, 7
        %v302 = vsub.s32 0, %v301
        %v303 = vrot.slane %v298, %v302
        %v305 = vmul.f32 %v293, %v303
        %v306 = vmul.f32 %v294, %v303
        %v307 = vmul.f32 %v295, %v303
        %v308 = vmul.f32 %v296, %v303
        %v309 = vadd.f32 %v289, %v305
        %v310 = vadd.f32 %v290, %v306
        %v311 = vadd.f32 %v291, %v307
        %v312 = vadd.f32 %v292, %v308
        %s313 = scalar_lea.vmem %s216, 80 [#allocation2]
        %v314 = vld [vmem:[%s313] sm:$0xf]
        %v315 = vld [vmem:[%s313 + $0x8] sm:$0xf]
        %v316 = vld [vmem:[%s313 + $0x10] sm:$0xf]
        %v317 = vld [vmem:[%s313 + $0x18] sm:$0xf]
        %s318 = scalar_lea.vmem [#allocation5], 3
        %v319 = vld [vmem:[%s318] sm:$0x1]
        %v321 = vlaneseq
        %v322 = vshrl.u32 %v321, 7
        %v323 = vsub.s32 0, %v322
        %v324 = vrot.slane %v319, %v323
        %v326 = vmul.f32 %v314, %v324
        %v327 = vmul.f32 %v315, %v324
        %v328 = vmul.f32 %v316, %v324
        %v329 = vmul.f32 %v317, %v324
        %v330 = vadd.f32 %v309, %v326
        %v331 = vadd.f32 %v310, %v327
        %v332 = vadd.f32 %v311, %v328
        %v333 = vadd.f32 %v312, %v329
        %s334 = scalar_lea.vmem %s216, 120 [#allocation2]
        %v335 = vld [vmem:[%s334] sm:$0xf]
        %v336 = vld [vmem:[%s334 + $0x8] sm:$0xf]
        %v337 = vld [vmem:[%s334 + $0x10] sm:$0xf]
        %v338 = vld [vmem:[%s334 + $0x18] sm:$0xf]
        %s339 = scalar_lea.vmem [#allocation5], 4
        %v340 = vld [vmem:[%s339] sm:$0x1]
        %v342 = vlaneseq
        %v343 = vshrl.u32 %v342, 7
        %v344 = vsub.s32 0, %v343
        %v345 = vrot.slane %v340, %v344
        %v347 = vmul.f32 %v335, %v345
        %v348 = vmul.f32 %v336, %v345
        %v349 = vmul.f32 %v337, %v345
        %v350 = vmul.f32 %v338, %v345
        %v351 = vadd.f32 %v330, %v347
        %v352 = vadd.f32 %v331, %v348
        %v353 = vadd.f32 %v332, %v349
        %v354 = vadd.f32 %v333, %v350
        %v355 = vld [vmem:[%s313 + $0x1] sm:$0xf]
        %v356 = vld [vmem:[%s313 + $0x9] sm:$0xf]
        %v357 = vld [vmem:[%s313 + $0x11] sm:$0xf]
        %v358 = vld [vmem:[%s313 + $0x19] sm:$0xf]
        %s359 = scalar_lea.vmem [#allocation5], 5
        %v360 = vld [vmem:[%s359] sm:$0x1]
        %v362 = vlaneseq
        %v363 = vshrl.u32 %v362, 7
        %v364 = vsub.s32 0, %v363
        %v365 = vrot.slane %v360, %v364
        %v367 = vmul.f32 %v355, %v365
        %v368 = vmul.f32 %v356, %v365
        %v369 = vmul.f32 %v357, %v365
        %v370 = vmul.f32 %v358, %v365
        %v371 = vadd.f32 %v351, %v367
        %v372 = vadd.f32 %v352, %v368
        %v373 = vadd.f32 %v353, %v369
        %v374 = vadd.f32 %v354, %v370
        %s375 = scalar_lea.vmem %s216, 8 [#allocation2]
        %v376 = vld [vmem:[%s375] sm:$0xf]
        %v377 = vld [vmem:[%s375 + $0x8] sm:$0xf]
        %v378 = vld [vmem:[%s375 + $0x10] sm:$0xf]
        %v379 = vld [vmem:[%s375 + $0x18] sm:$0xf]
        %s380 = scalar_lea.vmem [#allocation5], 6
        %v381 = vld [vmem:[%s380] sm:$0x1]
        %v383 = vlaneseq
        %v384 = vshrl.u32 %v383, 7
        %v385 = vsub.s32 0, %v384
        %v386 = vrot.slane %v381, %v385
        %v388 = vmul.f32 %v376, %v386
        %v389 = vmul.f32 %v377, %v386
        %v390 = vmul.f32 %v378, %v386
        %v391 = vmul.f32 %v379, %v386
        %v392 = vadd.f32 %v371, %v388
        %v393 = vadd.f32 %v372, %v389
        %v394 = vadd.f32 %v373, %v390
        %v395 = vadd.f32 %v374, %v391
        %s396 = scalar_lea.vmem %s216, 48 [#allocation2]
        %v397 = vld [vmem:[%s396] sm:$0xf]
        %v398 = vld [vmem:[%s396 + $0x8] sm:$0xf]
        %v399 = vld [vmem:[%s396 + $0x10] sm:$0xf]
        %v400 = vld [vmem:[%s396 + $0x18] sm:$0xf]
        %s401 = scalar_lea.vmem [#allocation5], 7
        %v402 = vld [vmem:[%s401] sm:$0x1]
        %v404 = vlaneseq
        %v405 = vshrl.u32 %v404, 7
        %v406 = vsub.s32 0, %v405
        %v407 = vrot.slane %v402, %v406
        %v409 = vmul.f32 %v397, %v407
        %v410 = vmul.f32 %v398, %v407
        %v411 = vmul.f32 %v399, %v407
        %v412 = vmul.f32 %v400, %v407
        %v413 = vadd.f32 %v392, %v409
        %v414 = vadd.f32 %v393, %v410
        %v415 = vadd.f32 %v394, %v411
        %v416 = vadd.f32 %v395, %v412
        %v417 = vld [vmem:[%s375 + $0x1] sm:$0xf]
        %v418 = vld [vmem:[%s375 + $0x9] sm:$0xf]
        %v419 = vld [vmem:[%s375 + $0x11] sm:$0xf]
        %v420 = vld [vmem:[%s375 + $0x19] sm:$0xf]
        %s421 = scalar_lea.vmem [#allocation5], 8
        %v422 = vld [vmem:[%s421] sm:$0x1]
        %v424 = vlaneseq
        %v425 = vshrl.u32 %v424, 7
        %v426 = vsub.s32 0, %v425
        %v427 = vrot.slane %v422, %v426
        %v429 = vmul.f32 %v417, %v427
        %v430 = vmul.f32 %v418, %v427
        %v431 = vmul.f32 %v419, %v427
        %v432 = vmul.f32 %v420, %v427
        %v433 = vadd.f32 %v413, %v429
        %v434 = vadd.f32 %v414, %v430
        %v435 = vadd.f32 %v415, %v431
        %v436 = vadd.f32 %v416, %v432
        %v437 = vld [vmem:[#allocation7] sm:$0x1]
        %v439 = vlaneseq
        %v440 = vshrl.u32 %v439, 7
        %v441 = vsub.s32 0, %v440
        %v442 = vrot.slane %v437, %v441
        %v444 = vadd.f32 %v433, %v442
        %v445 = vadd.f32 %v434, %v442
        %v446 = vadd.f32 %v435, %v442
        %v447 = vadd.f32 %v436, %v442
        %v448 = vxor.u32 %v444, 2147483648
        %v449 = vxor.u32 %v445, 2147483648
        %v450 = vxor.u32 %v446, 2147483648
        %v451 = vxor.u32 %v447, 2147483648
        %v452 = vmul.f32 %v448, 1.442695
        %v453 = vpow.pop %v452
        %v454 = vmul.f32 %v449, 1.442695
        %v455 = vpow.pop %v454
        %v456 = vmul.f32 %v450, 1.442695
        %v457 = vpow.pop %v456
        %v458 = vmul.f32 %v451, 1.442695
        %v459 = vpow.pop %v458
        %v460 = vadd.f32 %v453, 1.0
        %v461 = vadd.f32 %v455, 1.0
        %v462 = vadd.f32 %v457, 1.0
        %v463 = vadd.f32 %v459, 1.0
        %v464 = vrcp.pop %v460
        %v465 = vmul.f32 1.0, %v464
        %v466 = vrcp.pop %v461
        %v467 = vmul.f32 1.0, %v466
        %v468 = vrcp.pop %v462
        %v469 = vmul.f32 1.0, %v468
        %v470 = vrcp.pop %v463
        %v471 = vmul.f32 1.0, %v470
        %v472 = vmul.f32 %v444, %v465
        %v473 = vmul.f32 %v445, %v467
        %v474 = vmul.f32 %v446, %v469
        %v475 = vmul.f32 %v447, %v471
        %vm476 = vcmask 781312
        %477 = vst.msk [vmem:[%s246] sm:$0xf] %vm476, %v472
        %478 = vst.msk [vmem:[%s246 + $0x4] sm:$0xf] %vm476, %v473
        %479 = vst.msk [vmem:[%s246 + $0x8] sm:$0xf] %vm476, %v474
        %480 = vst.msk [vmem:[%s246 + $0xc] sm:$0xf] %vm476, %v475
        %v481 = vsel %vm476, %v472, 0.0
        %v482 = vsel %vm476, %v473, 0.0
        %v483 = vadd.f32 %v481, %v482
        %v484 = vsel %vm476, %v474, 0.0
        %v485 = vadd.f32 %v483, %v484
        %v486 = vsel %vm476, %v475, 0.0
        %v487 = vadd.f32 %v485, %v486
        %v488 = vrot.slane %v487, 4
        %v489 = vadd.f32 %v487, %v488
        %v490 = vrot.slane %v489, 2
        %v491 = vadd.f32 %v489, %v490
        %v492 = vrot.slane %v491, 1
        %v493 = vadd.f32 %v491, %v492
        %v494 = vrcp.pop 16.0
        %v495 = vmul.f32 %v493, %v494
        %vm496 = vcmask 778240
        %497 = vst.msk [vmem:[%s252] sm:$0x1] %vm496, %v495
        %s498 = sand.u32 %s102, 1
        %s499 = scalar_lea.sflag [#allocation4], %s498
        %s500 = sand.u32 %s102, 1
        %s501 = smul.addr %s500, 16
        %s502 = scalar_lea.vmem [#allocation8], %s501
        %s503 = sand.u32 %s128, 1
        %s504 = scalar_lea.sflag [#allocation10], %s503
        %s505 = sand.u32 %s128, 1
        %s506 = scalar_lea.vmem [#allocation9], %s505
        // Predicated region
        $region45: #{_lambda_.17} parent=31 // pred_check
          %p507 = pneg %p112
        $region46: #{_lambda_.17} parent=31 // pred_check_branch
          %509 = sbr.rel (%p507) target = $region48
        $region47: #{_lambda_.17} parent=31 // pred_region
          %s511 = ssub.s32 256, 256
          %512 = vsyncadd %s499, %s511
          %s513 = smul.addr %s26, 4
          %s514 = smul.addr %s513, 64
          %s515 = scalar_lea.hbm %s3, %s514
          %s516 = sshll.u32 %s502, 4
          %s517 = int_to_ptr.vmem [resolvable:$true] %s516
          %522 = dma.vmem_to_hbm [thread:$0]  %s517, 256, %s515, %s499, 64, 64, 4
        $region48: #{_lambda_.17} parent=31 // pred_fallthru
          _
        // Predicated region
        $region49: #{_lambda_.17} parent=31 // pred_check
          %p523 = pneg %p138
        $region50: #{_lambda_.17} parent=31 // pred_check_branch
          %525 = sbr.rel (%p523) target = $region52
        $region51: #{_lambda_.17} parent=31 // pred_region
          %s527 = ssub.s32 16, 16
          %528 = vsyncadd %s504, %s527
          %s529 = smul.addr %s26, 16
          %s530 = scalar_lea.hbm %s4, %s529
          %s532 = sshll.u32 %s506, 4
          %s533 = int_to_ptr.vmem [resolvable:$true] %s532
          %535 = dma.vmem_to_hbm [thread:$0]  %s533, 16, %s530, %s504
        $region52: #{_lambda_.17} parent=31 // pred_fallthru
          _
      $region32: #{_lambda_.17} parent=5 // pred_fallthru
        _
      %p536 = scmp.le.s32.totalorder 2, %s21
      // Predicated region
      $region53: #{_lambda_.17} parent=5 // pred_check
        %p537 = pneg %p536
      $region54: #{_lambda_.17} parent=5 // pred_check_branch
        %539 = sbr.rel (%p537) target = $region56
      $region55: #{_lambda_.17} parent=5 // pred_region
        %s540 = ssub.s32 %s21, 2
        // Predicated region
        $region57: #{_lambda_.17} parent=55 // pred_check
          %p541 = pneg %p118
        $region58: #{_lambda_.17} parent=55 // pred_check_branch
          %543 = sbr.rel (%p541) target = $region60
        $region59: #{_lambda_.17} parent=55 // pred_region
          %s544 = sand.u32 %s103, 1
          %s545 = scalar_lea.sflag [#allocation4], %s544
          %s546 = sand.u32 %s103, 1
          %s547 = smul.addr %s546, 16
          %s548 = scalar_lea.vmem [#allocation8], %s547
          %549 = dma.done %s545, 256
        $region60: #{_lambda_.17} parent=55 // pred_fallthru
          _
        // Predicated region
        $region61: #{_lambda_.17} parent=55 // pred_check
          %p550 = pneg %p144
        $region62: #{_lambda_.17} parent=55 // pred_check_branch
          %552 = sbr.rel (%p550) target = $region64
        $region63: #{_lambda_.17} parent=55 // pred_region
          %s553 = sand.u32 %s129, 1
          %s554 = scalar_lea.sflag [#allocation10], %s553
          %s555 = sand.u32 %s129, 1
          %s556 = scalar_lea.vmem [#allocation9], %s555
          %557 = dma.done %s554, 16
        $region64: #{_lambda_.17} parent=55 // pred_fallthru
          _
      $region56: #{_lambda_.17} parent=5 // pred_fallthru
        _
    $region6: #{_lambda_.17} parent=1 // loop_footer
      %s25 = sadd.s32 1, %s21
    $region7: #{_lambda_.17} parent=1 // loop_footer_branch
      %20 = sbr.rel target = $region3
    $region8: #{_lambda_.17} parent=1 // loop_exit
      _
    %558 = vsyncpa [#allocation3], 1
    %s559 = scalar_lea.sflag [#allocation3], 1
    %560 = vsyncpa %s559, 1
    %561 = vsyncpa [#allocation6], 1
    %562 = vsyncpa [#allocation4], 1
    %s563 = scalar_lea.sflag [#allocation4], 1
    %564 = vsyncpa %s563, 1
    %565 = vsyncpa [#allocation10], 1
    %s566 = scalar_lea.sflag [#allocation10], 1
    %567 = vsyncpa %s566, 1

// kernel: _lambda_.19
$region0: #{_lambda_.19}
  #allocation0 [shape = 'u32[]', space=smem, size = 0x4, offset = 0x4, fixed_abs, tag = 'smem constant byte address 0x4 - core index']
  #allocation1 [shape = 'u32[144,128]{1,0:T(1,128)}', space=vmem, size = 0x12000, scoped, tag = 'internal scratch']
  %s0 = inlined_call_operand.hbm [shape: f32[2,16,96], index: 0, kind: input, shape index: {}]
  %s1 = inlined_call_operand.hbm [shape: f32[2,1,96], index: 1, kind: input, shape index: {}]
  %s2 = inlined_call_operand.hbm [shape: bf16[96,24], index: 2, kind: input, shape index: {}]
  %s3 = inlined_call_operand.hbm [shape: f32[1,24], index: 3, kind: input, shape index: {}]
  %s4 = inlined_call_operand.hbm [shape: f32[1,24], index: 4, kind: input, shape index: {}]
  %s5 = inlined_call_operand.hbm [shape: f32[2,16,24], index: 5, kind: output, shape index: {}]
  %s6 = sld [smem:[#allocation0]]
  $region73: #{_lambda_.19} parent=0
    _
  %s8 = ssub.s32 1, %s6
  %s9 = scalar_select 0, %s8, %s6
  $region1: #{_lambda_.19} parent=0
    #allocation2 [shape = 'u8[16384]{0}', space=vmem, size = 0x4000, scoped, tag = 'input window, operand 0']
    #allocation3 [shape = 's32[2]{0}', space=sflag, size = 0x8, scoped, tag = 'scoped memory for _lambda_.19']
    #allocation4 [shape = 's32[2]{0}', space=sflag, size = 0x8, scoped, tag = 'scoped memory for _lambda_.19']
    #allocation5 [shape = 'u8[1024]{0}', space=vmem, size = 0x400, scoped, tag = 'input window, operand 1']
    #allocation6 [shape = 's32[2]{0}', space=sflag, size = 0x8, scoped, tag = 'scoped memory for _lambda_.19']
    #allocation7 [shape = 'u8[24576]{0}', space=vmem, size = 0x6000, scoped, tag = 'input window, operand 2, single buffered']
    #allocation8 [shape = 'u8[512]{0}', space=vmem, size = 0x400, scoped, tag = 'input window, operand 3, single buffered']
    #allocation9 [shape = 's32[1]{0}', space=sflag, size = 0x4, scoped, tag = 'scoped memory for _lambda_.19']
    #allocation10 [shape = 'u8[512]{0}', space=vmem, size = 0x400, scoped, tag = 'input window, operand 4, single buffered']
    #allocation11 [shape = 'u8[16384]{0}', space=vmem, size = 0x4000, scoped, tag = 'output window, operand 0']
    %10 = vsyncpa [#allocation3], 0
    %s11 = scalar_lea.sflag [#allocation3], 1
    %12 = vsyncpa %s11, 0
    %13 = vsyncpa [#allocation6], 0
    %s14 = scalar_lea.sflag [#allocation6], 1
    %15 = vsyncpa %s14, 0
    %16 = vsyncpa [#allocation9], 0
    %17 = vsyncpa [#allocation4], 0
    %s18 = scalar_lea.sflag [#allocation4], 1
    %19 = vsyncpa %s18, 0
    loop: start=0, step=1, limit=4
    $region2: #{_lambda_.19} parent=1 // loop_pre_header
      _
    $region3: #{_lambda_.19} parent=1 // loop_header
      %s21 = sphi 0, %s25
      %p22 = scmp.ge.s32.totalorder %s21, 4
      %s28 = sphi 0, %s40
      %s29 = sphi 0, %s36
      %s30 = sphi 0, %s28
      %s31 = sphi 0, %s29
      %s32 = sphi 0, %s30
      %s33 = sphi 0, %s31
      %s45 = sphi 0, %s47
      %s48 = sphi 0, %s45
      %s49 = sphi 0, %s48
      %s65 = sphi 0, %s49
      %s71 = sphi 0, %s73
      %s74 = sphi 0, %s71
      %s75 = sphi 0, %s74
      %s91 = sphi 0, %s75
      %s95 = sphi 0, %s95
      %s97 = sphi 0, %s95
      %s98 = sphi 0, %s97
      %s112 = sphi 0, %s98
      %s116 = sphi 0, %s116
      %s118 = sphi 0, %s116
      %s119 = sphi 0, %s118
      %s133 = sphi 0, %s119
      %s137 = sphi 0, %s137
      %s139 = sphi 0, %s137
      %s140 = sphi 0, %s139
      %s154 = sphi 0, %s140
      %s162 = sphi 0, %s164
      %s165 = sphi 0, %s162
      %s166 = sphi 0, %s165
      %s182 = sphi 0, %s166
    $region4: #{_lambda_.19} parent=1 // loop_header_branch
      %24 = sbr.rel (%p22) target = $region8
    $region5: #{_lambda_.19} parent=1 // loop_body
      %s26 = ssub.s32 %s21, 1
      %s27 = ssub.s32 %s21, 2
      %s34 = sadd.s32 1, %s29
      %p35 = scmp.ge.s32.totalorder %s34, 1
      %s36 = scalar_select %p35, 0, %s34
      %s37 = sadd.s32 1, %s28
      %s38 = scalar_select %p35, %s37, %s28
      %p39 = scmp.ge.s32.totalorder %s38, 2
      %s40 = scalar_select %p39, 0, %s38
      %s41 = ssub.s32 %s28, %s40
      %s42 = ssub.s32 %s29, %s36
      %s43 = sor.u32 %s41, %s42
      %p44 = scmp.eq.s32.totalorder %s43, 0
      %s46 = sadd.s32 %s45, 1
      %s47 = scalar_select %p44, %s45, %s46
      %p50 = pneg %p44
      %p51 = scmp.eq.s32.totalorder %s21, 1
      %p52 = por %p50, %p51
      %p53 = scmp.ne.s32.totalorder %s45, %s48
      %p54 = scmp.eq.s32.totalorder %s21, 0
      %p55 = por %p53, %p54
      %p56 = scmp.ne.s32.totalorder %s45, %s48
      %p57 = scmp.eq.s32.totalorder %s26, 1
      %p58 = por %p56, %p57
      %p59 = scmp.ne.s32.totalorder %s48, %s49
      %p60 = scmp.eq.s32.totalorder %s26, 0
      %p61 = por %p59, %p60
      %p62 = scmp.ne.s32.totalorder %s48, %s49
      %p63 = scmp.eq.s32.totalorder %s27, 1
      %p64 = por %p62, %p63
      %p66 = scmp.ne.s32.totalorder %s49, %s65
      %p67 = scmp.eq.s32.totalorder %s27, 0
      %p68 = por %p66, %p67
      %s69 = ssub.s32 %s28, %s40
      %p70 = scmp.eq.s32.totalorder %s69, 0
      %s72 = sadd.s32 %s71, 1
      %s73 = scalar_select %p70, %s71, %s72
      %p76 = pneg %p70
      %p77 = scmp.eq.s32.totalorder %s21, 1
      %p78 = por %p76, %p77
      %p79 = scmp.ne.s32.totalorder %s71, %s74
      %p80 = scmp.eq.s32.totalorder %s21, 0
      %p81 = por %p79, %p80
      %p82 = scmp.ne.s32.totalorder %s71, %s74
      %p83 = scmp.eq.s32.totalorder %s26, 1
      %p84 = por %p82, %p83
      %p85 = scmp.ne.s32.totalorder %s74, %s75
      %p86 = scmp.eq.s32.totalorder %s26, 0
      %p87 = por %p85, %p86
      %p88 = scmp.ne.s32.totalorder %s74, %s75
      %p89 = scmp.eq.s32.totalorder %s27, 1
      %p90 = por %p88, %p89
      %p92 = scmp.ne.s32.totalorder %s75, %s91
      %p93 = scmp.eq.s32.totalorder %s27, 0
      %p94 = por %p92, %p93
      %s96 = sadd.s32 %s95, 1
      %p99 = scmp.eq.s32.totalorder %s21, 1
      %p100 = scmp.ne.s32.totalorder %s95, %s97
      %p101 = scmp.eq.s32.totalorder %s21, 0
      %p102 = por %p100, %p101
      %p103 = scmp.ne.s32.totalorder %s95, %s97
      %p104 = scmp.eq.s32.totalorder %s26, 1
      %p105 = por %p103, %p104
      %p106 = scmp.ne.s32.totalorder %s97, %s98
      %p107 = scmp.eq.s32.totalorder %s26, 0
      %p108 = por %p106, %p107
      %p109 = scmp.ne.s32.totalorder %s97, %s98
      %p110 = scmp.eq.s32.totalorder %s27, 1
      %p111 = por %p109, %p110
      %p113 = scmp.ne.s32.totalorder %s98, %s112
      %p114 = scmp.eq.s32.totalorder %s27, 0
      %p115 = por %p113, %p114
      %s117 = sadd.s32 %s116, 1
      %p120 = scmp.eq.s32.totalorder %s21, 1
      %p121 = scmp.ne.s32.totalorder %s116, %s118
      %p122 = scmp.eq.s32.totalorder %s21, 0
      %p123 = por %p121, %p122
      %p124 = scmp.ne.s32.totalorder %s116, %s118
      %p125 = scmp.eq.s32.totalorder %s26, 1
      %p126 = por %p124, %p125
      %p127 = scmp.ne.s32.totalorder %s118, %s119
      %p128 = scmp.eq.s32.totalorder %s26, 0
      %p129 = por %p127, %p128
      %p130 = scmp.ne.s32.totalorder %s118, %s119
      %p131 = scmp.eq.s32.totalorder %s27, 1
      %p132 = por %p130, %p131
      %p134 = scmp.ne.s32.totalorder %s119, %s133
      %p135 = scmp.eq.s32.totalorder %s27, 0
      %p136 = por %p134, %p135
      %s138 = sadd.s32 %s137, 1
      %p141 = scmp.eq.s32.totalorder %s21, 1
      %p142 = scmp.ne.s32.totalorder %s137, %s139
      %p143 = scmp.eq.s32.totalorder %s21, 0
      %p144 = por %p142, %p143
      %p145 = scmp.ne.s32.totalorder %s137, %s139
      %p146 = scmp.eq.s32.totalorder %s26, 1
      %p147 = por %p145, %p146
      %p148 = scmp.ne.s32.totalorder %s139, %s140
      %p149 = scmp.eq.s32.totalorder %s26, 0
      %p150 = por %p148, %p149
      %p151 = scmp.ne.s32.totalorder %s139, %s140
      %p152 = scmp.eq.s32.totalorder %s27, 1
      %p153 = por %p151, %p152
      %p155 = scmp.ne.s32.totalorder %s140, %s154
      %p156 = scmp.eq.s32.totalorder %s27, 0
      %p157 = por %p155, %p156
      %s158 = ssub.s32 %s28, %s40
      %s159 = ssub.s32 %s29, %s36
      %s160 = sor.u32 %s158, %s159
      %p161 = scmp.eq.s32.totalorder %s160, 0
      %s163 = sadd.s32 %s162, 1
      %s164 = scalar_select %p161, %s162, %s163
      %p167 = pneg %p161
      %p168 = scmp.eq.s32.totalorder %s21, 1
      %p169 = por %p167, %p168
      %p170 = scmp.ne.s32.totalorder %s162, %s165
      %p171 = scmp.eq.s32.totalorder %s21, 0
      %p172 = por %p170, %p171
      %p173 = scmp.ne.s32.totalorder %s162, %s165
      %p174 = scmp.eq.s32.totalorder %s26, 1
      %p175 = por %p173, %p174
      %p176 = scmp.ne.s32.totalorder %s165, %s166
      %p177 = scmp.eq.s32.totalorder %s26, 0
      %p178 = por %p176, %p177
      %p179 = scmp.ne.s32.totalorder %s165, %s166
      %p180 = scmp.eq.s32.totalorder %s27, 1
      %p181 = por %p179, %p180
      %p183 = scmp.ne.s32.totalorder %s166, %s182
      %p184 = scmp.eq.s32.totalorder %s27, 0
      %p185 = por %p183, %p184
      %p186 = scmp.le.s32.totalorder 1, %s21
      %p187 = scmp.lt.s32.totalorder %s21, 3
      %p188 = pnand %p186, %p187
      %p189 = pneg %p188
      // Predicated region
      $region9: #{_lambda_.19} parent=5 // pred_check
        _
      $region10: #{_lambda_.19} parent=5 // pred_check_branch
        %191 = sbr.rel (%p188) target = $region12
      $region11: #{_lambda_.19} parent=5 // pred_region
        %s192 = ssub.s32 %s21, 1
        // Predicated region
        $region13: #{_lambda_.19} parent=11 // pred_check
          %p193 = pneg %p108
        $region14: #{_lambda_.19} parent=11 // pred_check_branch
          %195 = sbr.rel (%p193) target = $region16
        $region15: #{_lambda_.19} parent=11 // pred_region
          %s197 = ssub.s32 768, 768
          %198 = vsyncadd [#allocation6], %s197
          %s199 = sshll.u32 [#allocation7], 4
          %s200 = int_to_ptr.vmem [resolvable:$true] %s199
          %205 = dma.hbm_to_vmem [thread:$0]  %s2, 768, %s200, [#allocation6], 64, 64, 4
        $region16: #{_lambda_.19} parent=11 // pred_fallthru
          _
        // Predicated region
        $region17: #{_lambda_.19} parent=11 // pred_check
          %p206 = pneg %p129
        $region18: #{_lambda_.19} parent=11 // pred_check_branch
          %208 = sbr.rel (%p206) target = $region20
        $region19: #{_lambda_.19} parent=11 // pred_region
          %s210 = ssub.s32 16, 16
          %211 = vsyncadd [#allocation9], %s210
          %s213 = sshll.u32 [#allocation8], 4
          %s214 = int_to_ptr.vmem [resolvable:$true] %s213
          %216 = dma.hbm_to_vmem [thread:$0]  %s3, 16, %s214, [#allocation9]
        $region20: #{_lambda_.19} parent=11 // pred_fallthru
          _
        // Predicated region
        $region21: #{_lambda_.19} parent=11 // pred_check
          %p217 = pneg %p150
        $region22: #{_lambda_.19} parent=11 // pred_check_branch
          %219 = sbr.rel (%p217) target = $region24
        $region23: #{_lambda_.19} parent=11 // pred_region
          %s221 = ssub.s32 16, 16
          %222 = vsyncadd [#allocation9], %s221
          %s224 = sshll.u32 [#allocation10], 4
          %s225 = int_to_ptr.vmem [resolvable:$true] %s224
          %227 = dma.hbm_to_vmem [thread:$0]  %s4, 16, %s225, [#allocation9]
        $region24: #{_lambda_.19} parent=11 // pred_fallthru
          _
      $region12: #{_lambda_.19} parent=5 // pred_fallthru
        _
      %p228 = scmp.lt.s32.totalorder %s21, 2
      // Predicated region
      $region25: #{_lambda_.19} parent=5 // pred_check
        %p229 = pneg %p228
      $region26: #{_lambda_.19} parent=5 // pred_check_branch
        %231 = sbr.rel (%p229) target = $region28
      $region27: #{_lambda_.19} parent=5 // pred_region
        // Predicated region
        $region29: #{_lambda_.19} parent=27 // pred_check
          %p232 = pneg %p55
        $region30: #{_lambda_.19} parent=27 // pred_check_branch
          %234 = sbr.rel (%p232) target = $region32
        $region31: #{_lambda_.19} parent=27 // pred_region
          %s235 = sand.u32 %s45, 1
          %s236 = scalar_lea.sflag [#allocation3], %s235
          %s237 = sand.u32 %s45, 1
          %s238 = smul.addr %s237, 16
          %s239 = scalar_lea.vmem [#allocation2], %s238
          %s240 = smul.u32 2, %s29
          %s242 = ssub.s32 256, 256
          %243 = vsyncadd %s236, %s242
          %s244 = smul.addr %s28, 2
          %s245 = sadd.s32 %s240, %s244
          %s246 = smul.addr %s245, 128
          %s247 = scalar_lea.hbm %s0, %s246
          %s248 = sshll.u32 %s239, 4
          %s249 = int_to_ptr.vmem [resolvable:$true] %s248
          %254 = dma.hbm_to_vmem [thread:$0]  %s247, 256, %s249, %s236, 128, 128, 8
        $region32: #{_lambda_.19} parent=27 // pred_fallthru
          _
        // Predicated region
        $region33: #{_lambda_.19} parent=27 // pred_check
          %p255 = pneg %p81
        $region34: #{_lambda_.19} parent=27 // pred_check_branch
          %257 = sbr.rel (%p255) target = $region36
        $region35: #{_lambda_.19} parent=27 // pred_region
          %s258 = sand.u32 %s21, 1
          %s259 = scalar_lea.sflag [#allocation6], %s258
          %s260 = sand.u32 %s71, 1
          %s261 = scalar_lea.vmem [#allocation5], %s260
          %s263 = ssub.s32 16, 16
          %264 = vsyncadd %s259, %s263
          %s265 = smul.addr %s28, 16
          %s266 = scalar_lea.hbm %s1, %s265
          %s268 = sshll.u32 %s261, 4
          %s269 = int_to_ptr.vmem [resolvable:$true] %s268
          %271 = dma.hbm_to_vmem [thread:$0]  %s266, 16, %s269, %s259
        $region36: #{_lambda_.19} parent=27 // pred_fallthru
          _
      $region28: #{_lambda_.19} parent=5 // pred_fallthru
        _
      %p272 = scmp.le.s32.totalorder 1, %s21
      %p273 = scmp.lt.s32.totalorder %s21, 3
      %p274 = pnand %p272, %p273
      %p275 = pneg %p274
      // Predicated region
      $region37: #{_lambda_.19} parent=5 // pred_check
        _
      $region38: #{_lambda_.19} parent=5 // pred_check_branch
        %277 = sbr.rel (%p274) target = $region40
      $region39: #{_lambda_.19} parent=5 // pred_region
        %s278 = ssub.s32 %s21, 1
        %s279 = sand.u32 %s48, 1
        %s280 = scalar_lea.sflag [#allocation3], %s279
        %s281 = sand.u32 %s48, 1
        %s282 = smul.addr %s281, 16
        %s283 = scalar_lea.vmem [#allocation2], %s282
        // Predicated region
        $region41: #{_lambda_.19} parent=39 // pred_check
          %p284 = pneg %p61
        $region42: #{_lambda_.19} parent=39 // pred_check_branch
          %286 = sbr.rel (%p284) target = $region44
        $region43: #{_lambda_.19} parent=39 // pred_region
          %287 = dma.done %s280, 256
        $region44: #{_lambda_.19} parent=39 // pred_fallthru
          _
        %s288 = sand.u32 %s26, 1
        %s289 = scalar_lea.sflag [#allocation6], %s288
        %s290 = sand.u32 %s74, 1
        %s291 = scalar_lea.vmem [#allocation5], %s290
        // Predicated region
        $region45: #{_lambda_.19} parent=39 // pred_check
          %p292 = pneg %p87
        $region46: #{_lambda_.19} parent=39 // pred_check_branch
          %294 = sbr.rel (%p292) target = $region48
        $region47: #{_lambda_.19} parent=39 // pred_region
          %295 = dma.done %s289, 16
        $region48: #{_lambda_.19} parent=39 // pred_fallthru
          _
        // Predicated region
        $region49: #{_lambda_.19} parent=39 // pred_check
          %p296 = pneg %p108
        $region50: #{_lambda_.19} parent=39 // pred_check_branch
          %298 = sbr.rel (%p296) target = $region52
        $region51: #{_lambda_.19} parent=39 // pred_region
          %299 = dma.done [#allocation6], 768
        $region52: #{_lambda_.19} parent=39 // pred_fallthru
          _
        // Predicated region
        $region53: #{_lambda_.19} parent=39 // pred_check
          %p300 = pneg %p129
        $region54: #{_lambda_.19} parent=39 // pred_check_branch
          %302 = sbr.rel (%p300) target = $region56
        $region55: #{_lambda_.19} parent=39 // pred_region
          %303 = dma.done [#allocation9], 16
        $region56: #{_lambda_.19} parent=39 // pred_fallthru
          _
        // Predicated region
        $region57: #{_lambda_.19} parent=39 // pred_check
          %p304 = pneg %p150
        $region58: #{_lambda_.19} parent=39 // pred_check_branch
          %306 = sbr.rel (%p304) target = $region60
        $region59: #{_lambda_.19} parent=39 // pred_region
          %307 = dma.done [#allocation9], 16
        $region60: #{_lambda_.19} parent=39 // pred_fallthru
          _
        %s308 = sand.u32 %s48, 1
        %s309 = scalar_lea.sflag [#allocation3], %s308
        %s310 = sand.u32 %s48, 1
        %s311 = smul.addr %s310, 16
        %s312 = scalar_lea.vmem [#allocation2], %s311
        %p313 = pneg %p61
        %p314 = pneg %p58
        %s315 = sand.u32 %s26, 1
        %s316 = scalar_lea.sflag [#allocation6], %s315
        %s317 = sand.u32 %s74, 1
        %s318 = scalar_lea.vmem [#allocation5], %s317
        %p319 = pneg %p87
        %p320 = pneg %p84
        %p321 = pneg %p108
        %p322 = pneg %p105
        %p323 = pneg %p129
        %p324 = pneg %p126
        %p325 = pneg %p150
        %p326 = pneg %p147
        %p327 = pneg %p178
        %p328 = pneg %p175
        %s329 = sand.u32 %s165, 1
        %s330 = scalar_lea.sflag [#allocation4], %s329
        %s331 = sand.u32 %s165, 1
        %s332 = smul.addr %s331, 16
        %s333 = scalar_lea.vmem [#allocation11], %s332
        %s334 = smul.u32 2, %s31
        %s335 = smul.u32 2, %s31
        %v337 = vld [vmem:[%s283] sm:$0xff]
        %v338 = vld [vmem:[%s283 + $0x8] sm:$0xff]
        %v339 = vld [vmem:[%s291] sm:$0x1]
        %v341 = vlaneseq
        %v342 = vshrl.u32 %v341, 7
        %v343 = vsub.s32 0, %v342
        %v344 = vrot.slane %v339, %v343
        %v346 = vmul.f32 %v337, %v344
        %v347 = vmul.f32 %v338, %v344
        %v348 = vpack.c.bf16 %v347, %v346
        %v349 = vld [vmem:[#allocation7] sm:$0xf]
        %v350 = vld [vmem:[#allocation7 + $0x4] sm:$0xf]
        %v351 = vld [vmem:[#allocation7 + $0x8] sm:$0xf]
        %v352 = vld [vmem:[#allocation7 + $0xc] sm:$0xf]
        %v353 = vld [vmem:[#allocation7 + $0x10] sm:$0xf]
        %v354 = vld [vmem:[#allocation7 + $0x14] sm:$0xf]
        %v355 = vld [vmem:[#allocation7 + $0x18] sm:$0xf]
        %v356 = vld [vmem:[#allocation7 + $0x1c] sm:$0xf]
        %v357 = vld [vmem:[#allocation7 + $0x20] sm:$0xf]
        %v358 = vld [vmem:[#allocation7 + $0x24] sm:$0xf]
        %v359 = vld [vmem:[#allocation7 + $0x28] sm:$0xf]
        %v360 = vld [vmem:[#allocation7 + $0x2c] sm:$0xf]
        %v373 = vunpack.c.l.b16 %v349
        %v374 = vunpack.c.l.b16 %v350
        %v375 = vunpack.c.l.b16 %v351
        %v376 = vunpack.c.l.b16 %v352
        %v377 = vunpack.c.l.b16 %v353
        %v378 = vunpack.c.l.b16 %v354
        %v379 = vunpack.c.l.b16 %v355
        %v380 = vunpack.c.l.b16 %v356
        %v381 = vunpack.c.l.b16 %v357
        %v382 = vunpack.c.l.b16 %v358
        %v383 = vunpack.c.l.b16 %v359
        %v384 = vunpack.c.l.b16 %v360
        %v385 = vpack.c.b16 %v374, %v373
        %v386 = vpack.c.b16 %v376, %v375
        %v387 = vpack.c.b16 %v378, %v377
        %v388 = vpack.c.b16 %v380, %v379
        %v389 = vpack.c.b16 %v382, %v381
        %v390 = vpack.c.b16 %v384, %v383
        %vm397 = vcmask 785408
        %v399 = vsel %vm397, %v348, 0
        %401 = vmatprep.subr.bf16.mxu0 0
        %402 = vmatpush1.bf16.msra.mxu0 %v385
        %403 = vmatprep.subr.bf16.mxu0 0
        %404 = vmatpush1.bf16.msra.mxu0 %v386
        %405 = vmatprep.subr.bf16.mxu0 0
        %406 = vmatpush1.bf16.msra.mxu0 %v387
        %407 = vmatprep.subr.bf16.mxu0 0
        %408 = vmatpush1.bf16.msra.mxu0 %v388
        %409 = vmatprep.subr.bf16.mxu0 0
        %410 = vmatpush1.bf16.msra.mxu0 %v389
        %411 = vmatprep.subr.bf16.mxu0 0
        %412 = vmatpush1.bf16.msra.mxu0 %v390
        %413 = vmatprep.subr.bf16.mxu0 0
        %414 = vmatpush1.bf16.msra.mxu0 0
        %415 = vmatprep.subr.bf16.mxu0 0
        %416 = vmatpush1.bf16.msra.mxu0 0
        %417 = vmatprep.subr.bf16.mxu0 0
        %418 = vmatpush1.bf16.msra.mxu0 0
        %419 = vmatprep.subr.bf16.mxu0 0
        %420 = vmatpush1.bf16.msra.mxu0 0
        %421 = vmatprep.subr.bf16.mxu0 0
        %422 = vmatpush1.bf16.msra.mxu0 0
        %423 = vmatprep.subr.bf16.mxu0 0
        %424 = vmatpush1.bf16.msra.mxu0 0
        %425 = vmatprep.subr.bf16.mxu0 0
        %426 = vmatpush1.bf16.msra.mxu0 0
        %427 = vmatprep.subr.bf16.mxu0 0
        %428 = vmatpush1.bf16.msra.mxu0 0
        %429 = vmatprep.subr.bf16.mxu0 0
        %430 = vmatpush1.bf16.msra.mxu0 0
        %431 = vmatprep.subr.bf16.mxu0 0
        %432 = vmatpush1.bf16.msra.mxu0 0
        %433 = vmatprep.mubr.bf16.mxu0 0
        %434 = vmatmul.mubr.bf16.gmra.mrb[0].mxu0 %v399
        %v435 = vpop.f32.mrb[0].mxu0
        %v436 = vadd.f32 0.0, %v435
        %v437 = vpop.f32.mrb[0].mxu0
        %v438 = vpop.f32.mrb[0].mxu0
        %v439 = vadd.f32 0.0, %v438
        %v440 = vpop.f32.mrb[0].mxu0
        %441 = vdwg.mxu0
        %v442 = vld [vmem:[#allocation8] sm:$0x1]
        %v444 = vlaneseq
        %v445 = vshrl.u32 %v444, 7
        %v446 = vsub.s32 0, %v445
        %v447 = vrot.slane %v442, %v446
        %v449 = vmul.f32 %v436, %v447
        %v450 = vmul.f32 %v439, %v447
        %v451 = vld [vmem:[#allocation10] sm:$0x1]
        %v453 = vlaneseq
        %v454 = vshrl.u32 %v453, 7
        %v455 = vsub.s32 0, %v454
        %v456 = vrot.slane %v451, %v455
        %v458 = vadd.f32 %v449, %v456
        %v459 = vadd.f32 %v450, %v456
        %vm460 = vcmask 195584
        %461 = vst.msk [vmem:[%s333] sm:$0xff] %vm460, %v458
        %462 = vst.msk [vmem:[%s333 + $0x8] sm:$0xff] %vm460, %v459
        %s463 = sand.u32 %s165, 1
        %s464 = scalar_lea.sflag [#allocation4], %s463
        %s465 = sand.u32 %s165, 1
        %s466 = smul.addr %s465, 16
        %s467 = scalar_lea.vmem [#allocation11], %s466
        // Predicated region
        $region61: #{_lambda_.19} parent=39 // pred_check
          %p468 = pneg %p175
        $region62: #{_lambda_.19} parent=39 // pred_check_branch
          %470 = sbr.rel (%p468) target = $region64
        $region63: #{_lambda_.19} parent=39 // pred_region
          %s471 = smul.u32 2, %s31
          %s473 = ssub.s32 256, 256
          %474 = vsyncadd %s464, %s473
          %s475 = smul.addr %s30, 2
          %s476 = sadd.s32 %s471, %s475
          %s477 = smul.addr %s476, 128
          %s478 = scalar_lea.hbm %s5, %s477
          %s479 = sshll.u32 %s467, 4
          %s480 = int_to_ptr.vmem [resolvable:$true] %s479
          %485 = dma.vmem_to_hbm [thread:$0]  %s480, 256, %s478, %s464, 128, 128, 8
        $region64: #{_lambda_.19} parent=39 // pred_fallthru
          _
      $region40: #{_lambda_.19} parent=5 // pred_fallthru
        _
      %p486 = scmp.le.s32.totalorder 2, %s21
      // Predicated region
      $region65: #{_lambda_.19} parent=5 // pred_check
        %p487 = pneg %p486
      $region66: #{_lambda_.19} parent=5 // pred_check_branch
        %489 = sbr.rel (%p487) target = $region68
      $region67: #{_lambda_.19} parent=5 // pred_region
        %s490 = ssub.s32 %s21, 2
        // Predicated region
        $region69: #{_lambda_.19} parent=67 // pred_check
          %p491 = pneg %p181
        $region70: #{_lambda_.19} parent=67 // pred_check_branch
          %493 = sbr.rel (%p491) target = $region72
        $region71: #{_lambda_.19} parent=67 // pred_region
          %s494 = sand.u32 %s166, 1
          %s495 = scalar_lea.sflag [#allocation4], %s494
          %s496 = sand.u32 %s166, 1
          %s497 = smul.addr %s496, 16
          %s498 = scalar_lea.vmem [#allocation11], %s497
          %499 = dma.done %s495, 256
        $region72: #{_lambda_.19} parent=67 // pred_fallthru
          _
      $region68: #{_lambda_.19} parent=5 // pred_fallthru
        _
    $region6: #{_lambda_.19} parent=1 // loop_footer
      %s25 = sadd.s32 1, %s21
    $region7: #{_lambda_.19} parent=1 // loop_footer_branch
      %20 = sbr.rel target = $region3
    $region8: #{_lambda_.19} parent=1 // loop_exit
      _
    %500 = vsyncpa [#allocation3], 1
    %s501 = scalar_lea.sflag [#allocation3], 1
    %502 = vsyncpa %s501, 1
    %503 = vsyncpa [#allocation6], 1
    %s504 = scalar_lea.sflag [#allocation6], 1
    %505 = vsyncpa %s504, 1
    %506 = vsyncpa [#allocation9], 1
    %507 = vsyncpa [#allocation4], 1
    %s508 = scalar_lea.sflag [#allocation4], 1
    %509 = vsyncpa %s508, 1

// kernel: _lambda_.20
$region0: #{_lambda_.20}
  #allocation0 [shape = 'u32[]', space=smem, size = 0x4, offset = 0x4, fixed_abs, tag = 'smem constant byte address 0x4 - core index']
  #allocation1 [shape = 'u32[144,128]{1,0:T(1,128)}', space=vmem, size = 0x12000, scoped, tag = 'internal scratch']
  %s0 = inlined_call_operand.hbm [shape: f32[2,16,24], index: 0, kind: input, shape index: {}]
  %s1 = inlined_call_operand.hbm [shape: bf16[24,144], index: 1, kind: input, shape index: {}]
  %s2 = inlined_call_operand.hbm [shape: f32[1,144], index: 2, kind: input, shape index: {}]
  %s3 = inlined_call_operand.hbm [shape: f32[1,144], index: 3, kind: input, shape index: {}]
  %s4 = inlined_call_operand.hbm [shape: f32[2,16,144], index: 4, kind: output, shape index: {}]
  %s5 = sld [smem:[#allocation0]]
  $region65: #{_lambda_.20} parent=0
    _
  %s7 = ssub.s32 1, %s5
  %s8 = scalar_select 0, %s7, %s5
  $region1: #{_lambda_.20} parent=0
    #allocation2 [shape = 'u8[16384]{0}', space=vmem, size = 0x4000, scoped, tag = 'input window, operand 0']
    #allocation3 [shape = 's32[2]{0}', space=sflag, size = 0x8, scoped, tag = 'scoped memory for _lambda_.20']
    #allocation4 [shape = 's32[2]{0}', space=sflag, size = 0x8, scoped, tag = 'scoped memory for _lambda_.20']
    #allocation5 [shape = 'u8[12288]{0}', space=vmem, size = 0x3000, scoped, tag = 'input window, operand 1, single buffered']
    #allocation6 [shape = 's32[1]{0}', space=sflag, size = 0x4, scoped, tag = 'scoped memory for _lambda_.20']
    #allocation7 [shape = 'u8[1024]{0}', space=vmem, size = 0x400, scoped, tag = 'input window, operand 2, single buffered']
    #allocation8 [shape = 'u8[1024]{0}', space=vmem, size = 0x400, scoped, tag = 'input window, operand 3, single buffered']
    #allocation9 [shape = 's32[1]{0}', space=sflag, size = 0x4, scoped, tag = 'scoped memory for _lambda_.20']
    #allocation10 [shape = 'u8[32768]{0}', space=vmem, size = 0x8000, scoped, tag = 'output window, operand 0']
    %9 = vsyncpa [#allocation3], 0
    %s10 = scalar_lea.sflag [#allocation3], 1
    %11 = vsyncpa %s10, 0
    %12 = vsyncpa [#allocation6], 0
    %13 = vsyncpa [#allocation9], 0
    %14 = vsyncpa [#allocation4], 0
    %s15 = scalar_lea.sflag [#allocation4], 1
    %16 = vsyncpa %s15, 0
    loop: start=0, step=1, limit=4
    $region2: #{_lambda_.20} parent=1 // loop_pre_header
      _
    $region3: #{_lambda_.20} parent=1 // loop_header
      %s18 = sphi 0, %s22
      %p19 = scmp.ge.s32.totalorder %s18, 4
      %s25 = sphi 0, %s37
      %s26 = sphi 0, %s33
      %s27 = sphi 0, %s25
      %s28 = sphi 0, %s26
      %s29 = sphi 0, %s27
      %s30 = sphi 0, %s28
      %s42 = sphi 0, %s44
      %s45 = sphi 0, %s42
      %s46 = sphi 0, %s45
      %s62 = sphi 0, %s46
      %s66 = sphi 0, %s66
      %s68 = sphi 0, %s66
      %s69 = sphi 0, %s68
      %s83 = sphi 0, %s69
      %s87 = sphi 0, %s87
      %s89 = sphi 0, %s87
      %s90 = sphi 0, %s89
      %s104 = sphi 0, %s90
      %s108 = sphi 0, %s108
      %s110 = sphi 0, %s108
      %s111 = sphi 0, %s110
      %s125 = sphi 0, %s111
      %s133 = sphi 0, %s135
      %s136 = sphi 0, %s133
      %s137 = sphi 0, %s136
      %s153 = sphi 0, %s137
    $region4: #{_lambda_.20} parent=1 // loop_header_branch
      %21 = sbr.rel (%p19) target = $region8
    $region5: #{_lambda_.20} parent=1 // loop_body
      %s23 = ssub.s32 %s18, 1
      %s24 = ssub.s32 %s18, 2
      %s31 = sadd.s32 1, %s26
      %p32 = scmp.ge.s32.totalorder %s31, 1
      %s33 = scalar_select %p32, 0, %s31
      %s34 = sadd.s32 1, %s25
      %s35 = scalar_select %p32, %s34, %s25
      %p36 = scmp.ge.s32.totalorder %s35, 2
      %s37 = scalar_select %p36, 0, %s35
      %s38 = ssub.s32 %s25, %s37
      %s39 = ssub.s32 %s26, %s33
      %s40 = sor.u32 %s38, %s39
      %p41 = scmp.eq.s32.totalorder %s40, 0
      %s43 = sadd.s32 %s42, 1
      %s44 = scalar_select %p41, %s42, %s43
      %p47 = pneg %p41
      %p48 = scmp.eq.s32.totalorder %s18, 1
      %p49 = por %p47, %p48
      %p50 = scmp.ne.s32.totalorder %s42, %s45
      %p51 = scmp.eq.s32.totalorder %s18, 0
      %p52 = por %p50, %p51
      %p53 = scmp.ne.s32.totalorder %s42, %s45
      %p54 = scmp.eq.s32.totalorder %s23, 1
      %p55 = por %p53, %p54
      %p56 = scmp.ne.s32.totalorder %s45, %s46
      %p57 = scmp.eq.s32.totalorder %s23, 0
      %p58 = por %p56, %p57
      %p59 = scmp.ne.s32.totalorder %s45, %s46
      %p60 = scmp.eq.s32.totalorder %s24, 1
      %p61 = por %p59, %p60
      %p63 = scmp.ne.s32.totalorder %s46, %s62
      %p64 = scmp.eq.s32.totalorder %s24, 0
      %p65 = por %p63, %p64
      %s67 = sadd.s32 %s66, 1
      %p70 = scmp.eq.s32.totalorder %s18, 1
      %p71 = scmp.ne.s32.totalorder %s66, %s68
      %p72 = scmp.eq.s32.totalorder %s18, 0
      %p73 = por %p71, %p72
      %p74 = scmp.ne.s32.totalorder %s66, %s68
      %p75 = scmp.eq.s32.totalorder %s23, 1
      %p76 = por %p74, %p75
      %p77 = scmp.ne.s32.totalorder %s68, %s69
      %p78 = scmp.eq.s32.totalorder %s23, 0
      %p79 = por %p77, %p78
      %p80 = scmp.ne.s32.totalorder %s68, %s69
      %p81 = scmp.eq.s32.totalorder %s24, 1
      %p82 = por %p80, %p81
      %p84 = scmp.ne.s32.totalorder %s69, %s83
      %p85 = scmp.eq.s32.totalorder %s24, 0
      %p86 = por %p84, %p85
      %s88 = sadd.s32 %s87, 1
      %p91 = scmp.eq.s32.totalorder %s18, 1
      %p92 = scmp.ne.s32.totalorder %s87, %s89
      %p93 = scmp.eq.s32.totalorder %s18, 0
      %p94 = por %p92, %p93
      %p95 = scmp.ne.s32.totalorder %s87, %s89
      %p96 = scmp.eq.s32.totalorder %s23, 1
      %p97 = por %p95, %p96
      %p98 = scmp.ne.s32.totalorder %s89, %s90
      %p99 = scmp.eq.s32.totalorder %s23, 0
      %p100 = por %p98, %p99
      %p101 = scmp.ne.s32.totalorder %s89, %s90
      %p102 = scmp.eq.s32.totalorder %s24, 1
      %p103 = por %p101, %p102
      %p105 = scmp.ne.s32.totalorder %s90, %s104
      %p106 = scmp.eq.s32.totalorder %s24, 0
      %p107 = por %p105, %p106
      %s109 = sadd.s32 %s108, 1
      %p112 = scmp.eq.s32.totalorder %s18, 1
      %p113 = scmp.ne.s32.totalorder %s108, %s110
      %p114 = scmp.eq.s32.totalorder %s18, 0
      %p115 = por %p113, %p114
      %p116 = scmp.ne.s32.totalorder %s108, %s110
      %p117 = scmp.eq.s32.totalorder %s23, 1
      %p118 = por %p116, %p117
      %p119 = scmp.ne.s32.totalorder %s110, %s111
      %p120 = scmp.eq.s32.totalorder %s23, 0
      %p121 = por %p119, %p120
      %p122 = scmp.ne.s32.totalorder %s110, %s111
      %p123 = scmp.eq.s32.totalorder %s24, 1
      %p124 = por %p122, %p123
      %p126 = scmp.ne.s32.totalorder %s111, %s125
      %p127 = scmp.eq.s32.totalorder %s24, 0
      %p128 = por %p126, %p127
      %s129 = ssub.s32 %s25, %s37
      %s130 = ssub.s32 %s26, %s33
      %s131 = sor.u32 %s129, %s130
      %p132 = scmp.eq.s32.totalorder %s131, 0
      %s134 = sadd.s32 %s133, 1
      %s135 = scalar_select %p132, %s133, %s134
      %p138 = pneg %p132
      %p139 = scmp.eq.s32.totalorder %s18, 1
      %p140 = por %p138, %p139
      %p141 = scmp.ne.s32.totalorder %s133, %s136
      %p142 = scmp.eq.s32.totalorder %s18, 0
      %p143 = por %p141, %p142
      %p144 = scmp.ne.s32.totalorder %s133, %s136
      %p145 = scmp.eq.s32.totalorder %s23, 1
      %p146 = por %p144, %p145
      %p147 = scmp.ne.s32.totalorder %s136, %s137
      %p148 = scmp.eq.s32.totalorder %s23, 0
      %p149 = por %p147, %p148
      %p150 = scmp.ne.s32.totalorder %s136, %s137
      %p151 = scmp.eq.s32.totalorder %s24, 1
      %p152 = por %p150, %p151
      %p154 = scmp.ne.s32.totalorder %s137, %s153
      %p155 = scmp.eq.s32.totalorder %s24, 0
      %p156 = por %p154, %p155
      %p157 = scmp.le.s32.totalorder 1, %s18
      %p158 = scmp.lt.s32.totalorder %s18, 3
      %p159 = pnand %p157, %p158
      %p160 = pneg %p159
      // Predicated region
      $region9: #{_lambda_.20} parent=5 // pred_check
        _
      $region10: #{_lambda_.20} parent=5 // pred_check_branch
        %162 = sbr.rel (%p159) target = $region12
      $region11: #{_lambda_.20} parent=5 // pred_region
        %s163 = ssub.s32 %s18, 1
        // Predicated region
        $region13: #{_lambda_.20} parent=11 // pred_check
          %p164 = pneg %p79
        $region14: #{_lambda_.20} parent=11 // pred_check_branch
          %166 = sbr.rel (%p164) target = $region16
        $region15: #{_lambda_.20} parent=11 // pred_region
          %s168 = ssub.s32 384, 384
          %169 = vsyncadd [#allocation6], %s168
          %s170 = sshll.u32 [#allocation5], 4
          %s171 = int_to_ptr.vmem [resolvable:$true] %s170
          %176 = dma.hbm_to_vmem [thread:$0]  %s1, 384, %s171, [#allocation6], 128, 128, 8
        $region16: #{_lambda_.20} parent=11 // pred_fallthru
          _
        // Predicated region
        $region17: #{_lambda_.20} parent=11 // pred_check
          %p177 = pneg %p100
        $region18: #{_lambda_.20} parent=11 // pred_check_branch
          %179 = sbr.rel (%p177) target = $region20
        $region19: #{_lambda_.20} parent=11 // pred_region
          %s181 = ssub.s32 32, 32
          %182 = vsyncadd [#allocation6], %s181
          %s184 = sshll.u32 [#allocation7], 4
          %s185 = int_to_ptr.vmem [resolvable:$true] %s184
          %187 = dma.hbm_to_vmem [thread:$0]  %s2, 32, %s185, [#allocation6]
        $region20: #{_lambda_.20} parent=11 // pred_fallthru
          _
        // Predicated region
        $region21: #{_lambda_.20} parent=11 // pred_check
          %p188 = pneg %p121
        $region22: #{_lambda_.20} parent=11 // pred_check_branch
          %190 = sbr.rel (%p188) target = $region24
        $region23: #{_lambda_.20} parent=11 // pred_region
          %s192 = ssub.s32 32, 32
          %193 = vsyncadd [#allocation9], %s192
          %s195 = sshll.u32 [#allocation8], 4
          %s196 = int_to_ptr.vmem [resolvable:$true] %s195
          %198 = dma.hbm_to_vmem [thread:$0]  %s3, 32, %s196, [#allocation9]
        $region24: #{_lambda_.20} parent=11 // pred_fallthru
          _
      $region12: #{_lambda_.20} parent=5 // pred_fallthru
        _
      %p199 = scmp.lt.s32.totalorder %s18, 2
      // Predicated region
      $region25: #{_lambda_.20} parent=5 // pred_check
        %p200 = pneg %p199
      $region26: #{_lambda_.20} parent=5 // pred_check_branch
        %202 = sbr.rel (%p200) target = $region28
      $region27: #{_lambda_.20} parent=5 // pred_region
        // Predicated region
        $region29: #{_lambda_.20} parent=27 // pred_check
          %p203 = pneg %p52
        $region30: #{_lambda_.20} parent=27 // pred_check_branch
          %205 = sbr.rel (%p203) target = $region32
        $region31: #{_lambda_.20} parent=27 // pred_region
          %s206 = sand.u32 %s42, 1
          %s207 = scalar_lea.sflag [#allocation3], %s206
          %s208 = sand.u32 %s42, 1
          %s209 = smul.addr %s208, 16
          %s210 = scalar_lea.vmem [#allocation2], %s209
          %s211 = smul.u32 2, %s26
          %s213 = ssub.s32 256, 256
          %214 = vsyncadd %s207, %s213
          %s215 = smul.addr %s25, 2
          %s216 = sadd.s32 %s211, %s215
          %s217 = smul.addr %s216, 128
          %s218 = scalar_lea.hbm %s0, %s217
          %s219 = sshll.u32 %s210, 4
          %s220 = int_to_ptr.vmem [resolvable:$true] %s219
          %225 = dma.hbm_to_vmem [thread:$0]  %s218, 256, %s220, %s207, 128, 128, 8
        $region32: #{_lambda_.20} parent=27 // pred_fallthru
          _
      $region28: #{_lambda_.20} parent=5 // pred_fallthru
        _
      %p226 = scmp.le.s32.totalorder 1, %s18
      %p227 = scmp.lt.s32.totalorder %s18, 3
      %p228 = pnand %p226, %p227
      %p229 = pneg %p228
      // Predicated region
      $region33: #{_lambda_.20} parent=5 // pred_check
        _
      $region34: #{_lambda_.20} parent=5 // pred_check_branch
        %231 = sbr.rel (%p228) target = $region36
      $region35: #{_lambda_.20} parent=5 // pred_region
        %s232 = ssub.s32 %s18, 1
        %s233 = sand.u32 %s45, 1
        %s234 = scalar_lea.sflag [#allocation3], %s233
        %s235 = sand.u32 %s45, 1
        %s236 = smul.addr %s235, 16
        %s237 = scalar_lea.vmem [#allocation2], %s236
        // Predicated region
        $region37: #{_lambda_.20} parent=35 // pred_check
          %p238 = pneg %p58
        $region38: #{_lambda_.20} parent=35 // pred_check_branch
          %240 = sbr.rel (%p238) target = $region40
        $region39: #{_lambda_.20} parent=35 // pred_region
          %241 = dma.done %s234, 256
        $region40: #{_lambda_.20} parent=35 // pred_fallthru
          _
        // Predicated region
        $region41: #{_lambda_.20} parent=35 // pred_check
          %p242 = pneg %p79
        $region42: #{_lambda_.20} parent=35 // pred_check_branch
          %244 = sbr.rel (%p242) target = $region44
        $region43: #{_lambda_.20} parent=35 // pred_region
          %245 = dma.done [#allocation6], 384
        $region44: #{_lambda_.20} parent=35 // pred_fallthru
          _
        // Predicated region
        $region45: #{_lambda_.20} parent=35 // pred_check
          %p246 = pneg %p100
        $region46: #{_lambda_.20} parent=35 // pred_check_branch
          %248 = sbr.rel (%p246) target = $region48
        $region47: #{_lambda_.20} parent=35 // pred_region
          %249 = dma.done [#allocation6], 32
        $region48: #{_lambda_.20} parent=35 // pred_fallthru
          _
        // Predicated region
        $region49: #{_lambda_.20} parent=35 // pred_check
          %p250 = pneg %p121
        $region50: #{_lambda_.20} parent=35 // pred_check_branch
          %252 = sbr.rel (%p250) target = $region52
        $region51: #{_lambda_.20} parent=35 // pred_region
          %253 = dma.done [#allocation9], 32
        $region52: #{_lambda_.20} parent=35 // pred_fallthru
          _
        %s254 = sand.u32 %s45, 1
        %s255 = scalar_lea.sflag [#allocation3], %s254
        %s256 = sand.u32 %s45, 1
        %s257 = smul.addr %s256, 16
        %s258 = scalar_lea.vmem [#allocation2], %s257
        %p259 = pneg %p58
        %p260 = pneg %p55
        %p261 = pneg %p79
        %p262 = pneg %p76
        %p263 = pneg %p100
        %p264 = pneg %p97
        %p265 = pneg %p121
        %p266 = pneg %p118
        %p267 = pneg %p149
        %p268 = pneg %p146
        %s269 = sand.u32 %s136, 1
        %s270 = scalar_lea.sflag [#allocation4], %s269
        %s271 = sand.u32 %s136, 1
        %s272 = smul.addr %s271, 32
        %s273 = scalar_lea.vmem [#allocation10], %s272
        %s274 = smul.u32 2, %s28
        %s275 = smul.u32 2, %s28
        %v277 = vld [vmem:[%s237] sm:$0xff]
        %v278 = vld [vmem:[%s237 + $0x8] sm:$0xff]
        %v279 = vpack.c.bf16 %v278, %v277
        %v280 = vld [vmem:[#allocation5] sm:$0xff]
        %v281 = vld [vmem:[#allocation5 + $0x8] sm:$0xff]
        %v282 = vld [vmem:[#allocation5 + $0x10] sm:$0xff]
        %v286 = vunpack.c.l.b16 %v280
        %v287 = vunpack.c.h.b16 %v280
        %v288 = vunpack.c.l.b16 %v281
        %v289 = vunpack.c.h.b16 %v281
        %v290 = vunpack.c.l.b16 %v282
        %v291 = vunpack.c.h.b16 %v282
        %v292 = vpack.c.b16 %v288, %v286
        %v293 = vpack.c.b16 %v289, %v287
        %v294 = vpack.c.b16 %v290, %v290
        %v295 = vpack.c.b16 %v291, %v291
        %vm298 = vcmask 195584
        %v300 = vsel %vm298, %v279, 0
        %vm302 = vcmask 1043456
        %v304 = vsel %vm302, %v294, 0
        %v307 = vsel %vm302, %v295, 0
        %309 = vmatprep.subr.bf16.mxu0 %v293
        %310 = vmatpush1.bf16.msra.mxu0 %v292
        %311 = vmatprep.subr.bf16.mxu0 %v307
        %312 = vmatpush1.bf16.msra.mxu0 %v304
        %313 = vmatprep.subr.bf16.mxu0 0
        %314 = vmatpush1.bf16.msra.mxu0 0
        %315 = vmatprep.subr.bf16.mxu0 0
        %316 = vmatpush1.bf16.msra.mxu0 0
        %317 = vmatprep.subr.bf16.mxu0 0
        %318 = vmatpush1.bf16.msra.mxu0 0
        %319 = vmatprep.subr.bf16.mxu0 0
        %320 = vmatpush1.bf16.msra.mxu0 0
        %321 = vmatprep.subr.bf16.mxu0 0
        %322 = vmatpush1.bf16.msra.mxu0 0
        %323 = vmatprep.subr.bf16.mxu0 0
        %324 = vmatpush1.bf16.msra.mxu0 0
        %325 = vmatprep.subr.bf16.mxu0 0
        %326 = vmatpush1.bf16.msra.mxu0 0
        %327 = vmatprep.subr.bf16.mxu0 0
        %328 = vmatpush1.bf16.msra.mxu0 0
        %329 = vmatprep.subr.bf16.mxu0 0
        %330 = vmatpush1.bf16.msra.mxu0 0
        %331 = vmatprep.subr.bf16.mxu0 0
        %332 = vmatpush1.bf16.msra.mxu0 0
        %333 = vmatprep.subr.bf16.mxu0 0
        %334 = vmatpush1.bf16.msra.mxu0 0
        %335 = vmatprep.subr.bf16.mxu0 0
        %336 = vmatpush1.bf16.msra.mxu0 0
        %337 = vmatprep.subr.bf16.mxu0 0
        %338 = vmatpush1.bf16.msra.mxu0 0
        %339 = vmatprep.subr.bf16.mxu0 0
        %340 = vmatpush1.bf16.msra.mxu0 0
        %341 = vmatprep.mubr.bf16.mxu0 0
        %342 = vmatmul.mubr.bf16.gmra.mrb[0].mxu0 %v300
        %v343 = vpop.f32.mrb[0].mxu0
        %v344 = vadd.f32 0.0, %v343
        %v345 = vpop.f32.mrb[0].mxu0
        %v346 = vadd.f32 0.0, %v345
        %v347 = vpop.f32.mrb[0].mxu0
        %v348 = vadd.f32 0.0, %v347
        %v349 = vpop.f32.mrb[0].mxu0
        %v350 = vadd.f32 0.0, %v349
        %351 = vdwg.mxu0
        %v352 = vld [vmem:[#allocation7] sm:$0x3]
        %v354 = vlaneseq
        %v355 = vshrl.u32 %v354, 7
        %v356 = vsub.s32 0, %v355
        %v357 = vrot.slane %v352, %v356
        %v358 = vlaneseq
        %v359 = vshrl.u32 %v358, 7
        %v360 = vsub.s32 1, %v359
        %v361 = vrot.slane %v352, %v360
        %v364 = vmul.f32 %v344, %v357
        %v365 = vmul.f32 %v346, %v361
        %v366 = vmul.f32 %v348, %v357
        %v367 = vmul.f32 %v350, %v361
        %v368 = vld [vmem:[#allocation8] sm:$0x3]
        %v370 = vlaneseq
        %v371 = vshrl.u32 %v370, 7
        %v372 = vsub.s32 0, %v371
        %v373 = vrot.slane %v368, %v372
        %v374 = vlaneseq
        %v375 = vshrl.u32 %v374, 7
        %v376 = vsub.s32 1, %v375
        %v377 = vrot.slane %v368, %v376
        %v380 = vadd.f32 %v364, %v373
        %v381 = vadd.f32 %v365, %v377
        %v382 = vadd.f32 %v366, %v373
        %v383 = vadd.f32 %v367, %v377
        %v384 = vxor.u32 %v380, 2147483648
        %v385 = vxor.u32 %v381, 2147483648
        %v386 = vxor.u32 %v382, 2147483648
        %v387 = vxor.u32 %v383, 2147483648
        %v388 = vmul.f32 %v384, 1.442695
        %v389 = vpow.pop %v388
        %v390 = vmul.f32 %v385, 1.442695
        %v391 = vpow.pop %v390
        %v392 = vmul.f32 %v386, 1.442695
        %v393 = vpow.pop %v392
        %v394 = vmul.f32 %v387, 1.442695
        %v395 = vpow.pop %v394
        %v396 = vadd.f32 %v389, 1.0
        %v397 = vadd.f32 %v391, 1.0
        %v398 = vadd.f32 %v393, 1.0
        %v399 = vadd.f32 %v395, 1.0
        %v400 = vrcp.pop %v396
        %v401 = vmul.f32 1.0, %v400
        %v402 = vrcp.pop %v397
        %v403 = vmul.f32 1.0, %v402
        %v404 = vrcp.pop %v398
        %v405 = vmul.f32 1.0, %v404
        %v406 = vrcp.pop %v399
        %v407 = vmul.f32 1.0, %v406
        %v408 = vmul.f32 %v380, %v401
        %v409 = vmul.f32 %v381, %v403
        %v410 = vmul.f32 %v382, %v405
        %v411 = vmul.f32 %v383, %v407
        %412 = vst [vmem:[%s273] sm:$0xff] %v408
        %vm413 = vcmask 130048
        %414 = vst.msk [vmem:[%s273 + $0x8] sm:$0xff] %vm413, %v409
        %415 = vst [vmem:[%s273 + $0x10] sm:$0xff] %v410
        %416 = vst.msk [vmem:[%s273 + $0x18] sm:$0xff] %vm413, %v411
        %s417 = sand.u32 %s136, 1
        %s418 = scalar_lea.sflag [#allocation4], %s417
        %s419 = sand.u32 %s136, 1
        %s420 = smul.addr %s419, 32
        %s421 = scalar_lea.vmem [#allocation10], %s420
        // Predicated region
        $region53: #{_lambda_.20} parent=35 // pred_check
          %p422 = pneg %p146
        $region54: #{_lambda_.20} parent=35 // pred_check_branch
          %424 = sbr.rel (%p422) target = $region56
        $region55: #{_lambda_.20} parent=35 // pred_region
          %s425 = smul.u32 2, %s28
          %s427 = ssub.s32 512, 512
          %428 = vsyncadd %s418, %s427
          %s429 = smul.addr %s425, 2
          %s430 = smul.addr %s27, 4
          %s431 = sadd.s32 %s429, %s430
          %s432 = smul.addr %s431, 128
          %s433 = scalar_lea.hbm %s4, %s432
          %s434 = sshll.u32 %s421, 4
          %s435 = int_to_ptr.vmem [resolvable:$true] %s434
          %440 = dma.vmem_to_hbm [thread:$0]  %s435, 512, %s433, %s418, 256, 256, 16
        $region56: #{_lambda_.20} parent=35 // pred_fallthru
          _
      $region36: #{_lambda_.20} parent=5 // pred_fallthru
        _
      %p441 = scmp.le.s32.totalorder 2, %s18
      // Predicated region
      $region57: #{_lambda_.20} parent=5 // pred_check
        %p442 = pneg %p441
      $region58: #{_lambda_.20} parent=5 // pred_check_branch
        %444 = sbr.rel (%p442) target = $region60
      $region59: #{_lambda_.20} parent=5 // pred_region
        %s445 = ssub.s32 %s18, 2
        // Predicated region
        $region61: #{_lambda_.20} parent=59 // pred_check
          %p446 = pneg %p152
        $region62: #{_lambda_.20} parent=59 // pred_check_branch
          %448 = sbr.rel (%p446) target = $region64
        $region63: #{_lambda_.20} parent=59 // pred_region
          %s449 = sand.u32 %s137, 1
          %s450 = scalar_lea.sflag [#allocation4], %s449
          %s451 = sand.u32 %s137, 1
          %s452 = smul.addr %s451, 32
          %s453 = scalar_lea.vmem [#allocation10], %s452
          %454 = dma.done %s450, 512
        $region64: #{_lambda_.20} parent=59 // pred_fallthru
          _
      $region60: #{_lambda_.20} parent=5 // pred_fallthru
        _
    $region6: #{_lambda_.20} parent=1 // loop_footer
      %s22 = sadd.s32 1, %s18
    $region7: #{_lambda_.20} parent=1 // loop_footer_branch
      %17 = sbr.rel target = $region3
    $region8: #{_lambda_.20} parent=1 // loop_exit
      _
    %455 = vsyncpa [#allocation3], 1
    %s456 = scalar_lea.sflag [#allocation3], 1
    %457 = vsyncpa %s456, 1
    %458 = vsyncpa [#allocation6], 1
    %459 = vsyncpa [#allocation9], 1
    %460 = vsyncpa [#allocation4], 1
    %s461 = scalar_lea.sflag [#allocation4], 1
    %462 = vsyncpa %s461, 1

// kernel: _lambda_.22
$region0: #{_lambda_.22}
  #allocation0 [shape = 'u32[]', space=smem, size = 0x4, offset = 0x4, fixed_abs, tag = 'smem constant byte address 0x4 - core index']
  #allocation1 [shape = 'u32[144,128]{1,0:T(1,128)}', space=vmem, size = 0x12000, scoped, tag = 'internal scratch']
  %s0 = inlined_call_operand.hbm [shape: f32[2,144], index: 0, kind: input, shape index: {}]
  %s1 = inlined_call_operand.hbm [shape: f32[144,8], index: 1, kind: input, shape index: {}]
  %s2 = inlined_call_operand.hbm [shape: f32[1,8], index: 2, kind: input, shape index: {}]
  %s3 = inlined_call_operand.hbm [shape: f32[8,144], index: 3, kind: input, shape index: {}]
  %s4 = inlined_call_operand.hbm [shape: f32[1,144], index: 4, kind: input, shape index: {}]
  %s5 = inlined_call_operand.hbm [shape: f32[2,144], index: 5, kind: output, shape index: {}]
  %s6 = sld [smem:[#allocation0]]
  $region50: #{_lambda_.22} parent=0
    _
  %s8 = ssub.s32 1, %s6
  %s9 = scalar_select 0, %s8, %s6
  $region1: #{_lambda_.22} parent=0
    #allocation2 [shape = 'u8[2048]{0}', space=vmem, size = 0x800, scoped, tag = 'input window, operand 0, single buffered']
    #allocation3 [shape = 's32[1]{0}', space=sflag, size = 0x4, scoped, tag = 'scoped memory for _lambda_.22']
    #allocation4 [shape = 's32[1]{0}', space=sflag, size = 0x4, scoped, tag = 'scoped memory for _lambda_.22']
    #allocation5 [shape = 'u8[73728]{0}', space=vmem, size = 0x12000, scoped, tag = 'input window, operand 1, single buffered']
    #allocation6 [shape = 's32[1]{0}', space=sflag, size = 0x4, scoped, tag = 'scoped memory for _lambda_.22']
    #allocation7 [shape = 'u8[512]{0}', space=vmem, size = 0x400, scoped, tag = 'input window, operand 2, single buffered']
    #allocation8 [shape = 'u8[8192]{0}', space=vmem, size = 0x2000, scoped, tag = 'input window, operand 3, single buffered']
    #allocation9 [shape = 's32[1]{0}', space=sflag, size = 0x4, scoped, tag = 'scoped memory for _lambda_.22']
    #allocation10 [shape = 'u8[1024]{0}', space=vmem, size = 0x400, scoped, tag = 'input window, operand 4, single buffered']
    #allocation11 [shape = 'u8[2048]{0}', space=vmem, size = 0x800, scoped, tag = 'output window, operand 0, single buffered']
    %10 = vsyncpa [#allocation3], 0
    %11 = vsyncpa [#allocation6], 0
    %12 = vsyncpa [#allocation9], 0
    %13 = vsyncpa [#allocation4], 0
    // Predicated region
    $region2: #{_lambda_.22} parent=1 // pred_check
      _
    $region3: #{_lambda_.22} parent=1 // pred_check_branch
      %15 = sbr.rel (0) target = $region5
    $region4: #{_lambda_.22} parent=1 // pred_region
      %s17 = ssub.s32 64, 64
      %18 = vsyncadd [#allocation3], %s17
      %s20 = sshll.u32 [#allocation2], 4
      %s21 = int_to_ptr.vmem [resolvable:$true] %s20
      %23 = dma.hbm_to_vmem [thread:$0]  %s0, 64, %s21, [#allocation3]
    $region5: #{_lambda_.22} parent=1 // pred_fallthru
      _
    // Predicated region
    $region6: #{_lambda_.22} parent=1 // pred_check
      _
    $region7: #{_lambda_.22} parent=1 // pred_check_branch
      %25 = sbr.rel (0) target = $region9
    $region8: #{_lambda_.22} parent=1 // pred_region
      %s27 = ssub.s32 2304, 2304
      %28 = vsyncadd [#allocation6], %s27
      %s29 = sshll.u32 [#allocation5], 4
      %s30 = int_to_ptr.vmem [resolvable:$true] %s29
      %35 = dma.hbm_to_vmem [thread:$0]  %s1, 2304, %s30, [#allocation6], 128, 128, 8
    $region9: #{_lambda_.22} parent=1 // pred_fallthru
      _
    // Predicated region
    $region10: #{_lambda_.22} parent=1 // pred_check
      _
    $region11: #{_lambda_.22} parent=1 // pred_check_branch
      %37 = sbr.rel (0) target = $region13
    $region12: #{_lambda_.22} parent=1 // pred_region
      %s39 = ssub.s32 16, 16
      %40 = vsyncadd [#allocation6], %s39
      %s42 = sshll.u32 [#allocation7], 4
      %s43 = int_to_ptr.vmem [resolvable:$true] %s42
      %45 = dma.hbm_to_vmem [thread:$0]  %s2, 16, %s43, [#allocation6]
    $region13: #{_lambda_.22} parent=1 // pred_fallthru
      _
    // Predicated region
    $region14: #{_lambda_.22} parent=1 // pred_check
      _
    $region15: #{_lambda_.22} parent=1 // pred_check_branch
      %47 = sbr.rel (0) target = $region17
    $region16: #{_lambda_.22} parent=1 // pred_region
      %s49 = ssub.s32 256, 256
      %50 = vsyncadd [#allocation9], %s49
      %s52 = sshll.u32 [#allocation8], 4
      %s53 = int_to_ptr.vmem [resolvable:$true] %s52
      %55 = dma.hbm_to_vmem [thread:$0]  %s3, 256, %s53, [#allocation9]
    $region17: #{_lambda_.22} parent=1 // pred_fallthru
      _
    // Predicated region
    $region18: #{_lambda_.22} parent=1 // pred_check
      _
    $region19: #{_lambda_.22} parent=1 // pred_check_branch
      %57 = sbr.rel (0) target = $region21
    $region20: #{_lambda_.22} parent=1 // pred_region
      %s59 = ssub.s32 32, 32
      %60 = vsyncadd [#allocation9], %s59
      %s62 = sshll.u32 [#allocation10], 4
      %s63 = int_to_ptr.vmem [resolvable:$true] %s62
      %65 = dma.hbm_to_vmem [thread:$0]  %s4, 32, %s63, [#allocation9]
    $region21: #{_lambda_.22} parent=1 // pred_fallthru
      _
    // Predicated region
    $region22: #{_lambda_.22} parent=1 // pred_check
      _
    $region23: #{_lambda_.22} parent=1 // pred_check_branch
      %67 = sbr.rel (0) target = $region25
    $region24: #{_lambda_.22} parent=1 // pred_region
      %68 = dma.done [#allocation3], 64
    $region25: #{_lambda_.22} parent=1 // pred_fallthru
      _
    // Predicated region
    $region26: #{_lambda_.22} parent=1 // pred_check
      _
    $region27: #{_lambda_.22} parent=1 // pred_check_branch
      %70 = sbr.rel (0) target = $region29
    $region28: #{_lambda_.22} parent=1 // pred_region
      %71 = dma.done [#allocation6], 2304
    $region29: #{_lambda_.22} parent=1 // pred_fallthru
      _
    // Predicated region
    $region30: #{_lambda_.22} parent=1 // pred_check
      _
    $region31: #{_lambda_.22} parent=1 // pred_check_branch
      %73 = sbr.rel (0) target = $region33
    $region32: #{_lambda_.22} parent=1 // pred_region
      %74 = dma.done [#allocation6], 16
    $region33: #{_lambda_.22} parent=1 // pred_fallthru
      _
    // Predicated region
    $region34: #{_lambda_.22} parent=1 // pred_check
      _
    $region35: #{_lambda_.22} parent=1 // pred_check_branch
      %76 = sbr.rel (0) target = $region37
    $region36: #{_lambda_.22} parent=1 // pred_region
      %77 = dma.done [#allocation9], 256
    $region37: #{_lambda_.22} parent=1 // pred_fallthru
      _
    // Predicated region
    $region38: #{_lambda_.22} parent=1 // pred_check
      _
    $region39: #{_lambda_.22} parent=1 // pred_check_branch
      %79 = sbr.rel (0) target = $region41
    $region40: #{_lambda_.22} parent=1 // pred_region
      %80 = dma.done [#allocation9], 32
    $region41: #{_lambda_.22} parent=1 // pred_fallthru
      _
    %v81 = vld [vmem:[#allocation2] sm:$0xf]
    %v82 = vld [vmem:[#allocation5] sm:$0xff]
    %v83 = vld [vmem:[#allocation5 + $0x8] sm:$0xff]
    %v84 = vld [vmem:[#allocation5 + $0x10] sm:$0xff]
    %v85 = vld [vmem:[#allocation5 + $0x18] sm:$0xff]
    %v86 = vld [vmem:[#allocation5 + $0x20] sm:$0xff]
    %v87 = vld [vmem:[#allocation5 + $0x28] sm:$0xff]
    %v88 = vld [vmem:[#allocation5 + $0x30] sm:$0xff]
    %v89 = vld [vmem:[#allocation5 + $0x38] sm:$0xff]
    %v90 = vld [vmem:[#allocation5 + $0x40] sm:$0xff]
    %v91 = vld [vmem:[#allocation5 + $0x48] sm:$0xff]
    %v92 = vld [vmem:[#allocation5 + $0x50] sm:$0xff]
    %v93 = vld [vmem:[#allocation5 + $0x58] sm:$0xff]
    %v94 = vld [vmem:[#allocation5 + $0x60] sm:$0xff]
    %v95 = vld [vmem:[#allocation5 + $0x68] sm:$0xff]
    %v96 = vld [vmem:[#allocation5 + $0x70] sm:$0xff]
    %v97 = vld [vmem:[#allocation5 + $0x78] sm:$0xff]
    %v98 = vld [vmem:[#allocation5 + $0x80] sm:$0xff]
    %v99 = vld [vmem:[#allocation5 + $0x88] sm:$0xff]
    %v100 = vld [vmem:[#allocation7] sm:$0x1]
    %v102 = vlaneseq
    %v103 = vshrl.u32 %v102, 7
    %v104 = vsub.s32 0, %v103
    %v105 = vrot.slane %v100, %v104
    %v109 = vunpack.c.l.s4 1983009808
    %v110 = vunpack.c.0.s8 %v109
    %v111 = vlaneseq
    %v112 = vshrl.u32 %v111, 7
    %v113 = vsub.s32 %v110, %v112
    %v114 = vrot.slane %v81, %v113
    %v115 = vcombine.high %v114, %v114
    %vm117 = vcmask 130048
    %v118 = vsel %vm117, %v115, 0
    %120 = vmatprep.subr.mxu0 0.0
    %121 = vmatpush1.msra.mxu0 %v82
    %122 = vmatprep.subr.mxu0 0.0
    %123 = vmatpush1.msra.mxu0 %v83
    %124 = vmatprep.subr.mxu0 0.0
    %125 = vmatpush1.msra.mxu0 %v84
    %126 = vmatprep.subr.mxu0 0.0
    %127 = vmatpush1.msra.mxu0 %v85
    %128 = vmatprep.subr.mxu0 0.0
    %129 = vmatpush1.msra.mxu0 %v86
    %130 = vmatprep.subr.mxu0 0.0
    %131 = vmatpush1.msra.mxu0 %v87
    %132 = vmatprep.subr.mxu0 0.0
    %133 = vmatpush1.msra.mxu0 %v88
    %134 = vmatprep.subr.mxu0 0.0
    %135 = vmatpush1.msra.mxu0 %v89
    %136 = vmatprep.subr.mxu0 0.0
    %137 = vmatpush1.msra.mxu0 %v90
    %138 = vmatprep.subr.mxu0 0.0
    %139 = vmatpush1.msra.mxu0 %v91
    %140 = vmatprep.subr.mxu0 0.0
    %141 = vmatpush1.msra.mxu0 %v92
    %142 = vmatprep.subr.mxu0 0.0
    %143 = vmatpush1.msra.mxu0 %v93
    %144 = vmatprep.subr.mxu0 0.0
    %145 = vmatpush1.msra.mxu0 %v94
    %146 = vmatprep.subr.mxu0 0.0
    %147 = vmatpush1.msra.mxu0 %v95
    %148 = vmatprep.subr.mxu0 0.0
    %149 = vmatpush1.msra.mxu0 %v96
    %150 = vmatprep.subr.mxu0 0.0
    %151 = vmatpush1.msra.mxu0 %v97
    %152 = vmatprep.subr.mxu0 0.0
    %153 = vmatpush1.msra.mxu0 %v98
    %154 = vmatprep.subr.mxu0 0.0
    %155 = vmatpush1.msra.mxu0 %v99
    %156 = vmatprep.subr.mxu0 0.0
    %157 = vmatpush1.msra.mxu0 0.0
    %158 = vmatprep.subr.mxu0 0.0
    %159 = vmatpush1.msra.mxu0 0.0
    %160 = vmatprep.subr.mxu0 0.0
    %161 = vmatpush1.msra.mxu0 0.0
    %162 = vmatprep.subr.mxu0 0.0
    %163 = vmatpush1.msra.mxu0 0.0
    %164 = vmatprep.subr.mxu0 0.0
    %165 = vmatpush1.msra.mxu0 0.0
    %166 = vmatprep.subr.mxu0 0.0
    %167 = vmatpush1.msra.mxu0 0.0
    %168 = vmatprep.subr.mxu0 0.0
    %169 = vmatpush1.msra.mxu0 0.0
    %170 = vmatprep.subr.mxu0 0.0
    %171 = vmatpush1.msra.mxu0 0.0
    %172 = vmatprep.subr.mxu0 0.0
    %173 = vmatpush1.msra.mxu0 0.0
    %174 = vmatprep.subr.mxu0 0.0
    %175 = vmatpush1.msra.mxu0 0.0
    %176 = vmatprep.subr.mxu0 0.0
    %177 = vmatpush1.msra.mxu0 0.0
    %178 = vmatprep.subr.mxu0 0.0
    %179 = vmatpush1.msra.mxu0 0.0
    %180 = vmatprep.subr.mxu0 0.0
    %181 = vmatpush1.msra.mxu0 0.0
    %182 = vmatprep.subr.mxu0 0.0
    %183 = vmatpush1.msra.mxu0 0.0
    %184 = vmatprep.mubr.f32.mxu0 %v118
    %185 = vmatmul.mubr.f32.gmra.mrb[0].mxu0 %v114
    %v186 = vpop.f32.mrb[0].mxu0
    %v187 = vadd.f32 %v105, %v186
    %v188 = vpop.f32.mrb[0].mxu0
    %189 = vdwg.mxu0
    %v190 = vxor.u32 %v187, 2147483648
    %v191 = vmul.f32 %v190, 1.442695
    %v192 = vpow.pop %v191
    %v193 = vadd.f32 %v192, 1.0
    %v194 = vrcp.pop %v193
    %v195 = vmul.f32 1.0, %v194
    %v196 = vmul.f32 %v187, %v195
    %v197 = vld [vmem:[#allocation8] sm:$0xff]
    %v198 = vld [vmem:[#allocation8 + $0x8] sm:$0xff]
    %v199 = vld [vmem:[#allocation10] sm:$0x3]
    %v201 = vlaneseq
    %v202 = vshrl.u32 %v201, 7
    %v203 = vsub.s32 0, %v202
    %v204 = vrot.slane %v199, %v203
    %v205 = vlaneseq
    %v206 = vshrl.u32 %v205, 7
    %v207 = vsub.s32 1, %v206
    %v208 = vrot.slane %v199, %v207
    %vm211 = vcmask 64512
    %v213 = vsel %vm211, %v196, 0
    %215 = vmatprep.subr.mxu0 %v198
    %216 = vmatpush1.msra.mxu0 %v197
    %217 = vmatprep.subr.mxu0 0.0
    %218 = vmatpush1.msra.mxu0 0.0
    %219 = vmatprep.subr.mxu0 0.0
    %220 = vmatpush1.msra.mxu0 0.0
    %221 = vmatprep.subr.mxu0 0.0
    %222 = vmatpush1.msra.mxu0 0.0
    %223 = vmatprep.subr.mxu0 0.0
    %224 = vmatpush1.msra.mxu0 0.0
    %225 = vmatprep.subr.mxu0 0.0
    %226 = vmatpush1.msra.mxu0 0.0
    %227 = vmatprep.subr.mxu0 0.0
    %228 = vmatpush1.msra.mxu0 0.0
    %229 = vmatprep.subr.mxu0 0.0
    %230 = vmatpush1.msra.mxu0 0.0
    %231 = vmatprep.subr.mxu0 0.0
    %232 = vmatpush1.msra.mxu0 0.0
    %233 = vmatprep.subr.mxu0 0.0
    %234 = vmatpush1.msra.mxu0 0.0
    %235 = vmatprep.subr.mxu0 0.0
    %236 = vmatpush1.msra.mxu0 0.0
    %237 = vmatprep.subr.mxu0 0.0
    %238 = vmatpush1.msra.mxu0 0.0
    %239 = vmatprep.subr.mxu0 0.0
    %240 = vmatpush1.msra.mxu0 0.0
    %241 = vmatprep.subr.mxu0 0.0
    %242 = vmatpush1.msra.mxu0 0.0
    %243 = vmatprep.subr.mxu0 0.0
    %244 = vmatpush1.msra.mxu0 0.0
    %245 = vmatprep.subr.mxu0 0.0
    %246 = vmatpush1.msra.mxu0 0.0
    %247 = vmatprep.subr.mxu0 0.0
    %248 = vmatpush1.msra.mxu0 0.0
    %249 = vmatprep.subr.mxu0 0.0
    %250 = vmatpush1.msra.mxu0 0.0
    %251 = vmatprep.subr.mxu0 0.0
    %252 = vmatpush1.msra.mxu0 0.0
    %253 = vmatprep.subr.mxu0 0.0
    %254 = vmatpush1.msra.mxu0 0.0
    %255 = vmatprep.subr.mxu0 0.0
    %256 = vmatpush1.msra.mxu0 0.0
    %257 = vmatprep.subr.mxu0 0.0
    %258 = vmatpush1.msra.mxu0 0.0
    %259 = vmatprep.subr.mxu0 0.0
    %260 = vmatpush1.msra.mxu0 0.0
    %261 = vmatprep.subr.mxu0 0.0
    %262 = vmatpush1.msra.mxu0 0.0
    %263 = vmatprep.subr.mxu0 0.0
    %264 = vmatpush1.msra.mxu0 0.0
    %265 = vmatprep.subr.mxu0 0.0
    %266 = vmatpush1.msra.mxu0 0.0
    %267 = vmatprep.subr.mxu0 0.0
    %268 = vmatpush1.msra.mxu0 0.0
    %269 = vmatprep.subr.mxu0 0.0
    %270 = vmatpush1.msra.mxu0 0.0
    %271 = vmatprep.subr.mxu0 0.0
    %272 = vmatpush1.msra.mxu0 0.0
    %273 = vmatprep.subr.mxu0 0.0
    %274 = vmatpush1.msra.mxu0 0.0
    %275 = vmatprep.subr.mxu0 0.0
    %276 = vmatpush1.msra.mxu0 0.0
    %277 = vmatprep.subr.mxu0 0.0
    %278 = vmatpush1.msra.mxu0 0.0
    %279 = vmatprep.mubr.f32.mxu0 0.0
    %280 = vmatmul.mubr.f32.gmra.mrb[0].mxu0 %v213
    %v281 = vpop.f32.mrb[0].mxu0
    %v282 = vadd.f32 %v204, %v281
    %v283 = vpop.f32.mrb[0].mxu0
    %v284 = vadd.f32 %v208, %v283
    %285 = vdwg.mxu0
    %v286 = vxor.u32 %v282, 2147483648
    %v287 = vxor.u32 %v284, 2147483648
    %v288 = vmul.f32 %v286, 1.442695
    %v289 = vpow.pop %v288
    %v290 = vmul.f32 %v287, 1.442695
    %v291 = vpow.pop %v290
    %v292 = vadd.f32 %v289, 1.0
    %v293 = vadd.f32 %v291, 1.0
    %v294 = vrcp.pop %v292
    %v295 = vmul.f32 1.0, %v294
    %v296 = vrcp.pop %v293
    %v297 = vmul.f32 1.0, %v296
    %v300 = vcombine.low %v295, %v297
    %v302 = vunpack.c.l.s4 1983009808
    %v303 = vunpack.c.0.s8 %v302
    %v304 = vlaneseq
    %v305 = vshrl.u32 %v304, 7
    %v306 = vsub.s32 %v303, %v305
    %v307 = vrot.slane %v300, %v306
    %vm309 = vcmask 1041408
    %vm310 = vcmask 125954
    %vm311 = vmor %vm310, %vm309
    %312 = vst.msk [vmem:[#allocation11] sm:$0xf] %vm311, %v307
    // Predicated region
    $region42: #{_lambda_.22} parent=1 // pred_check
      _
    $region43: #{_lambda_.22} parent=1 // pred_check_branch
      %314 = sbr.rel (0) target = $region45
    $region44: #{_lambda_.22} parent=1 // pred_region
      %s316 = ssub.s32 64, 64
      %317 = vsyncadd [#allocation4], %s316
      %s319 = sshll.u32 [#allocation11], 4
      %s320 = int_to_ptr.vmem [resolvable:$true] %s319
      %322 = dma.vmem_to_hbm [thread:$0]  %s320, 64, %s5, [#allocation4]
    $region45: #{_lambda_.22} parent=1 // pred_fallthru
      _
    // Predicated region
    $region46: #{_lambda_.22} parent=1 // pred_check
      _
    $region47: #{_lambda_.22} parent=1 // pred_check_branch
      %324 = sbr.rel (0) target = $region49
    $region48: #{_lambda_.22} parent=1 // pred_region
      %325 = dma.done [#allocation4], 64
    $region49: #{_lambda_.22} parent=1 // pred_fallthru
      _
    %326 = vsyncpa [#allocation3], 1
    %327 = vsyncpa [#allocation6], 1
    %328 = vsyncpa [#allocation9], 1
    %329 = vsyncpa [#allocation4], 1

// kernel: _lambda_.23
$region0: #{_lambda_.23}
  #allocation0 [shape = 'u32[]', space=smem, size = 0x4, offset = 0x4, fixed_abs, tag = 'smem constant byte address 0x4 - core index']
  #allocation1 [shape = 'u32[144,128]{1,0:T(1,128)}', space=vmem, size = 0x12000, scoped, tag = 'internal scratch']
  %s0 = inlined_call_operand.hbm [shape: f32[2,16,144], index: 0, kind: input, shape index: {}]
  %s1 = inlined_call_operand.hbm [shape: f32[2,1,144], index: 1, kind: input, shape index: {}]
  %s2 = inlined_call_operand.hbm [shape: bf16[144,24], index: 2, kind: input, shape index: {}]
  %s3 = inlined_call_operand.hbm [shape: f32[1,24], index: 3, kind: input, shape index: {}]
  %s4 = inlined_call_operand.hbm [shape: f32[1,24], index: 4, kind: input, shape index: {}]
  %s5 = inlined_call_operand.hbm [shape: f32[2,16,24], index: 5, kind: input, shape index: {}]
  %s6 = inlined_call_operand.hbm [shape: f32[2,16,24], index: 6, kind: output, shape index: {}]
  %s7 = sld [smem:[#allocation0]]
  $region81: #{_lambda_.23} parent=0
    _
  %s9 = ssub.s32 1, %s7
  %s10 = scalar_select 0, %s9, %s7
  $region1: #{_lambda_.23} parent=0
    #allocation2 [shape = 'u8[32768]{0}', space=vmem, size = 0x8000, scoped, tag = 'input window, operand 0']
    #allocation3 [shape = 's32[2]{0}', space=sflag, size = 0x8, scoped, tag = 'scoped memory for _lambda_.23']
    #allocation4 [shape = 's32[2]{0}', space=sflag, size = 0x8, scoped, tag = 'scoped memory for _lambda_.23']
    #allocation5 [shape = 'u8[2048]{0}', space=vmem, size = 0x800, scoped, tag = 'input window, operand 1']
    #allocation6 [shape = 's32[2]{0}', space=sflag, size = 0x8, scoped, tag = 'scoped memory for _lambda_.23']
    #allocation7 [shape = 'u8[36864]{0}', space=vmem, size = 0x9000, scoped, tag = 'input window, operand 2, single buffered']
    #allocation8 [shape = 'u8[512]{0}', space=vmem, size = 0x400, scoped, tag = 'input window, operand 3, single buffered']
    #allocation9 [shape = 's32[1]{0}', space=sflag, size = 0x4, scoped, tag = 'scoped memory for _lambda_.23']
    #allocation10 [shape = 'u8[512]{0}', space=vmem, size = 0x400, scoped, tag = 'input window, operand 4, single buffered']
    #allocation11 [shape = 'u8[16384]{0}', space=vmem, size = 0x4000, scoped, tag = 'input window, operand 5']
    #allocation12 [shape = 's32[2]{0}', space=sflag, size = 0x8, scoped, tag = 'scoped memory for _lambda_.23']
    #allocation13 [shape = 'u8[16384]{0}', space=vmem, size = 0x4000, scoped, tag = 'output window, operand 0']
    %11 = vsyncpa [#allocation3], 0
    %s12 = scalar_lea.sflag [#allocation3], 1
    %13 = vsyncpa %s12, 0
    %14 = vsyncpa [#allocation6], 0
    %s15 = scalar_lea.sflag [#allocation6], 1
    %16 = vsyncpa %s15, 0
    %17 = vsyncpa [#allocation9], 0
    %18 = vsyncpa [#allocation12], 0
    %s19 = scalar_lea.sflag [#allocation12], 1
    %20 = vsyncpa %s19, 0
    %21 = vsyncpa [#allocation4], 0
    %s22 = scalar_lea.sflag [#allocation4], 1
    %23 = vsyncpa %s22, 0
    loop: start=0, step=1, limit=4
    $region2: #{_lambda_.23} parent=1 // loop_pre_header
      _
    $region3: #{_lambda_.23} parent=1 // loop_header
      %s25 = sphi 0, %s29
      %p26 = scmp.ge.s32.totalorder %s25, 4
      %s32 = sphi 0, %s44
      %s33 = sphi 0, %s40
      %s34 = sphi 0, %s32
      %s35 = sphi 0, %s33
      %s36 = sphi 0, %s34
      %s37 = sphi 0, %s35
      %s49 = sphi 0, %s51
      %s52 = sphi 0, %s49
      %s53 = sphi 0, %s52
      %s69 = sphi 0, %s53
      %s75 = sphi 0, %s77
      %s78 = sphi 0, %s75
      %s79 = sphi 0, %s78
      %s95 = sphi 0, %s79
      %s99 = sphi 0, %s99
      %s101 = sphi 0, %s99
      %s102 = sphi 0, %s101
      %s116 = sphi 0, %s102
      %s120 = sphi 0, %s120
      %s122 = sphi 0, %s120
      %s123 = sphi 0, %s122
      %s137 = sphi 0, %s123
      %s141 = sphi 0, %s141
      %s143 = sphi 0, %s141
      %s144 = sphi 0, %s143
      %s158 = sphi 0, %s144
      %s166 = sphi 0, %s168
      %s169 = sphi 0, %s166
      %s170 = sphi 0, %s169
      %s186 = sphi 0, %s170
      %s194 = sphi 0, %s196
      %s197 = sphi 0, %s194
      %s198 = sphi 0, %s197
      %s214 = sphi 0, %s198
    $region4: #{_lambda_.23} parent=1 // loop_header_branch
      %28 = sbr.rel (%p26) target = $region8
    $region5: #{_lambda_.23} parent=1 // loop_body
      %s30 = ssub.s32 %s25, 1
      %s31 = ssub.s32 %s25, 2
      %s38 = sadd.s32 1, %s33
      %p39 = scmp.ge.s32.totalorder %s38, 1
      %s40 = scalar_select %p39, 0, %s38
      %s41 = sadd.s32 1, %s32
      %s42 = scalar_select %p39, %s41, %s32
      %p43 = scmp.ge.s32.totalorder %s42, 2
      %s44 = scalar_select %p43, 0, %s42
      %s45 = ssub.s32 %s32, %s44
      %s46 = ssub.s32 %s33, %s40
      %s47 = sor.u32 %s45, %s46
      %p48 = scmp.eq.s32.totalorder %s47, 0
      %s50 = sadd.s32 %s49, 1
      %s51 = scalar_select %p48, %s49, %s50
      %p54 = pneg %p48
      %p55 = scmp.eq.s32.totalorder %s25, 1
      %p56 = por %p54, %p55
      %p57 = scmp.ne.s32.totalorder %s49, %s52
      %p58 = scmp.eq.s32.totalorder %s25, 0
      %p59 = por %p57, %p58
      %p60 = scmp.ne.s32.totalorder %s49, %s52
      %p61 = scmp.eq.s32.totalorder %s30, 1
      %p62 = por %p60, %p61
      %p63 = scmp.ne.s32.totalorder %s52, %s53
      %p64 = scmp.eq.s32.totalorder %s30, 0
      %p65 = por %p63, %p64
      %p66 = scmp.ne.s32.totalorder %s52, %s53
      %p67 = scmp.eq.s32.totalorder %s31, 1
      %p68 = por %p66, %p67
      %p70 = scmp.ne.s32.totalorder %s53, %s69
      %p71 = scmp.eq.s32.totalorder %s31, 0
      %p72 = por %p70, %p71
      %s73 = ssub.s32 %s32, %s44
      %p74 = scmp.eq.s32.totalorder %s73, 0
      %s76 = sadd.s32 %s75, 1
      %s77 = scalar_select %p74, %s75, %s76
      %p80 = pneg %p74
      %p81 = scmp.eq.s32.totalorder %s25, 1
      %p82 = por %p80, %p81
      %p83 = scmp.ne.s32.totalorder %s75, %s78
      %p84 = scmp.eq.s32.totalorder %s25, 0
      %p85 = por %p83, %p84
      %p86 = scmp.ne.s32.totalorder %s75, %s78
      %p87 = scmp.eq.s32.totalorder %s30, 1
      %p88 = por %p86, %p87
      %p89 = scmp.ne.s32.totalorder %s78, %s79
      %p90 = scmp.eq.s32.totalorder %s30, 0
      %p91 = por %p89, %p90
      %p92 = scmp.ne.s32.totalorder %s78, %s79
      %p93 = scmp.eq.s32.totalorder %s31, 1
      %p94 = por %p92, %p93
      %p96 = scmp.ne.s32.totalorder %s79, %s95
      %p97 = scmp.eq.s32.totalorder %s31, 0
      %p98 = por %p96, %p97
      %s100 = sadd.s32 %s99, 1
      %p103 = scmp.eq.s32.totalorder %s25, 1
      %p104 = scmp.ne.s32.totalorder %s99, %s101
      %p105 = scmp.eq.s32.totalorder %s25, 0
      %p106 = por %p104, %p105
      %p107 = scmp.ne.s32.totalorder %s99, %s101
      %p108 = scmp.eq.s32.totalorder %s30, 1
      %p109 = por %p107, %p108
      %p110 = scmp.ne.s32.totalorder %s101, %s102
      %p111 = scmp.eq.s32.totalorder %s30, 0
      %p112 = por %p110, %p111
      %p113 = scmp.ne.s32.totalorder %s101, %s102
      %p114 = scmp.eq.s32.totalorder %s31, 1
      %p115 = por %p113, %p114
      %p117 = scmp.ne.s32.totalorder %s102, %s116
      %p118 = scmp.eq.s32.totalorder %s31, 0
      %p119 = por %p117, %p118
      %s121 = sadd.s32 %s120, 1
      %p124 = scmp.eq.s32.totalorder %s25, 1
      %p125 = scmp.ne.s32.totalorder %s120, %s122
      %p126 = scmp.eq.s32.totalorder %s25, 0
      %p127 = por %p125, %p126
      %p128 = scmp.ne.s32.totalorder %s120, %s122
      %p129 = scmp.eq.s32.totalorder %s30, 1
      %p130 = por %p128, %p129
      %p131 = scmp.ne.s32.totalorder %s122, %s123
      %p132 = scmp.eq.s32.totalorder %s30, 0
      %p133 = por %p131, %p132
      %p134 = scmp.ne.s32.totalorder %s122, %s123
      %p135 = scmp.eq.s32.totalorder %s31, 1
      %p136 = por %p134, %p135
      %p138 = scmp.ne.s32.totalorder %s123, %s137
      %p139 = scmp.eq.s32.totalorder %s31, 0
      %p140 = por %p138, %p139
      %s142 = sadd.s32 %s141, 1
      %p145 = scmp.eq.s32.totalorder %s25, 1
      %p146 = scmp.ne.s32.totalorder %s141, %s143
      %p147 = scmp.eq.s32.totalorder %s25, 0
      %p148 = por %p146, %p147
      %p149 = scmp.ne.s32.totalorder %s141, %s143
      %p150 = scmp.eq.s32.totalorder %s30, 1
      %p151 = por %p149, %p150
      %p152 = scmp.ne.s32.totalorder %s143, %s144
      %p153 = scmp.eq.s32.totalorder %s30, 0
      %p154 = por %p152, %p153
      %p155 = scmp.ne.s32.totalorder %s143, %s144
      %p156 = scmp.eq.s32.totalorder %s31, 1
      %p157 = por %p155, %p156
      %p159 = scmp.ne.s32.totalorder %s144, %s158
      %p160 = scmp.eq.s32.totalorder %s31, 0
      %p161 = por %p159, %p160
      %s162 = ssub.s32 %s32, %s44
      %s163 = ssub.s32 %s33, %s40
      %s164 = sor.u32 %s162, %s163
      %p165 = scmp.eq.s32.totalorder %s164, 0
      %s167 = sadd.s32 %s166, 1
      %s168 = scalar_select %p165, %s166, %s167
      %p171 = pneg %p165
      %p172 = scmp.eq.s32.totalorder %s25, 1
      %p173 = por %p171, %p172
      %p174 = scmp.ne.s32.totalorder %s166, %s169
      %p175 = scmp.eq.s32.totalorder %s25, 0
      %p176 = por %p174, %p175
      %p177 = scmp.ne.s32.totalorder %s166, %s169
      %p178 = scmp.eq.s32.totalorder %s30, 1
      %p179 = por %p177, %p178
      %p180 = scmp.ne.s32.totalorder %s169, %s170
      %p181 = scmp.eq.s32.totalorder %s30, 0
      %p182 = por %p180, %p181
      %p183 = scmp.ne.s32.totalorder %s169, %s170
      %p184 = scmp.eq.s32.totalorder %s31, 1
      %p185 = por %p183, %p184
      %p187 = scmp.ne.s32.totalorder %s170, %s186
      %p188 = scmp.eq.s32.totalorder %s31, 0
      %p189 = por %p187, %p188
      %s190 = ssub.s32 %s32, %s44
      %s191 = ssub.s32 %s33, %s40
      %s192 = sor.u32 %s190, %s191
      %p193 = scmp.eq.s32.totalorder %s192, 0
      %s195 = sadd.s32 %s194, 1
      %s196 = scalar_select %p193, %s194, %s195
      %p199 = pneg %p193
      %p200 = scmp.eq.s32.totalorder %s25, 1
      %p201 = por %p199, %p200
      %p202 = scmp.ne.s32.totalorder %s194, %s197
      %p203 = scmp.eq.s32.totalorder %s25, 0
      %p204 = por %p202, %p203
      %p205 = scmp.ne.s32.totalorder %s194, %s197
      %p206 = scmp.eq.s32.totalorder %s30, 1
      %p207 = por %p205, %p206
      %p208 = scmp.ne.s32.totalorder %s197, %s198
      %p209 = scmp.eq.s32.totalorder %s30, 0
      %p210 = por %p208, %p209
      %p211 = scmp.ne.s32.totalorder %s197, %s198
      %p212 = scmp.eq.s32.totalorder %s31, 1
      %p213 = por %p211, %p212
      %p215 = scmp.ne.s32.totalorder %s198, %s214
      %p216 = scmp.eq.s32.totalorder %s31, 0
      %p217 = por %p215, %p216
      %p218 = scmp.le.s32.totalorder 1, %s25
      %p219 = scmp.lt.s32.totalorder %s25, 3
      %p220 = pnand %p218, %p219
      %p221 = pneg %p220
      // Predicated region
      $region9: #{_lambda_.23} parent=5 // pred_check
        _
      $region10: #{_lambda_.23} parent=5 // pred_check_branch
        %223 = sbr.rel (%p220) target = $region12
      $region11: #{_lambda_.23} parent=5 // pred_region
        %s224 = ssub.s32 %s25, 1
        // Predicated region
        $region13: #{_lambda_.23} parent=11 // pred_check
          %p225 = pneg %p112
        $region14: #{_lambda_.23} parent=11 // pred_check_branch
          %227 = sbr.rel (%p225) target = $region16
        $region15: #{_lambda_.23} parent=11 // pred_region
          %s229 = ssub.s32 1152, 1152
          %230 = vsyncadd [#allocation6], %s229
          %s231 = sshll.u32 [#allocation7], 4
          %s232 = int_to_ptr.vmem [resolvable:$true] %s231
          %237 = dma.hbm_to_vmem [thread:$0]  %s2, 1152, %s232, [#allocation6], 64, 64, 4
        $region16: #{_lambda_.23} parent=11 // pred_fallthru
          _
        // Predicated region
        $region17: #{_lambda_.23} parent=11 // pred_check
          %p238 = pneg %p133
        $region18: #{_lambda_.23} parent=11 // pred_check_branch
          %240 = sbr.rel (%p238) target = $region20
        $region19: #{_lambda_.23} parent=11 // pred_region
          %s242 = ssub.s32 16, 16
          %243 = vsyncadd [#allocation9], %s242
          %s245 = sshll.u32 [#allocation8], 4
          %s246 = int_to_ptr.vmem [resolvable:$true] %s245
          %248 = dma.hbm_to_vmem [thread:$0]  %s3, 16, %s246, [#allocation9]
        $region20: #{_lambda_.23} parent=11 // pred_fallthru
          _
        // Predicated region
        $region21: #{_lambda_.23} parent=11 // pred_check
          %p249 = pneg %p154
        $region22: #{_lambda_.23} parent=11 // pred_check_branch
          %251 = sbr.rel (%p249) target = $region24
        $region23: #{_lambda_.23} parent=11 // pred_region
          %s253 = ssub.s32 16, 16
          %254 = vsyncadd [#allocation9], %s253
          %s256 = sshll.u32 [#allocation10], 4
          %s257 = int_to_ptr.vmem [resolvable:$true] %s256
          %259 = dma.hbm_to_vmem [thread:$0]  %s4, 16, %s257, [#allocation9]
        $region24: #{_lambda_.23} parent=11 // pred_fallthru
          _
      $region12: #{_lambda_.23} parent=5 // pred_fallthru
        _
      %p260 = scmp.lt.s32.totalorder %s25, 2
      // Predicated region
      $region25: #{_lambda_.23} parent=5 // pred_check
        %p261 = pneg %p260
      $region26: #{_lambda_.23} parent=5 // pred_check_branch
        %263 = sbr.rel (%p261) target = $region28
      $region27: #{_lambda_.23} parent=5 // pred_region
        // Predicated region
        $region29: #{_lambda_.23} parent=27 // pred_check
          %p264 = pneg %p59
        $region30: #{_lambda_.23} parent=27 // pred_check_branch
          %266 = sbr.rel (%p264) target = $region32
        $region31: #{_lambda_.23} parent=27 // pred_region
          %s267 = sand.u32 %s49, 1
          %s268 = scalar_lea.sflag [#allocation3], %s267
          %s269 = sand.u32 %s49, 1
          %s270 = smul.addr %s269, 32
          %s271 = scalar_lea.vmem [#allocation2], %s270
          %s272 = smul.u32 2, %s33
          %s274 = ssub.s32 512, 512
          %275 = vsyncadd %s268, %s274
          %s276 = smul.addr %s272, 2
          %s277 = smul.addr %s32, 4
          %s278 = sadd.s32 %s276, %s277
          %s279 = smul.addr %s278, 128
          %s280 = scalar_lea.hbm %s0, %s279
          %s281 = sshll.u32 %s271, 4
          %s282 = int_to_ptr.vmem [resolvable:$true] %s281
          %287 = dma.hbm_to_vmem [thread:$0]  %s280, 512, %s282, %s268, 256, 256, 16
        $region32: #{_lambda_.23} parent=27 // pred_fallthru
          _
        // Predicated region
        $region33: #{_lambda_.23} parent=27 // pred_check
          %p288 = pneg %p85
        $region34: #{_lambda_.23} parent=27 // pred_check_branch
          %290 = sbr.rel (%p288) target = $region36
        $region35: #{_lambda_.23} parent=27 // pred_region
          %s291 = sand.u32 %s25, 1
          %s292 = scalar_lea.sflag [#allocation6], %s291
          %s293 = sand.u32 %s75, 1
          %s294 = smul.addr %s293, 2
          %s295 = scalar_lea.vmem [#allocation5], %s294
          %s297 = ssub.s32 32, 32
          %298 = vsyncadd %s292, %s297
          %s299 = smul.addr %s32, 2
          %s300 = smul.addr %s299, 16
          %s301 = scalar_lea.hbm %s1, %s300
          %s303 = sshll.u32 %s295, 4
          %s304 = int_to_ptr.vmem [resolvable:$true] %s303
          %306 = dma.hbm_to_vmem [thread:$0]  %s301, 32, %s304, %s292
        $region36: #{_lambda_.23} parent=27 // pred_fallthru
          _
        // Predicated region
        $region37: #{_lambda_.23} parent=27 // pred_check
          %p307 = pneg %p176
        $region38: #{_lambda_.23} parent=27 // pred_check_branch
          %309 = sbr.rel (%p307) target = $region40
        $region39: #{_lambda_.23} parent=27 // pred_region
          %s310 = sand.u32 %s166, 1
          %s311 = scalar_lea.sflag [#allocation12], %s310
          %s312 = sand.u32 %s166, 1
          %s313 = smul.addr %s312, 16
          %s314 = scalar_lea.vmem [#allocation11], %s313
          %s315 = smul.u32 2, %s33
          %s317 = ssub.s32 256, 256
          %318 = vsyncadd %s311, %s317
          %s319 = smul.addr %s32, 2
          %s320 = sadd.s32 %s315, %s319
          %s321 = smul.addr %s320, 128
          %s322 = scalar_lea.hbm %s5, %s321
          %s323 = sshll.u32 %s314, 4
          %s324 = int_to_ptr.vmem [resolvable:$true] %s323
          %329 = dma.hbm_to_vmem [thread:$0]  %s322, 256, %s324, %s311, 128, 128, 8
        $region40: #{_lambda_.23} parent=27 // pred_fallthru
          _
      $region28: #{_lambda_.23} parent=5 // pred_fallthru
        _
      %p330 = scmp.le.s32.totalorder 1, %s25
      %p331 = scmp.lt.s32.totalorder %s25, 3
      %p332 = pnand %p330, %p331
      %p333 = pneg %p332
      // Predicated region
      $region41: #{_lambda_.23} parent=5 // pred_check
        _
      $region42: #{_lambda_.23} parent=5 // pred_check_branch
        %335 = sbr.rel (%p332) target = $region44
      $region43: #{_lambda_.23} parent=5 // pred_region
        %s336 = ssub.s32 %s25, 1
        %s337 = sand.u32 %s52, 1
        %s338 = scalar_lea.sflag [#allocation3], %s337
        %s339 = sand.u32 %s52, 1
        %s340 = smul.addr %s339, 32
        %s341 = scalar_lea.vmem [#allocation2], %s340
        // Predicated region
        $region45: #{_lambda_.23} parent=43 // pred_check
          %p342 = pneg %p65
        $region46: #{_lambda_.23} parent=43 // pred_check_branch
          %344 = sbr.rel (%p342) target = $region48
        $region47: #{_lambda_.23} parent=43 // pred_region
          %345 = dma.done %s338, 512
        $region48: #{_lambda_.23} parent=43 // pred_fallthru
          _
        %s346 = sand.u32 %s30, 1
        %s347 = scalar_lea.sflag [#allocation6], %s346
        %s348 = sand.u32 %s78, 1
        %s349 = smul.addr %s348, 2
        %s350 = scalar_lea.vmem [#allocation5], %s349
        // Predicated region
        $region49: #{_lambda_.23} parent=43 // pred_check
          %p351 = pneg %p91
        $region50: #{_lambda_.23} parent=43 // pred_check_branch
          %353 = sbr.rel (%p351) target = $region52
        $region51: #{_lambda_.23} parent=43 // pred_region
          %354 = dma.done %s347, 32
        $region52: #{_lambda_.23} parent=43 // pred_fallthru
          _
        // Predicated region
        $region53: #{_lambda_.23} parent=43 // pred_check
          %p355 = pneg %p112
        $region54: #{_lambda_.23} parent=43 // pred_check_branch
          %357 = sbr.rel (%p355) target = $region56
        $region55: #{_lambda_.23} parent=43 // pred_region
          %358 = dma.done [#allocation6], 1152
        $region56: #{_lambda_.23} parent=43 // pred_fallthru
          _
        // Predicated region
        $region57: #{_lambda_.23} parent=43 // pred_check
          %p359 = pneg %p133
        $region58: #{_lambda_.23} parent=43 // pred_check_branch
          %361 = sbr.rel (%p359) target = $region60
        $region59: #{_lambda_.23} parent=43 // pred_region
          %362 = dma.done [#allocation9], 16
        $region60: #{_lambda_.23} parent=43 // pred_fallthru
          _
        // Predicated region
        $region61: #{_lambda_.23} parent=43 // pred_check
          %p363 = pneg %p154
        $region62: #{_lambda_.23} parent=43 // pred_check_branch
          %365 = sbr.rel (%p363) target = $region64
        $region63: #{_lambda_.23} parent=43 // pred_region
          %366 = dma.done [#allocation9], 16
        $region64: #{_lambda_.23} parent=43 // pred_fallthru
          _
        %s367 = sand.u32 %s169, 1
        %s368 = scalar_lea.sflag [#allocation12], %s367
        %s369 = sand.u32 %s169, 1
        %s370 = smul.addr %s369, 16
        %s371 = scalar_lea.vmem [#allocation11], %s370
        // Predicated region
        $region65: #{_lambda_.23} parent=43 // pred_check
          %p372 = pneg %p182
        $region66: #{_lambda_.23} parent=43 // pred_check_branch
          %374 = sbr.rel (%p372) target = $region68
        $region67: #{_lambda_.23} parent=43 // pred_region
          %375 = dma.done %s368, 256
        $region68: #{_lambda_.23} parent=43 // pred_fallthru
          _
        %s376 = sand.u32 %s52, 1
        %s377 = scalar_lea.sflag [#allocation3], %s376
        %s378 = sand.u32 %s52, 1
        %s379 = smul.addr %s378, 32
        %s380 = scalar_lea.vmem [#allocation2], %s379
        %p381 = pneg %p65
        %p382 = pneg %p62
        %s383 = sand.u32 %s30, 1
        %s384 = scalar_lea.sflag [#allocation6], %s383
        %s385 = sand.u32 %s78, 1
        %s386 = smul.addr %s385, 2
        %s387 = scalar_lea.vmem [#allocation5], %s386
        %p388 = pneg %p91
        %p389 = pneg %p88
        %p390 = pneg %p112
        %p391 = pneg %p109
        %p392 = pneg %p133
        %p393 = pneg %p130
        %p394 = pneg %p154
        %p395 = pneg %p151
        %s396 = sand.u32 %s169, 1
        %s397 = scalar_lea.sflag [#allocation12], %s396
        %s398 = sand.u32 %s169, 1
        %s399 = smul.addr %s398, 16
        %s400 = scalar_lea.vmem [#allocation11], %s399
        %p401 = pneg %p182
        %p402 = pneg %p179
        %p403 = pneg %p210
        %p404 = pneg %p207
        %s405 = sand.u32 %s197, 1
        %s406 = scalar_lea.sflag [#allocation4], %s405
        %s407 = sand.u32 %s197, 1
        %s408 = smul.addr %s407, 16
        %s409 = scalar_lea.vmem [#allocation13], %s408
        %s410 = smul.u32 2, %s35
        %s411 = smul.u32 2, %s35
        %s412 = smul.u32 2, %s35
        %v414 = vld [vmem:[%s341] sm:$0xff]
        %v415 = vld [vmem:[%s341 + $0x8] sm:$0xff]
        %v416 = vld [vmem:[%s341 + $0x10] sm:$0xff]
        %v417 = vld [vmem:[%s341 + $0x18] sm:$0xff]
        %v418 = vld [vmem:[%s350] sm:$0x3]
        %v420 = vlaneseq
        %v421 = vshrl.u32 %v420, 7
        %v422 = vsub.s32 0, %v421
        %v423 = vrot.slane %v418, %v422
        %v424 = vlaneseq
        %v425 = vshrl.u32 %v424, 7
        %v426 = vsub.s32 1, %v425
        %v427 = vrot.slane %v418, %v426
        %v430 = vmul.f32 %v414, %v423
        %v431 = vmul.f32 %v415, %v427
        %v432 = vmul.f32 %v416, %v423
        %v433 = vmul.f32 %v417, %v427
        %v434 = vpack.c.bf16 %v432, %v430
        %v435 = vpack.c.bf16 %v433, %v431
        %v436 = vld [vmem:[#allocation7] sm:$0xf]
        %v437 = vld [vmem:[#allocation7 + $0x4] sm:$0xf]
        %v438 = vld [vmem:[#allocation7 + $0x8] sm:$0xf]
        %v439 = vld [vmem:[#allocation7 + $0xc] sm:$0xf]
        %v440 = vld [vmem:[#allocation7 + $0x10] sm:$0xf]
        %v441 = vld [vmem:[#allocation7 + $0x14] sm:$0xf]
        %v442 = vld [vmem:[#allocation7 + $0x18] sm:$0xf]
        %v443 = vld [vmem:[#allocation7 + $0x1c] sm:$0xf]
        %v444 = vld [vmem:[#allocation7 + $0x20] sm:$0xf]
        %v445 = vld [vmem:[#allocation7 + $0x24] sm:$0xf]
        %v446 = vld [vmem:[#allocation7 + $0x28] sm:$0xf]
        %v447 = vld [vmem:[#allocation7 + $0x2c] sm:$0xf]
        %v448 = vld [vmem:[#allocation7 + $0x30] sm:$0xf]
        %v449 = vld [vmem:[#allocation7 + $0x34] sm:$0xf]
        %v450 = vld [vmem:[#allocation7 + $0x38] sm:$0xf]
        %v451 = vld [vmem:[#allocation7 + $0x3c] sm:$0xf]
        %v452 = vld [vmem:[#allocation7 + $0x40] sm:$0xf]
        %v453 = vld [vmem:[#allocation7 + $0x44] sm:$0xf]
        %v472 = vunpack.c.l.b16 %v436
        %v473 = vunpack.c.l.b16 %v437
        %v474 = vunpack.c.l.b16 %v438
        %v475 = vunpack.c.l.b16 %v439
        %v476 = vunpack.c.l.b16 %v440
        %v477 = vunpack.c.l.b16 %v441
        %v478 = vunpack.c.l.b16 %v442
        %v479 = vunpack.c.l.b16 %v443
        %v480 = vunpack.c.l.b16 %v444
        %v481 = vunpack.c.l.b16 %v445
        %v482 = vunpack.c.l.b16 %v446
        %v483 = vunpack.c.l.b16 %v447
        %v484 = vunpack.c.l.b16 %v448
        %v485 = vunpack.c.l.b16 %v449
        %v486 = vunpack.c.l.b16 %v450
        %v487 = vunpack.c.l.b16 %v451
        %v488 = vunpack.c.l.b16 %v452
        %v489 = vunpack.c.l.b16 %v453
        %v490 = vpack.c.b16 %v473, %v472
        %v491 = vpack.c.b16 %v475, %v474
        %v492 = vpack.c.b16 %v477, %v476
        %v493 = vpack.c.b16 %v479, %v478
        %v494 = vpack.c.b16 %v481, %v480
        %v495 = vpack.c.b16 %v483, %v482
        %v496 = vpack.c.b16 %v485, %v484
        %v497 = vpack.c.b16 %v487, %v486
        %v498 = vpack.c.b16 %v489, %v488
        %vm508 = vcmask 130048
        %v510 = vsel %vm508, %v435, 0
        %512 = vmatprep.subr.bf16.mxu0 0
        %513 = vmatpush1.bf16.msra.mxu0 %v490
        %514 = vmatprep.subr.bf16.mxu0 0
        %515 = vmatpush1.bf16.msra.mxu0 %v491
        %516 = vmatprep.subr.bf16.mxu0 0
        %517 = vmatpush1.bf16.msra.mxu0 %v492
        %518 = vmatprep.subr.bf16.mxu0 0
        %519 = vmatpush1.bf16.msra.mxu0 %v493
        %520 = vmatprep.subr.bf16.mxu0 0
        %521 = vmatpush1.bf16.msra.mxu0 %v494
        %522 = vmatprep.subr.bf16.mxu0 0
        %523 = vmatpush1.bf16.msra.mxu0 %v495
        %524 = vmatprep.subr.bf16.mxu0 0
        %525 = vmatpush1.bf16.msra.mxu0 %v496
        %526 = vmatprep.subr.bf16.mxu0 0
        %527 = vmatpush1.bf16.msra.mxu0 %v497
        %528 = vmatprep.subr.bf16.mxu0 0
        %529 = vmatpush1.bf16.msra.mxu0 %v498
        %530 = vmatprep.subr.bf16.mxu0 0
        %531 = vmatpush1.bf16.msra.mxu0 0
        %532 = vmatprep.subr.bf16.mxu0 0
        %533 = vmatpush1.bf16.msra.mxu0 0
        %534 = vmatprep.subr.bf16.mxu0 0
        %535 = vmatpush1.bf16.msra.mxu0 0
        %536 = vmatprep.subr.bf16.mxu0 0
        %537 = vmatpush1.bf16.msra.mxu0 0
        %538 = vmatprep.subr.bf16.mxu0 0
        %539 = vmatpush1.bf16.msra.mxu0 0
        %540 = vmatprep.subr.bf16.mxu0 0
        %541 = vmatpush1.bf16.msra.mxu0 0
        %542 = vmatprep.subr.bf16.mxu0 0
        %543 = vmatpush1.bf16.msra.mxu0 0
        %544 = vmatprep.mubr.bf16.mxu0 %v510
        %545 = vmatmul.mubr.bf16.gmra.mrb[0].mxu0 %v434
        %v546 = vpop.f32.mrb[0].mxu0
        %v547 = vadd.f32 0.0, %v546
        %v548 = vpop.f32.mrb[0].mxu0
        %v549 = vpop.f32.mrb[0].mxu0
        %v550 = vadd.f32 0.0, %v549
        %v551 = vpop.f32.mrb[0].mxu0
        %552 = vdwg.mxu0
        %v553 = vld [vmem:[#allocation8] sm:$0x1]
        %v555 = vlaneseq
        %v556 = vshrl.u32 %v555, 7
        %v557 = vsub.s32 0, %v556
        %v558 = vrot.slane %v553, %v557
        %v560 = vmul.f32 %v547, %v558
        %v561 = vmul.f32 %v550, %v558
        %v562 = vld [vmem:[#allocation10] sm:$0x1]
        %v564 = vlaneseq
        %v565 = vshrl.u32 %v564, 7
        %v566 = vsub.s32 0, %v565
        %v567 = vrot.slane %v562, %v566
        %v569 = vadd.f32 %v560, %v567
        %v570 = vadd.f32 %v561, %v567
        %v571 = vld [vmem:[%s371] sm:$0xff]
        %v572 = vld [vmem:[%s371 + $0x8] sm:$0xff]
        %v573 = vadd.f32 %v569, %v571
        %v574 = vadd.f32 %v570, %v572
        %vm575 = vcmask 195584
        %576 = vst.msk [vmem:[%s409] sm:$0xff] %vm575, %v573
        %577 = vst.msk [vmem:[%s409 + $0x8] sm:$0xff] %vm575, %v574
        %s578 = sand.u32 %s197, 1
        %s579 = scalar_lea.sflag [#allocation4], %s578
        %s580 = sand.u32 %s197, 1
        %s581 = smul.addr %s580, 16
        %s582 = scalar_lea.vmem [#allocation13], %s581
        // Predicated region
        $region69: #{_lambda_.23} parent=43 // pred_check
          %p583 = pneg %p207
        $region70: #{_lambda_.23} parent=43 // pred_check_branch
          %585 = sbr.rel (%p583) target = $region72
        $region71: #{_lambda_.23} parent=43 // pred_region
          %s586 = smul.u32 2, %s35
          %s588 = ssub.s32 256, 256
          %589 = vsyncadd %s579, %s588
          %s590 = smul.addr %s34, 2
          %s591 = sadd.s32 %s586, %s590
          %s592 = smul.addr %s591, 128
          %s593 = scalar_lea.hbm %s6, %s592
          %s594 = sshll.u32 %s582, 4
          %s595 = int_to_ptr.vmem [resolvable:$true] %s594
          %600 = dma.vmem_to_hbm [thread:$0]  %s595, 256, %s593, %s579, 128, 128, 8
        $region72: #{_lambda_.23} parent=43 // pred_fallthru
          _
      $region44: #{_lambda_.23} parent=5 // pred_fallthru
        _
      %p601 = scmp.le.s32.totalorder 2, %s25
      // Predicated region
      $region73: #{_lambda_.23} parent=5 // pred_check
        %p602 = pneg %p601
      $region74: #{_lambda_.23} parent=5 // pred_check_branch
        %604 = sbr.rel (%p602) target = $region76
      $region75: #{_lambda_.23} parent=5 // pred_region
        %s605 = ssub.s32 %s25, 2
        // Predicated region
        $region77: #{_lambda_.23} parent=75 // pred_check
          %p606 = pneg %p213
        $region78: #{_lambda_.23} parent=75 // pred_check_branch
          %608 = sbr.rel (%p606) target = $region80
        $region79: #{_lambda_.23} parent=75 // pred_region
          %s609 = sand.u32 %s198, 1
          %s610 = scalar_lea.sflag [#allocation4], %s609
          %s611 = sand.u32 %s198, 1
          %s612 = smul.addr %s611, 16
          %s613 = scalar_lea.vmem [#allocation13], %s612
          %614 = dma.done %s610, 256
        $region80: #{_lambda_.23} parent=75 // pred_fallthru
          _
      $region76: #{_lambda_.23} parent=5 // pred_fallthru
        _
    $region6: #{_lambda_.23} parent=1 // loop_footer
      %s29 = sadd.s32 1, %s25
    $region7: #{_lambda_.23} parent=1 // loop_footer_branch
      %24 = sbr.rel target = $region3
    $region8: #{_lambda_.23} parent=1 // loop_exit
      _
    %615 = vsyncpa [#allocation3], 1
    %s616 = scalar_lea.sflag [#allocation3], 1
    %617 = vsyncpa %s616, 1
    %618 = vsyncpa [#allocation6], 1
    %s619 = scalar_lea.sflag [#allocation6], 1
    %620 = vsyncpa %s619, 1
    %621 = vsyncpa [#allocation9], 1
    %622 = vsyncpa [#allocation12], 1
    %s623 = scalar_lea.sflag [#allocation12], 1
    %624 = vsyncpa %s623, 1
    %625 = vsyncpa [#allocation4], 1
    %s626 = scalar_lea.sflag [#allocation4], 1
    %627 = vsyncpa %s626, 1

// kernel: _lambda_.21
$region0: #{_lambda_.21}
  #allocation0 [shape = 'u32[]', space=smem, size = 0x4, offset = 0x4, fixed_abs, tag = 'smem constant byte address 0x4 - core index']
  #allocation1 [shape = 'u32[144,128]{1,0:T(1,128)}', space=vmem, size = 0x12000, scoped, tag = 'internal scratch']
  %s0 = inlined_call_operand.hbm [shape: f32[2,1,6,6,144], index: 0, kind: input, shape index: {}]
  %s1 = inlined_call_operand.hbm [shape: f32[9,1,144], index: 1, kind: input, shape index: {}]
  %s2 = inlined_call_operand.hbm [shape: f32[1,144], index: 2, kind: input, shape index: {}]
  %s3 = inlined_call_operand.hbm [shape: f32[2,4,4,144], index: 3, kind: output, shape index: {0}]
  %s4 = inlined_call_operand.hbm [shape: f32[2,1,144], index: 4, kind: output, shape index: {1}]
  %5 = xla_tuple %s3, %s4
  %s6 = sld [smem:[#allocation0]]
  $region65: #{_lambda_.21} parent=0
    _
  %s8 = ssub.s32 1, %s6
  %s9 = scalar_select 0, %s8, %s6
  $region1: #{_lambda_.21} parent=0
    #allocation2 [shape = 'u8[98304]{0}', space=vmem, size = 0x18000, scoped, tag = 'input window, operand 0']
    #allocation3 [shape = 's32[2]{0}', space=sflag, size = 0x8, scoped, tag = 'scoped memory for _lambda_.21']
    #allocation4 [shape = 's32[2]{0}', space=sflag, size = 0x8, scoped, tag = 'scoped memory for _lambda_.21']
    #allocation5 [shape = 'u8[9216]{0}', space=vmem, size = 0x2400, scoped, tag = 'input window, operand 1, single buffered']
    #allocation6 [shape = 's32[1]{0}', space=sflag, size = 0x4, scoped, tag = 'scoped memory for _lambda_.21']
    #allocation7 [shape = 'u8[1024]{0}', space=vmem, size = 0x400, scoped, tag = 'input window, operand 2, single buffered']
    #allocation8 [shape = 'u8[32768]{0}', space=vmem, size = 0x8000, scoped, tag = 'output window, operand 0']
    #allocation9 [shape = 'u8[2048]{0}', space=vmem, size = 0x800, scoped, tag = 'output window, operand 1']
    #allocation10 [shape = 's32[2]{0}', space=sflag, size = 0x8, scoped, tag = 'scoped memory for _lambda_.21']
    %10 = vsyncpa [#allocation3], 0
    %s11 = scalar_lea.sflag [#allocation3], 1
    %12 = vsyncpa %s11, 0
    %13 = vsyncpa [#allocation6], 0
    %14 = vsyncpa [#allocation4], 0
    %s15 = scalar_lea.sflag [#allocation4], 1
    %16 = vsyncpa %s15, 0
    %17 = vsyncpa [#allocation10], 0
    %s18 = scalar_lea.sflag [#allocation10], 1
    %19 = vsyncpa %s18, 0
    loop: start=0, step=1, limit=4
    $region2: #{_lambda_.21} parent=1 // loop_pre_header
      _
    $region3: #{_lambda_.21} parent=1 // loop_header
      %s21 = sphi 0, %s25
      %p22 = scmp.ge.s32.totalorder %s21, 4
      %s31 = sphi 0, %s33
      %s34 = sphi 0, %s31
      %s35 = sphi 0, %s34
      %s51 = sphi 0, %s35
      %s55 = sphi 0, %s55
      %s57 = sphi 0, %s55
      %s58 = sphi 0, %s57
      %s72 = sphi 0, %s58
      %s76 = sphi 0, %s76
      %s78 = sphi 0, %s76
      %s79 = sphi 0, %s78
      %s93 = sphi 0, %s79
      %s99 = sphi 0, %s101
      %s102 = sphi 0, %s99
      %s103 = sphi 0, %s102
      %s119 = sphi 0, %s103
      %s125 = sphi 0, %s127
      %s128 = sphi 0, %s125
      %s129 = sphi 0, %s128
      %s145 = sphi 0, %s129
    $region4: #{_lambda_.21} parent=1 // loop_header_branch
      %24 = sbr.rel (%p22) target = $region8
    $region5: #{_lambda_.21} parent=1 // loop_body
      %s26 = ssub.s32 %s21, 1
      %s27 = ssub.s32 %s21, 2
      %s28 = sadd.s32 %s21, 1
      %s29 = ssub.s32 %s21, %s28
      %p30 = scmp.eq.s32.totalorder %s29, 0
      %s32 = sadd.s32 %s31, 1
      %s33 = scalar_select %p30, %s31, %s32
      %p36 = pneg %p30
      %p37 = scmp.eq.s32.totalorder %s21, 1
      %p38 = por %p36, %p37
      %p39 = scmp.ne.s32.totalorder %s31, %s34
      %p40 = scmp.eq.s32.totalorder %s21, 0
      %p41 = por %p39, %p40
      %p42 = scmp.ne.s32.totalorder %s31, %s34
      %p43 = scmp.eq.s32.totalorder %s26, 1
      %p44 = por %p42, %p43
      %p45 = scmp.ne.s32.totalorder %s34, %s35
      %p46 = scmp.eq.s32.totalorder %s26, 0
      %p47 = por %p45, %p46
      %p48 = scmp.ne.s32.totalorder %s34, %s35
      %p49 = scmp.eq.s32.totalorder %s27, 1
      %p50 = por %p48, %p49
      %p52 = scmp.ne.s32.totalorder %s35, %s51
      %p53 = scmp.eq.s32.totalorder %s27, 0
      %p54 = por %p52, %p53
      %s56 = sadd.s32 %s55, 1
      %p59 = scmp.eq.s32.totalorder %s21, 1
      %p60 = scmp.ne.s32.totalorder %s55, %s57
      %p61 = scmp.eq.s32.totalorder %s21, 0
      %p62 = por %p60, %p61
      %p63 = scmp.ne.s32.totalorder %s55, %s57
      %p64 = scmp.eq.s32.totalorder %s26, 1
      %p65 = por %p63, %p64
      %p66 = scmp.ne.s32.totalorder %s57, %s58
      %p67 = scmp.eq.s32.totalorder %s26, 0
      %p68 = por %p66, %p67
      %p69 = scmp.ne.s32.totalorder %s57, %s58
      %p70 = scmp.eq.s32.totalorder %s27, 1
      %p71 = por %p69, %p70
      %p73 = scmp.ne.s32.totalorder %s58, %s72
      %p74 = scmp.eq.s32.totalorder %s27, 0
      %p75 = por %p73, %p74
      %s77 = sadd.s32 %s76, 1
      %p80 = scmp.eq.s32.totalorder %s21, 1
      %p81 = scmp.ne.s32.totalorder %s76, %s78
      %p82 = scmp.eq.s32.totalorder %s21, 0
      %p83 = por %p81, %p82
      %p84 = scmp.ne.s32.totalorder %s76, %s78
      %p85 = scmp.eq.s32.totalorder %s26, 1
      %p86 = por %p84, %p85
      %p87 = scmp.ne.s32.totalorder %s78, %s79
      %p88 = scmp.eq.s32.totalorder %s26, 0
      %p89 = por %p87, %p88
      %p90 = scmp.ne.s32.totalorder %s78, %s79
      %p91 = scmp.eq.s32.totalorder %s27, 1
      %p92 = por %p90, %p91
      %p94 = scmp.ne.s32.totalorder %s79, %s93
      %p95 = scmp.eq.s32.totalorder %s27, 0
      %p96 = por %p94, %p95
      %s97 = ssub.s32 %s21, %s28
      %p98 = scmp.eq.s32.totalorder %s97, 0
      %s100 = sadd.s32 %s99, 1
      %s101 = scalar_select %p98, %s99, %s100
      %p104 = pneg %p98
      %p105 = scmp.eq.s32.totalorder %s21, 1
      %p106 = por %p104, %p105
      %p107 = scmp.ne.s32.totalorder %s99, %s102
      %p108 = scmp.eq.s32.totalorder %s21, 0
      %p109 = por %p107, %p108
      %p110 = scmp.ne.s32.totalorder %s99, %s102
      %p111 = scmp.eq.s32.totalorder %s26, 1
      %p112 = por %p110, %p111
      %p113 = scmp.ne.s32.totalorder %s102, %s103
      %p114 = scmp.eq.s32.totalorder %s26, 0
      %p115 = por %p113, %p114
      %p116 = scmp.ne.s32.totalorder %s102, %s103
      %p117 = scmp.eq.s32.totalorder %s27, 1
      %p118 = por %p116, %p117
      %p120 = scmp.ne.s32.totalorder %s103, %s119
      %p121 = scmp.eq.s32.totalorder %s27, 0
      %p122 = por %p120, %p121
      %s123 = ssub.s32 %s21, %s28
      %p124 = scmp.eq.s32.totalorder %s123, 0
      %s126 = sadd.s32 %s125, 1
      %s127 = scalar_select %p124, %s125, %s126
      %p130 = pneg %p124
      %p131 = scmp.eq.s32.totalorder %s21, 1
      %p132 = por %p130, %p131
      %p133 = scmp.ne.s32.totalorder %s125, %s128
      %p134 = scmp.eq.s32.totalorder %s21, 0
      %p135 = por %p133, %p134
      %p136 = scmp.ne.s32.totalorder %s125, %s128
      %p137 = scmp.eq.s32.totalorder %s26, 1
      %p138 = por %p136, %p137
      %p139 = scmp.ne.s32.totalorder %s128, %s129
      %p140 = scmp.eq.s32.totalorder %s26, 0
      %p141 = por %p139, %p140
      %p142 = scmp.ne.s32.totalorder %s128, %s129
      %p143 = scmp.eq.s32.totalorder %s27, 1
      %p144 = por %p142, %p143
      %p146 = scmp.ne.s32.totalorder %s129, %s145
      %p147 = scmp.eq.s32.totalorder %s27, 0
      %p148 = por %p146, %p147
      %p149 = scmp.le.s32.totalorder 1, %s21
      %p150 = scmp.lt.s32.totalorder %s21, 3
      %p151 = pnand %p149, %p150
      %p152 = pneg %p151
      // Predicated region
      $region9: #{_lambda_.21} parent=5 // pred_check
        _
      $region10: #{_lambda_.21} parent=5 // pred_check_branch
        %154 = sbr.rel (%p151) target = $region12
      $region11: #{_lambda_.21} parent=5 // pred_region
        %s155 = ssub.s32 %s21, 1
        // Predicated region
        $region13: #{_lambda_.21} parent=11 // pred_check
          %p156 = pneg %p68
        $region14: #{_lambda_.21} parent=11 // pred_check_branch
          %158 = sbr.rel (%p156) target = $region16
        $region15: #{_lambda_.21} parent=11 // pred_region
          %s160 = ssub.s32 288, 288
          %161 = vsyncadd [#allocation6], %s160
          %s162 = sshll.u32 [#allocation5], 4
          %s163 = int_to_ptr.vmem [resolvable:$true] %s162
          %168 = dma.hbm_to_vmem [thread:$0]  %s1, 288, %s163, [#allocation6], 32, 32, 2
        $region16: #{_lambda_.21} parent=11 // pred_fallthru
          _
        // Predicated region
        $region17: #{_lambda_.21} parent=11 // pred_check
          %p169 = pneg %p89
        $region18: #{_lambda_.21} parent=11 // pred_check_branch
          %171 = sbr.rel (%p169) target = $region20
        $region19: #{_lambda_.21} parent=11 // pred_region
          %s173 = ssub.s32 32, 32
          %174 = vsyncadd [#allocation6], %s173
          %s176 = sshll.u32 [#allocation7], 4
          %s177 = int_to_ptr.vmem [resolvable:$true] %s176
          %179 = dma.hbm_to_vmem [thread:$0]  %s2, 32, %s177, [#allocation6]
        $region20: #{_lambda_.21} parent=11 // pred_fallthru
          _
      $region12: #{_lambda_.21} parent=5 // pred_fallthru
        _
      %p180 = scmp.lt.s32.totalorder %s21, 2
      // Predicated region
      $region21: #{_lambda_.21} parent=5 // pred_check
        %p181 = pneg %p180
      $region22: #{_lambda_.21} parent=5 // pred_check_branch
        %183 = sbr.rel (%p181) target = $region24
      $region23: #{_lambda_.21} parent=5 // pred_region
        // Predicated region
        $region25: #{_lambda_.21} parent=23 // pred_check
          %p184 = pneg %p41
        $region26: #{_lambda_.21} parent=23 // pred_check_branch
          %186 = sbr.rel (%p184) target = $region28
        $region27: #{_lambda_.21} parent=23 // pred_region
          %s187 = sand.u32 %s31, 1
          %s188 = scalar_lea.sflag [#allocation3], %s187
          %s189 = sand.u32 %s31, 1
          %s190 = smul.addr %s189, 96
          %s191 = scalar_lea.vmem [#allocation2], %s190
          %s193 = ssub.s32 1536, 1536
          %194 = vsyncadd %s188, %s193
          %s195 = smul.addr %s21, 12
          %s196 = smul.addr %s195, 128
          %s197 = scalar_lea.hbm %s0, %s196
          %s198 = sshll.u32 %s191, 4
          %s199 = int_to_ptr.vmem [resolvable:$true] %s198
          %204 = dma.hbm_to_vmem [thread:$0]  %s197, 1536, %s199, %s188, 256, 256, 16
        $region28: #{_lambda_.21} parent=23 // pred_fallthru
          _
      $region24: #{_lambda_.21} parent=5 // pred_fallthru
        _
      %p205 = scmp.le.s32.totalorder 1, %s21
      %p206 = scmp.lt.s32.totalorder %s21, 3
      %p207 = pnand %p205, %p206
      %p208 = pneg %p207
      // Predicated region
      $region29: #{_lambda_.21} parent=5 // pred_check
        _
      $region30: #{_lambda_.21} parent=5 // pred_check_branch
        %210 = sbr.rel (%p207) target = $region32
      $region31: #{_lambda_.21} parent=5 // pred_region
        %s211 = ssub.s32 %s21, 1
        %s212 = sand.u32 %s34, 1
        %s213 = scalar_lea.sflag [#allocation3], %s212
        %s214 = sand.u32 %s34, 1
        %s215 = smul.addr %s214, 96
        %s216 = scalar_lea.vmem [#allocation2], %s215
        // Predicated region
        $region33: #{_lambda_.21} parent=31 // pred_check
          %p217 = pneg %p47
        $region34: #{_lambda_.21} parent=31 // pred_check_branch
          %219 = sbr.rel (%p217) target = $region36
        $region35: #{_lambda_.21} parent=31 // pred_region
          %220 = dma.done %s213, 1536
        $region36: #{_lambda_.21} parent=31 // pred_fallthru
          _
        // Predicated region
        $region37: #{_lambda_.21} parent=31 // pred_check
          %p221 = pneg %p68
        $region38: #{_lambda_.21} parent=31 // pred_check_branch
          %223 = sbr.rel (%p221) target = $region40
        $region39: #{_lambda_.21} parent=31 // pred_region
          %224 = dma.done [#allocation6], 288
        $region40: #{_lambda_.21} parent=31 // pred_fallthru
          _
        // Predicated region
        $region41: #{_lambda_.21} parent=31 // pred_check
          %p225 = pneg %p89
        $region42: #{_lambda_.21} parent=31 // pred_check_branch
          %227 = sbr.rel (%p225) target = $region44
        $region43: #{_lambda_.21} parent=31 // pred_region
          %228 = dma.done [#allocation6], 32
        $region44: #{_lambda_.21} parent=31 // pred_fallthru
          _
        %s229 = sand.u32 %s34, 1
        %s230 = scalar_lea.sflag [#allocation3], %s229
        %s231 = sand.u32 %s34, 1
        %s232 = smul.addr %s231, 96
        %s233 = scalar_lea.vmem [#allocation2], %s232
        %p234 = pneg %p47
        %p235 = pneg %p44
        %p236 = pneg %p68
        %p237 = pneg %p65
        %p238 = pneg %p89
        %p239 = pneg %p86
        %p240 = pneg %p115
        %p241 = pneg %p112
        %s242 = sand.u32 %s102, 1
        %s243 = scalar_lea.sflag [#allocation4], %s242
        %s244 = sand.u32 %s102, 1
        %s245 = smul.addr %s244, 32
        %s246 = scalar_lea.vmem [#allocation8], %s245
        %p247 = pneg %p141
        %p248 = pneg %p138
        %s249 = sand.u32 %s128, 1
        %s250 = scalar_lea.sflag [#allocation10], %s249
        %s251 = sand.u32 %s128, 1
        %s252 = smul.addr %s251, 2
        %s253 = scalar_lea.vmem [#allocation9], %s252
        %v254 = vld [vmem:[%s216] sm:$0xf]
        %v255 = vld [vmem:[%s216 + $0x8] sm:$0xf]
        %v256 = vld [vmem:[%s216 + $0x10] sm:$0xf]
        %v257 = vld [vmem:[%s216 + $0x18] sm:$0xf]
        %v258 = vld [vmem:[%s216 + $0x20] sm:$0xf]
        %v259 = vld [vmem:[%s216 + $0x28] sm:$0xf]
        %v260 = vld [vmem:[%s216 + $0x30] sm:$0xf]
        %v261 = vld [vmem:[%s216 + $0x38] sm:$0xf]
        %v262 = vld [vmem:[#allocation5] sm:$0x3]
        %v264 = vlaneseq
        %v265 = vshrl.u32 %v264, 7
        %v266 = vsub.s32 0, %v265
        %v267 = vrot.slane %v262, %v266
        %v268 = vlaneseq
        %v269 = vshrl.u32 %v268, 7
        %v270 = vsub.s32 1, %v269
        %v271 = vrot.slane %v262, %v270
        %v274 = vmul.f32 %v254, %v267
        %v275 = vmul.f32 %v255, %v271
        %v276 = vmul.f32 %v256, %v267
        %v277 = vmul.f32 %v257, %v271
        %v278 = vmul.f32 %v258, %v267
        %v279 = vmul.f32 %v259, %v271
        %v280 = vmul.f32 %v260, %v267
        %v281 = vmul.f32 %v261, %v271
        %v282 = vadd.f32 %v274, 0.0
        %v283 = vadd.f32 %v275, 0.0
        %v284 = vadd.f32 %v276, 0.0
        %v285 = vadd.f32 %v277, 0.0
        %v286 = vadd.f32 %v278, 0.0
        %v287 = vadd.f32 %v279, 0.0
        %v288 = vadd.f32 %v280, 0.0
        %v289 = vadd.f32 %v281, 0.0
        %v290 = vld [vmem:[%s216] sm:$0x1e]
        %v291 = vld [vmem:[%s216 + $0x8] sm:$0x1e]
        %v292 = vld [vmem:[%s216 + $0x10] sm:$0x1e]
        %v293 = vld [vmem:[%s216 + $0x18] sm:$0x1e]
        %v294 = vld [vmem:[%s216 + $0x20] sm:$0x1e]
        %v295 = vld [vmem:[%s216 + $0x28] sm:$0x1e]
        %v296 = vld [vmem:[%s216 + $0x30] sm:$0x1e]
        %v297 = vld [vmem:[%s216 + $0x38] sm:$0x1e]
        %s298 = scalar_lea.vmem [#allocation5], 2
        %v299 = vld [vmem:[%s298] sm:$0x3]
        %v301 = vlaneseq
        %v302 = vshrl.u32 %v301, 7
        %v303 = vsub.s32 0, %v302
        %v304 = vrot.slane %v299, %v303
        %v305 = vlaneseq
        %v306 = vshrl.u32 %v305, 7
        %v307 = vsub.s32 1, %v306
        %v308 = vrot.slane %v299, %v307
        %v311 = vmul.f32 %v290, %v304
        %v312 = vmul.f32 %v291, %v308
        %v313 = vmul.f32 %v292, %v304
        %v314 = vmul.f32 %v293, %v308
        %v315 = vmul.f32 %v294, %v304
        %v316 = vmul.f32 %v295, %v308
        %v317 = vmul.f32 %v296, %v304
        %v318 = vmul.f32 %v297, %v308
        %v327 = vrot.slane %v311, 1
        %v328 = vrot.slane %v312, 1
        %v329 = vrot.slane %v313, 1
        %v330 = vrot.slane %v314, 1
        %v331 = vrot.slane %v315, 1
        %v332 = vrot.slane %v316, 1
        %v333 = vrot.slane %v317, 1
        %v334 = vrot.slane %v318, 1
        %v343 = vadd.f32 %v282, %v327
        %v344 = vadd.f32 %v283, %v328
        %v345 = vadd.f32 %v284, %v329
        %v346 = vadd.f32 %v285, %v330
        %v347 = vadd.f32 %v286, %v331
        %v348 = vadd.f32 %v287, %v332
        %v349 = vadd.f32 %v288, %v333
        %v350 = vadd.f32 %v289, %v334
        %v351 = vld [vmem:[%s216] sm:$0x3c]
        %v352 = vld [vmem:[%s216 + $0x8] sm:$0x3c]
        %v353 = vld [vmem:[%s216 + $0x10] sm:$0x3c]
        %v354 = vld [vmem:[%s216 + $0x18] sm:$0x3c]
        %v355 = vld [vmem:[%s216 + $0x20] sm:$0x3c]
        %v356 = vld [vmem:[%s216 + $0x28] sm:$0x3c]
        %v357 = vld [vmem:[%s216 + $0x30] sm:$0x3c]
        %v358 = vld [vmem:[%s216 + $0x38] sm:$0x3c]
        %s359 = scalar_lea.vmem [#allocation5], 4
        %v360 = vld [vmem:[%s359] sm:$0x3]
        %v362 = vlaneseq
        %v363 = vshrl.u32 %v362, 7
        %v364 = vsub.s32 0, %v363
        %v365 = vrot.slane %v360, %v364
        %v366 = vlaneseq
        %v367 = vshrl.u32 %v366, 7
        %v368 = vsub.s32 1, %v367
        %v369 = vrot.slane %v360, %v368
        %v372 = vmul.f32 %v351, %v365
        %v373 = vmul.f32 %v352, %v369
        %v374 = vmul.f32 %v353, %v365
        %v375 = vmul.f32 %v354, %v369
        %v376 = vmul.f32 %v355, %v365
        %v377 = vmul.f32 %v356, %v369
        %v378 = vmul.f32 %v357, %v365
        %v379 = vmul.f32 %v358, %v369
        %v388 = vrot.slane %v372, 2
        %v389 = vrot.slane %v373, 2
        %v390 = vrot.slane %v374, 2
        %v391 = vrot.slane %v375, 2
        %v392 = vrot.slane %v376, 2
        %v393 = vrot.slane %v377, 2
        %v394 = vrot.slane %v378, 2
        %v395 = vrot.slane %v379, 2
        %v404 = vadd.f32 %v343, %v388
        %v405 = vadd.f32 %v344, %v389
        %v406 = vadd.f32 %v345, %v390
        %v407 = vadd.f32 %v346, %v391
        %v408 = vadd.f32 %v347, %v392
        %v409 = vadd.f32 %v348, %v393
        %v410 = vadd.f32 %v349, %v394
        %v411 = vadd.f32 %v350, %v395
        %s412 = scalar_lea.vmem %s216, 16 [#allocation2]
        %v413 = vld [vmem:[%s412] sm:$0xf]
        %v414 = vld [vmem:[%s412 + $0x8] sm:$0xf]
        %v415 = vld [vmem:[%s412 + $0x10] sm:$0xf]
        %v416 = vld [vmem:[%s412 + $0x18] sm:$0xf]
        %v417 = vld [vmem:[%s412 + $0x20] sm:$0xf]
        %v418 = vld [vmem:[%s412 + $0x28] sm:$0xf]
        %v419 = vld [vmem:[%s412 + $0x30] sm:$0xf]
        %v420 = vld [vmem:[%s412 + $0x38] sm:$0xf]
        %s421 = scalar_lea.vmem [#allocation5], 6
        %v422 = vld [vmem:[%s421] sm:$0x3]
        %v424 = vlaneseq
        %v425 = vshrl.u32 %v424, 7
        %v426 = vsub.s32 0, %v425
        %v427 = vrot.slane %v422, %v426
        %v428 = vlaneseq
        %v429 = vshrl.u32 %v428, 7
        %v430 = vsub.s32 1, %v429
        %v431 = vrot.slane %v422, %v430
        %v434 = vmul.f32 %v413, %v427
        %v435 = vmul.f32 %v414, %v431
        %v436 = vmul.f32 %v415, %v427
        %v437 = vmul.f32 %v416, %v431
        %v438 = vmul.f32 %v417, %v427
        %v439 = vmul.f32 %v418, %v431
        %v440 = vmul.f32 %v419, %v427
        %v441 = vmul.f32 %v420, %v431
        %v442 = vadd.f32 %v404, %v434
        %v443 = vadd.f32 %v405, %v435
        %v444 = vadd.f32 %v406, %v436
        %v445 = vadd.f32 %v407, %v437
        %v446 = vadd.f32 %v408, %v438
        %v447 = vadd.f32 %v409, %v439
        %v448 = vadd.f32 %v410, %v440
        %v449 = vadd.f32 %v411, %v441
        %v450 = vld [vmem:[%s412] sm:$0x1e]
        %v451 = vld [vmem:[%s412 + $0x8] sm:$0x1e]
        %v452 = vld [vmem:[%s412 + $0x10] sm:$0x1e]
        %v453 = vld [vmem:[%s412 + $0x18] sm:$0x1e]
        %v454 = vld [vmem:[%s412 + $0x20] sm:$0x1e]
        %v455 = vld [vmem:[%s412 + $0x28] sm:$0x1e]
        %v456 = vld [vmem:[%s412 + $0x30] sm:$0x1e]
        %v457 = vld [vmem:[%s412 + $0x38] sm:$0x1e]
        %s458 = scalar_lea.vmem [#allocation5], 8
        %v459 = vld [vmem:[%s458] sm:$0x3]
        %v461 = vlaneseq
        %v462 = vshrl.u32 %v461, 7
        %v463 = vsub.s32 0, %v462
        %v464 = vrot.slane %v459, %v463
        %v465 = vlaneseq
        %v466 = vshrl.u32 %v465, 7
        %v467 = vsub.s32 1, %v466
        %v468 = vrot.slane %v459, %v467
        %v471 = vmul.f32 %v450, %v464
        %v472 = vmul.f32 %v451, %v468
        %v473 = vmul.f32 %v452, %v464
        %v474 = vmul.f32 %v453, %v468
        %v475 = vmul.f32 %v454, %v464
        %v476 = vmul.f32 %v455, %v468
        %v477 = vmul.f32 %v456, %v464
        %v478 = vmul.f32 %v457, %v468
        %v487 = vrot.slane %v471, 1
        %v488 = vrot.slane %v472, 1
        %v489 = vrot.slane %v473, 1
        %v490 = vrot.slane %v474, 1
        %v491 = vrot.slane %v475, 1
        %v492 = vrot.slane %v476, 1
        %v493 = vrot.slane %v477, 1
        %v494 = vrot.slane %v478, 1
        %v503 = vadd.f32 %v442, %v487
        %v504 = vadd.f32 %v443, %v488
        %v505 = vadd.f32 %v444, %v489
        %v506 = vadd.f32 %v445, %v490
        %v507 = vadd.f32 %v446, %v491
        %v508 = vadd.f32 %v447, %v492
        %v509 = vadd.f32 %v448, %v493
        %v510 = vadd.f32 %v449, %v494
        %v511 = vld [vmem:[%s412] sm:$0x3c]
        %v512 = vld [vmem:[%s412 + $0x8] sm:$0x3c]
        %v513 = vld [vmem:[%s412 + $0x10] sm:$0x3c]
        %v514 = vld [vmem:[%s412 + $0x18] sm:$0x3c]
        %v515 = vld [vmem:[%s412 + $0x20] sm:$0x3c]
        %v516 = vld [vmem:[%s412 + $0x28] sm:$0x3c]
        %v517 = vld [vmem:[%s412 + $0x30] sm:$0x3c]
        %v518 = vld [vmem:[%s412 + $0x38] sm:$0x3c]
        %s519 = scalar_lea.vmem [#allocation5], 10
        %v520 = vld [vmem:[%s519] sm:$0x3]
        %v522 = vlaneseq
        %v523 = vshrl.u32 %v522, 7
        %v524 = vsub.s32 0, %v523
        %v525 = vrot.slane %v520, %v524
        %v526 = vlaneseq
        %v527 = vshrl.u32 %v526, 7
        %v528 = vsub.s32 1, %v527
        %v529 = vrot.slane %v520, %v528
        %v532 = vmul.f32 %v511, %v525
        %v533 = vmul.f32 %v512, %v529
        %v534 = vmul.f32 %v513, %v525
        %v535 = vmul.f32 %v514, %v529
        %v536 = vmul.f32 %v515, %v525
        %v537 = vmul.f32 %v516, %v529
        %v538 = vmul.f32 %v517, %v525
        %v539 = vmul.f32 %v518, %v529
        %v548 = vrot.slane %v532, 2
        %v549 = vrot.slane %v533, 2
        %v550 = vrot.slane %v534, 2
        %v551 = vrot.slane %v535, 2
        %v552 = vrot.slane %v536, 2
        %v553 = vrot.slane %v537, 2
        %v554 = vrot.slane %v538, 2
        %v555 = vrot.slane %v539, 2
        %v564 = vadd.f32 %v503, %v548
        %v565 = vadd.f32 %v504, %v549
        %v566 = vadd.f32 %v505, %v550
        %v567 = vadd.f32 %v506, %v551
        %v568 = vadd.f32 %v507, %v552
        %v569 = vadd.f32 %v508, %v553
        %v570 = vadd.f32 %v509, %v554
        %v571 = vadd.f32 %v510, %v555
        %s572 = scalar_lea.vmem %s216, 32 [#allocation2]
        %v573 = vld [vmem:[%s572] sm:$0xf]
        %v574 = vld [vmem:[%s572 + $0x8] sm:$0xf]
        %v575 = vld [vmem:[%s572 + $0x10] sm:$0xf]
        %v576 = vld [vmem:[%s572 + $0x18] sm:$0xf]
        %v577 = vld [vmem:[%s572 + $0x20] sm:$0xf]
        %v578 = vld [vmem:[%s572 + $0x28] sm:$0xf]
        %v579 = vld [vmem:[%s572 + $0x30] sm:$0xf]
        %v580 = vld [vmem:[%s572 + $0x38] sm:$0xf]
        %s581 = scalar_lea.vmem [#allocation5], 12
        %v582 = vld [vmem:[%s581] sm:$0x3]
        %v584 = vlaneseq
        %v585 = vshrl.u32 %v584, 7
        %v586 = vsub.s32 0, %v585
        %v587 = vrot.slane %v582, %v586
        %v588 = vlaneseq
        %v589 = vshrl.u32 %v588, 7
        %v590 = vsub.s32 1, %v589
        %v591 = vrot.slane %v582, %v590
        %v594 = vmul.f32 %v573, %v587
        %v595 = vmul.f32 %v574, %v591
        %v596 = vmul.f32 %v575, %v587
        %v597 = vmul.f32 %v576, %v591
        %v598 = vmul.f32 %v577, %v587
        %v599 = vmul.f32 %v578, %v591
        %v600 = vmul.f32 %v579, %v587
        %v601 = vmul.f32 %v580, %v591
        %v602 = vadd.f32 %v564, %v594
        %v603 = vadd.f32 %v565, %v595
        %v604 = vadd.f32 %v566, %v596
        %v605 = vadd.f32 %v567, %v597
        %v606 = vadd.f32 %v568, %v598
        %v607 = vadd.f32 %v569, %v599
        %v608 = vadd.f32 %v570, %v600
        %v609 = vadd.f32 %v571, %v601
        %v610 = vld [vmem:[%s572] sm:$0x1e]
        %v611 = vld [vmem:[%s572 + $0x8] sm:$0x1e]
        %v612 = vld [vmem:[%s572 + $0x10] sm:$0x1e]
        %v613 = vld [vmem:[%s572 + $0x18] sm:$0x1e]
        %v614 = vld [vmem:[%s572 + $0x20] sm:$0x1e]
        %v615 = vld [vmem:[%s572 + $0x28] sm:$0x1e]
        %v616 = vld [vmem:[%s572 + $0x30] sm:$0x1e]
        %v617 = vld [vmem:[%s572 + $0x38] sm:$0x1e]
        %s618 = scalar_lea.vmem [#allocation5], 14
        %v619 = vld [vmem:[%s618] sm:$0x3]
        %v621 = vlaneseq
        %v622 = vshrl.u32 %v621, 7
        %v623 = vsub.s32 0, %v622
        %v624 = vrot.slane %v619, %v623
        %v625 = vlaneseq
        %v626 = vshrl.u32 %v625, 7
        %v627 = vsub.s32 1, %v626
        %v628 = vrot.slane %v619, %v627
        %v631 = vmul.f32 %v610, %v624
        %v632 = vmul.f32 %v611, %v628
        %v633 = vmul.f32 %v612, %v624
        %v634 = vmul.f32 %v613, %v628
        %v635 = vmul.f32 %v614, %v624
        %v636 = vmul.f32 %v615, %v628
        %v637 = vmul.f32 %v616, %v624
        %v638 = vmul.f32 %v617, %v628
        %v647 = vrot.slane %v631, 1
        %v648 = vrot.slane %v632, 1
        %v649 = vrot.slane %v633, 1
        %v650 = vrot.slane %v634, 1
        %v651 = vrot.slane %v635, 1
        %v652 = vrot.slane %v636, 1
        %v653 = vrot.slane %v637, 1
        %v654 = vrot.slane %v638, 1
        %v663 = vadd.f32 %v602, %v647
        %v664 = vadd.f32 %v603, %v648
        %v665 = vadd.f32 %v604, %v649
        %v666 = vadd.f32 %v605, %v650
        %v667 = vadd.f32 %v606, %v651
        %v668 = vadd.f32 %v607, %v652
        %v669 = vadd.f32 %v608, %v653
        %v670 = vadd.f32 %v609, %v654
        %v671 = vld [vmem:[%s572] sm:$0x3c]
        %v672 = vld [vmem:[%s572 + $0x8] sm:$0x3c]
        %v673 = vld [vmem:[%s572 + $0x10] sm:$0x3c]
        %v674 = vld [vmem:[%s572 + $0x18] sm:$0x3c]
        %v675 = vld [vmem:[%s572 + $0x20] sm:$0x3c]
        %v676 = vld [vmem:[%s572 + $0x28] sm:$0x3c]
        %v677 = vld [vmem:[%s572 + $0x30] sm:$0x3c]
        %v678 = vld [vmem:[%s572 + $0x38] sm:$0x3c]
        %s679 = scalar_lea.vmem [#allocation5], 16
        %v680 = vld [vmem:[%s679] sm:$0x3]
        %v682 = vlaneseq
        %v683 = vshrl.u32 %v682, 7
        %v684 = vsub.s32 0, %v683
        %v685 = vrot.slane %v680, %v684
        %v686 = vlaneseq
        %v687 = vshrl.u32 %v686, 7
        %v688 = vsub.s32 1, %v687
        %v689 = vrot.slane %v680, %v688
        %v692 = vmul.f32 %v671, %v685
        %v693 = vmul.f32 %v672, %v689
        %v694 = vmul.f32 %v673, %v685
        %v695 = vmul.f32 %v674, %v689
        %v696 = vmul.f32 %v675, %v685
        %v697 = vmul.f32 %v676, %v689
        %v698 = vmul.f32 %v677, %v685
        %v699 = vmul.f32 %v678, %v689
        %v708 = vrot.slane %v692, 2
        %v709 = vrot.slane %v693, 2
        %v710 = vrot.slane %v694, 2
        %v711 = vrot.slane %v695, 2
        %v712 = vrot.slane %v696, 2
        %v713 = vrot.slane %v697, 2
        %v714 = vrot.slane %v698, 2
        %v715 = vrot.slane %v699, 2
        %v724 = vadd.f32 %v663, %v708
        %v725 = vadd.f32 %v664, %v709
        %v726 = vadd.f32 %v665, %v710
        %v727 = vadd.f32 %v666, %v711
        %v728 = vadd.f32 %v667, %v712
        %v729 = vadd.f32 %v668, %v713
        %v730 = vadd.f32 %v669, %v714
        %v731 = vadd.f32 %v670, %v715
        %v732 = vld [vmem:[#allocation7] sm:$0x3]
        %v734 = vlaneseq
        %v735 = vshrl.u32 %v734, 7
        %v736 = vsub.s32 0, %v735
        %v737 = vrot.slane %v732, %v736
        %v738 = vlaneseq
        %v739 = vshrl.u32 %v738, 7
        %v740 = vsub.s32 1, %v739
        %v741 = vrot.slane %v732, %v740
        %v744 = vadd.f32 %v724, %v737
        %v745 = vadd.f32 %v725, %v741
        %v746 = vadd.f32 %v726, %v737
        %v747 = vadd.f32 %v727, %v741
        %v748 = vadd.f32 %v728, %v737
        %v749 = vadd.f32 %v729, %v741
        %v750 = vadd.f32 %v730, %v737
        %v751 = vadd.f32 %v731, %v741
        %v752 = vxor.u32 %v744, 2147483648
        %v753 = vxor.u32 %v745, 2147483648
        %v754 = vxor.u32 %v746, 2147483648
        %v755 = vxor.u32 %v747, 2147483648
        %v756 = vxor.u32 %v748, 2147483648
        %v757 = vxor.u32 %v749, 2147483648
        %v758 = vxor.u32 %v750, 2147483648
        %v759 = vxor.u32 %v751, 2147483648
        %v760 = vmul.f32 %v752, 1.442695
        %v761 = vpow.pop %v760
        %v762 = vmul.f32 %v753, 1.442695
        %v763 = vpow.pop %v762
        %v764 = vmul.f32 %v754, 1.442695
        %v765 = vpow.pop %v764
        %v766 = vmul.f32 %v755, 1.442695
        %v767 = vpow.pop %v766
        %v768 = vmul.f32 %v756, 1.442695
        %v769 = vpow.pop %v768
        %v770 = vmul.f32 %v757, 1.442695
        %v771 = vpow.pop %v770
        %v772 = vmul.f32 %v758, 1.442695
        %v773 = vpow.pop %v772
        %v774 = vmul.f32 %v759, 1.442695
        %v775 = vpow.pop %v774
        %v776 = vadd.f32 %v761, 1.0
        %v777 = vadd.f32 %v763, 1.0
        %v778 = vadd.f32 %v765, 1.0
        %v779 = vadd.f32 %v767, 1.0
        %v780 = vadd.f32 %v769, 1.0
        %v781 = vadd.f32 %v771, 1.0
        %v782 = vadd.f32 %v773, 1.0
        %v783 = vadd.f32 %v775, 1.0
        %v784 = vrcp.pop %v776
        %v785 = vmul.f32 1.0, %v784
        %v786 = vrcp.pop %v777
        %v787 = vmul.f32 1.0, %v786
        %v788 = vrcp.pop %v778
        %v789 = vmul.f32 1.0, %v788
        %v790 = vrcp.pop %v779
        %v791 = vmul.f32 1.0, %v790
        %v792 = vrcp.pop %v780
        %v793 = vmul.f32 1.0, %v792
        %v794 = vrcp.pop %v781
        %v795 = vmul.f32 1.0, %v794
        %v796 = vrcp.pop %v782
        %v797 = vmul.f32 1.0, %v796
        %v798 = vrcp.pop %v783
        %v799 = vmul.f32 1.0, %v798
        %v800 = vmul.f32 %v744, %v785
        %v801 = vmul.f32 %v745, %v787
        %v802 = vmul.f32 %v746, %v789
        %v803 = vmul.f32 %v747, %v791
        %v804 = vmul.f32 %v748, %v793
        %v805 = vmul.f32 %v749, %v795
        %v806 = vmul.f32 %v750, %v797
        %v807 = vmul.f32 %v751, %v799
        %v816 = vcombine.low %v800, %v801
        %v817 = vcombine.low %v802, %v803
        %v818 = vcombine.low %v804, %v805
        %v819 = vcombine.low %v806, %v807
        %vm824 = vcmask 1043456
        %vm825 = vcmask 130052
        %vm826 = vmor %vm825, %vm824
        %827 = vst.msk [vmem:[%s246] sm:$0xff] %vm826, %v816
        %828 = vst.msk [vmem:[%s246 + $0x8] sm:$0xff] %vm826, %v817
        %829 = vst.msk [vmem:[%s246 + $0x10] sm:$0xff] %vm826, %v818
        %830 = vst.msk [vmem:[%s246 + $0x18] sm:$0xff] %vm826, %v819
        %v831 = vsel %vm824, %v800, 0.0
        %v832 = vsel %vm824, %v802, 0.0
        %v833 = vadd.f32 %v831, %v832
        %v834 = vsel %vm824, %v804, 0.0
        %v835 = vadd.f32 %v833, %v834
        %v836 = vsel %vm824, %v806, 0.0
        %v837 = vadd.f32 %v835, %v836
        %v838 = vrot.slane %v837, 4
        %v839 = vadd.f32 %v837, %v838
        %v840 = vrot.slane %v839, 2
        %v841 = vadd.f32 %v839, %v840
        %v842 = vrot.slane %v841, 1
        %v843 = vadd.f32 %v841, %v842
        %vm844 = vcmask 125952
        %v845 = vsel %vm844, %v801, 0.0
        %v846 = vsel %vm844, %v803, 0.0
        %v847 = vadd.f32 %v845, %v846
        %v848 = vsel %vm844, %v805, 0.0
        %v849 = vadd.f32 %v847, %v848
        %v850 = vsel %vm844, %v807, 0.0
        %v851 = vadd.f32 %v849, %v850
        %v852 = vrot.slane %v851, 4
        %v853 = vadd.f32 %v851, %v852
        %v854 = vrot.slane %v853, 2
        %v855 = vadd.f32 %v853, %v854
        %v856 = vrot.slane %v855, 1
        %v857 = vadd.f32 %v855, %v856
        %v858 = vrcp.pop 16.0
        %v859 = vmul.f32 %v843, %v858
        %v860 = vmul.f32 %v857, %v858
        %v863 = vcombine.low %v859, %v860
        %v865 = vunpack.c.l.s4 1966171168
        %v866 = vunpack.c.0.s8 %v865
        %v867 = vlaneseq
        %v868 = vshrl.u32 %v867, 7
        %v869 = vsub.s32 %v866, %v868
        %v870 = vrot.slane %v863, %v869
        %v872 = vunpack.c.l.s4 1966171168
        %v873 = vunpack.c.0.s8 %v872
        %v874 = vlaneseq
        %v875 = vshrl.u32 %v874, 7
        %v876 = vsub.s32 %v873, %v875
        %v877 = vrot.slane %v870, %v876
        %v879 = vlaneseq
        %vm880 = vcmp.ge.s32.totalorder %v879, 0
        %vm881 = vcmp.lt.s32.totalorder %v879, 144
        %vm882 = vmand %vm880, %vm881
        %883 = vst.msk [vmem:[%s253] sm:$0x3] %vm882, %v877
        %s884 = sand.u32 %s102, 1
        %s885 = scalar_lea.sflag [#allocation4], %s884
        %s886 = sand.u32 %s102, 1
        %s887 = smul.addr %s886, 32
        %s888 = scalar_lea.vmem [#allocation8], %s887
        %s889 = sand.u32 %s128, 1
        %s890 = scalar_lea.sflag [#allocation10], %s889
        %s891 = sand.u32 %s128, 1
        %s892 = smul.addr %s891, 2
        %s893 = scalar_lea.vmem [#allocation9], %s892
        // Predicated region
        $region45: #{_lambda_.21} parent=31 // pred_check
          %p894 = pneg %p112
        $region46: #{_lambda_.21} parent=31 // pred_check_branch
          %896 = sbr.rel (%p894) target = $region48
        $region47: #{_lambda_.21} parent=31 // pred_region
          %s898 = ssub.s32 512, 512
          %899 = vsyncadd %s885, %s898
          %s900 = smul.addr %s26, 8
          %s901 = smul.addr %s900, 64
          %s902 = scalar_lea.hbm %s3, %s901
          %s903 = sshll.u32 %s888, 4
          %s904 = int_to_ptr.vmem [resolvable:$true] %s903
          %909 = dma.vmem_to_hbm [thread:$0]  %s904, 512, %s902, %s885, 128, 128, 8
        $region48: #{_lambda_.21} parent=31 // pred_fallthru
          _
        // Predicated region
        $region49: #{_lambda_.21} parent=31 // pred_check
          %p910 = pneg %p138
        $region50: #{_lambda_.21} parent=31 // pred_check_branch
          %912 = sbr.rel (%p910) target = $region52
        $region51: #{_lambda_.21} parent=31 // pred_region
          %s914 = ssub.s32 32, 32
          %915 = vsyncadd %s890, %s914
          %s916 = smul.addr %s26, 2
          %s917 = smul.addr %s916, 16
          %s918 = scalar_lea.hbm %s4, %s917
          %s920 = sshll.u32 %s893, 4
          %s921 = int_to_ptr.vmem [resolvable:$true] %s920
          %923 = dma.vmem_to_hbm [thread:$0]  %s921, 32, %s918, %s890
        $region52: #{_lambda_.21} parent=31 // pred_fallthru
          _
      $region32: #{_lambda_.21} parent=5 // pred_fallthru
        _
      %p924 = scmp.le.s32.totalorder 2, %s21
      // Predicated region
      $region53: #{_lambda_.21} parent=5 // pred_check
        %p925 = pneg %p924
      $region54: #{_lambda_.21} parent=5 // pred_check_branch
        %927 = sbr.rel (%p925) target = $region56
      $region55: #{_lambda_.21} parent=5 // pred_region
        %s928 = ssub.s32 %s21, 2
        // Predicated region
        $region57: #{_lambda_.21} parent=55 // pred_check
          %p929 = pneg %p118
        $region58: #{_lambda_.21} parent=55 // pred_check_branch
          %931 = sbr.rel (%p929) target = $region60
        $region59: #{_lambda_.21} parent=55 // pred_region
          %s932 = sand.u32 %s103, 1
          %s933 = scalar_lea.sflag [#allocation4], %s932
          %s934 = sand.u32 %s103, 1
          %s935 = smul.addr %s934, 32
          %s936 = scalar_lea.vmem [#allocation8], %s935
          %937 = dma.done %s933, 512
        $region60: #{_lambda_.21} parent=55 // pred_fallthru
          _
        // Predicated region
        $region61: #{_lambda_.21} parent=55 // pred_check
          %p938 = pneg %p144
        $region62: #{_lambda_.21} parent=55 // pred_check_branch
          %940 = sbr.rel (%p938) target = $region64
        $region63: #{_lambda_.21} parent=55 // pred_region
          %s941 = sand.u32 %s129, 1
          %s942 = scalar_lea.sflag [#allocation10], %s941
          %s943 = sand.u32 %s129, 1
          %s944 = smul.addr %s943, 2
          %s945 = scalar_lea.vmem [#allocation9], %s944
          %946 = dma.done %s942, 32
        $region64: #{_lambda_.21} parent=55 // pred_fallthru
          _
      $region56: #{_lambda_.21} parent=5 // pred_fallthru
        _
    $region6: #{_lambda_.21} parent=1 // loop_footer
      %s25 = sadd.s32 1, %s21
    $region7: #{_lambda_.21} parent=1 // loop_footer_branch
      %20 = sbr.rel target = $region3
    $region8: #{_lambda_.21} parent=1 // loop_exit
      _
    %947 = vsyncpa [#allocation3], 1
    %s948 = scalar_lea.sflag [#allocation3], 1
    %949 = vsyncpa %s948, 1
    %950 = vsyncpa [#allocation6], 1
    %951 = vsyncpa [#allocation4], 1
    %s952 = scalar_lea.sflag [#allocation4], 1
    %953 = vsyncpa %s952, 1
    %954 = vsyncpa [#allocation10], 1
    %s955 = scalar_lea.sflag [#allocation10], 1
    %956 = vsyncpa %s955, 1

</llo_original>
